<compile_context>
chip_gen: v5e
topology: v5e:2x2
jax: 0.10.0
libtpu: 0.0.40
codegen_flags: <defaults>
</compile_context>

<pallas_src>
import functools

import jax
import jax.numpy as jnp
from jax.experimental import pallas as pl
from jax.experimental.pallas import tpu as pltpu

ACT_DIM = 6        # action vector size
NUM_HEADS = 10     # len(self.fc_out)
HEAD_OUT = 6       # each head: model_dim -> 6
F_OUT = NUM_HEADS * HEAD_OUT


# ---------------------------------------------------------------------------
# Fused kernel: (folded) action encoder + GRU input gates -> GRU recurrence ->
# packed output heads.  All weight refs are whole-array VMEM blocks; the
# activations / output are blocked over the (padded) batch dimension.
# ---------------------------------------------------------------------------
def _guidenet_kernel(img_ref, act_ref,
                     wa1_ref, ba1_ref,
                     wx_ref, waf_ref, bg_ref,
                     whh_ref, bhn_ref,
                     whead_ref, bhead_ref,
                     out_ref,
                     gx_ref, hs_ref,
                     *, T, Nb, D):
    f32 = jnp.float32
    cdt = whh_ref.dtype          # compute (MXU operand) dtype, bf16 by default
    rows = T * Nb

    # ---- batched, time-independent part: one MXU pass over all T*Nb rows ----
    a = act_ref[...].reshape(rows, ACT_DIM).astype(cdt)                  # (rows, 6)
    img = img_ref[...].reshape(rows, D).astype(cdt)                      # (rows, D)

    # action encoder first Linear + SiLU (f32 elementwise math)
    h1 = jnp.dot(a, wa1_ref[...], preferred_element_type=f32) + ba1_ref[...]
    h1 = h1 * jax.nn.sigmoid(h1)                                         # SiLU

    # fused input-side gate pre-activations for all timesteps:
    #   gx = img @ w_ih[:D] + silu(...) @ (w_a2 @ w_ih[D:2D]) + fused bias
    gx = (jnp.dot(img, wx_ref[...], preferred_element_type=f32)
          + jnp.dot(h1.astype(cdt), waf_ref[...], preferred_element_type=f32)
          + bg_ref[...])                                                 # (rows, 3D)
    gx_ref[...] = gx

    whh = whh_ref[...]                                                   # (D, 3D) bf16
    # hoisted broadcast of the n-gate recurrent bias (JAX does not CSE it)
    bhn = jnp.broadcast_to(bhn_ref[...], (Nb, D)).astype(f32)            # (Nb, D)

    # ---- GRU recurrence (PyTorch gate order [r, z, n], h0 = 0) ----
    def gru_step(xg, h):
        hg = jnp.dot(h.astype(cdt), whh, preferred_element_type=f32)     # (Nb, 3D)
        r = jax.nn.sigmoid(xg[:, 0:D] + hg[:, 0:D])
        z = jax.nn.sigmoid(xg[:, D:2 * D] + hg[:, D:2 * D])
        n = jnp.tanh(xg[:, 2 * D:3 * D] + r * (hg[:, 2 * D:3 * D] + bhn))
        return (1.0 - z) * n + z * h

    h0 = jnp.zeros((Nb, D), f32)
    if T <= 24:
        # small T: fully unrolled, static slices, h carried in vregs
        h = h0
        for t in range(T):
            h = gru_step(gx_ref[t * Nb:(t + 1) * Nb, :], h)
            hs_ref[t * Nb:(t + 1) * Nb, :] = h       # lane-dense 128-wide store
    else:
        # large T: bound live ranges with a real loop over the VMEM gx scratch
        def body(t, h):
            start = pl.multiple_of(t * Nb, 8)
            h = gru_step(gx_ref[pl.ds(start, Nb), :], h)
            hs_ref[pl.ds(start, Nb), :] = h
            return h
        jax.lax.fori_loop(0, T, body, h0)

    # ---- packed 10-head projection, hoisted out of the serial loop ----
    out = (jnp.dot(hs_ref[...].astype(cdt), whead_ref[...],
                   preferred_element_type=f32)
           + bhead_ref[...])                                             # (rows, 60)
    out_ref[...] = out.reshape(T, Nb, F_OUT).astype(out_ref.dtype)


def _replicated_spec(shape):
    nd = len(shape)
    return pl.BlockSpec(shape, lambda b: (0,) * nd)


def _batched_spec(T, Nb, last):
    return pl.BlockSpec((T, Nb, last), lambda b: (0, b, 0))


def us_guidenet_forward(params, img_feats, acts, *, compute_dtype=jnp.bfloat16):
    """img_feats: (N, T, model_dim) precomputed image features; acts: (N, T-1, 6)."""
    # TODO(synk): feature_model (external image backbone) is not defined in the
    # spec; image features are taken as a precomputed (N, T, D) input instead.
    N, T, D = img_feats.shape
    out_dt = img_feats.dtype
    f32 = jnp.float32
    cdt = compute_dtype

    # prepend the zero action (module: torch.cat([zeros(N,1,6), acts], dim=1))
    acts_full = jnp.concatenate(
        [jnp.zeros((N, 1, ACT_DIM), acts.dtype), acts], axis=1)          # (N, T, 6)

    # pad batch to a multiple of 8 (f32 sublane count)
    n_pad = -(-N // 8) * 8
    if n_pad != N:
        pad = ((0, n_pad - N), (0, 0), (0, 0))
        img_feats = jnp.pad(img_feats, pad)
        acts_full = jnp.pad(acts_full, pad)

    # time-major layout: per-timestep rows are contiguous sublane blocks
    # TODO(synk): at production sizes request time-major features from the
    # backbone instead of transposing the largest tensor here.
    img3d = img_feats.transpose(1, 0, 2)                                 # (T, n_pad, D)
    act3d = acts_full.transpose(1, 0, 2)                                 # (T, n_pad, 6)

    # batch grid axis ("parallel") when the padded batch is large enough to
    # split without starving MXU/sublane fill -> both v7x TensorCores.
    num_blocks = 2 if (n_pad >= 256 and n_pad % 16 == 0) else 1
    Nb = n_pad // num_blocks

    # ---- weight fusion (done once, in f32, then cast to bf16) ----
    w_ih = params["w_ih"].astype(f32)                                    # (2D, 3D)
    w_x = w_ih[:D, :]                                                    # img side
    w_af = params["w_a2"].astype(f32) @ w_ih[D:2 * D, :]                 # (D, 3D)
    b_g = (params["b_ih"].astype(f32)
           + params["b_a2"].astype(f32) @ w_ih[D:2 * D, :]
           + jnp.concatenate([params["b_hh"][:2 * D].astype(f32),
                              jnp.zeros((D,), f32)]))                    # (3D,)
    b_hn = params["b_hh"][2 * D:].astype(f32)                            # (D,)

    row = lambda v: v.reshape(1, -1).astype(f32)
    operands = (
        img3d, act3d,
        params["w_a1"].astype(cdt), row(params["b_a1"]),
        w_x.astype(cdt), w_af.astype(cdt), row(b_g),
        params["w_hh"].astype(cdt), row(b_hn),
        params["w_head"].astype(cdt), row(params["b_head"]),
    )

    in_specs = [
        _batched_spec(T, Nb, D),        # img3d
        _batched_spec(T, Nb, ACT_DIM),  # act3d
    ] + [_replicated_spec(op.shape) for op in operands[2:]]

    kern = functools.partial(_guidenet_kernel, T=T, Nb=Nb, D=D)
    out_tm = pl.pallas_call(
        kern,
        out_shape=jax.ShapeDtypeStruct((T, n_pad, F_OUT), out_dt),
        grid_spec=pltpu.PrefetchScalarGridSpec(
            num_scalar_prefetch=0,
            grid=(num_blocks,),
            in_specs=in_specs,
            out_specs=_batched_spec(T, Nb, F_OUT),
            scratch_shapes=[
                pltpu.VMEM((T * Nb, 3 * D), jnp.float32),   # gx scratch
                pltpu.VMEM((T * Nb, D), jnp.float32),       # per-step h history
            ],
        ),
        compiler_params=pltpu.CompilerParams(
            dimension_semantics=("parallel",)),
    )(*operands)

    return out_tm.transpose(1, 0, 2)[:N]                                 # (N, T, 60)


# ---------------------------------------------------------------------------
# Parameters (weights stored pre-transposed as (in_features, out_features)).
# The 10 heads are packed column-wise so that the packed output column order
# matches rearrange('f b n -> b (f n)') of the original module.
# TODO(synk): verify head column ordering against a PyTorch golden when
# importing real checkpoints.
# ---------------------------------------------------------------------------
def init_params(key, model_dim):
    D = model_dim
    ks = jax.random.split(key, 12)

    def lin(k, fan_in, fan_out):
        bound = fan_in ** -0.5
        return jax.random.uniform(k, (fan_in, fan_out), jnp.float32, -bound, bound)

    def bias(k, n, fan_in):
        bound = fan_in ** -0.5
        return jax.random.uniform(k, (n,), jnp.float32, -bound, bound)

    # TODO(synk): build_proj('mlp', model_dim, 6) has no definition in the
    # spec; each head is implemented as a single Linear(model_dim, 6).
    return {
        "w_a1": lin(ks[0], ACT_DIM, D), "b_a1": bias(ks[1], D, ACT_DIM),
        "w_a2": lin(ks[2], D, D),       "b_a2": bias(ks[3], D, D),
        "w_ih": lin(ks[4], 2 * D, 3 * D), "b_ih": bias(ks[5], 3 * D, D),
        "w_hh": lin(ks[6], D, 3 * D),     "b_hh": bias(ks[7], 3 * D, D),
        "w_head": lin(ks[8], D, F_OUT),   "b_head": bias(ks[9], F_OUT, D),
    }


# ---------------------------------------------------------------------------
# Pure-JAX reference (same math as the PyTorch module, no weight fusion).
# ---------------------------------------------------------------------------
def ref_forward(params, img_feats, acts):
    N, T, D = img_feats.shape
    acts_full = jnp.concatenate(
        [jnp.zeros((N, 1, ACT_DIM), acts.dtype), acts], axis=1)
    a2 = acts_full.reshape(N * T, ACT_DIM)
    h1 = a2 @ params["w_a1"] + params["b_a1"]
    h1 = h1 * jax.nn.sigmoid(h1)
    act_feats = (h1 @ params["w_a2"] + params["b_a2"]).reshape(N, T, D)
    x = jnp.concatenate([img_feats, act_feats], axis=-1)                 # (N, T, 2D)

    def step(h, x_t):                                                    # x_t: (N, 2D)
        gx = x_t @ params["w_ih"] + params["b_ih"]
        gh = h @ params["w_hh"] + params["b_hh"]
        r = jax.nn.sigmoid(gx[:, :D] + gh[:, :D])
        z = jax.nn.sigmoid(gx[:, D:2 * D] + gh[:, D:2 * D])
        n = jnp.tanh(gx[:, 2 * D:] + r * gh[:, 2 * D:])
        h_new = (1.0 - z) * n + z * h
        return h_new, h_new

    _, hs = jax.lax.scan(step, jnp.zeros((N, D), jnp.float32),
                         x.transpose(1, 0, 2))                           # (T, N, D)
    gru_out = hs.transpose(1, 0, 2).reshape(N * T, D)
    out = gru_out @ params["w_head"] + params["b_head"]
    return out.reshape(N, T, -1)


if __name__ == "__main__":
    # small test consistent with the module: batch=8, seq=8, model_dim=384
    N, T, D = 8, 8, 384
    key = jax.random.PRNGKey(0)
    k_img, k_act, k_par = jax.random.split(key, 3)
    img_feats = jax.random.normal(k_img, (N, T, D), jnp.float32)
    acts = jax.random.normal(k_act, (N, T - 1, ACT_DIM), jnp.float32)
    params = init_params(k_par, D)

    out = us_guidenet_forward(params, img_feats, acts)
    out = jax.block_until_ready(out)
    assert out.shape == (N, T, F_OUT), out.shape

    r = ref_forward(params, img_feats, acts)
    err = float(jnp.max(jnp.abs(out - r)))
    # kernel uses bf16 operands / f32 accumulation + algebraic weight fusion,
    # so compare with a bf16-appropriate tolerance
    assert jnp.allclose(out, r, atol=2e-2, rtol=2e-2), f"max abs err={err}"
    print("KERNEL_OK")
</pallas_src>

<mosaic_0001>
module attributes {stable_mosaic.version = 11 : i64} {
  func.func @_guidenet_kernel(%arg0: i32, %arg1: memref<8x8x384xf32, #tpu.memory_space<vmem>>, %arg2: memref<8x8x6xf32, #tpu.memory_space<vmem>>, %arg3: memref<6x384xbf16, #tpu.memory_space<vmem>>, %arg4: memref<1x384xf32, #tpu.memory_space<vmem>>, %arg5: memref<384x1152xbf16, #tpu.memory_space<vmem>>, %arg6: memref<384x1152xbf16, #tpu.memory_space<vmem>>, %arg7: memref<1x1152xf32, #tpu.memory_space<vmem>>, %arg8: memref<384x1152xbf16, #tpu.memory_space<vmem>>, %arg9: memref<1x384xf32, #tpu.memory_space<vmem>>, %arg10: memref<384x60xbf16, #tpu.memory_space<vmem>>, %arg11: memref<1x60xf32, #tpu.memory_space<vmem>>, %arg12: memref<8x8x60xf32, #tpu.memory_space<vmem>>, %arg13: memref<64x1152xf32, #tpu.memory_space<vmem>>, %arg14: memref<64x384xf32, #tpu.memory_space<vmem>>) attributes {dimension_semantics = [#tpu.dimension_semantics<parallel>], iteration_bounds = array<i64: 1>, scalar_prefetch = 0 : i64, scratch_operands = 2 : i64, tpu.core_type = #tpu.core_type<tc>, window_params = [{transform_indices = @transform_0, window_bounds = array<i64: 8, 8, 384>}, {transform_indices = @transform_1, window_bounds = array<i64: 8, 8, 6>}, {pipeline_mode = #tpu.pipeline_mode<synchronous>, transform_indices = @transform_2, window_bounds = array<i64: 6, 384>}, {pipeline_mode = #tpu.pipeline_mode<synchronous>, transform_indices = @transform_3, window_bounds = array<i64: 1, 384>}, {pipeline_mode = #tpu.pipeline_mode<synchronous>, transform_indices = @transform_4, window_bounds = array<i64: 384, 1152>}, {pipeline_mode = #tpu.pipeline_mode<synchronous>, transform_indices = @transform_5, window_bounds = array<i64: 384, 1152>}, {pipeline_mode = #tpu.pipeline_mode<synchronous>, transform_indices = @transform_6, window_bounds = array<i64: 1, 1152>}, {pipeline_mode = #tpu.pipeline_mode<synchronous>, transform_indices = @transform_7, window_bounds = array<i64: 384, 1152>}, {pipeline_mode = #tpu.pipeline_mode<synchronous>, transform_indices = @transform_8, window_bounds = array<i64: 1, 384>}, {pipeline_mode = #tpu.pipeline_mode<synchronous>, transform_indices = @transform_9, window_bounds = array<i64: 384, 60>}, {pipeline_mode = #tpu.pipeline_mode<synchronous>, transform_indices = @transform_10, window_bounds = array<i64: 1, 60>}, {transform_indices = @transform_11, window_bounds = array<i64: 8, 8, 60>}]} {
    %c0 = arith.constant 0 : index
    %c0_0 = arith.constant 0 : index
    %c0_1 = arith.constant 0 : index
    %0 = vector.load %arg2[%c0, %c0_0, %c0_1] : memref<8x8x6xf32, #tpu.memory_space<vmem>>, vector<8x8x6xf32>
    %1 = vector.shape_cast %0 : vector<8x8x6xf32> to vector<64x6xf32>
    %2 = arith.truncf %1 : vector<64x6xf32> to vector<64x6xbf16>
    %c0_2 = arith.constant 0 : index
    %c0_3 = arith.constant 0 : index
    %c0_4 = arith.constant 0 : index
    %3 = vector.load %arg1[%c0_2, %c0_3, %c0_4] : memref<8x8x384xf32, #tpu.memory_space<vmem>>, vector<8x8x384xf32>
    %4 = vector.shape_cast %3 : vector<8x8x384xf32> to vector<64x384xf32>
    %5 = arith.truncf %4 : vector<64x384xf32> to vector<64x384xbf16>
    %c0_5 = arith.constant 0 : index
    %c0_6 = arith.constant 0 : index
    %6 = vector.load %arg3[%c0_5, %c0_6] : memref<6x384xbf16, #tpu.memory_space<vmem>>, vector<6x384xbf16>
    %cst = arith.constant dense<0.000000e+00> : vector<64x384xf32>
    %7 = tpu.matmul %2, %6, %cst {dimension_numbers = #tpu.dot_dimension_numbers<[1], [0], [0], [1], [0, 0, 1, 1], [], []>} : vector<64x6xbf16>, vector<6x384xbf16>, vector<64x384xf32> -> vector<64x384xf32>
    %c0_7 = arith.constant 0 : index
    %c0_8 = arith.constant 0 : index
    %8 = vector.load %arg4[%c0_7, %c0_8] : memref<1x384xf32, #tpu.memory_space<vmem>>, vector<1x384xf32>
    %9 = vector.broadcast %8 : vector<1x384xf32> to vector<64x384xf32>
    %10 = arith.addf %7, %9 : vector<64x384xf32>
    %11 = arith.negf %10 : vector<64x384xf32>
    %12 = math.exp %11 : vector<64x384xf32>
    %cst_9 = arith.constant 1.000000e+00 : f32
    %13 = vector.broadcast %cst_9 : f32 to vector<64x384xf32>
    %14 = arith.addf %13, %12 : vector<64x384xf32>
    %15 = arith.divf %13, %14 : vector<64x384xf32>
    %16 = arith.mulf %10, %15 : vector<64x384xf32>
    %c0_10 = arith.constant 0 : index
    %c0_11 = arith.constant 0 : index
    %17 = vector.load %arg5[%c0_10, %c0_11] : memref<384x1152xbf16, #tpu.memory_space<vmem>>, vector<384x1152xbf16>
    %cst_12 = arith.constant dense<0.000000e+00> : vector<64x1152xf32>
    %18 = tpu.matmul %5, %17, %cst_12 {dimension_numbers = #tpu.dot_dimension_numbers<[1], [0], [0], [1], [0, 0, 1, 1], [], []>} : vector<64x384xbf16>, vector<384x1152xbf16>, vector<64x1152xf32> -> vector<64x1152xf32>
    %19 = arith.truncf %16 : vector<64x384xf32> to vector<64x384xbf16>
    %c0_13 = arith.constant 0 : index
    %c0_14 = arith.constant 0 : index
    %20 = vector.load %arg6[%c0_13, %c0_14] : memref<384x1152xbf16, #tpu.memory_space<vmem>>, vector<384x1152xbf16>
    %cst_15 = arith.constant dense<0.000000e+00> : vector<64x1152xf32>
    %21 = tpu.matmul %19, %20, %cst_15 {dimension_numbers = #tpu.dot_dimension_numbers<[1], [0], [0], [1], [0, 0, 1, 1], [], []>} : vector<64x384xbf16>, vector<384x1152xbf16>, vector<64x1152xf32> -> vector<64x1152xf32>
    %22 = arith.addf %18, %21 : vector<64x1152xf32>
    %c0_16 = arith.constant 0 : index
    %c0_17 = arith.constant 0 : index
    %23 = vector.load %arg7[%c0_16, %c0_17] : memref<1x1152xf32, #tpu.memory_space<vmem>>, vector<1x1152xf32>
    %24 = vector.broadcast %23 : vector<1x1152xf32> to vector<64x1152xf32>
    %25 = arith.addf %22, %24 : vector<64x1152xf32>
    %c0_18 = arith.constant 0 : index
    %c0_19 = arith.constant 0 : index
    %26 = vector.load %arg13[%c0_18, %c0_19] : memref<64x1152xf32, #tpu.memory_space<vmem>>, vector<64x1152xf32>
    tpu.vector_store %arg13[%c0_18, %c0_19], %25 {strides = array<i32>} : memref<64x1152xf32, #tpu.memory_space<vmem>>, vector<64x1152xf32>,
    %c0_20 = arith.constant 0 : index
    %c0_21 = arith.constant 0 : index
    %27 = vector.load %arg8[%c0_20, %c0_21] : memref<384x1152xbf16, #tpu.memory_space<vmem>>, vector<384x1152xbf16>
    %c0_22 = arith.constant 0 : index
    %c0_23 = arith.constant 0 : index
    %28 = vector.load %arg9[%c0_22, %c0_23] : memref<1x384xf32, #tpu.memory_space<vmem>>, vector<1x384xf32>
    %29 = vector.shape_cast %28 : vector<1x384xf32> to vector<1x384xf32>
    %30 = vector.broadcast %29 : vector<1x384xf32> to vector<8x384xf32>
    %cst_24 = arith.constant 0.000000e+00 : f32
    %31 = vector.broadcast %cst_24 : f32 to vector<8x384xf32>
    %c0_25 = arith.constant 0 : index
    %c0_26 = arith.constant 0 : index
    %32 = vector.load %arg13[%c0_25, %c0_26] : memref<64x1152xf32, #tpu.memory_space<vmem>>, vector<8x1152xf32>
    %33 = arith.truncf %31 : vector<8x384xf32> to vector<8x384xbf16>
    %cst_27 = arith.constant dense<0.000000e+00> : vector<8x1152xf32>
    %34 = tpu.matmul %33, %27, %cst_27 {dimension_numbers = #tpu.dot_dimension_numbers<[1], [0], [0], [1], [0, 0, 1, 1], [], []>} : vector<8x384xbf16>, vector<384x1152xbf16>, vector<8x1152xf32> -> vector<8x1152xf32>
    %35 = vector.extract_strided_slice %32 {offsets = [0, 0], sizes = [8, 384], strides = [1, 1]} : vector<8x1152xf32> to vector<8x384xf32>
    %36 = vector.extract_strided_slice %34 {offsets = [0, 0], sizes = [8, 384], strides = [1, 1]} : vector<8x1152xf32> to vector<8x384xf32>
    %37 = arith.addf %35, %36 : vector<8x384xf32>
    %38 = arith.negf %37 : vector<8x384xf32>
    %39 = math.exp %38 : vector<8x384xf32>
    %cst_28 = arith.constant 1.000000e+00 : f32
    %40 = vector.broadcast %cst_28 : f32 to vector<8x384xf32>
    %41 = arith.addf %40, %39 : vector<8x384xf32>
    %42 = arith.divf %40, %41 : vector<8x384xf32>
    %43 = vector.extract_strided_slice %32 {offsets = [0, 384], sizes = [8, 384], strides = [1, 1]} : vector<8x1152xf32> to vector<8x384xf32>
    %44 = vector.extract_strided_slice %34 {offsets = [0, 384], sizes = [8, 384], strides = [1, 1]} : vector<8x1152xf32> to vector<8x384xf32>
    %45 = arith.addf %43, %44 : vector<8x384xf32>
    %46 = arith.negf %45 : vector<8x384xf32>
    %47 = math.exp %46 : vector<8x384xf32>
    %cst_29 = arith.constant 1.000000e+00 : f32
    %48 = vector.broadcast %cst_29 : f32 to vector<8x384xf32>
    %49 = arith.addf %48, %47 : vector<8x384xf32>
    %50 = arith.divf %48, %49 : vector<8x384xf32>
    %51 = vector.extract_strided_slice %32 {offsets = [0, 768], sizes = [8, 384], strides = [1, 1]} : vector<8x1152xf32> to vector<8x384xf32>
    %52 = vector.extract_strided_slice %34 {offsets = [0, 768], sizes = [8, 384], strides = [1, 1]} : vector<8x1152xf32> to vector<8x384xf32>
    %53 = arith.addf %52, %30 : vector<8x384xf32>
    %54 = arith.mulf %42, %53 : vector<8x384xf32>
    %55 = arith.addf %51, %54 : vector<8x384xf32>
    %56 = math.tanh %55 : vector<8x384xf32>
    %cst_30 = arith.constant 1.000000e+00 : f32
    %57 = vector.broadcast %cst_30 : f32 to vector<8x384xf32>
    %58 = arith.subf %57, %50 : vector<8x384xf32>
    %59 = arith.mulf %58, %56 : vector<8x384xf32>
    %60 = arith.mulf %50, %31 : vector<8x384xf32>
    %61 = arith.addf %59, %60 : vector<8x384xf32>
    %c0_31 = arith.constant 0 : index
    %c0_32 = arith.constant 0 : index
    %62 = vector.load %arg14[%c0_31, %c0_32] : memref<64x384xf32, #tpu.memory_space<vmem>>, vector<8x384xf32>
    tpu.vector_store %arg14[%c0_31, %c0_32], %61 {strides = array<i32>} : memref<64x384xf32, #tpu.memory_space<vmem>>, vector<8x384xf32>,
    %c8 = arith.constant 8 : index
    %c0_33 = arith.constant 0 : index
    %63 = vector.load %arg13[%c8, %c0_33] : memref<64x1152xf32, #tpu.memory_space<vmem>>, vector<8x1152xf32>
    %64 = arith.truncf %61 : vector<8x384xf32> to vector<8x384xbf16>
    %cst_34 = arith.constant dense<0.000000e+00> : vector<8x1152xf32>
    %65 = tpu.matmul %64, %27, %cst_34 {dimension_numbers = #tpu.dot_dimension_numbers<[1], [0], [0], [1], [0, 0, 1, 1], [], []>} : vector<8x384xbf16>, vector<384x1152xbf16>, vector<8x1152xf32> -> vector<8x1152xf32>
    %66 = vector.extract_strided_slice %63 {offsets = [0, 0], sizes = [8, 384], strides = [1, 1]} : vector<8x1152xf32> to vector<8x384xf32>
    %67 = vector.extract_strided_slice %65 {offsets = [0, 0], sizes = [8, 384], strides = [1, 1]} : vector<8x1152xf32> to vector<8x384xf32>
    %68 = arith.addf %66, %67 : vector<8x384xf32>
    %69 = arith.negf %68 : vector<8x384xf32>
    %70 = math.exp %69 : vector<8x384xf32>
    %cst_35 = arith.constant 1.000000e+00 : f32
    %71 = vector.broadcast %cst_35 : f32 to vector<8x384xf32>
    %72 = arith.addf %71, %70 : vector<8x384xf32>
    %73 = arith.divf %71, %72 : vector<8x384xf32>
    %74 = vector.extract_strided_slice %63 {offsets = [0, 384], sizes = [8, 384], strides = [1, 1]} : vector<8x1152xf32> to vector<8x384xf32>
    %75 = vector.extract_strided_slice %65 {offsets = [0, 384], sizes = [8, 384], strides = [1, 1]} : vector<8x1152xf32> to vector<8x384xf32>
    %76 = arith.addf %74, %75 : vector<8x384xf32>
    %77 = arith.negf %76 : vector<8x384xf32>
    %78 = math.exp %77 : vector<8x384xf32>
    %cst_36 = arith.constant 1.000000e+00 : f32
    %79 = vector.broadcast %cst_36 : f32 to vector<8x384xf32>
    %80 = arith.addf %79, %78 : vector<8x384xf32>
    %81 = arith.divf %79, %80 : vector<8x384xf32>
    %82 = vector.extract_strided_slice %63 {offsets = [0, 768], sizes = [8, 384], strides = [1, 1]} : vector<8x1152xf32> to vector<8x384xf32>
    %83 = vector.extract_strided_slice %65 {offsets = [0, 768], sizes = [8, 384], strides = [1, 1]} : vector<8x1152xf32> to vector<8x384xf32>
    %84 = arith.addf %83, %30 : vector<8x384xf32>
    %85 = arith.mulf %73, %84 : vector<8x384xf32>
    %86 = arith.addf %82, %85 : vector<8x384xf32>
    %87 = math.tanh %86 : vector<8x384xf32>
    %cst_37 = arith.constant 1.000000e+00 : f32
    %88 = vector.broadcast %cst_37 : f32 to vector<8x384xf32>
    %89 = arith.subf %88, %81 : vector<8x384xf32>
    %90 = arith.mulf %89, %87 : vector<8x384xf32>
    %91 = arith.mulf %81, %61 : vector<8x384xf32>
    %92 = arith.addf %90, %91 : vector<8x384xf32>
    %c8_38 = arith.constant 8 : index
    %c0_39 = arith.constant 0 : index
    %93 = vector.load %arg14[%c8_38, %c0_39] : memref<64x384xf32, #tpu.memory_space<vmem>>, vector<8x384xf32>
    tpu.vector_store %arg14[%c8_38, %c0_39], %92 {strides = array<i32>} : memref<64x384xf32, #tpu.memory_space<vmem>>, vector<8x384xf32>,
    %c16 = arith.constant 16 : index
    %c0_40 = arith.constant 0 : index
    %94 = vector.load %arg13[%c16, %c0_40] : memref<64x1152xf32, #tpu.memory_space<vmem>>, vector<8x1152xf32>
    %95 = arith.truncf %92 : vector<8x384xf32> to vector<8x384xbf16>
    %cst_41 = arith.constant dense<0.000000e+00> : vector<8x1152xf32>
    %96 = tpu.matmul %95, %27, %cst_41 {dimension_numbers = #tpu.dot_dimension_numbers<[1], [0], [0], [1], [0, 0, 1, 1], [], []>} : vector<8x384xbf16>, vector<384x1152xbf16>, vector<8x1152xf32> -> vector<8x1152xf32>
    %97 = vector.extract_strided_slice %94 {offsets = [0, 0], sizes = [8, 384], strides = [1, 1]} : vector<8x1152xf32> to vector<8x384xf32>
    %98 = vector.extract_strided_slice %96 {offsets = [0, 0], sizes = [8, 384], strides = [1, 1]} : vector<8x1152xf32> to vector<8x384xf32>
    %99 = arith.addf %97, %98 : vector<8x384xf32>
    %100 = arith.negf %99 : vector<8x384xf32>
    %101 = math.exp %100 : vector<8x384xf32>
    %cst_42 = arith.constant 1.000000e+00 : f32
    %102 = vector.broadcast %cst_42 : f32 to vector<8x384xf32>
    %103 = arith.addf %102, %101 : vector<8x384xf32>
    %104 = arith.divf %102, %103 : vector<8x384xf32>
    %105 = vector.extract_strided_slice %94 {offsets = [0, 384], sizes = [8, 384], strides = [1, 1]} : vector<8x1152xf32> to vector<8x384xf32>
    %106 = vector.extract_strided_slice %96 {offsets = [0, 384], sizes = [8, 384], strides = [1, 1]} : vector<8x1152xf32> to vector<8x384xf32>
    %107 = arith.addf %105, %106 : vector<8x384xf32>
    %108 = arith.negf %107 : vector<8x384xf32>
    %109 = math.exp %108 : vector<8x384xf32>
    %cst_43 = arith.constant 1.000000e+00 : f32
    %110 = vector.broadcast %cst_43 : f32 to vector<8x384xf32>
    %111 = arith.addf %110, %109 : vector<8x384xf32>
    %112 = arith.divf %110, %111 : vector<8x384xf32>
    %113 = vector.extract_strided_slice %94 {offsets = [0, 768], sizes = [8, 384], strides = [1, 1]} : vector<8x1152xf32> to vector<8x384xf32>
    %114 = vector.extract_strided_slice %96 {offsets = [0, 768], sizes = [8, 384], strides = [1, 1]} : vector<8x1152xf32> to vector<8x384xf32>
    %115 = arith.addf %114, %30 : vector<8x384xf32>
    %116 = arith.mulf %104, %115 : vector<8x384xf32>
    %117 = arith.addf %113, %116 : vector<8x384xf32>
    %118 = math.tanh %117 : vector<8x384xf32>
    %cst_44 = arith.constant 1.000000e+00 : f32
    %119 = vector.broadcast %cst_44 : f32 to vector<8x384xf32>
    %120 = arith.subf %119, %112 : vector<8x384xf32>
    %121 = arith.mulf %120, %118 : vector<8x384xf32>
    %122 = arith.mulf %112, %92 : vector<8x384xf32>
    %123 = arith.addf %121, %122 : vector<8x384xf32>
    %c16_45 = arith.constant 16 : index
    %c0_46 = arith.constant 0 : index
    %124 = vector.load %arg14[%c16_45, %c0_46] : memref<64x384xf32, #tpu.memory_space<vmem>>, vector<8x384xf32>
    tpu.vector_store %arg14[%c16_45, %c0_46], %123 {strides = array<i32>} : memref<64x384xf32, #tpu.memory_space<vmem>>, vector<8x384xf32>,
    %c24 = arith.constant 24 : index
    %c0_47 = arith.constant 0 : index
    %125 = vector.load %arg13[%c24, %c0_47] : memref<64x1152xf32, #tpu.memory_space<vmem>>, vector<8x1152xf32>
    %126 = arith.truncf %123 : vector<8x384xf32> to vector<8x384xbf16>
    %cst_48 = arith.constant dense<0.000000e+00> : vector<8x1152xf32>
    %127 = tpu.matmul %126, %27, %cst_48 {dimension_numbers = #tpu.dot_dimension_numbers<[1], [0], [0], [1], [0, 0, 1, 1], [], []>} : vector<8x384xbf16>, vector<384x1152xbf16>, vector<8x1152xf32> -> vector<8x1152xf32>
    %128 = vector.extract_strided_slice %125 {offsets = [0, 0], sizes = [8, 384], strides = [1, 1]} : vector<8x1152xf32> to vector<8x384xf32>
    %129 = vector.extract_strided_slice %127 {offsets = [0, 0], sizes = [8, 384], strides = [1, 1]} : vector<8x1152xf32> to vector<8x384xf32>
    %130 = arith.addf %128, %129 : vector<8x384xf32>
    %131 = arith.negf %130 : vector<8x384xf32>
    %132 = math.exp %131 : vector<8x384xf32>
    %cst_49 = arith.constant 1.000000e+00 : f32
    %133 = vector.broadcast %cst_49 : f32 to vector<8x384xf32>
    %134 = arith.addf %133, %132 : vector<8x384xf32>
    %135 = arith.divf %133, %134 : vector<8x384xf32>
    %136 = vector.extract_strided_slice %125 {offsets = [0, 384], sizes = [8, 384], strides = [1, 1]} : vector<8x1152xf32> to vector<8x384xf32>
    %137 = vector.extract_strided_slice %127 {offsets = [0, 384], sizes = [8, 384], strides = [1, 1]} : vector<8x1152xf32> to vector<8x384xf32>
    %138 = arith.addf %136, %137 : vector<8x384xf32>
    %139 = arith.negf %138 : vector<8x384xf32>
    %140 = math.exp %139 : vector<8x384xf32>
    %cst_50 = arith.constant 1.000000e+00 : f32
    %141 = vector.broadcast %cst_50 : f32 to vector<8x384xf32>
    %142 = arith.addf %141, %140 : vector<8x384xf32>
    %143 = arith.divf %141, %142 : vector<8x384xf32>
    %144 = vector.extract_strided_slice %125 {offsets = [0, 768], sizes = [8, 384], strides = [1, 1]} : vector<8x1152xf32> to vector<8x384xf32>
    %145 = vector.extract_strided_slice %127 {offsets = [0, 768], sizes = [8, 384], strides = [1, 1]} : vector<8x1152xf32> to vector<8x384xf32>
    %146 = arith.addf %145, %30 : vector<8x384xf32>
    %147 = arith.mulf %135, %146 : vector<8x384xf32>
    %148 = arith.addf %144, %147 : vector<8x384xf32>
    %149 = math.tanh %148 : vector<8x384xf32>
    %cst_51 = arith.constant 1.000000e+00 : f32
    %150 = vector.broadcast %cst_51 : f32 to vector<8x384xf32>
    %151 = arith.subf %150, %143 : vector<8x384xf32>
    %152 = arith.mulf %151, %149 : vector<8x384xf32>
    %153 = arith.mulf %143, %123 : vector<8x384xf32>
    %154 = arith.addf %152, %153 : vector<8x384xf32>
    %c24_52 = arith.constant 24 : index
    %c0_53 = arith.constant 0 : index
    %155 = vector.load %arg14[%c24_52, %c0_53] : memref<64x384xf32, #tpu.memory_space<vmem>>, vector<8x384xf32>
    tpu.vector_store %arg14[%c24_52, %c0_53], %154 {strides = array<i32>} : memref<64x384xf32, #tpu.memory_space<vmem>>, vector<8x384xf32>,
    %c32 = arith.constant 32 : index
    %c0_54 = arith.constant 0 : index
    %156 = vector.load %arg13[%c32, %c0_54] : memref<64x1152xf32, #tpu.memory_space<vmem>>, vector<8x1152xf32>
    %157 = arith.truncf %154 : vector<8x384xf32> to vector<8x384xbf16>
    %cst_55 = arith.constant dense<0.000000e+00> : vector<8x1152xf32>
    %158 = tpu.matmul %157, %27, %cst_55 {dimension_numbers = #tpu.dot_dimension_numbers<[1], [0], [0], [1], [0, 0, 1, 1], [], []>} : vector<8x384xbf16>, vector<384x1152xbf16>, vector<8x1152xf32> -> vector<8x1152xf32>
    %159 = vector.extract_strided_slice %156 {offsets = [0, 0], sizes = [8, 384], strides = [1, 1]} : vector<8x1152xf32> to vector<8x384xf32>
    %160 = vector.extract_strided_slice %158 {offsets = [0, 0], sizes = [8, 384], strides = [1, 1]} : vector<8x1152xf32> to vector<8x384xf32>
    %161 = arith.addf %159, %160 : vector<8x384xf32>
    %162 = arith.negf %161 : vector<8x384xf32>
    %163 = math.exp %162 : vector<8x384xf32>
    %cst_56 = arith.constant 1.000000e+00 : f32
    %164 = vector.broadcast %cst_56 : f32 to vector<8x384xf32>
    %165 = arith.addf %164, %163 : vector<8x384xf32>
    %166 = arith.divf %164, %165 : vector<8x384xf32>
    %167 = vector.extract_strided_slice %156 {offsets = [0, 384], sizes = [8, 384], strides = [1, 1]} : vector<8x1152xf32> to vector<8x384xf32>
    %168 = vector.extract_strided_slice %158 {offsets = [0, 384], sizes = [8, 384], strides = [1, 1]} : vector<8x1152xf32> to vector<8x384xf32>
    %169 = arith.addf %167, %168 : vector<8x384xf32>
    %170 = arith.negf %169 : vector<8x384xf32>
    %171 = math.exp %170 : vector<8x384xf32>
    %cst_57 = arith.constant 1.000000e+00 : f32
    %172 = vector.broadcast %cst_57 : f32 to vector<8x384xf32>
    %173 = arith.addf %172, %171 : vector<8x384xf32>
    %174 = arith.divf %172, %173 : vector<8x384xf32>
    %175 = vector.extract_strided_slice %156 {offsets = [0, 768], sizes = [8, 384], strides = [1, 1]} : vector<8x1152xf32> to vector<8x384xf32>
    %176 = vector.extract_strided_slice %158 {offsets = [0, 768], sizes = [8, 384], strides = [1, 1]} : vector<8x1152xf32> to vector<8x384xf32>
    %177 = arith.addf %176, %30 : vector<8x384xf32>
    %178 = arith.mulf %166, %177 : vector<8x384xf32>
    %179 = arith.addf %175, %178 : vector<8x384xf32>
    %180 = math.tanh %179 : vector<8x384xf32>
    %cst_58 = arith.constant 1.000000e+00 : f32
    %181 = vector.broadcast %cst_58 : f32 to vector<8x384xf32>
    %182 = arith.subf %181, %174 : vector<8x384xf32>
    %183 = arith.mulf %182, %180 : vector<8x384xf32>
    %184 = arith.mulf %174, %154 : vector<8x384xf32>
    %185 = arith.addf %183, %184 : vector<8x384xf32>
    %c32_59 = arith.constant 32 : index
    %c0_60 = arith.constant 0 : index
    %186 = vector.load %arg14[%c32_59, %c0_60] : memref<64x384xf32, #tpu.memory_space<vmem>>, vector<8x384xf32>
    tpu.vector_store %arg14[%c32_59, %c0_60], %185 {strides = array<i32>} : memref<64x384xf32, #tpu.memory_space<vmem>>, vector<8x384xf32>,
    %c40 = arith.constant 40 : index
    %c0_61 = arith.constant 0 : index
    %187 = vector.load %arg13[%c40, %c0_61] : memref<64x1152xf32, #tpu.memory_space<vmem>>, vector<8x1152xf32>
    %188 = arith.truncf %185 : vector<8x384xf32> to vector<8x384xbf16>
    %cst_62 = arith.constant dense<0.000000e+00> : vector<8x1152xf32>
    %189 = tpu.matmul %188, %27, %cst_62 {dimension_numbers = #tpu.dot_dimension_numbers<[1], [0], [0], [1], [0, 0, 1, 1], [], []>} : vector<8x384xbf16>, vector<384x1152xbf16>, vector<8x1152xf32> -> vector<8x1152xf32>
    %190 = vector.extract_strided_slice %187 {offsets = [0, 0], sizes = [8, 384], strides = [1, 1]} : vector<8x1152xf32> to vector<8x384xf32>
    %191 = vector.extract_strided_slice %189 {offsets = [0, 0], sizes = [8, 384], strides = [1, 1]} : vector<8x1152xf32> to vector<8x384xf32>
    %192 = arith.addf %190, %191 : vector<8x384xf32>
    %193 = arith.negf %192 : vector<8x384xf32>
    %194 = math.exp %193 : vector<8x384xf32>
    %cst_63 = arith.constant 1.000000e+00 : f32
    %195 = vector.broadcast %cst_63 : f32 to vector<8x384xf32>
    %196 = arith.addf %195, %194 : vector<8x384xf32>
    %197 = arith.divf %195, %196 : vector<8x384xf32>
    %198 = vector.extract_strided_slice %187 {offsets = [0, 384], sizes = [8, 384], strides = [1, 1]} : vector<8x1152xf32> to vector<8x384xf32>
    %199 = vector.extract_strided_slice %189 {offsets = [0, 384], sizes = [8, 384], strides = [1, 1]} : vector<8x1152xf32> to vector<8x384xf32>
    %200 = arith.addf %198, %199 : vector<8x384xf32>
    %201 = arith.negf %200 : vector<8x384xf32>
    %202 = math.exp %201 : vector<8x384xf32>
    %cst_64 = arith.constant 1.000000e+00 : f32
    %203 = vector.broadcast %cst_64 : f32 to vector<8x384xf32>
    %204 = arith.addf %203, %202 : vector<8x384xf32>
    %205 = arith.divf %203, %204 : vector<8x384xf32>
    %206 = vector.extract_strided_slice %187 {offsets = [0, 768], sizes = [8, 384], strides = [1, 1]} : vector<8x1152xf32> to vector<8x384xf32>
    %207 = vector.extract_strided_slice %189 {offsets = [0, 768], sizes = [8, 384], strides = [1, 1]} : vector<8x1152xf32> to vector<8x384xf32>
    %208 = arith.addf %207, %30 : vector<8x384xf32>
    %209 = arith.mulf %197, %208 : vector<8x384xf32>
    %210 = arith.addf %206, %209 : vector<8x384xf32>
    %211 = math.tanh %210 : vector<8x384xf32>
    %cst_65 = arith.constant 1.000000e+00 : f32
    %212 = vector.broadcast %cst_65 : f32 to vector<8x384xf32>
    %213 = arith.subf %212, %205 : vector<8x384xf32>
    %214 = arith.mulf %213, %211 : vector<8x384xf32>
    %215 = arith.mulf %205, %185 : vector<8x384xf32>
    %216 = arith.addf %214, %215 : vector<8x384xf32>
    %c40_66 = arith.constant 40 : index
    %c0_67 = arith.constant 0 : index
    %217 = vector.load %arg14[%c40_66, %c0_67] : memref<64x384xf32, #tpu.memory_space<vmem>>, vector<8x384xf32>
    tpu.vector_store %arg14[%c40_66, %c0_67], %216 {strides = array<i32>} : memref<64x384xf32, #tpu.memory_space<vmem>>, vector<8x384xf32>,
    %c48 = arith.constant 48 : index
    %c0_68 = arith.constant 0 : index
    %218 = vector.load %arg13[%c48, %c0_68] : memref<64x1152xf32, #tpu.memory_space<vmem>>, vector<8x1152xf32>
    %219 = arith.truncf %216 : vector<8x384xf32> to vector<8x384xbf16>
    %cst_69 = arith.constant dense<0.000000e+00> : vector<8x1152xf32>
    %220 = tpu.matmul %219, %27, %cst_69 {dimension_numbers = #tpu.dot_dimension_numbers<[1], [0], [0], [1], [0, 0, 1, 1], [], []>} : vector<8x384xbf16>, vector<384x1152xbf16>, vector<8x1152xf32> -> vector<8x1152xf32>
    %221 = vector.extract_strided_slice %218 {offsets = [0, 0], sizes = [8, 384], strides = [1, 1]} : vector<8x1152xf32> to vector<8x384xf32>
    %222 = vector.extract_strided_slice %220 {offsets = [0, 0], sizes = [8, 384], strides = [1, 1]} : vector<8x1152xf32> to vector<8x384xf32>
    %223 = arith.addf %221, %222 : vector<8x384xf32>
    %224 = arith.negf %223 : vector<8x384xf32>
    %225 = math.exp %224 : vector<8x384xf32>
    %cst_70 = arith.constant 1.000000e+00 : f32
    %226 = vector.broadcast %cst_70 : f32 to vector<8x384xf32>
    %227 = arith.addf %226, %225 : vector<8x384xf32>
    %228 = arith.divf %226, %227 : vector<8x384xf32>
    %229 = vector.extract_strided_slice %218 {offsets = [0, 384], sizes = [8, 384], strides = [1, 1]} : vector<8x1152xf32> to vector<8x384xf32>
    %230 = vector.extract_strided_slice %220 {offsets = [0, 384], sizes = [8, 384], strides = [1, 1]} : vector<8x1152xf32> to vector<8x384xf32>
    %231 = arith.addf %229, %230 : vector<8x384xf32>
    %232 = arith.negf %231 : vector<8x384xf32>
    %233 = math.exp %232 : vector<8x384xf32>
    %cst_71 = arith.constant 1.000000e+00 : f32
    %234 = vector.broadcast %cst_71 : f32 to vector<8x384xf32>
    %235 = arith.addf %234, %233 : vector<8x384xf32>
    %236 = arith.divf %234, %235 : vector<8x384xf32>
    %237 = vector.extract_strided_slice %218 {offsets = [0, 768], sizes = [8, 384], strides = [1, 1]} : vector<8x1152xf32> to vector<8x384xf32>
    %238 = vector.extract_strided_slice %220 {offsets = [0, 768], sizes = [8, 384], strides = [1, 1]} : vector<8x1152xf32> to vector<8x384xf32>
    %239 = arith.addf %238, %30 : vector<8x384xf32>
    %240 = arith.mulf %228, %239 : vector<8x384xf32>
    %241 = arith.addf %237, %240 : vector<8x384xf32>
    %242 = math.tanh %241 : vector<8x384xf32>
    %cst_72 = arith.constant 1.000000e+00 : f32
    %243 = vector.broadcast %cst_72 : f32 to vector<8x384xf32>
    %244 = arith.subf %243, %236 : vector<8x384xf32>
    %245 = arith.mulf %244, %242 : vector<8x384xf32>
    %246 = arith.mulf %236, %216 : vector<8x384xf32>
    %247 = arith.addf %245, %246 : vector<8x384xf32>
    %c48_73 = arith.constant 48 : index
    %c0_74 = arith.constant 0 : index
    %248 = vector.load %arg14[%c48_73, %c0_74] : memref<64x384xf32, #tpu.memory_space<vmem>>, vector<8x384xf32>
    tpu.vector_store %arg14[%c48_73, %c0_74], %247 {strides = array<i32>} : memref<64x384xf32, #tpu.memory_space<vmem>>, vector<8x384xf32>,
    %c56 = arith.constant 56 : index
    %c0_75 = arith.constant 0 : index
    %249 = vector.load %arg13[%c56, %c0_75] : memref<64x1152xf32, #tpu.memory_space<vmem>>, vector<8x1152xf32>
    %250 = arith.truncf %247 : vector<8x384xf32> to vector<8x384xbf16>
    %cst_76 = arith.constant dense<0.000000e+00> : vector<8x1152xf32>
    %251 = tpu.matmul %250, %27, %cst_76 {dimension_numbers = #tpu.dot_dimension_numbers<[1], [0], [0], [1], [0, 0, 1, 1], [], []>} : vector<8x384xbf16>, vector<384x1152xbf16>, vector<8x1152xf32> -> vector<8x1152xf32>
    %252 = vector.extract_strided_slice %249 {offsets = [0, 0], sizes = [8, 384], strides = [1, 1]} : vector<8x1152xf32> to vector<8x384xf32>
    %253 = vector.extract_strided_slice %251 {offsets = [0, 0], sizes = [8, 384], strides = [1, 1]} : vector<8x1152xf32> to vector<8x384xf32>
    %254 = arith.addf %252, %253 : vector<8x384xf32>
    %255 = arith.negf %254 : vector<8x384xf32>
    %256 = math.exp %255 : vector<8x384xf32>
    %cst_77 = arith.constant 1.000000e+00 : f32
    %257 = vector.broadcast %cst_77 : f32 to vector<8x384xf32>
    %258 = arith.addf %257, %256 : vector<8x384xf32>
    %259 = arith.divf %257, %258 : vector<8x384xf32>
    %260 = vector.extract_strided_slice %249 {offsets = [0, 384], sizes = [8, 384], strides = [1, 1]} : vector<8x1152xf32> to vector<8x384xf32>
    %261 = vector.extract_strided_slice %251 {offsets = [0, 384], sizes = [8, 384], strides = [1, 1]} : vector<8x1152xf32> to vector<8x384xf32>
    %262 = arith.addf %260, %261 : vector<8x384xf32>
    %263 = arith.negf %262 : vector<8x384xf32>
    %264 = math.exp %263 : vector<8x384xf32>
    %cst_78 = arith.constant 1.000000e+00 : f32
    %265 = vector.broadcast %cst_78 : f32 to vector<8x384xf32>
    %266 = arith.addf %265, %264 : vector<8x384xf32>
    %267 = arith.divf %265, %266 : vector<8x384xf32>
    %268 = vector.extract_strided_slice %249 {offsets = [0, 768], sizes = [8, 384], strides = [1, 1]} : vector<8x1152xf32> to vector<8x384xf32>
    %269 = vector.extract_strided_slice %251 {offsets = [0, 768], sizes = [8, 384], strides = [1, 1]} : vector<8x1152xf32> to vector<8x384xf32>
    %270 = arith.addf %269, %30 : vector<8x384xf32>
    %271 = arith.mulf %259, %270 : vector<8x384xf32>
    %272 = arith.addf %268, %271 : vector<8x384xf32>
    %273 = math.tanh %272 : vector<8x384xf32>
    %cst_79 = arith.constant 1.000000e+00 : f32
    %274 = vector.broadcast %cst_79 : f32 to vector<8x384xf32>
    %275 = arith.subf %274, %267 : vector<8x384xf32>
    %276 = arith.mulf %275, %273 : vector<8x384xf32>
    %277 = arith.mulf %267, %247 : vector<8x384xf32>
    %278 = arith.addf %276, %277 : vector<8x384xf32>
    %c56_80 = arith.constant 56 : index
    %c0_81 = arith.constant 0 : index
    %279 = vector.load %arg14[%c56_80, %c0_81] : memref<64x384xf32, #tpu.memory_space<vmem>>, vector<8x384xf32>
    tpu.vector_store %arg14[%c56_80, %c0_81], %278 {strides = array<i32>} : memref<64x384xf32, #tpu.memory_space<vmem>>, vector<8x384xf32>,
    %c0_82 = arith.constant 0 : index
    %c0_83 = arith.constant 0 : index
    %280 = vector.load %arg14[%c0_82, %c0_83] : memref<64x384xf32, #tpu.memory_space<vmem>>, vector<64x384xf32>
    %281 = arith.truncf %280 : vector<64x384xf32> to vector<64x384xbf16>
    %c0_84 = arith.constant 0 : index
    %c0_85 = arith.constant 0 : index
    %282 = vector.load %arg10[%c0_84, %c0_85] : memref<384x60xbf16, #tpu.memory_space<vmem>>, vector<384x60xbf16>
    %cst_86 = arith.constant dense<0.000000e+00> : vector<64x60xf32>
    %283 = tpu.matmul %281, %282, %cst_86 {dimension_numbers = #tpu.dot_dimension_numbers<[1], [0], [0], [1], [0, 0, 1, 1], [], []>} : vector<64x384xbf16>, vector<384x60xbf16>, vector<64x60xf32> -> vector<64x60xf32>
    %c0_87 = arith.constant 0 : index
    %c0_88 = arith.constant 0 : index
    %284 = vector.load %arg11[%c0_87, %c0_88] : memref<1x60xf32, #tpu.memory_space<vmem>>, vector<1x60xf32>
    %285 = vector.broadcast %284 : vector<1x60xf32> to vector<64x60xf32>
    %286 = arith.addf %283, %285 : vector<64x60xf32>
    %287 = vector.shape_cast %286 : vector<64x60xf32> to vector<8x8x60xf32>
    %c0_89 = arith.constant 0 : index
    %c0_90 = arith.constant 0 : index
    %c0_91 = arith.constant 0 : index
    %288 = vector.load %arg12[%c0_89, %c0_90, %c0_91] : memref<8x8x60xf32, #tpu.memory_space<vmem>>, vector<8x8x60xf32>
    tpu.vector_store %arg12[%c0_89, %c0_90, %c0_91], %287 {strides = array<i32>} : memref<8x8x60xf32, #tpu.memory_space<vmem>>, vector<8x8x60xf32>,
    return
  }
  func.func @transform_0(%arg0: i32) -> (i32, i32, i32) {
    %c0_i32 = arith.constant 0 : i32
    %c0_i32_0 = arith.constant 0 : i32
    %c0_i32_1 = arith.constant 0 : i32
    return %c0_i32, %arg0, %c0_i32_0 : i32, i32, i32
  }
  func.func @transform_1(%arg0: i32) -> (i32, i32, i32) {
    %c0_i32 = arith.constant 0 : i32
    %c0_i32_0 = arith.constant 0 : i32
    %c0_i32_1 = arith.constant 0 : i32
    return %c0_i32, %arg0, %c0_i32_0 : i32, i32, i32
  }
  func.func @transform_2(%arg0: i32) -> (i32, i32) {
    %c0_i32 = arith.constant 0 : i32
    %c0_i32_0 = arith.constant 0 : i32
    %c0_i32_1 = arith.constant 0 : i32
    return %c0_i32, %c0_i32_0 : i32, i32
  }
  func.func @transform_3(%arg0: i32) -> (i32, i32) {
    %c0_i32 = arith.constant 0 : i32
    %c0_i32_0 = arith.constant 0 : i32
    %c0_i32_1 = arith.constant 0 : i32
    return %c0_i32, %c0_i32_0 : i32, i32
  }
  func.func @transform_4(%arg0: i32) -> (i32, i32) {
    %c0_i32 = arith.constant 0 : i32
    %c0_i32_0 = arith.constant 0 : i32
    %c0_i32_1 = arith.constant 0 : i32
    return %c0_i32, %c0_i32_0 : i32, i32
  }
  func.func @transform_5(%arg0: i32) -> (i32, i32) {
    %c0_i32 = arith.constant 0 : i32
    %c0_i32_0 = arith.constant 0 : i32
    %c0_i32_1 = arith.constant 0 : i32
    return %c0_i32, %c0_i32_0 : i32, i32
  }
  func.func @transform_6(%arg0: i32) -> (i32, i32) {
    %c0_i32 = arith.constant 0 : i32
    %c0_i32_0 = arith.constant 0 : i32
    %c0_i32_1 = arith.constant 0 : i32
    return %c0_i32, %c0_i32_0 : i32, i32
  }
  func.func @transform_7(%arg0: i32) -> (i32, i32) {
    %c0_i32 = arith.constant 0 : i32
    %c0_i32_0 = arith.constant 0 : i32
    %c0_i32_1 = arith.constant 0 : i32
    return %c0_i32, %c0_i32_0 : i32, i32
  }
  func.func @transform_8(%arg0: i32) -> (i32, i32) {
    %c0_i32 = arith.constant 0 : i32
    %c0_i32_0 = arith.constant 0 : i32
    %c0_i32_1 = arith.constant 0 : i32
    return %c0_i32, %c0_i32_0 : i32, i32
  }
  func.func @transform_9(%arg0: i32) -> (i32, i32) {
    %c0_i32 = arith.constant 0 : i32
    %c0_i32_0 = arith.constant 0 : i32
    %c0_i32_1 = arith.constant 0 : i32
    return %c0_i32, %c0_i32_0 : i32, i32
  }
  func.func @transform_10(%arg0: i32) -> (i32, i32) {
    %c0_i32 = arith.constant 0 : i32
    %c0_i32_0 = arith.constant 0 : i32
    %c0_i32_1 = arith.constant 0 : i32
    return %c0_i32, %c0_i32_0 : i32, i32
  }
  func.func @transform_11(%arg0: i32) -> (i32, i32, i32) {
    %c0_i32 = arith.constant 0 : i32
    %c0_i32_0 = arith.constant 0 : i32
    %c0_i32_1 = arith.constant 0 : i32
    return %c0_i32, %arg0, %c0_i32_0 : i32, i32, i32
  }
}

</mosaic_0001>

<llo_original>
// kernel: tpu_custom_call.1
$region0: #{tpu_custom_call.1}
  #allocation0 [shape = 'u32[]', space=smem, size = 0x4, offset = 0x4, fixed_abs, tag = 'smem constant byte address 0x4 - core index']
  #allocation1 [shape = 'u32[72,128]{1,0:T(1,128)}', space=vmem, size = 0x9000, scoped, tag = 'internal scratch']
  #allocation2 [shape = 'f32[64,1152]{1,0:T(8,128)}', space=vmem, size = 0x48000, scoped, tag = 'scratch operand']
  #allocation3 [shape = 'f32[64,384]{1,0:T(8,128)}', space=vmem, size = 0x18000, scoped, tag = 'scratch operand']
  %s0 = inlined_call_operand.vmem [shape: f32[8,8,384], index: 0, kind: input, shape index: {}]
  %s1 = inlined_call_operand.vmem [shape: f32[8,8,6], index: 1, kind: input, shape index: {}]
  %s2 = inlined_call_operand.vmem [shape: bf16[6,384], index: 2, kind: input, shape index: {}]
  %s3 = inlined_call_operand.vmem [shape: f32[1,384], index: 3, kind: input, shape index: {}]
  %s4 = inlined_call_operand.hbm [shape: bf16[384,1152], index: 4, kind: input, shape index: {}]
  %s5 = inlined_call_operand.hbm [shape: bf16[384,1152], index: 5, kind: input, shape index: {}]
  %s6 = inlined_call_operand.vmem [shape: f32[1,1152], index: 6, kind: input, shape index: {}]
  %s7 = inlined_call_operand.hbm [shape: bf16[384,1152], index: 7, kind: input, shape index: {}]
  %s8 = inlined_call_operand.vmem [shape: f32[1,384], index: 8, kind: input, shape index: {}]
  %s9 = inlined_call_operand.vmem [shape: bf16[384,60], index: 9, kind: input, shape index: {}]
  %s10 = inlined_call_operand.vmem [shape: f32[1,60], index: 10, kind: input, shape index: {}]
  %s11 = inlined_call_operand.hbm [shape: f32[8,8,60], index: 11, kind: output, shape index: {}]
  %s12 = sld [smem:[#allocation0]]
  $region66: #{tpu_custom_call.1} parent=0
    _
  %s14 = ssub.s32 1, %s12
  %s15 = scalar_select 0, %s14, %s12
  $region1: #{tpu_custom_call.1} parent=0
    #allocation4 [shape = 'u8[884736]{0}', space=vmem, size = 0xd8000, scoped, tag = 'input window, operand 4, single buffered']
    #allocation5 [shape = 's32[1]{0}', space=sflag, size = 0x4, scoped, tag = 'scoped memory for tpu_custom_call.1']
    #allocation6 [shape = 's32[1]{0}', space=sflag, size = 0x4, scoped, tag = 'scoped memory for tpu_custom_call.1']
    #allocation7 [shape = 'u8[884736]{0}', space=vmem, size = 0xd8000, scoped, tag = 'input window, operand 5, single buffered']
    #allocation8 [shape = 's32[1]{0}', space=sflag, size = 0x4, scoped, tag = 'scoped memory for tpu_custom_call.1']
    #allocation9 [shape = 'u8[884736]{0}', space=vmem, size = 0xd8000, scoped, tag = 'input window, operand 7, single buffered']
    #allocation10 [shape = 'u8[32768]{0}', space=vmem, size = 0x8000, scoped, tag = 'output window, operand 0, single buffered']
    %16 = vsyncpa [#allocation5], 0
    %17 = vsyncpa [#allocation8], 0
    %18 = vsyncpa [#allocation6], 0
    // Predicated region
    $region2: #{tpu_custom_call.1} parent=1 // pred_check
      _
    $region3: #{tpu_custom_call.1} parent=1 // pred_check_branch
      %20 = sbr.rel (0) target = $region5
    $region4: #{tpu_custom_call.1} parent=1 // pred_region
      _
    $region5: #{tpu_custom_call.1} parent=1 // pred_fallthru
      _
    // Predicated region
    $region6: #{tpu_custom_call.1} parent=1 // pred_check
      _
    $region7: #{tpu_custom_call.1} parent=1 // pred_check_branch
      %22 = sbr.rel (0) target = $region9
    $region8: #{tpu_custom_call.1} parent=1 // pred_region
      _
    $region9: #{tpu_custom_call.1} parent=1 // pred_fallthru
      _
    // Predicated region
    $region10: #{tpu_custom_call.1} parent=1 // pred_check
      _
    $region11: #{tpu_custom_call.1} parent=1 // pred_check_branch
      %24 = sbr.rel (0) target = $region13
    $region12: #{tpu_custom_call.1} parent=1 // pred_region
      _
    $region13: #{tpu_custom_call.1} parent=1 // pred_fallthru
      _
    // Predicated region
    $region14: #{tpu_custom_call.1} parent=1 // pred_check
      _
    $region15: #{tpu_custom_call.1} parent=1 // pred_check_branch
      %26 = sbr.rel (0) target = $region17
    $region16: #{tpu_custom_call.1} parent=1 // pred_region
      _
    $region17: #{tpu_custom_call.1} parent=1 // pred_fallthru
      _
    // Predicated region
    $region18: #{tpu_custom_call.1} parent=1 // pred_check
      _
    $region19: #{tpu_custom_call.1} parent=1 // pred_check_branch
      %28 = sbr.rel (0) target = $region21
    $region20: #{tpu_custom_call.1} parent=1 // pred_region
      %30 = vsyncadd [#allocation5], 0
      %s31 = sshll.u32 %s4, 4
      %s32 = int_to_ptr.hbm [resolvable:$true] %s31
      %s33 = sshll.u32 [#allocation4], 4
      %s34 = int_to_ptr.vmem [resolvable:$true] %s33
      %39 = dma.hbm_to_vmem [thread:$0]  %s32, 27648, %s34, [#allocation5], 576, 576, 36
    $region21: #{tpu_custom_call.1} parent=1 // pred_fallthru
      _
    // Predicated region
    $region22: #{tpu_custom_call.1} parent=1 // pred_check
      _
    $region23: #{tpu_custom_call.1} parent=1 // pred_check_branch
      %41 = sbr.rel (0) target = $region25
    $region24: #{tpu_custom_call.1} parent=1 // pred_region
      %43 = vsyncadd [#allocation8], 0
      %s44 = sshll.u32 %s5, 4
      %s45 = int_to_ptr.hbm [resolvable:$true] %s44
      %s46 = sshll.u32 [#allocation7], 4
      %s47 = int_to_ptr.vmem [resolvable:$true] %s46
      %52 = dma.hbm_to_vmem [thread:$0]  %s45, 27648, %s47, [#allocation8], 576, 576, 36
    $region25: #{tpu_custom_call.1} parent=1 // pred_fallthru
      _
    // Predicated region
    $region26: #{tpu_custom_call.1} parent=1 // pred_check
      _
    $region27: #{tpu_custom_call.1} parent=1 // pred_check_branch
      %54 = sbr.rel (0) target = $region29
    $region28: #{tpu_custom_call.1} parent=1 // pred_region
      _
    $region29: #{tpu_custom_call.1} parent=1 // pred_fallthru
      _
    // Predicated region
    $region30: #{tpu_custom_call.1} parent=1 // pred_check
      _
    $region31: #{tpu_custom_call.1} parent=1 // pred_check_branch
      %56 = sbr.rel (0) target = $region33
    $region32: #{tpu_custom_call.1} parent=1 // pred_region
      %58 = vsyncadd [#allocation8], 0
      %s59 = sshll.u32 %s7, 4
      %s60 = int_to_ptr.hbm [resolvable:$true] %s59
      %s61 = sshll.u32 [#allocation9], 4
      %s62 = int_to_ptr.vmem [resolvable:$true] %s61
      %67 = dma.hbm_to_vmem [thread:$0]  %s60, 27648, %s62, [#allocation8], 576, 576, 36
    $region33: #{tpu_custom_call.1} parent=1 // pred_fallthru
      _
    // Predicated region
    $region34: #{tpu_custom_call.1} parent=1 // pred_check
      _
    $region35: #{tpu_custom_call.1} parent=1 // pred_check_branch
      %69 = sbr.rel (0) target = $region37
    $region36: #{tpu_custom_call.1} parent=1 // pred_region
      _
    $region37: #{tpu_custom_call.1} parent=1 // pred_fallthru
      _
    // Predicated region
    $region38: #{tpu_custom_call.1} parent=1 // pred_check
      _
    $region39: #{tpu_custom_call.1} parent=1 // pred_check_branch
      %71 = sbr.rel (0) target = $region41
    $region40: #{tpu_custom_call.1} parent=1 // pred_region
      _
    $region41: #{tpu_custom_call.1} parent=1 // pred_fallthru
      _
    // Predicated region
    $region42: #{tpu_custom_call.1} parent=1 // pred_check
      _
    $region43: #{tpu_custom_call.1} parent=1 // pred_check_branch
      %73 = sbr.rel (0) target = $region45
    $region44: #{tpu_custom_call.1} parent=1 // pred_region
      _
    $region45: #{tpu_custom_call.1} parent=1 // pred_fallthru
      _
    // Predicated region
    $region46: #{tpu_custom_call.1} parent=1 // pred_check
      _
    $region47: #{tpu_custom_call.1} parent=1 // pred_check_branch
      %75 = sbr.rel (0) target = $region49
    $region48: #{tpu_custom_call.1} parent=1 // pred_region
      %77 = dma.done [#allocation5], 27648
    $region49: #{tpu_custom_call.1} parent=1 // pred_fallthru
      _
    // Predicated region
    $region50: #{tpu_custom_call.1} parent=1 // pred_check
      _
    $region51: #{tpu_custom_call.1} parent=1 // pred_check_branch
      %79 = sbr.rel (0) target = $region53
    $region52: #{tpu_custom_call.1} parent=1 // pred_region
      %81 = dma.done [#allocation8], 27648
    $region53: #{tpu_custom_call.1} parent=1 // pred_fallthru
      _
    // Predicated region
    $region54: #{tpu_custom_call.1} parent=1 // pred_check
      _
    $region55: #{tpu_custom_call.1} parent=1 // pred_check_branch
      %83 = sbr.rel (0) target = $region57
    $region56: #{tpu_custom_call.1} parent=1 // pred_region
      %85 = dma.done [#allocation8], 27648
    $region57: #{tpu_custom_call.1} parent=1 // pred_fallthru
      _
    %v87 = vld [vmem:[%s1] sm:$0xff]
    %v88 = vld [vmem:[%s1 + $0x8] sm:$0xff]
    %v89 = vld [vmem:[%s1 + $0x10] sm:$0xff]
    %v90 = vld [vmem:[%s1 + $0x18] sm:$0xff]
    %v91 = vld [vmem:[%s1 + $0x20] sm:$0xff]
    %v92 = vld [vmem:[%s1 + $0x28] sm:$0xff]
    %v93 = vld [vmem:[%s1 + $0x30] sm:$0xff]
    %v94 = vld [vmem:[%s1 + $0x38] sm:$0xff]
    %v95 = vpack.c.bf16 %v88, %v87
    %v96 = vpack.c.bf16 %v90, %v89
    %v97 = vpack.c.bf16 %v92, %v91
    %v98 = vpack.c.bf16 %v94, %v93
    %v99 = vld [vmem:[%s0] sm:$0xff]
    %v100 = vld [vmem:[%s0 + $0x8] sm:$0xff]
    %v101 = vld [vmem:[%s0 + $0x10] sm:$0xff]
    %v102 = vld [vmem:[%s0 + $0x18] sm:$0xff]
    %v103 = vld [vmem:[%s0 + $0x20] sm:$0xff]
    %v104 = vld [vmem:[%s0 + $0x28] sm:$0xff]
    %v105 = vld [vmem:[%s0 + $0x30] sm:$0xff]
    %v106 = vld [vmem:[%s0 + $0x38] sm:$0xff]
    %v107 = vld [vmem:[%s0 + $0x40] sm:$0xff]
    %v108 = vld [vmem:[%s0 + $0x48] sm:$0xff]
    %v109 = vld [vmem:[%s0 + $0x50] sm:$0xff]
    %v110 = vld [vmem:[%s0 + $0x58] sm:$0xff]
    %v111 = vld [vmem:[%s0 + $0x60] sm:$0xff]
    %v112 = vld [vmem:[%s0 + $0x68] sm:$0xff]
    %v113 = vld [vmem:[%s0 + $0x70] sm:$0xff]
    %v114 = vld [vmem:[%s0 + $0x78] sm:$0xff]
    %v115 = vld [vmem:[%s0 + $0x80] sm:$0xff]
    %v116 = vld [vmem:[%s0 + $0x88] sm:$0xff]
    %v117 = vld [vmem:[%s0 + $0x90] sm:$0xff]
    %v118 = vld [vmem:[%s0 + $0x98] sm:$0xff]
    %v119 = vld [vmem:[%s0 + $0xa0] sm:$0xff]
    %v120 = vld [vmem:[%s0 + $0xa8] sm:$0xff]
    %v121 = vld [vmem:[%s0 + $0xb0] sm:$0xff]
    %v122 = vld [vmem:[%s0 + $0xb8] sm:$0xff]
    %v123 = vpack.c.bf16 %v102, %v99
    %v124 = vpack.c.bf16 %v103, %v100
    %v125 = vpack.c.bf16 %v104, %v101
    %v126 = vpack.c.bf16 %v108, %v105
    %v127 = vpack.c.bf16 %v109, %v106
    %v128 = vpack.c.bf16 %v110, %v107
    %v129 = vpack.c.bf16 %v114, %v111
    %v130 = vpack.c.bf16 %v115, %v112
    %v131 = vpack.c.bf16 %v116, %v113
    %v132 = vpack.c.bf16 %v120, %v117
    %v133 = vpack.c.bf16 %v121, %v118
    %v134 = vpack.c.bf16 %v122, %v119
    %v135 = vld [vmem:[%s2] sm:$0x77]
    %v136 = vld [vmem:[%s2 + $0x8] sm:$0x7]
    %v137 = vld [vmem:[%s3] sm:$0x7]
    %v139 = vperm.slane %v137, 0
    %v140 = vperm.slane %v137, 1
    %v141 = vperm.slane %v137, 2
    %v147 = vunpack.c.l.b16 %v135
    %v148 = vunpack.c.h.b16 %v135
    %v149 = vunpack.c.l.b16 %v136
    %v150 = vpack.c.b16 %v147, %v147
    %v151 = vpack.c.b16 %v148, %v148
    %v152 = vpack.c.b16 %v149, %v149
    %vm153 = vcmask 48128
    %v155 = vsel %vm153, %v95, 0
    %v158 = vsel %vm153, %v96, 0
    %v161 = vsel %vm153, %v97, 0
    %v164 = vsel %vm153, %v98, 0
    %vm166 = vcmask 1042432
    %v168 = vsel %vm166, %v150, 0
    %v171 = vsel %vm166, %v151, 0
    %v174 = vsel %vm166, %v152, 0
    %176 = vmatpush.bf16.msra.mxu0 0
    %177 = vmatpush.bf16.msra.mxu0 0
    %178 = vmatpush.bf16.msra.mxu0 0
    %179 = vmatpush.bf16.msra.mxu0 0
    %180 = vmatpush.bf16.msra.mxu0 0
    %181 = vmatpush.bf16.msra.mxu0 0
    %182 = vmatpush.bf16.msra.mxu0 0
    %183 = vmatpush.bf16.msra.mxu0 %v168
    %184 = vmatmul.bf16.gmra.mxu0 %v155
    %v185 = vpop.f32.mrf.mxu0
    %v186 = vadd.f32 %v139, %v185
    %v187 = vpop.f32.mrf.mxu0
    %v188 = vadd.f32 %v139, %v187
    %189 = vmatmul.bf16.gmra.mxu0 %v158
    %v190 = vpop.f32.mrf.mxu0
    %v191 = vadd.f32 %v139, %v190
    %v192 = vpop.f32.mrf.mxu0
    %v193 = vadd.f32 %v139, %v192
    %194 = vmatmul.bf16.gmra.mxu0 %v161
    %v195 = vpop.f32.mrf.mxu0
    %v196 = vadd.f32 %v139, %v195
    %v197 = vpop.f32.mrf.mxu0
    %v198 = vadd.f32 %v139, %v197
    %199 = vmatmul.bf16.gmra.mxu0 %v164
    %v200 = vpop.f32.mrf.mxu0
    %v201 = vadd.f32 %v139, %v200
    %v202 = vpop.f32.mrf.mxu0
    %v203 = vadd.f32 %v139, %v202
    %204 = vdwg.mxu0
    %205 = vmatpush.bf16.msra.mxu0 0
    %206 = vmatpush.bf16.msra.mxu0 0
    %207 = vmatpush.bf16.msra.mxu0 0
    %208 = vmatpush.bf16.msra.mxu0 0
    %209 = vmatpush.bf16.msra.mxu0 0
    %210 = vmatpush.bf16.msra.mxu0 0
    %211 = vmatpush.bf16.msra.mxu0 0
    %212 = vmatpush.bf16.msra.mxu0 %v171
    %213 = vmatmul.bf16.gmra.mxu0 %v155
    %v214 = vpop.f32.mrf.mxu0
    %v215 = vadd.f32 %v140, %v214
    %v216 = vpop.f32.mrf.mxu0
    %v217 = vadd.f32 %v140, %v216
    %218 = vmatmul.bf16.gmra.mxu0 %v158
    %v219 = vpop.f32.mrf.mxu0
    %v220 = vadd.f32 %v140, %v219
    %v221 = vpop.f32.mrf.mxu0
    %v222 = vadd.f32 %v140, %v221
    %223 = vmatmul.bf16.gmra.mxu0 %v161
    %v224 = vpop.f32.mrf.mxu0
    %v225 = vadd.f32 %v140, %v224
    %v226 = vpop.f32.mrf.mxu0
    %v227 = vadd.f32 %v140, %v226
    %228 = vmatmul.bf16.gmra.mxu0 %v164
    %v229 = vpop.f32.mrf.mxu0
    %v230 = vadd.f32 %v140, %v229
    %v231 = vpop.f32.mrf.mxu0
    %v232 = vadd.f32 %v140, %v231
    %233 = vdwg.mxu0
    %234 = vmatpush.bf16.msra.mxu0 0
    %235 = vmatpush.bf16.msra.mxu0 0
    %236 = vmatpush.bf16.msra.mxu0 0
    %237 = vmatpush.bf16.msra.mxu0 0
    %238 = vmatpush.bf16.msra.mxu0 0
    %239 = vmatpush.bf16.msra.mxu0 0
    %240 = vmatpush.bf16.msra.mxu0 0
    %241 = vmatpush.bf16.msra.mxu0 %v174
    %242 = vmatmul.bf16.gmra.mxu0 %v155
    %v243 = vpop.f32.mrf.mxu0
    %v244 = vadd.f32 %v141, %v243
    %v245 = vpop.f32.mrf.mxu0
    %v246 = vadd.f32 %v141, %v245
    %247 = vmatmul.bf16.gmra.mxu0 %v158
    %v248 = vpop.f32.mrf.mxu0
    %v249 = vadd.f32 %v141, %v248
    %v250 = vpop.f32.mrf.mxu0
    %v251 = vadd.f32 %v141, %v250
    %252 = vmatmul.bf16.gmra.mxu0 %v161
    %v253 = vpop.f32.mrf.mxu0
    %v254 = vadd.f32 %v141, %v253
    %v255 = vpop.f32.mrf.mxu0
    %v256 = vadd.f32 %v141, %v255
    %257 = vmatmul.bf16.gmra.mxu0 %v164
    %v258 = vpop.f32.mrf.mxu0
    %v259 = vadd.f32 %v141, %v258
    %v260 = vpop.f32.mrf.mxu0
    %v261 = vadd.f32 %v141, %v260
    %262 = vdwg.mxu0
    %v263 = vxor.u32 %v186, 2147483648
    %v264 = vxor.u32 %v215, 2147483648
    %v265 = vxor.u32 %v244, 2147483648
    %v266 = vxor.u32 %v188, 2147483648
    %v267 = vxor.u32 %v217, 2147483648
    %v268 = vxor.u32 %v246, 2147483648
    %v269 = vxor.u32 %v191, 2147483648
    %v270 = vxor.u32 %v220, 2147483648
    %v271 = vxor.u32 %v249, 2147483648
    %v272 = vxor.u32 %v193, 2147483648
    %v273 = vxor.u32 %v222, 2147483648
    %v274 = vxor.u32 %v251, 2147483648
    %v275 = vxor.u32 %v196, 2147483648
    %v276 = vxor.u32 %v225, 2147483648
    %v277 = vxor.u32 %v254, 2147483648
    %v278 = vxor.u32 %v198, 2147483648
    %v279 = vxor.u32 %v227, 2147483648
    %v280 = vxor.u32 %v256, 2147483648
    %v281 = vxor.u32 %v201, 2147483648
    %v282 = vxor.u32 %v230, 2147483648
    %v283 = vxor.u32 %v259, 2147483648
    %v284 = vxor.u32 %v203, 2147483648
    %v285 = vxor.u32 %v232, 2147483648
    %v286 = vxor.u32 %v261, 2147483648
    %v287 = vmul.f32 %v263, 1.442695
    %v288 = vpow.pop %v287
    %v289 = vmul.f32 %v264, 1.442695
    %v290 = vpow.pop %v289
    %v291 = vmul.f32 %v265, 1.442695
    %v292 = vpow.pop %v291
    %v293 = vmul.f32 %v266, 1.442695
    %v294 = vpow.pop %v293
    %v295 = vmul.f32 %v267, 1.442695
    %v296 = vpow.pop %v295
    %v297 = vmul.f32 %v268, 1.442695
    %v298 = vpow.pop %v297
    %v299 = vmul.f32 %v269, 1.442695
    %v300 = vpow.pop %v299
    %v301 = vmul.f32 %v270, 1.442695
    %v302 = vpow.pop %v301
    %v303 = vmul.f32 %v271, 1.442695
    %v304 = vpow.pop %v303
    %v305 = vmul.f32 %v272, 1.442695
    %v306 = vpow.pop %v305
    %v307 = vmul.f32 %v273, 1.442695
    %v308 = vpow.pop %v307
    %v309 = vmul.f32 %v274, 1.442695
    %v310 = vpow.pop %v309
    %v311 = vmul.f32 %v275, 1.442695
    %v312 = vpow.pop %v311
    %v313 = vmul.f32 %v276, 1.442695
    %v314 = vpow.pop %v313
    %v315 = vmul.f32 %v277, 1.442695
    %v316 = vpow.pop %v315
    %v317 = vmul.f32 %v278, 1.442695
    %v318 = vpow.pop %v317
    %v319 = vmul.f32 %v279, 1.442695
    %v320 = vpow.pop %v319
    %v321 = vmul.f32 %v280, 1.442695
    %v322 = vpow.pop %v321
    %v323 = vmul.f32 %v281, 1.442695
    %v324 = vpow.pop %v323
    %v325 = vmul.f32 %v282, 1.442695
    %v326 = vpow.pop %v325
    %v327 = vmul.f32 %v283, 1.442695
    %v328 = vpow.pop %v327
    %v329 = vmul.f32 %v284, 1.442695
    %v330 = vpow.pop %v329
    %v331 = vmul.f32 %v285, 1.442695
    %v332 = vpow.pop %v331
    %v333 = vmul.f32 %v286, 1.442695
    %v334 = vpow.pop %v333
    %v335 = vadd.f32 %v288, 1.0
    %v336 = vadd.f32 %v290, 1.0
    %v337 = vadd.f32 %v292, 1.0
    %v338 = vadd.f32 %v294, 1.0
    %v339 = vadd.f32 %v296, 1.0
    %v340 = vadd.f32 %v298, 1.0
    %v341 = vadd.f32 %v300, 1.0
    %v342 = vadd.f32 %v302, 1.0
    %v343 = vadd.f32 %v304, 1.0
    %v344 = vadd.f32 %v306, 1.0
    %v345 = vadd.f32 %v308, 1.0
    %v346 = vadd.f32 %v310, 1.0
    %v347 = vadd.f32 %v312, 1.0
    %v348 = vadd.f32 %v314, 1.0
    %v349 = vadd.f32 %v316, 1.0
    %v350 = vadd.f32 %v318, 1.0
    %v351 = vadd.f32 %v320, 1.0
    %v352 = vadd.f32 %v322, 1.0
    %v353 = vadd.f32 %v324, 1.0
    %v354 = vadd.f32 %v326, 1.0
    %v355 = vadd.f32 %v328, 1.0
    %v356 = vadd.f32 %v330, 1.0
    %v357 = vadd.f32 %v332, 1.0
    %v358 = vadd.f32 %v334, 1.0
    %v359 = vrcp.pop %v335
    %v360 = vmul.f32 %v335, %v359
    %v361 = vsub.f32 1.0, %v360
    %v362 = vmul.f32 %v359, %v361
    %v363 = vadd.f32 %v359, %v362
    %vm364 = vweird.f32 %v335
    %vm365 = vweird.f32 %v359
    %vm366 = vmor %vm364, %vm365
    %v367 = vsel %vm366, %v359, %v363
    %v368 = vand.u32 2147483647, %v335
    %vm369 = vcmp.eq.f32.partialorder %v368, 8.507059e+37
    %v370 = vand.u32 %v335, 2147483648
    %v371 = vor.u32 1.1754944e-38, %v370
    %v372 = vsel %vm369, %v371, %v367
    %v373 = vmul.f32 1.0, %v372
    %v374 = vrcp.pop %v336
    %v375 = vmul.f32 %v336, %v374
    %v376 = vsub.f32 1.0, %v375
    %v377 = vmul.f32 %v374, %v376
    %v378 = vadd.f32 %v374, %v377
    %vm379 = vweird.f32 %v336
    %vm380 = vweird.f32 %v374
    %vm381 = vmor %vm379, %vm380
    %v382 = vsel %vm381, %v374, %v378
    %v383 = vand.u32 2147483647, %v336
    %vm384 = vcmp.eq.f32.partialorder %v383, 8.507059e+37
    %v385 = vand.u32 %v336, 2147483648
    %v386 = vor.u32 1.1754944e-38, %v385
    %v387 = vsel %vm384, %v386, %v382
    %v388 = vmul.f32 1.0, %v387
    %v389 = vrcp.pop %v337
    %v390 = vmul.f32 %v337, %v389
    %v391 = vsub.f32 1.0, %v390
    %v392 = vmul.f32 %v389, %v391
    %v393 = vadd.f32 %v389, %v392
    %vm394 = vweird.f32 %v337
    %vm395 = vweird.f32 %v389
    %vm396 = vmor %vm394, %vm395
    %v397 = vsel %vm396, %v389, %v393
    %v398 = vand.u32 2147483647, %v337
    %vm399 = vcmp.eq.f32.partialorder %v398, 8.507059e+37
    %v400 = vand.u32 %v337, 2147483648
    %v401 = vor.u32 1.1754944e-38, %v400
    %v402 = vsel %vm399, %v401, %v397
    %v403 = vmul.f32 1.0, %v402
    %v404 = vrcp.pop %v338
    %v405 = vmul.f32 %v338, %v404
    %v406 = vsub.f32 1.0, %v405
    %v407 = vmul.f32 %v404, %v406
    %v408 = vadd.f32 %v404, %v407
    %vm409 = vweird.f32 %v338
    %vm410 = vweird.f32 %v404
    %vm411 = vmor %vm409, %vm410
    %v412 = vsel %vm411, %v404, %v408
    %v413 = vand.u32 2147483647, %v338
    %vm414 = vcmp.eq.f32.partialorder %v413, 8.507059e+37
    %v415 = vand.u32 %v338, 2147483648
    %v416 = vor.u32 1.1754944e-38, %v415
    %v417 = vsel %vm414, %v416, %v412
    %v418 = vmul.f32 1.0, %v417
    %v419 = vrcp.pop %v339
    %v420 = vmul.f32 %v339, %v419
    %v421 = vsub.f32 1.0, %v420
    %v422 = vmul.f32 %v419, %v421
    %v423 = vadd.f32 %v419, %v422
    %vm424 = vweird.f32 %v339
    %vm425 = vweird.f32 %v419
    %vm426 = vmor %vm424, %vm425
    %v427 = vsel %vm426, %v419, %v423
    %v428 = vand.u32 2147483647, %v339
    %vm429 = vcmp.eq.f32.partialorder %v428, 8.507059e+37
    %v430 = vand.u32 %v339, 2147483648
    %v431 = vor.u32 1.1754944e-38, %v430
    %v432 = vsel %vm429, %v431, %v427
    %v433 = vmul.f32 1.0, %v432
    %v434 = vrcp.pop %v340
    %v435 = vmul.f32 %v340, %v434
    %v436 = vsub.f32 1.0, %v435
    %v437 = vmul.f32 %v434, %v436
    %v438 = vadd.f32 %v434, %v437
    %vm439 = vweird.f32 %v340
    %vm440 = vweird.f32 %v434
    %vm441 = vmor %vm439, %vm440
    %v442 = vsel %vm441, %v434, %v438
    %v443 = vand.u32 2147483647, %v340
    %vm444 = vcmp.eq.f32.partialorder %v443, 8.507059e+37
    %v445 = vand.u32 %v340, 2147483648
    %v446 = vor.u32 1.1754944e-38, %v445
    %v447 = vsel %vm444, %v446, %v442
    %v448 = vmul.f32 1.0, %v447
    %v449 = vrcp.pop %v341
    %v450 = vmul.f32 %v341, %v449
    %v451 = vsub.f32 1.0, %v450
    %v452 = vmul.f32 %v449, %v451
    %v453 = vadd.f32 %v449, %v452
    %vm454 = vweird.f32 %v341
    %vm455 = vweird.f32 %v449
    %vm456 = vmor %vm454, %vm455
    %v457 = vsel %vm456, %v449, %v453
    %v458 = vand.u32 2147483647, %v341
    %vm459 = vcmp.eq.f32.partialorder %v458, 8.507059e+37
    %v460 = vand.u32 %v341, 2147483648
    %v461 = vor.u32 1.1754944e-38, %v460
    %v462 = vsel %vm459, %v461, %v457
    %v463 = vmul.f32 1.0, %v462
    %v464 = vrcp.pop %v342
    %v465 = vmul.f32 %v342, %v464
    %v466 = vsub.f32 1.0, %v465
    %v467 = vmul.f32 %v464, %v466
    %v468 = vadd.f32 %v464, %v467
    %vm469 = vweird.f32 %v342
    %vm470 = vweird.f32 %v464
    %vm471 = vmor %vm469, %vm470
    %v472 = vsel %vm471, %v464, %v468
    %v473 = vand.u32 2147483647, %v342
    %vm474 = vcmp.eq.f32.partialorder %v473, 8.507059e+37
    %v475 = vand.u32 %v342, 2147483648
    %v476 = vor.u32 1.1754944e-38, %v475
    %v477 = vsel %vm474, %v476, %v472
    %v478 = vmul.f32 1.0, %v477
    %v479 = vrcp.pop %v343
    %v480 = vmul.f32 %v343, %v479
    %v481 = vsub.f32 1.0, %v480
    %v482 = vmul.f32 %v479, %v481
    %v483 = vadd.f32 %v479, %v482
    %vm484 = vweird.f32 %v343
    %vm485 = vweird.f32 %v479
    %vm486 = vmor %vm484, %vm485
    %v487 = vsel %vm486, %v479, %v483
    %v488 = vand.u32 2147483647, %v343
    %vm489 = vcmp.eq.f32.partialorder %v488, 8.507059e+37
    %v490 = vand.u32 %v343, 2147483648
    %v491 = vor.u32 1.1754944e-38, %v490
    %v492 = vsel %vm489, %v491, %v487
    %v493 = vmul.f32 1.0, %v492
    %v494 = vrcp.pop %v344
    %v495 = vmul.f32 %v344, %v494
    %v496 = vsub.f32 1.0, %v495
    %v497 = vmul.f32 %v494, %v496
    %v498 = vadd.f32 %v494, %v497
    %vm499 = vweird.f32 %v344
    %vm500 = vweird.f32 %v494
    %vm501 = vmor %vm499, %vm500
    %v502 = vsel %vm501, %v494, %v498
    %v503 = vand.u32 2147483647, %v344
    %vm504 = vcmp.eq.f32.partialorder %v503, 8.507059e+37
    %v505 = vand.u32 %v344, 2147483648
    %v506 = vor.u32 1.1754944e-38, %v505
    %v507 = vsel %vm504, %v506, %v502
    %v508 = vmul.f32 1.0, %v507
    %v509 = vrcp.pop %v345
    %v510 = vmul.f32 %v345, %v509
    %v511 = vsub.f32 1.0, %v510
    %v512 = vmul.f32 %v509, %v511
    %v513 = vadd.f32 %v509, %v512
    %vm514 = vweird.f32 %v345
    %vm515 = vweird.f32 %v509
    %vm516 = vmor %vm514, %vm515
    %v517 = vsel %vm516, %v509, %v513
    %v518 = vand.u32 2147483647, %v345
    %vm519 = vcmp.eq.f32.partialorder %v518, 8.507059e+37
    %v520 = vand.u32 %v345, 2147483648
    %v521 = vor.u32 1.1754944e-38, %v520
    %v522 = vsel %vm519, %v521, %v517
    %v523 = vmul.f32 1.0, %v522
    %v524 = vrcp.pop %v346
    %v525 = vmul.f32 %v346, %v524
    %v526 = vsub.f32 1.0, %v525
    %v527 = vmul.f32 %v524, %v526
    %v528 = vadd.f32 %v524, %v527
    %vm529 = vweird.f32 %v346
    %vm530 = vweird.f32 %v524
    %vm531 = vmor %vm529, %vm530
    %v532 = vsel %vm531, %v524, %v528
    %v533 = vand.u32 2147483647, %v346
    %vm534 = vcmp.eq.f32.partialorder %v533, 8.507059e+37
    %v535 = vand.u32 %v346, 2147483648
    %v536 = vor.u32 1.1754944e-38, %v535
    %v537 = vsel %vm534, %v536, %v532
    %v538 = vmul.f32 1.0, %v537
    %v539 = vrcp.pop %v347
    %v540 = vmul.f32 %v347, %v539
    %v541 = vsub.f32 1.0, %v540
    %v542 = vmul.f32 %v539, %v541
    %v543 = vadd.f32 %v539, %v542
    %vm544 = vweird.f32 %v347
    %vm545 = vweird.f32 %v539
    %vm546 = vmor %vm544, %vm545
    %v547 = vsel %vm546, %v539, %v543
    %v548 = vand.u32 2147483647, %v347
    %vm549 = vcmp.eq.f32.partialorder %v548, 8.507059e+37
    %v550 = vand.u32 %v347, 2147483648
    %v551 = vor.u32 1.1754944e-38, %v550
    %v552 = vsel %vm549, %v551, %v547
    %v553 = vmul.f32 1.0, %v552
    %v554 = vrcp.pop %v348
    %v555 = vmul.f32 %v348, %v554
    %v556 = vsub.f32 1.0, %v555
    %v557 = vmul.f32 %v554, %v556
    %v558 = vadd.f32 %v554, %v557
    %vm559 = vweird.f32 %v348
    %vm560 = vweird.f32 %v554
    %vm561 = vmor %vm559, %vm560
    %v562 = vsel %vm561, %v554, %v558
    %v563 = vand.u32 2147483647, %v348
    %vm564 = vcmp.eq.f32.partialorder %v563, 8.507059e+37
    %v565 = vand.u32 %v348, 2147483648
    %v566 = vor.u32 1.1754944e-38, %v565
    %v567 = vsel %vm564, %v566, %v562
    %v568 = vmul.f32 1.0, %v567
    %v569 = vrcp.pop %v349
    %v570 = vmul.f32 %v349, %v569
    %v571 = vsub.f32 1.0, %v570
    %v572 = vmul.f32 %v569, %v571
    %v573 = vadd.f32 %v569, %v572
    %vm574 = vweird.f32 %v349
    %vm575 = vweird.f32 %v569
    %vm576 = vmor %vm574, %vm575
    %v577 = vsel %vm576, %v569, %v573
    %v578 = vand.u32 2147483647, %v349
    %vm579 = vcmp.eq.f32.partialorder %v578, 8.507059e+37
    %v580 = vand.u32 %v349, 2147483648
    %v581 = vor.u32 1.1754944e-38, %v580
    %v582 = vsel %vm579, %v581, %v577
    %v583 = vmul.f32 1.0, %v582
    %v584 = vrcp.pop %v350
    %v585 = vmul.f32 %v350, %v584
    %v586 = vsub.f32 1.0, %v585
    %v587 = vmul.f32 %v584, %v586
    %v588 = vadd.f32 %v584, %v587
    %vm589 = vweird.f32 %v350
    %vm590 = vweird.f32 %v584
    %vm591 = vmor %vm589, %vm590
    %v592 = vsel %vm591, %v584, %v588
    %v593 = vand.u32 2147483647, %v350
    %vm594 = vcmp.eq.f32.partialorder %v593, 8.507059e+37
    %v595 = vand.u32 %v350, 2147483648
    %v596 = vor.u32 1.1754944e-38, %v595
    %v597 = vsel %vm594, %v596, %v592
    %v598 = vmul.f32 1.0, %v597
    %v599 = vrcp.pop %v351
    %v600 = vmul.f32 %v351, %v599
    %v601 = vsub.f32 1.0, %v600
    %v602 = vmul.f32 %v599, %v601
    %v603 = vadd.f32 %v599, %v602
    %vm604 = vweird.f32 %v351
    %vm605 = vweird.f32 %v599
    %vm606 = vmor %vm604, %vm605
    %v607 = vsel %vm606, %v599, %v603
    %v608 = vand.u32 2147483647, %v351
    %vm609 = vcmp.eq.f32.partialorder %v608, 8.507059e+37
    %v610 = vand.u32 %v351, 2147483648
    %v611 = vor.u32 1.1754944e-38, %v610
    %v612 = vsel %vm609, %v611, %v607
    %v613 = vmul.f32 1.0, %v612
    %v614 = vrcp.pop %v352
    %v615 = vmul.f32 %v352, %v614
    %v616 = vsub.f32 1.0, %v615
    %v617 = vmul.f32 %v614, %v616
    %v618 = vadd.f32 %v614, %v617
    %vm619 = vweird.f32 %v352
    %vm620 = vweird.f32 %v614
    %vm621 = vmor %vm619, %vm620
    %v622 = vsel %vm621, %v614, %v618
    %v623 = vand.u32 2147483647, %v352
    %vm624 = vcmp.eq.f32.partialorder %v623, 8.507059e+37
    %v625 = vand.u32 %v352, 2147483648
    %v626 = vor.u32 1.1754944e-38, %v625
    %v627 = vsel %vm624, %v626, %v622
    %v628 = vmul.f32 1.0, %v627
    %v629 = vrcp.pop %v353
    %v630 = vmul.f32 %v353, %v629
    %v631 = vsub.f32 1.0, %v630
    %v632 = vmul.f32 %v629, %v631
    %v633 = vadd.f32 %v629, %v632
    %vm634 = vweird.f32 %v353
    %vm635 = vweird.f32 %v629
    %vm636 = vmor %vm634, %vm635
    %v637 = vsel %vm636, %v629, %v633
    %v638 = vand.u32 2147483647, %v353
    %vm639 = vcmp.eq.f32.partialorder %v638, 8.507059e+37
    %v640 = vand.u32 %v353, 2147483648
    %v641 = vor.u32 1.1754944e-38, %v640
    %v642 = vsel %vm639, %v641, %v637
    %v643 = vmul.f32 1.0, %v642
    %v644 = vrcp.pop %v354
    %v645 = vmul.f32 %v354, %v644
    %v646 = vsub.f32 1.0, %v645
    %v647 = vmul.f32 %v644, %v646
    %v648 = vadd.f32 %v644, %v647
    %vm649 = vweird.f32 %v354
    %vm650 = vweird.f32 %v644
    %vm651 = vmor %vm649, %vm650
    %v652 = vsel %vm651, %v644, %v648
    %v653 = vand.u32 2147483647, %v354
    %vm654 = vcmp.eq.f32.partialorder %v653, 8.507059e+37
    %v655 = vand.u32 %v354, 2147483648
    %v656 = vor.u32 1.1754944e-38, %v655
    %v657 = vsel %vm654, %v656, %v652
    %v658 = vmul.f32 1.0, %v657
    %v659 = vrcp.pop %v355
    %v660 = vmul.f32 %v355, %v659
    %v661 = vsub.f32 1.0, %v660
    %v662 = vmul.f32 %v659, %v661
    %v663 = vadd.f32 %v659, %v662
    %vm664 = vweird.f32 %v355
    %vm665 = vweird.f32 %v659
    %vm666 = vmor %vm664, %vm665
    %v667 = vsel %vm666, %v659, %v663
    %v668 = vand.u32 2147483647, %v355
    %vm669 = vcmp.eq.f32.partialorder %v668, 8.507059e+37
    %v670 = vand.u32 %v355, 2147483648
    %v671 = vor.u32 1.1754944e-38, %v670
    %v672 = vsel %vm669, %v671, %v667
    %v673 = vmul.f32 1.0, %v672
    %v674 = vrcp.pop %v356
    %v675 = vmul.f32 %v356, %v674
    %v676 = vsub.f32 1.0, %v675
    %v677 = vmul.f32 %v674, %v676
    %v678 = vadd.f32 %v674, %v677
    %vm679 = vweird.f32 %v356
    %vm680 = vweird.f32 %v674
    %vm681 = vmor %vm679, %vm680
    %v682 = vsel %vm681, %v674, %v678
    %v683 = vand.u32 2147483647, %v356
    %vm684 = vcmp.eq.f32.partialorder %v683, 8.507059e+37
    %v685 = vand.u32 %v356, 2147483648
    %v686 = vor.u32 1.1754944e-38, %v685
    %v687 = vsel %vm684, %v686, %v682
    %v688 = vmul.f32 1.0, %v687
    %v689 = vrcp.pop %v357
    %v690 = vmul.f32 %v357, %v689
    %v691 = vsub.f32 1.0, %v690
    %v692 = vmul.f32 %v689, %v691
    %v693 = vadd.f32 %v689, %v692
    %vm694 = vweird.f32 %v357
    %vm695 = vweird.f32 %v689
    %vm696 = vmor %vm694, %vm695
    %v697 = vsel %vm696, %v689, %v693
    %v698 = vand.u32 2147483647, %v357
    %vm699 = vcmp.eq.f32.partialorder %v698, 8.507059e+37
    %v700 = vand.u32 %v357, 2147483648
    %v701 = vor.u32 1.1754944e-38, %v700
    %v702 = vsel %vm699, %v701, %v697
    %v703 = vmul.f32 1.0, %v702
    %v704 = vrcp.pop %v358
    %v705 = vmul.f32 %v358, %v704
    %v706 = vsub.f32 1.0, %v705
    %v707 = vmul.f32 %v704, %v706
    %v708 = vadd.f32 %v704, %v707
    %vm709 = vweird.f32 %v358
    %vm710 = vweird.f32 %v704
    %vm711 = vmor %vm709, %vm710
    %v712 = vsel %vm711, %v704, %v708
    %v713 = vand.u32 2147483647, %v358
    %vm714 = vcmp.eq.f32.partialorder %v713, 8.507059e+37
    %v715 = vand.u32 %v358, 2147483648
    %v716 = vor.u32 1.1754944e-38, %v715
    %v717 = vsel %vm714, %v716, %v712
    %v718 = vmul.f32 1.0, %v717
    %v719 = vmul.f32 %v186, %v373
    %v720 = vmul.f32 %v215, %v388
    %v721 = vmul.f32 %v244, %v403
    %v722 = vmul.f32 %v188, %v418
    %v723 = vmul.f32 %v217, %v433
    %v724 = vmul.f32 %v246, %v448
    %v725 = vmul.f32 %v191, %v463
    %v726 = vmul.f32 %v220, %v478
    %v727 = vmul.f32 %v249, %v493
    %v728 = vmul.f32 %v193, %v508
    %v729 = vmul.f32 %v222, %v523
    %v730 = vmul.f32 %v251, %v538
    %v731 = vmul.f32 %v196, %v553
    %v732 = vmul.f32 %v225, %v568
    %v733 = vmul.f32 %v254, %v583
    %v734 = vmul.f32 %v198, %v598
    %v735 = vmul.f32 %v227, %v613
    %v736 = vmul.f32 %v256, %v628
    %v737 = vmul.f32 %v201, %v643
    %v738 = vmul.f32 %v230, %v658
    %v739 = vmul.f32 %v259, %v673
    %v740 = vmul.f32 %v203, %v688
    %v741 = vmul.f32 %v232, %v703
    %v742 = vmul.f32 %v261, %v718
    %v743 = vld [vmem:[#allocation4] sm:$0xff]
    %v744 = vld [vmem:[#allocation4 + $0x8] sm:$0xff]
    %v745 = vld [vmem:[#allocation4 + $0x10] sm:$0xff]
    %v746 = vld [vmem:[#allocation4 + $0x18] sm:$0xff]
    %v747 = vld [vmem:[#allocation4 + $0x20] sm:$0xf]
    %v748 = vld [vmem:[#allocation4 + $0x24] sm:$0xff]
    %v749 = vld [vmem:[#allocation4 + $0x2c] sm:$0xff]
    %v750 = vld [vmem:[#allocation4 + $0x34] sm:$0xff]
    %v751 = vld [vmem:[#allocation4 + $0x3c] sm:$0xff]
    %v752 = vld [vmem:[#allocation4 + $0x44] sm:$0xf]
    %v753 = vld [vmem:[#allocation4 + $0x48] sm:$0xff]
    %v754 = vld [vmem:[#allocation4 + $0x50] sm:$0xff]
    %v755 = vld [vmem:[#allocation4 + $0x58] sm:$0xff]
    %v756 = vld [vmem:[#allocation4 + $0x60] sm:$0xff]
    %v757 = vld [vmem:[#allocation4 + $0x68] sm:$0xf]
    %v758 = vld [vmem:[#allocation4 + $0x6c] sm:$0xff]
    %v759 = vld [vmem:[#allocation4 + $0x74] sm:$0xff]
    %v760 = vld [vmem:[#allocation4 + $0x7c] sm:$0xff]
    %v761 = vld [vmem:[#allocation4 + $0x84] sm:$0xff]
    %v762 = vld [vmem:[#allocation4 + $0x8c] sm:$0xf]
    %v763 = vld [vmem:[#allocation4 + $0x90] sm:$0xff]
    %v764 = vld [vmem:[#allocation4 + $0x98] sm:$0xff]
    %v765 = vld [vmem:[#allocation4 + $0xa0] sm:$0xff]
    %v766 = vld [vmem:[#allocation4 + $0xa8] sm:$0xff]
    %v767 = vld [vmem:[#allocation4 + $0xb0] sm:$0xf]
    %v768 = vld [vmem:[#allocation4 + $0xb4] sm:$0xff]
    %v769 = vld [vmem:[#allocation4 + $0xbc] sm:$0xff]
    %v770 = vld [vmem:[#allocation4 + $0xc4] sm:$0xff]
    %v771 = vld [vmem:[#allocation4 + $0xcc] sm:$0xff]
    %v772 = vld [vmem:[#allocation4 + $0xd4] sm:$0xf]
    %v773 = vld [vmem:[#allocation4 + $0xd8] sm:$0xff]
    %v774 = vld [vmem:[#allocation4 + $0xe0] sm:$0xff]
    %v775 = vld [vmem:[#allocation4 + $0xe8] sm:$0xff]
    %v776 = vld [vmem:[#allocation4 + $0xf0] sm:$0xff]
    %v777 = vld [vmem:[#allocation4 + $0xf8] sm:$0xf]
    %v778 = vld [vmem:[#allocation4 + $0xfc] sm:$0xff]
    %v779 = vld [vmem:[#allocation4 + $0x104] sm:$0xff]
    %v780 = vld [vmem:[#allocation4 + $0x10c] sm:$0xff]
    %v781 = vld [vmem:[#allocation4 + $0x114] sm:$0xff]
    %v782 = vld [vmem:[#allocation4 + $0x11c] sm:$0xf]
    %v783 = vld [vmem:[#allocation4 + $0x120] sm:$0xff]
    %v784 = vld [vmem:[#allocation4 + $0x128] sm:$0xff]
    %v785 = vld [vmem:[#allocation4 + $0x130] sm:$0xff]
    %v786 = vld [vmem:[#allocation4 + $0x138] sm:$0xff]
    %v787 = vld [vmem:[#allocation4 + $0x140] sm:$0xf]
    %v788 = vld [vmem:[#allocation4 + $0x144] sm:$0xff]
    %v789 = vld [vmem:[#allocation4 + $0x14c] sm:$0xff]
    %v790 = vld [vmem:[#allocation4 + $0x154] sm:$0xff]
    %v791 = vld [vmem:[#allocation4 + $0x15c] sm:$0xff]
    %v792 = vld [vmem:[#allocation4 + $0x164] sm:$0xf]
    %v793 = vld [vmem:[#allocation4 + $0x168] sm:$0xff]
    %v794 = vld [vmem:[#allocation4 + $0x170] sm:$0xff]
    %v795 = vld [vmem:[#allocation4 + $0x178] sm:$0xff]
    %v796 = vld [vmem:[#allocation4 + $0x180] sm:$0xff]
    %v797 = vld [vmem:[#allocation4 + $0x188] sm:$0xf]
    %v798 = vld [vmem:[#allocation4 + $0x18c] sm:$0xff]
    %v799 = vld [vmem:[#allocation4 + $0x194] sm:$0xff]
    %v800 = vld [vmem:[#allocation4 + $0x19c] sm:$0xff]
    %v801 = vld [vmem:[#allocation4 + $0x1a4] sm:$0xff]
    %v802 = vld [vmem:[#allocation4 + $0x1ac] sm:$0xf]
    %v803 = vld [vmem:[#allocation4 + $0x1b0] sm:$0xff]
    %v804 = vld [vmem:[#allocation4 + $0x1b8] sm:$0xff]
    %v805 = vld [vmem:[#allocation4 + $0x1c0] sm:$0xff]
    %v806 = vld [vmem:[#allocation4 + $0x1c8] sm:$0xff]
    %v807 = vld [vmem:[#allocation4 + $0x1d0] sm:$0xf]
    %v808 = vld [vmem:[#allocation4 + $0x1d4] sm:$0xff]
    %v809 = vld [vmem:[#allocation4 + $0x1dc] sm:$0xff]
    %v810 = vld [vmem:[#allocation4 + $0x1e4] sm:$0xff]
    %v811 = vld [vmem:[#allocation4 + $0x1ec] sm:$0xff]
    %v812 = vld [vmem:[#allocation4 + $0x1f4] sm:$0xf]
    %v813 = vld [vmem:[#allocation4 + $0x1f8] sm:$0xff]
    %v814 = vld [vmem:[#allocation4 + $0x200] sm:$0xff]
    %v815 = vld [vmem:[#allocation4 + $0x208] sm:$0xff]
    %v816 = vld [vmem:[#allocation4 + $0x210] sm:$0xff]
    %v817 = vld [vmem:[#allocation4 + $0x218] sm:$0xf]
    %v818 = vld [vmem:[#allocation4 + $0x21c] sm:$0xff]
    %v819 = vld [vmem:[#allocation4 + $0x224] sm:$0xff]
    %v820 = vld [vmem:[#allocation4 + $0x22c] sm:$0xff]
    %v821 = vld [vmem:[#allocation4 + $0x234] sm:$0xff]
    %v822 = vld [vmem:[#allocation4 + $0x23c] sm:$0xf]
    %v823 = vld [vmem:[#allocation4 + $0x240] sm:$0xff]
    %v824 = vld [vmem:[#allocation4 + $0x248] sm:$0xff]
    %v825 = vld [vmem:[#allocation4 + $0x250] sm:$0xff]
    %v826 = vld [vmem:[#allocation4 + $0x258] sm:$0xff]
    %v827 = vld [vmem:[#allocation4 + $0x260] sm:$0xf]
    %v828 = vld [vmem:[#allocation4 + $0x264] sm:$0xff]
    %v829 = vld [vmem:[#allocation4 + $0x26c] sm:$0xff]
    %v830 = vld [vmem:[#allocation4 + $0x274] sm:$0xff]
    %v831 = vld [vmem:[#allocation4 + $0x27c] sm:$0xff]
    %v832 = vld [vmem:[#allocation4 + $0x284] sm:$0xf]
    %v833 = vld [vmem:[#allocation4 + $0x288] sm:$0xff]
    %v834 = vld [vmem:[#allocation4 + $0x290] sm:$0xff]
    %v835 = vld [vmem:[#allocation4 + $0x298] sm:$0xff]
    %v836 = vld [vmem:[#allocation4 + $0x2a0] sm:$0xff]
    %v837 = vld [vmem:[#allocation4 + $0x2a8] sm:$0xf]
    %v838 = vld [vmem:[#allocation4 + $0x2ac] sm:$0xff]
    %v839 = vld [vmem:[#allocation4 + $0x2b4] sm:$0xff]
    %v840 = vld [vmem:[#allocation4 + $0x2bc] sm:$0xff]
    %v841 = vld [vmem:[#allocation4 + $0x2c4] sm:$0xff]
    %v842 = vld [vmem:[#allocation4 + $0x2cc] sm:$0xf]
    %v843 = vld [vmem:[#allocation4 + $0x2d0] sm:$0xff]
    %v844 = vld [vmem:[#allocation4 + $0x2d8] sm:$0xff]
    %v845 = vld [vmem:[#allocation4 + $0x2e0] sm:$0xff]
    %v846 = vld [vmem:[#allocation4 + $0x2e8] sm:$0xff]
    %v847 = vld [vmem:[#allocation4 + $0x2f0] sm:$0xf]
    %v848 = vld [vmem:[#allocation4 + $0x2f4] sm:$0xff]
    %v849 = vld [vmem:[#allocation4 + $0x2fc] sm:$0xff]
    %v850 = vld [vmem:[#allocation4 + $0x304] sm:$0xff]
    %v851 = vld [vmem:[#allocation4 + $0x30c] sm:$0xff]
    %v852 = vld [vmem:[#allocation4 + $0x314] sm:$0xf]
    %v853 = vld [vmem:[#allocation4 + $0x318] sm:$0xff]
    %v854 = vld [vmem:[#allocation4 + $0x320] sm:$0xff]
    %v855 = vld [vmem:[#allocation4 + $0x328] sm:$0xff]
    %v856 = vld [vmem:[#allocation4 + $0x330] sm:$0xff]
    %v857 = vld [vmem:[#allocation4 + $0x338] sm:$0xf]
    %v858 = vld [vmem:[#allocation4 + $0x33c] sm:$0xff]
    %v859 = vld [vmem:[#allocation4 + $0x344] sm:$0xff]
    %v860 = vld [vmem:[#allocation4 + $0x34c] sm:$0xff]
    %v861 = vld [vmem:[#allocation4 + $0x354] sm:$0xff]
    %v862 = vld [vmem:[#allocation4 + $0x35c] sm:$0xf]
    %v863 = vld [vmem:[#allocation4 + $0x360] sm:$0xff]
    %v864 = vld [vmem:[#allocation4 + $0x368] sm:$0xff]
    %v865 = vld [vmem:[#allocation4 + $0x370] sm:$0xff]
    %v866 = vld [vmem:[#allocation4 + $0x378] sm:$0xff]
    %v867 = vld [vmem:[#allocation4 + $0x380] sm:$0xf]
    %v868 = vld [vmem:[#allocation4 + $0x384] sm:$0xff]
    %v869 = vld [vmem:[#allocation4 + $0x38c] sm:$0xff]
    %v870 = vld [vmem:[#allocation4 + $0x394] sm:$0xff]
    %v871 = vld [vmem:[#allocation4 + $0x39c] sm:$0xff]
    %v872 = vld [vmem:[#allocation4 + $0x3a4] sm:$0xf]
    %v873 = vld [vmem:[#allocation4 + $0x3a8] sm:$0xff]
    %v874 = vld [vmem:[#allocation4 + $0x3b0] sm:$0xff]
    %v875 = vld [vmem:[#allocation4 + $0x3b8] sm:$0xff]
    %v876 = vld [vmem:[#allocation4 + $0x3c0] sm:$0xff]
    %v877 = vld [vmem:[#allocation4 + $0x3c8] sm:$0xf]
    %v878 = vld [vmem:[#allocation4 + $0x3cc] sm:$0xff]
    %v879 = vld [vmem:[#allocation4 + $0x3d4] sm:$0xff]
    %v880 = vld [vmem:[#allocation4 + $0x3dc] sm:$0xff]
    %v881 = vld [vmem:[#allocation4 + $0x3e4] sm:$0xff]
    %v882 = vld [vmem:[#allocation4 + $0x3ec] sm:$0xf]
    %v883 = vld [vmem:[#allocation4 + $0x3f0] sm:$0xff]
    %v884 = vld [vmem:[#allocation4 + $0x3f8] sm:$0xff]
    %v885 = vld [vmem:[#allocation4 + $0x400] sm:$0xff]
    %v886 = vld [vmem:[#allocation4 + $0x408] sm:$0xff]
    %v887 = vld [vmem:[#allocation4 + $0x410] sm:$0xf]
    %v888 = vld [vmem:[#allocation4 + $0x414] sm:$0xff]
    %v889 = vld [vmem:[#allocation4 + $0x41c] sm:$0xff]
    %v890 = vld [vmem:[#allocation4 + $0x424] sm:$0xff]
    %v891 = vld [vmem:[#allocation4 + $0x42c] sm:$0xff]
    %v892 = vld [vmem:[#allocation4 + $0x434] sm:$0xf]
    %v893 = vld [vmem:[#allocation4 + $0x438] sm:$0xff]
    %v894 = vld [vmem:[#allocation4 + $0x440] sm:$0xff]
    %v895 = vld [vmem:[#allocation4 + $0x448] sm:$0xff]
    %v896 = vld [vmem:[#allocation4 + $0x450] sm:$0xff]
    %v897 = vld [vmem:[#allocation4 + $0x458] sm:$0xf]
    %v898 = vld [vmem:[#allocation4 + $0x45c] sm:$0xff]
    %v899 = vld [vmem:[#allocation4 + $0x464] sm:$0xff]
    %v900 = vld [vmem:[#allocation4 + $0x46c] sm:$0xff]
    %v901 = vld [vmem:[#allocation4 + $0x474] sm:$0xff]
    %v902 = vld [vmem:[#allocation4 + $0x47c] sm:$0xf]
    %v903 = vld [vmem:[#allocation4 + $0x480] sm:$0xff]
    %v904 = vld [vmem:[#allocation4 + $0x488] sm:$0xff]
    %v905 = vld [vmem:[#allocation4 + $0x490] sm:$0xff]
    %v906 = vld [vmem:[#allocation4 + $0x498] sm:$0xff]
    %v907 = vld [vmem:[#allocation4 + $0x4a0] sm:$0xf]
    %v908 = vld [vmem:[#allocation4 + $0x4a4] sm:$0xff]
    %v909 = vld [vmem:[#allocation4 + $0x4ac] sm:$0xff]
    %v910 = vld [vmem:[#allocation4 + $0x4b4] sm:$0xff]
    %v911 = vld [vmem:[#allocation4 + $0x4bc] sm:$0xff]
    %v912 = vld [vmem:[#allocation4 + $0x4c4] sm:$0xf]
    %v913 = vld [vmem:[#allocation4 + $0x4c8] sm:$0xff]
    %v914 = vld [vmem:[#allocation4 + $0x4d0] sm:$0xff]
    %v915 = vld [vmem:[#allocation4 + $0x4d8] sm:$0xff]
    %v916 = vld [vmem:[#allocation4 + $0x4e0] sm:$0xff]
    %v917 = vld [vmem:[#allocation4 + $0x4e8] sm:$0xf]
    %v918 = vld [vmem:[#allocation4 + $0x4ec] sm:$0xff]
    %v919 = vld [vmem:[#allocation4 + $0x4f4] sm:$0xff]
    %v920 = vld [vmem:[#allocation4 + $0x4fc] sm:$0xff]
    %v921 = vld [vmem:[#allocation4 + $0x504] sm:$0xff]
    %v922 = vld [vmem:[#allocation4 + $0x50c] sm:$0xf]
    %v923 = vld [vmem:[#allocation4 + $0x510] sm:$0xff]
    %v924 = vld [vmem:[#allocation4 + $0x518] sm:$0xff]
    %v925 = vld [vmem:[#allocation4 + $0x520] sm:$0xff]
    %v926 = vld [vmem:[#allocation4 + $0x528] sm:$0xff]
    %v927 = vld [vmem:[#allocation4 + $0x530] sm:$0xf]
    %v928 = vld [vmem:[#allocation4 + $0x534] sm:$0xff]
    %v929 = vld [vmem:[#allocation4 + $0x53c] sm:$0xff]
    %v930 = vld [vmem:[#allocation4 + $0x544] sm:$0xff]
    %v931 = vld [vmem:[#allocation4 + $0x54c] sm:$0xff]
    %v932 = vld [vmem:[#allocation4 + $0x554] sm:$0xf]
    %v933 = vld [vmem:[#allocation4 + $0x558] sm:$0xff]
    %v934 = vld [vmem:[#allocation4 + $0x560] sm:$0xff]
    %v935 = vld [vmem:[#allocation4 + $0x568] sm:$0xff]
    %v936 = vld [vmem:[#allocation4 + $0x570] sm:$0xff]
    %v937 = vld [vmem:[#allocation4 + $0x578] sm:$0xf]
    %v938 = vld [vmem:[#allocation4 + $0x57c] sm:$0xff]
    %v939 = vld [vmem:[#allocation4 + $0x584] sm:$0xff]
    %v940 = vld [vmem:[#allocation4 + $0x58c] sm:$0xff]
    %v941 = vld [vmem:[#allocation4 + $0x594] sm:$0xff]
    %v942 = vld [vmem:[#allocation4 + $0x59c] sm:$0xf]
    %v943 = vld [vmem:[#allocation4 + $0x5a0] sm:$0xff]
    %v944 = vld [vmem:[#allocation4 + $0x5a8] sm:$0xff]
    %v945 = vld [vmem:[#allocation4 + $0x5b0] sm:$0xff]
    %v946 = vld [vmem:[#allocation4 + $0x5b8] sm:$0xff]
    %v947 = vld [vmem:[#allocation4 + $0x5c0] sm:$0xf]
    %v948 = vld [vmem:[#allocation4 + $0x5c4] sm:$0xff]
    %v949 = vld [vmem:[#allocation4 + $0x5cc] sm:$0xff]
    %v950 = vld [vmem:[#allocation4 + $0x5d4] sm:$0xff]
    %v951 = vld [vmem:[#allocation4 + $0x5dc] sm:$0xff]
    %v952 = vld [vmem:[#allocation4 + $0x5e4] sm:$0xf]
    %v953 = vld [vmem:[#allocation4 + $0x5e8] sm:$0xff]
    %v954 = vld [vmem:[#allocation4 + $0x5f0] sm:$0xff]
    %v955 = vld [vmem:[#allocation4 + $0x5f8] sm:$0xff]
    %v956 = vld [vmem:[#allocation4 + $0x600] sm:$0xff]
    %v957 = vld [vmem:[#allocation4 + $0x608] sm:$0xf]
    %v958 = vld [vmem:[#allocation4 + $0x60c] sm:$0xff]
    %v959 = vld [vmem:[#allocation4 + $0x614] sm:$0xff]
    %v960 = vld [vmem:[#allocation4 + $0x61c] sm:$0xff]
    %v961 = vld [vmem:[#allocation4 + $0x624] sm:$0xff]
    %v962 = vld [vmem:[#allocation4 + $0x62c] sm:$0xf]
    %v963 = vld [vmem:[#allocation4 + $0x630] sm:$0xff]
    %v964 = vld [vmem:[#allocation4 + $0x638] sm:$0xff]
    %v965 = vld [vmem:[#allocation4 + $0x640] sm:$0xff]
    %v966 = vld [vmem:[#allocation4 + $0x648] sm:$0xff]
    %v967 = vld [vmem:[#allocation4 + $0x650] sm:$0xf]
    %v968 = vld [vmem:[#allocation4 + $0x654] sm:$0xff]
    %v969 = vld [vmem:[#allocation4 + $0x65c] sm:$0xff]
    %v970 = vld [vmem:[#allocation4 + $0x664] sm:$0xff]
    %v971 = vld [vmem:[#allocation4 + $0x66c] sm:$0xff]
    %v972 = vld [vmem:[#allocation4 + $0x674] sm:$0xf]
    %v973 = vld [vmem:[#allocation4 + $0x678] sm:$0xff]
    %v974 = vld [vmem:[#allocation4 + $0x680] sm:$0xff]
    %v975 = vld [vmem:[#allocation4 + $0x688] sm:$0xff]
    %v976 = vld [vmem:[#allocation4 + $0x690] sm:$0xff]
    %v977 = vld [vmem:[#allocation4 + $0x698] sm:$0xf]
    %v978 = vld [vmem:[#allocation4 + $0x69c] sm:$0xff]
    %v979 = vld [vmem:[#allocation4 + $0x6a4] sm:$0xff]
    %v980 = vld [vmem:[#allocation4 + $0x6ac] sm:$0xff]
    %v981 = vld [vmem:[#allocation4 + $0x6b4] sm:$0xff]
    %v982 = vld [vmem:[#allocation4 + $0x6bc] sm:$0xf]
    %v983 = vpack.c.bf16 %v722, %v719
    %v984 = vpack.c.bf16 %v723, %v720
    %v985 = vpack.c.bf16 %v724, %v721
    %v986 = vpack.c.bf16 %v728, %v725
    %v987 = vpack.c.bf16 %v729, %v726
    %v988 = vpack.c.bf16 %v730, %v727
    %v989 = vpack.c.bf16 %v734, %v731
    %v990 = vpack.c.bf16 %v735, %v732
    %v991 = vpack.c.bf16 %v736, %v733
    %v992 = vpack.c.bf16 %v740, %v737
    %v993 = vpack.c.bf16 %v741, %v738
    %v994 = vpack.c.bf16 %v742, %v739
    %v995 = vld [vmem:[#allocation7] sm:$0xff]
    %v996 = vld [vmem:[#allocation7 + $0x8] sm:$0xff]
    %v997 = vld [vmem:[#allocation7 + $0x10] sm:$0xff]
    %v998 = vld [vmem:[#allocation7 + $0x18] sm:$0xff]
    %v999 = vld [vmem:[#allocation7 + $0x20] sm:$0xf]
    %v1000 = vld [vmem:[#allocation7 + $0x24] sm:$0xff]
    %v1001 = vld [vmem:[#allocation7 + $0x2c] sm:$0xff]
    %v1002 = vld [vmem:[#allocation7 + $0x34] sm:$0xff]
    %v1003 = vld [vmem:[#allocation7 + $0x3c] sm:$0xff]
    %v1004 = vld [vmem:[#allocation7 + $0x44] sm:$0xf]
    %v1005 = vld [vmem:[#allocation7 + $0x48] sm:$0xff]
    %v1006 = vld [vmem:[#allocation7 + $0x50] sm:$0xff]
    %v1007 = vld [vmem:[#allocation7 + $0x58] sm:$0xff]
    %v1008 = vld [vmem:[#allocation7 + $0x60] sm:$0xff]
    %v1009 = vld [vmem:[#allocation7 + $0x68] sm:$0xf]
    %v1010 = vld [vmem:[#allocation7 + $0x6c] sm:$0xff]
    %v1011 = vld [vmem:[#allocation7 + $0x74] sm:$0xff]
    %v1012 = vld [vmem:[#allocation7 + $0x7c] sm:$0xff]
    %v1013 = vld [vmem:[#allocation7 + $0x84] sm:$0xff]
    %v1014 = vld [vmem:[#allocation7 + $0x8c] sm:$0xf]
    %v1015 = vld [vmem:[#allocation7 + $0x90] sm:$0xff]
    %v1016 = vld [vmem:[#allocation7 + $0x98] sm:$0xff]
    %v1017 = vld [vmem:[#allocation7 + $0xa0] sm:$0xff]
    %v1018 = vld [vmem:[#allocation7 + $0xa8] sm:$0xff]
    %v1019 = vld [vmem:[#allocation7 + $0xb0] sm:$0xf]
    %v1020 = vld [vmem:[#allocation7 + $0xb4] sm:$0xff]
    %v1021 = vld [vmem:[#allocation7 + $0xbc] sm:$0xff]
    %v1022 = vld [vmem:[#allocation7 + $0xc4] sm:$0xff]
    %v1023 = vld [vmem:[#allocation7 + $0xcc] sm:$0xff]
    %v1024 = vld [vmem:[#allocation7 + $0xd4] sm:$0xf]
    %v1025 = vld [vmem:[#allocation7 + $0xd8] sm:$0xff]
    %v1026 = vld [vmem:[#allocation7 + $0xe0] sm:$0xff]
    %v1027 = vld [vmem:[#allocation7 + $0xe8] sm:$0xff]
    %v1028 = vld [vmem:[#allocation7 + $0xf0] sm:$0xff]
    %v1029 = vld [vmem:[#allocation7 + $0xf8] sm:$0xf]
    %v1030 = vld [vmem:[#allocation7 + $0xfc] sm:$0xff]
    %v1031 = vld [vmem:[#allocation7 + $0x104] sm:$0xff]
    %v1032 = vld [vmem:[#allocation7 + $0x10c] sm:$0xff]
    %v1033 = vld [vmem:[#allocation7 + $0x114] sm:$0xff]
    %v1034 = vld [vmem:[#allocation7 + $0x11c] sm:$0xf]
    %v1035 = vld [vmem:[#allocation7 + $0x120] sm:$0xff]
    %v1036 = vld [vmem:[#allocation7 + $0x128] sm:$0xff]
    %v1037 = vld [vmem:[#allocation7 + $0x130] sm:$0xff]
    %v1038 = vld [vmem:[#allocation7 + $0x138] sm:$0xff]
    %v1039 = vld [vmem:[#allocation7 + $0x140] sm:$0xf]
    %v1040 = vld [vmem:[#allocation7 + $0x144] sm:$0xff]
    %v1041 = vld [vmem:[#allocation7 + $0x14c] sm:$0xff]
    %v1042 = vld [vmem:[#allocation7 + $0x154] sm:$0xff]
    %v1043 = vld [vmem:[#allocation7 + $0x15c] sm:$0xff]
    %v1044 = vld [vmem:[#allocation7 + $0x164] sm:$0xf]
    %v1045 = vld [vmem:[#allocation7 + $0x168] sm:$0xff]
    %v1046 = vld [vmem:[#allocation7 + $0x170] sm:$0xff]
    %v1047 = vld [vmem:[#allocation7 + $0x178] sm:$0xff]
    %v1048 = vld [vmem:[#allocation7 + $0x180] sm:$0xff]
    %v1049 = vld [vmem:[#allocation7 + $0x188] sm:$0xf]
    %v1050 = vld [vmem:[#allocation7 + $0x18c] sm:$0xff]
    %v1051 = vld [vmem:[#allocation7 + $0x194] sm:$0xff]
    %v1052 = vld [vmem:[#allocation7 + $0x19c] sm:$0xff]
    %v1053 = vld [vmem:[#allocation7 + $0x1a4] sm:$0xff]
    %v1054 = vld [vmem:[#allocation7 + $0x1ac] sm:$0xf]
    %v1055 = vld [vmem:[#allocation7 + $0x1b0] sm:$0xff]
    %v1056 = vld [vmem:[#allocation7 + $0x1b8] sm:$0xff]
    %v1057 = vld [vmem:[#allocation7 + $0x1c0] sm:$0xff]
    %v1058 = vld [vmem:[#allocation7 + $0x1c8] sm:$0xff]
    %v1059 = vld [vmem:[#allocation7 + $0x1d0] sm:$0xf]
    %v1060 = vld [vmem:[#allocation7 + $0x1d4] sm:$0xff]
    %v1061 = vld [vmem:[#allocation7 + $0x1dc] sm:$0xff]
    %v1062 = vld [vmem:[#allocation7 + $0x1e4] sm:$0xff]
    %v1063 = vld [vmem:[#allocation7 + $0x1ec] sm:$0xff]
    %v1064 = vld [vmem:[#allocation7 + $0x1f4] sm:$0xf]
    %v1065 = vld [vmem:[#allocation7 + $0x1f8] sm:$0xff]
    %v1066 = vld [vmem:[#allocation7 + $0x200] sm:$0xff]
    %v1067 = vld [vmem:[#allocation7 + $0x208] sm:$0xff]
    %v1068 = vld [vmem:[#allocation7 + $0x210] sm:$0xff]
    %v1069 = vld [vmem:[#allocation7 + $0x218] sm:$0xf]
    %v1070 = vld [vmem:[#allocation7 + $0x21c] sm:$0xff]
    %v1071 = vld [vmem:[#allocation7 + $0x224] sm:$0xff]
    %v1072 = vld [vmem:[#allocation7 + $0x22c] sm:$0xff]
    %v1073 = vld [vmem:[#allocation7 + $0x234] sm:$0xff]
    %v1074 = vld [vmem:[#allocation7 + $0x23c] sm:$0xf]
    %v1075 = vld [vmem:[#allocation7 + $0x240] sm:$0xff]
    %v1076 = vld [vmem:[#allocation7 + $0x248] sm:$0xff]
    %v1077 = vld [vmem:[#allocation7 + $0x250] sm:$0xff]
    %v1078 = vld [vmem:[#allocation7 + $0x258] sm:$0xff]
    %v1079 = vld [vmem:[#allocation7 + $0x260] sm:$0xf]
    %v1080 = vld [vmem:[#allocation7 + $0x264] sm:$0xff]
    %v1081 = vld [vmem:[#allocation7 + $0x26c] sm:$0xff]
    %v1082 = vld [vmem:[#allocation7 + $0x274] sm:$0xff]
    %v1083 = vld [vmem:[#allocation7 + $0x27c] sm:$0xff]
    %v1084 = vld [vmem:[#allocation7 + $0x284] sm:$0xf]
    %v1085 = vld [vmem:[#allocation7 + $0x288] sm:$0xff]
    %v1086 = vld [vmem:[#allocation7 + $0x290] sm:$0xff]
    %v1087 = vld [vmem:[#allocation7 + $0x298] sm:$0xff]
    %v1088 = vld [vmem:[#allocation7 + $0x2a0] sm:$0xff]
    %v1089 = vld [vmem:[#allocation7 + $0x2a8] sm:$0xf]
    %v1090 = vld [vmem:[#allocation7 + $0x2ac] sm:$0xff]
    %v1091 = vld [vmem:[#allocation7 + $0x2b4] sm:$0xff]
    %v1092 = vld [vmem:[#allocation7 + $0x2bc] sm:$0xff]
    %v1093 = vld [vmem:[#allocation7 + $0x2c4] sm:$0xff]
    %v1094 = vld [vmem:[#allocation7 + $0x2cc] sm:$0xf]
    %v1095 = vld [vmem:[#allocation7 + $0x2d0] sm:$0xff]
    %v1096 = vld [vmem:[#allocation7 + $0x2d8] sm:$0xff]
    %v1097 = vld [vmem:[#allocation7 + $0x2e0] sm:$0xff]
    %v1098 = vld [vmem:[#allocation7 + $0x2e8] sm:$0xff]
    %v1099 = vld [vmem:[#allocation7 + $0x2f0] sm:$0xf]
    %v1100 = vld [vmem:[#allocation7 + $0x2f4] sm:$0xff]
    %v1101 = vld [vmem:[#allocation7 + $0x2fc] sm:$0xff]
    %v1102 = vld [vmem:[#allocation7 + $0x304] sm:$0xff]
    %v1103 = vld [vmem:[#allocation7 + $0x30c] sm:$0xff]
    %v1104 = vld [vmem:[#allocation7 + $0x314] sm:$0xf]
    %v1105 = vld [vmem:[#allocation7 + $0x318] sm:$0xff]
    %v1106 = vld [vmem:[#allocation7 + $0x320] sm:$0xff]
    %v1107 = vld [vmem:[#allocation7 + $0x328] sm:$0xff]
    %v1108 = vld [vmem:[#allocation7 + $0x330] sm:$0xff]
    %v1109 = vld [vmem:[#allocation7 + $0x338] sm:$0xf]
    %v1110 = vld [vmem:[#allocation7 + $0x33c] sm:$0xff]
    %v1111 = vld [vmem:[#allocation7 + $0x344] sm:$0xff]
    %v1112 = vld [vmem:[#allocation7 + $0x34c] sm:$0xff]
    %v1113 = vld [vmem:[#allocation7 + $0x354] sm:$0xff]
    %v1114 = vld [vmem:[#allocation7 + $0x35c] sm:$0xf]
    %v1115 = vld [vmem:[#allocation7 + $0x360] sm:$0xff]
    %v1116 = vld [vmem:[#allocation7 + $0x368] sm:$0xff]
    %v1117 = vld [vmem:[#allocation7 + $0x370] sm:$0xff]
    %v1118 = vld [vmem:[#allocation7 + $0x378] sm:$0xff]
    %v1119 = vld [vmem:[#allocation7 + $0x380] sm:$0xf]
    %v1120 = vld [vmem:[#allocation7 + $0x384] sm:$0xff]
    %v1121 = vld [vmem:[#allocation7 + $0x38c] sm:$0xff]
    %v1122 = vld [vmem:[#allocation7 + $0x394] sm:$0xff]
    %v1123 = vld [vmem:[#allocation7 + $0x39c] sm:$0xff]
    %v1124 = vld [vmem:[#allocation7 + $0x3a4] sm:$0xf]
    %v1125 = vld [vmem:[#allocation7 + $0x3a8] sm:$0xff]
    %v1126 = vld [vmem:[#allocation7 + $0x3b0] sm:$0xff]
    %v1127 = vld [vmem:[#allocation7 + $0x3b8] sm:$0xff]
    %v1128 = vld [vmem:[#allocation7 + $0x3c0] sm:$0xff]
    %v1129 = vld [vmem:[#allocation7 + $0x3c8] sm:$0xf]
    %v1130 = vld [vmem:[#allocation7 + $0x3cc] sm:$0xff]
    %v1131 = vld [vmem:[#allocation7 + $0x3d4] sm:$0xff]
    %v1132 = vld [vmem:[#allocation7 + $0x3dc] sm:$0xff]
    %v1133 = vld [vmem:[#allocation7 + $0x3e4] sm:$0xff]
    %v1134 = vld [vmem:[#allocation7 + $0x3ec] sm:$0xf]
    %v1135 = vld [vmem:[#allocation7 + $0x3f0] sm:$0xff]
    %v1136 = vld [vmem:[#allocation7 + $0x3f8] sm:$0xff]
    %v1137 = vld [vmem:[#allocation7 + $0x400] sm:$0xff]
    %v1138 = vld [vmem:[#allocation7 + $0x408] sm:$0xff]
    %v1139 = vld [vmem:[#allocation7 + $0x410] sm:$0xf]
    %v1140 = vld [vmem:[#allocation7 + $0x414] sm:$0xff]
    %v1141 = vld [vmem:[#allocation7 + $0x41c] sm:$0xff]
    %v1142 = vld [vmem:[#allocation7 + $0x424] sm:$0xff]
    %v1143 = vld [vmem:[#allocation7 + $0x42c] sm:$0xff]
    %v1144 = vld [vmem:[#allocation7 + $0x434] sm:$0xf]
    %v1145 = vld [vmem:[#allocation7 + $0x438] sm:$0xff]
    %v1146 = vld [vmem:[#allocation7 + $0x440] sm:$0xff]
    %v1147 = vld [vmem:[#allocation7 + $0x448] sm:$0xff]
    %v1148 = vld [vmem:[#allocation7 + $0x450] sm:$0xff]
    %v1149 = vld [vmem:[#allocation7 + $0x458] sm:$0xf]
    %v1150 = vld [vmem:[#allocation7 + $0x45c] sm:$0xff]
    %v1151 = vld [vmem:[#allocation7 + $0x464] sm:$0xff]
    %v1152 = vld [vmem:[#allocation7 + $0x46c] sm:$0xff]
    %v1153 = vld [vmem:[#allocation7 + $0x474] sm:$0xff]
    %v1154 = vld [vmem:[#allocation7 + $0x47c] sm:$0xf]
    %v1155 = vld [vmem:[#allocation7 + $0x480] sm:$0xff]
    %v1156 = vld [vmem:[#allocation7 + $0x488] sm:$0xff]
    %v1157 = vld [vmem:[#allocation7 + $0x490] sm:$0xff]
    %v1158 = vld [vmem:[#allocation7 + $0x498] sm:$0xff]
    %v1159 = vld [vmem:[#allocation7 + $0x4a0] sm:$0xf]
    %v1160 = vld [vmem:[#allocation7 + $0x4a4] sm:$0xff]
    %v1161 = vld [vmem:[#allocation7 + $0x4ac] sm:$0xff]
    %v1162 = vld [vmem:[#allocation7 + $0x4b4] sm:$0xff]
    %v1163 = vld [vmem:[#allocation7 + $0x4bc] sm:$0xff]
    %v1164 = vld [vmem:[#allocation7 + $0x4c4] sm:$0xf]
    %v1165 = vld [vmem:[#allocation7 + $0x4c8] sm:$0xff]
    %v1166 = vld [vmem:[#allocation7 + $0x4d0] sm:$0xff]
    %v1167 = vld [vmem:[#allocation7 + $0x4d8] sm:$0xff]
    %v1168 = vld [vmem:[#allocation7 + $0x4e0] sm:$0xff]
    %v1169 = vld [vmem:[#allocation7 + $0x4e8] sm:$0xf]
    %v1170 = vld [vmem:[#allocation7 + $0x4ec] sm:$0xff]
    %v1171 = vld [vmem:[#allocation7 + $0x4f4] sm:$0xff]
    %v1172 = vld [vmem:[#allocation7 + $0x4fc] sm:$0xff]
    %v1173 = vld [vmem:[#allocation7 + $0x504] sm:$0xff]
    %v1174 = vld [vmem:[#allocation7 + $0x50c] sm:$0xf]
    %v1175 = vld [vmem:[#allocation7 + $0x510] sm:$0xff]
    %v1176 = vld [vmem:[#allocation7 + $0x518] sm:$0xff]
    %v1177 = vld [vmem:[#allocation7 + $0x520] sm:$0xff]
    %v1178 = vld [vmem:[#allocation7 + $0x528] sm:$0xff]
    %v1179 = vld [vmem:[#allocation7 + $0x530] sm:$0xf]
    %v1180 = vld [vmem:[#allocation7 + $0x534] sm:$0xff]
    %v1181 = vld [vmem:[#allocation7 + $0x53c] sm:$0xff]
    %v1182 = vld [vmem:[#allocation7 + $0x544] sm:$0xff]
    %v1183 = vld [vmem:[#allocation7 + $0x54c] sm:$0xff]
    %v1184 = vld [vmem:[#allocation7 + $0x554] sm:$0xf]
    %v1185 = vld [vmem:[#allocation7 + $0x558] sm:$0xff]
    %v1186 = vld [vmem:[#allocation7 + $0x560] sm:$0xff]
    %v1187 = vld [vmem:[#allocation7 + $0x568] sm:$0xff]
    %v1188 = vld [vmem:[#allocation7 + $0x570] sm:$0xff]
    %v1189 = vld [vmem:[#allocation7 + $0x578] sm:$0xf]
    %v1190 = vld [vmem:[#allocation7 + $0x57c] sm:$0xff]
    %v1191 = vld [vmem:[#allocation7 + $0x584] sm:$0xff]
    %v1192 = vld [vmem:[#allocation7 + $0x58c] sm:$0xff]
    %v1193 = vld [vmem:[#allocation7 + $0x594] sm:$0xff]
    %v1194 = vld [vmem:[#allocation7 + $0x59c] sm:$0xf]
    %v1195 = vld [vmem:[#allocation7 + $0x5a0] sm:$0xff]
    %v1196 = vld [vmem:[#allocation7 + $0x5a8] sm:$0xff]
    %v1197 = vld [vmem:[#allocation7 + $0x5b0] sm:$0xff]
    %v1198 = vld [vmem:[#allocation7 + $0x5b8] sm:$0xff]
    %v1199 = vld [vmem:[#allocation7 + $0x5c0] sm:$0xf]
    %v1200 = vld [vmem:[#allocation7 + $0x5c4] sm:$0xff]
    %v1201 = vld [vmem:[#allocation7 + $0x5cc] sm:$0xff]
    %v1202 = vld [vmem:[#allocation7 + $0x5d4] sm:$0xff]
    %v1203 = vld [vmem:[#allocation7 + $0x5dc] sm:$0xff]
    %v1204 = vld [vmem:[#allocation7 + $0x5e4] sm:$0xf]
    %v1205 = vld [vmem:[#allocation7 + $0x5e8] sm:$0xff]
    %v1206 = vld [vmem:[#allocation7 + $0x5f0] sm:$0xff]
    %v1207 = vld [vmem:[#allocation7 + $0x5f8] sm:$0xff]
    %v1208 = vld [vmem:[#allocation7 + $0x600] sm:$0xff]
    %v1209 = vld [vmem:[#allocation7 + $0x608] sm:$0xf]
    %v1210 = vld [vmem:[#allocation7 + $0x60c] sm:$0xff]
    %v1211 = vld [vmem:[#allocation7 + $0x614] sm:$0xff]
    %v1212 = vld [vmem:[#allocation7 + $0x61c] sm:$0xff]
    %v1213 = vld [vmem:[#allocation7 + $0x624] sm:$0xff]
    %v1214 = vld [vmem:[#allocation7 + $0x62c] sm:$0xf]
    %v1215 = vld [vmem:[#allocation7 + $0x630] sm:$0xff]
    %v1216 = vld [vmem:[#allocation7 + $0x638] sm:$0xff]
    %v1217 = vld [vmem:[#allocation7 + $0x640] sm:$0xff]
    %v1218 = vld [vmem:[#allocation7 + $0x648] sm:$0xff]
    %v1219 = vld [vmem:[#allocation7 + $0x650] sm:$0xf]
    %v1220 = vld [vmem:[#allocation7 + $0x654] sm:$0xff]
    %v1221 = vld [vmem:[#allocation7 + $0x65c] sm:$0xff]
    %v1222 = vld [vmem:[#allocation7 + $0x664] sm:$0xff]
    %v1223 = vld [vmem:[#allocation7 + $0x66c] sm:$0xff]
    %v1224 = vld [vmem:[#allocation7 + $0x674] sm:$0xf]
    %v1225 = vld [vmem:[#allocation7 + $0x678] sm:$0xff]
    %v1226 = vld [vmem:[#allocation7 + $0x680] sm:$0xff]
    %v1227 = vld [vmem:[#allocation7 + $0x688] sm:$0xff]
    %v1228 = vld [vmem:[#allocation7 + $0x690] sm:$0xff]
    %v1229 = vld [vmem:[#allocation7 + $0x698] sm:$0xf]
    %v1230 = vld [vmem:[#allocation7 + $0x69c] sm:$0xff]
    %v1231 = vld [vmem:[#allocation7 + $0x6a4] sm:$0xff]
    %v1232 = vld [vmem:[#allocation7 + $0x6ac] sm:$0xff]
    %v1233 = vld [vmem:[#allocation7 + $0x6b4] sm:$0xff]
    %v1234 = vld [vmem:[#allocation7 + $0x6bc] sm:$0xf]
    %v1475 = vunpack.c.l.b16 %v995
    %v1476 = vunpack.c.h.b16 %v995
    %v1477 = vunpack.c.l.b16 %v996
    %v1478 = vunpack.c.h.b16 %v996
    %v1479 = vunpack.c.l.b16 %v997
    %v1480 = vunpack.c.h.b16 %v997
    %v1481 = vunpack.c.l.b16 %v998
    %v1482 = vunpack.c.h.b16 %v998
    %v1483 = vunpack.c.l.b16 %v999
    %v1484 = vunpack.c.l.b16 %v1000
    %v1485 = vunpack.c.h.b16 %v1000
    %v1486 = vunpack.c.l.b16 %v1001
    %v1487 = vunpack.c.h.b16 %v1001
    %v1488 = vunpack.c.l.b16 %v1002
    %v1489 = vunpack.c.h.b16 %v1002
    %v1490 = vunpack.c.l.b16 %v1003
    %v1491 = vunpack.c.h.b16 %v1003
    %v1492 = vunpack.c.l.b16 %v1004
    %v1493 = vunpack.c.l.b16 %v1005
    %v1494 = vunpack.c.h.b16 %v1005
    %v1495 = vunpack.c.l.b16 %v1006
    %v1496 = vunpack.c.h.b16 %v1006
    %v1497 = vunpack.c.l.b16 %v1007
    %v1498 = vunpack.c.h.b16 %v1007
    %v1499 = vunpack.c.l.b16 %v1008
    %v1500 = vunpack.c.h.b16 %v1008
    %v1501 = vunpack.c.l.b16 %v1009
    %v1502 = vunpack.c.l.b16 %v1010
    %v1503 = vunpack.c.h.b16 %v1010
    %v1504 = vunpack.c.l.b16 %v1011
    %v1505 = vunpack.c.h.b16 %v1011
    %v1506 = vunpack.c.l.b16 %v1012
    %v1507 = vunpack.c.h.b16 %v1012
    %v1508 = vunpack.c.l.b16 %v1013
    %v1509 = vunpack.c.h.b16 %v1013
    %v1510 = vunpack.c.l.b16 %v1014
    %v1511 = vunpack.c.l.b16 %v1015
    %v1512 = vunpack.c.h.b16 %v1015
    %v1513 = vunpack.c.l.b16 %v1016
    %v1514 = vunpack.c.h.b16 %v1016
    %v1515 = vunpack.c.l.b16 %v1017
    %v1516 = vunpack.c.h.b16 %v1017
    %v1517 = vunpack.c.l.b16 %v1018
    %v1518 = vunpack.c.h.b16 %v1018
    %v1519 = vunpack.c.l.b16 %v1019
    %v1520 = vunpack.c.l.b16 %v1020
    %v1521 = vunpack.c.h.b16 %v1020
    %v1522 = vunpack.c.l.b16 %v1021
    %v1523 = vunpack.c.h.b16 %v1021
    %v1524 = vunpack.c.l.b16 %v1022
    %v1525 = vunpack.c.h.b16 %v1022
    %v1526 = vunpack.c.l.b16 %v1023
    %v1527 = vunpack.c.h.b16 %v1023
    %v1528 = vunpack.c.l.b16 %v1024
    %v1529 = vunpack.c.l.b16 %v1025
    %v1530 = vunpack.c.h.b16 %v1025
    %v1531 = vunpack.c.l.b16 %v1026
    %v1532 = vunpack.c.h.b16 %v1026
    %v1533 = vunpack.c.l.b16 %v1027
    %v1534 = vunpack.c.h.b16 %v1027
    %v1535 = vunpack.c.l.b16 %v1028
    %v1536 = vunpack.c.h.b16 %v1028
    %v1537 = vunpack.c.l.b16 %v1029
    %v1538 = vunpack.c.l.b16 %v1030
    %v1539 = vunpack.c.h.b16 %v1030
    %v1540 = vunpack.c.l.b16 %v1031
    %v1541 = vunpack.c.h.b16 %v1031
    %v1542 = vunpack.c.l.b16 %v1032
    %v1543 = vunpack.c.h.b16 %v1032
    %v1544 = vunpack.c.l.b16 %v1033
    %v1545 = vunpack.c.h.b16 %v1033
    %v1546 = vunpack.c.l.b16 %v1034
    %v1547 = vunpack.c.l.b16 %v1035
    %v1548 = vunpack.c.h.b16 %v1035
    %v1549 = vunpack.c.l.b16 %v1036
    %v1550 = vunpack.c.h.b16 %v1036
    %v1551 = vunpack.c.l.b16 %v1037
    %v1552 = vunpack.c.h.b16 %v1037
    %v1553 = vunpack.c.l.b16 %v1038
    %v1554 = vunpack.c.h.b16 %v1038
    %v1555 = vunpack.c.l.b16 %v1039
    %v1556 = vunpack.c.l.b16 %v1040
    %v1557 = vunpack.c.h.b16 %v1040
    %v1558 = vunpack.c.l.b16 %v1041
    %v1559 = vunpack.c.h.b16 %v1041
    %v1560 = vunpack.c.l.b16 %v1042
    %v1561 = vunpack.c.h.b16 %v1042
    %v1562 = vunpack.c.l.b16 %v1043
    %v1563 = vunpack.c.h.b16 %v1043
    %v1564 = vunpack.c.l.b16 %v1044
    %v1565 = vunpack.c.l.b16 %v1045
    %v1566 = vunpack.c.h.b16 %v1045
    %v1567 = vunpack.c.l.b16 %v1046
    %v1568 = vunpack.c.h.b16 %v1046
    %v1569 = vunpack.c.l.b16 %v1047
    %v1570 = vunpack.c.h.b16 %v1047
    %v1571 = vunpack.c.l.b16 %v1048
    %v1572 = vunpack.c.h.b16 %v1048
    %v1573 = vunpack.c.l.b16 %v1049
    %v1574 = vunpack.c.l.b16 %v1050
    %v1575 = vunpack.c.h.b16 %v1050
    %v1576 = vunpack.c.l.b16 %v1051
    %v1577 = vunpack.c.h.b16 %v1051
    %v1578 = vunpack.c.l.b16 %v1052
    %v1579 = vunpack.c.h.b16 %v1052
    %v1580 = vunpack.c.l.b16 %v1053
    %v1581 = vunpack.c.h.b16 %v1053
    %v1582 = vunpack.c.l.b16 %v1054
    %v1583 = vunpack.c.l.b16 %v1055
    %v1584 = vunpack.c.h.b16 %v1055
    %v1585 = vunpack.c.l.b16 %v1056
    %v1586 = vunpack.c.h.b16 %v1056
    %v1587 = vunpack.c.l.b16 %v1057
    %v1588 = vunpack.c.h.b16 %v1057
    %v1589 = vunpack.c.l.b16 %v1058
    %v1590 = vunpack.c.h.b16 %v1058
    %v1591 = vunpack.c.l.b16 %v1059
    %v1592 = vunpack.c.l.b16 %v1060
    %v1593 = vunpack.c.h.b16 %v1060
    %v1594 = vunpack.c.l.b16 %v1061
    %v1595 = vunpack.c.h.b16 %v1061
    %v1596 = vunpack.c.l.b16 %v1062
    %v1597 = vunpack.c.h.b16 %v1062
    %v1598 = vunpack.c.l.b16 %v1063
    %v1599 = vunpack.c.h.b16 %v1063
    %v1600 = vunpack.c.l.b16 %v1064
    %v1601 = vunpack.c.l.b16 %v1065
    %v1602 = vunpack.c.h.b16 %v1065
    %v1603 = vunpack.c.l.b16 %v1066
    %v1604 = vunpack.c.h.b16 %v1066
    %v1605 = vunpack.c.l.b16 %v1067
    %v1606 = vunpack.c.h.b16 %v1067
    %v1607 = vunpack.c.l.b16 %v1068
    %v1608 = vunpack.c.h.b16 %v1068
    %v1609 = vunpack.c.l.b16 %v1069
    %v1610 = vunpack.c.l.b16 %v1070
    %v1611 = vunpack.c.h.b16 %v1070
    %v1612 = vunpack.c.l.b16 %v1071
    %v1613 = vunpack.c.h.b16 %v1071
    %v1614 = vunpack.c.l.b16 %v1072
    %v1615 = vunpack.c.h.b16 %v1072
    %v1616 = vunpack.c.l.b16 %v1073
    %v1617 = vunpack.c.h.b16 %v1073
    %v1618 = vunpack.c.l.b16 %v1074
    %v1619 = vunpack.c.l.b16 %v1075
    %v1620 = vunpack.c.h.b16 %v1075
    %v1621 = vunpack.c.l.b16 %v1076
    %v1622 = vunpack.c.h.b16 %v1076
    %v1623 = vunpack.c.l.b16 %v1077
    %v1624 = vunpack.c.h.b16 %v1077
    %v1625 = vunpack.c.l.b16 %v1078
    %v1626 = vunpack.c.h.b16 %v1078
    %v1627 = vunpack.c.l.b16 %v1079
    %v1628 = vunpack.c.l.b16 %v1080
    %v1629 = vunpack.c.h.b16 %v1080
    %v1630 = vunpack.c.l.b16 %v1081
    %v1631 = vunpack.c.h.b16 %v1081
    %v1632 = vunpack.c.l.b16 %v1082
    %v1633 = vunpack.c.h.b16 %v1082
    %v1634 = vunpack.c.l.b16 %v1083
    %v1635 = vunpack.c.h.b16 %v1083
    %v1636 = vunpack.c.l.b16 %v1084
    %v1637 = vunpack.c.l.b16 %v1085
    %v1638 = vunpack.c.h.b16 %v1085
    %v1639 = vunpack.c.l.b16 %v1086
    %v1640 = vunpack.c.h.b16 %v1086
    %v1641 = vunpack.c.l.b16 %v1087
    %v1642 = vunpack.c.h.b16 %v1087
    %v1643 = vunpack.c.l.b16 %v1088
    %v1644 = vunpack.c.h.b16 %v1088
    %v1645 = vunpack.c.l.b16 %v1089
    %v1646 = vunpack.c.l.b16 %v1090
    %v1647 = vunpack.c.h.b16 %v1090
    %v1648 = vunpack.c.l.b16 %v1091
    %v1649 = vunpack.c.h.b16 %v1091
    %v1650 = vunpack.c.l.b16 %v1092
    %v1651 = vunpack.c.h.b16 %v1092
    %v1652 = vunpack.c.l.b16 %v1093
    %v1653 = vunpack.c.h.b16 %v1093
    %v1654 = vunpack.c.l.b16 %v1094
    %v1655 = vunpack.c.l.b16 %v1095
    %v1656 = vunpack.c.h.b16 %v1095
    %v1657 = vunpack.c.l.b16 %v1096
    %v1658 = vunpack.c.h.b16 %v1096
    %v1659 = vunpack.c.l.b16 %v1097
    %v1660 = vunpack.c.h.b16 %v1097
    %v1661 = vunpack.c.l.b16 %v1098
    %v1662 = vunpack.c.h.b16 %v1098
    %v1663 = vunpack.c.l.b16 %v1099
    %v1664 = vunpack.c.l.b16 %v1100
    %v1665 = vunpack.c.h.b16 %v1100
    %v1666 = vunpack.c.l.b16 %v1101
    %v1667 = vunpack.c.h.b16 %v1101
    %v1668 = vunpack.c.l.b16 %v1102
    %v1669 = vunpack.c.h.b16 %v1102
    %v1670 = vunpack.c.l.b16 %v1103
    %v1671 = vunpack.c.h.b16 %v1103
    %v1672 = vunpack.c.l.b16 %v1104
    %v1673 = vunpack.c.l.b16 %v1105
    %v1674 = vunpack.c.h.b16 %v1105
    %v1675 = vunpack.c.l.b16 %v1106
    %v1676 = vunpack.c.h.b16 %v1106
    %v1677 = vunpack.c.l.b16 %v1107
    %v1678 = vunpack.c.h.b16 %v1107
    %v1679 = vunpack.c.l.b16 %v1108
    %v1680 = vunpack.c.h.b16 %v1108
    %v1681 = vunpack.c.l.b16 %v1109
    %v1682 = vunpack.c.l.b16 %v1110
    %v1683 = vunpack.c.h.b16 %v1110
    %v1684 = vunpack.c.l.b16 %v1111
    %v1685 = vunpack.c.h.b16 %v1111
    %v1686 = vunpack.c.l.b16 %v1112
    %v1687 = vunpack.c.h.b16 %v1112
    %v1688 = vunpack.c.l.b16 %v1113
    %v1689 = vunpack.c.h.b16 %v1113
    %v1690 = vunpack.c.l.b16 %v1114
    %v1691 = vunpack.c.l.b16 %v1115
    %v1692 = vunpack.c.h.b16 %v1115
    %v1693 = vunpack.c.l.b16 %v1116
    %v1694 = vunpack.c.h.b16 %v1116
    %v1695 = vunpack.c.l.b16 %v1117
    %v1696 = vunpack.c.h.b16 %v1117
    %v1697 = vunpack.c.l.b16 %v1118
    %v1698 = vunpack.c.h.b16 %v1118
    %v1699 = vunpack.c.l.b16 %v1119
    %v1700 = vunpack.c.l.b16 %v1120
    %v1701 = vunpack.c.h.b16 %v1120
    %v1702 = vunpack.c.l.b16 %v1121
    %v1703 = vunpack.c.h.b16 %v1121
    %v1704 = vunpack.c.l.b16 %v1122
    %v1705 = vunpack.c.h.b16 %v1122
    %v1706 = vunpack.c.l.b16 %v1123
    %v1707 = vunpack.c.h.b16 %v1123
    %v1708 = vunpack.c.l.b16 %v1124
    %v1709 = vunpack.c.l.b16 %v1125
    %v1710 = vunpack.c.h.b16 %v1125
    %v1711 = vunpack.c.l.b16 %v1126
    %v1712 = vunpack.c.h.b16 %v1126
    %v1713 = vunpack.c.l.b16 %v1127
    %v1714 = vunpack.c.h.b16 %v1127
    %v1715 = vunpack.c.l.b16 %v1128
    %v1716 = vunpack.c.h.b16 %v1128
    %v1717 = vunpack.c.l.b16 %v1129
    %v1718 = vunpack.c.l.b16 %v1130
    %v1719 = vunpack.c.h.b16 %v1130
    %v1720 = vunpack.c.l.b16 %v1131
    %v1721 = vunpack.c.h.b16 %v1131
    %v1722 = vunpack.c.l.b16 %v1132
    %v1723 = vunpack.c.h.b16 %v1132
    %v1724 = vunpack.c.l.b16 %v1133
    %v1725 = vunpack.c.h.b16 %v1133
    %v1726 = vunpack.c.l.b16 %v1134
    %v1727 = vunpack.c.l.b16 %v1135
    %v1728 = vunpack.c.h.b16 %v1135
    %v1729 = vunpack.c.l.b16 %v1136
    %v1730 = vunpack.c.h.b16 %v1136
    %v1731 = vunpack.c.l.b16 %v1137
    %v1732 = vunpack.c.h.b16 %v1137
    %v1733 = vunpack.c.l.b16 %v1138
    %v1734 = vunpack.c.h.b16 %v1138
    %v1735 = vunpack.c.l.b16 %v1139
    %v1736 = vunpack.c.l.b16 %v1140
    %v1737 = vunpack.c.h.b16 %v1140
    %v1738 = vunpack.c.l.b16 %v1141
    %v1739 = vunpack.c.h.b16 %v1141
    %v1740 = vunpack.c.l.b16 %v1142
    %v1741 = vunpack.c.h.b16 %v1142
    %v1742 = vunpack.c.l.b16 %v1143
    %v1743 = vunpack.c.h.b16 %v1143
    %v1744 = vunpack.c.l.b16 %v1144
    %v1745 = vunpack.c.l.b16 %v1145
    %v1746 = vunpack.c.h.b16 %v1145
    %v1747 = vunpack.c.l.b16 %v1146
    %v1748 = vunpack.c.h.b16 %v1146
    %v1749 = vunpack.c.l.b16 %v1147
    %v1750 = vunpack.c.h.b16 %v1147
    %v1751 = vunpack.c.l.b16 %v1148
    %v1752 = vunpack.c.h.b16 %v1148
    %v1753 = vunpack.c.l.b16 %v1149
    %v1754 = vunpack.c.l.b16 %v1150
    %v1755 = vunpack.c.h.b16 %v1150
    %v1756 = vunpack.c.l.b16 %v1151
    %v1757 = vunpack.c.h.b16 %v1151
    %v1758 = vunpack.c.l.b16 %v1152
    %v1759 = vunpack.c.h.b16 %v1152
    %v1760 = vunpack.c.l.b16 %v1153
    %v1761 = vunpack.c.h.b16 %v1153
    %v1762 = vunpack.c.l.b16 %v1154
    %v1763 = vunpack.c.l.b16 %v1155
    %v1764 = vunpack.c.h.b16 %v1155
    %v1765 = vunpack.c.l.b16 %v1156
    %v1766 = vunpack.c.h.b16 %v1156
    %v1767 = vunpack.c.l.b16 %v1157
    %v1768 = vunpack.c.h.b16 %v1157
    %v1769 = vunpack.c.l.b16 %v1158
    %v1770 = vunpack.c.h.b16 %v1158
    %v1771 = vunpack.c.l.b16 %v1159
    %v1772 = vunpack.c.l.b16 %v1160
    %v1773 = vunpack.c.h.b16 %v1160
    %v1774 = vunpack.c.l.b16 %v1161
    %v1775 = vunpack.c.h.b16 %v1161
    %v1776 = vunpack.c.l.b16 %v1162
    %v1777 = vunpack.c.h.b16 %v1162
    %v1778 = vunpack.c.l.b16 %v1163
    %v1779 = vunpack.c.h.b16 %v1163
    %v1780 = vunpack.c.l.b16 %v1164
    %v1781 = vunpack.c.l.b16 %v1165
    %v1782 = vunpack.c.h.b16 %v1165
    %v1783 = vunpack.c.l.b16 %v1166
    %v1784 = vunpack.c.h.b16 %v1166
    %v1785 = vunpack.c.l.b16 %v1167
    %v1786 = vunpack.c.h.b16 %v1167
    %v1787 = vunpack.c.l.b16 %v1168
    %v1788 = vunpack.c.h.b16 %v1168
    %v1789 = vunpack.c.l.b16 %v1169
    %v1790 = vunpack.c.l.b16 %v1170
    %v1791 = vunpack.c.h.b16 %v1170
    %v1792 = vunpack.c.l.b16 %v1171
    %v1793 = vunpack.c.h.b16 %v1171
    %v1794 = vunpack.c.l.b16 %v1172
    %v1795 = vunpack.c.h.b16 %v1172
    %v1796 = vunpack.c.l.b16 %v1173
    %v1797 = vunpack.c.h.b16 %v1173
    %v1798 = vunpack.c.l.b16 %v1174
    %v1799 = vunpack.c.l.b16 %v1175
    %v1800 = vunpack.c.h.b16 %v1175
    %v1801 = vunpack.c.l.b16 %v1176
    %v1802 = vunpack.c.h.b16 %v1176
    %v1803 = vunpack.c.l.b16 %v1177
    %v1804 = vunpack.c.h.b16 %v1177
    %v1805 = vunpack.c.l.b16 %v1178
    %v1806 = vunpack.c.h.b16 %v1178
    %v1807 = vunpack.c.l.b16 %v1179
    %v1808 = vunpack.c.l.b16 %v1180
    %v1809 = vunpack.c.h.b16 %v1180
    %v1810 = vunpack.c.l.b16 %v1181
    %v1811 = vunpack.c.h.b16 %v1181
    %v1812 = vunpack.c.l.b16 %v1182
    %v1813 = vunpack.c.h.b16 %v1182
    %v1814 = vunpack.c.l.b16 %v1183
    %v1815 = vunpack.c.h.b16 %v1183
    %v1816 = vunpack.c.l.b16 %v1184
    %v1817 = vunpack.c.l.b16 %v1185
    %v1818 = vunpack.c.h.b16 %v1185
    %v1819 = vunpack.c.l.b16 %v1186
    %v1820 = vunpack.c.h.b16 %v1186
    %v1821 = vunpack.c.l.b16 %v1187
    %v1822 = vunpack.c.h.b16 %v1187
    %v1823 = vunpack.c.l.b16 %v1188
    %v1824 = vunpack.c.h.b16 %v1188
    %v1825 = vunpack.c.l.b16 %v1189
    %v1826 = vunpack.c.l.b16 %v1190
    %v1827 = vunpack.c.h.b16 %v1190
    %v1828 = vunpack.c.l.b16 %v1191
    %v1829 = vunpack.c.h.b16 %v1191
    %v1830 = vunpack.c.l.b16 %v1192
    %v1831 = vunpack.c.h.b16 %v1192
    %v1832 = vunpack.c.l.b16 %v1193
    %v1833 = vunpack.c.h.b16 %v1193
    %v1834 = vunpack.c.l.b16 %v1194
    %v1835 = vunpack.c.l.b16 %v1195
    %v1836 = vunpack.c.h.b16 %v1195
    %v1837 = vunpack.c.l.b16 %v1196
    %v1838 = vunpack.c.h.b16 %v1196
    %v1839 = vunpack.c.l.b16 %v1197
    %v1840 = vunpack.c.h.b16 %v1197
    %v1841 = vunpack.c.l.b16 %v1198
    %v1842 = vunpack.c.h.b16 %v1198
    %v1843 = vunpack.c.l.b16 %v1199
    %v1844 = vunpack.c.l.b16 %v1200
    %v1845 = vunpack.c.h.b16 %v1200
    %v1846 = vunpack.c.l.b16 %v1201
    %v1847 = vunpack.c.h.b16 %v1201
    %v1848 = vunpack.c.l.b16 %v1202
    %v1849 = vunpack.c.h.b16 %v1202
    %v1850 = vunpack.c.l.b16 %v1203
    %v1851 = vunpack.c.h.b16 %v1203
    %v1852 = vunpack.c.l.b16 %v1204
    %v1853 = vunpack.c.l.b16 %v1205
    %v1854 = vunpack.c.h.b16 %v1205
    %v1855 = vunpack.c.l.b16 %v1206
    %v1856 = vunpack.c.h.b16 %v1206
    %v1857 = vunpack.c.l.b16 %v1207
    %v1858 = vunpack.c.h.b16 %v1207
    %v1859 = vunpack.c.l.b16 %v1208
    %v1860 = vunpack.c.h.b16 %v1208
    %v1861 = vunpack.c.l.b16 %v1209
    %v1862 = vunpack.c.l.b16 %v1210
    %v1863 = vunpack.c.h.b16 %v1210
    %v1864 = vunpack.c.l.b16 %v1211
    %v1865 = vunpack.c.h.b16 %v1211
    %v1866 = vunpack.c.l.b16 %v1212
    %v1867 = vunpack.c.h.b16 %v1212
    %v1868 = vunpack.c.l.b16 %v1213
    %v1869 = vunpack.c.h.b16 %v1213
    %v1870 = vunpack.c.l.b16 %v1214
    %v1871 = vunpack.c.l.b16 %v1215
    %v1872 = vunpack.c.h.b16 %v1215
    %v1873 = vunpack.c.l.b16 %v1216
    %v1874 = vunpack.c.h.b16 %v1216
    %v1875 = vunpack.c.l.b16 %v1217
    %v1876 = vunpack.c.h.b16 %v1217
    %v1877 = vunpack.c.l.b16 %v1218
    %v1878 = vunpack.c.h.b16 %v1218
    %v1879 = vunpack.c.l.b16 %v1219
    %v1880 = vunpack.c.l.b16 %v1220
    %v1881 = vunpack.c.h.b16 %v1220
    %v1882 = vunpack.c.l.b16 %v1221
    %v1883 = vunpack.c.h.b16 %v1221
    %v1884 = vunpack.c.l.b16 %v1222
    %v1885 = vunpack.c.h.b16 %v1222
    %v1886 = vunpack.c.l.b16 %v1223
    %v1887 = vunpack.c.h.b16 %v1223
    %v1888 = vunpack.c.l.b16 %v1224
    %v1889 = vunpack.c.l.b16 %v1225
    %v1890 = vunpack.c.h.b16 %v1225
    %v1891 = vunpack.c.l.b16 %v1226
    %v1892 = vunpack.c.h.b16 %v1226
    %v1893 = vunpack.c.l.b16 %v1227
    %v1894 = vunpack.c.h.b16 %v1227
    %v1895 = vunpack.c.l.b16 %v1228
    %v1896 = vunpack.c.h.b16 %v1228
    %v1897 = vunpack.c.l.b16 %v1229
    %v1898 = vunpack.c.l.b16 %v1230
    %v1899 = vunpack.c.h.b16 %v1230
    %v1900 = vunpack.c.l.b16 %v1231
    %v1901 = vunpack.c.h.b16 %v1231
    %v1902 = vunpack.c.l.b16 %v1232
    %v1903 = vunpack.c.h.b16 %v1232
    %v1904 = vunpack.c.l.b16 %v1233
    %v1905 = vunpack.c.h.b16 %v1233
    %v1906 = vunpack.c.l.b16 %v1234
    %v1907 = vpack.c.b16 %v1484, %v1475
    %v1908 = vpack.c.b16 %v1485, %v1476
    %v1909 = vpack.c.b16 %v1486, %v1477
    %v1910 = vpack.c.b16 %v1487, %v1478
    %v1911 = vpack.c.b16 %v1488, %v1479
    %v1912 = vpack.c.b16 %v1489, %v1480
    %v1913 = vpack.c.b16 %v1490, %v1481
    %v1914 = vpack.c.b16 %v1491, %v1482
    %v1915 = vpack.c.b16 %v1492, %v1483
    %v1916 = vpack.c.b16 %v1502, %v1493
    %v1917 = vpack.c.b16 %v1503, %v1494
    %v1918 = vpack.c.b16 %v1504, %v1495
    %v1919 = vpack.c.b16 %v1505, %v1496
    %v1920 = vpack.c.b16 %v1506, %v1497
    %v1921 = vpack.c.b16 %v1507, %v1498
    %v1922 = vpack.c.b16 %v1508, %v1499
    %v1923 = vpack.c.b16 %v1509, %v1500
    %v1924 = vpack.c.b16 %v1510, %v1501
    %v1925 = vpack.c.b16 %v1520, %v1511
    %v1926 = vpack.c.b16 %v1521, %v1512
    %v1927 = vpack.c.b16 %v1522, %v1513
    %v1928 = vpack.c.b16 %v1523, %v1514
    %v1929 = vpack.c.b16 %v1524, %v1515
    %v1930 = vpack.c.b16 %v1525, %v1516
    %v1931 = vpack.c.b16 %v1526, %v1517
    %v1932 = vpack.c.b16 %v1527, %v1518
    %v1933 = vpack.c.b16 %v1528, %v1519
    %v1934 = vpack.c.b16 %v1538, %v1529
    %v1935 = vpack.c.b16 %v1539, %v1530
    %v1936 = vpack.c.b16 %v1540, %v1531
    %v1937 = vpack.c.b16 %v1541, %v1532
    %v1938 = vpack.c.b16 %v1542, %v1533
    %v1939 = vpack.c.b16 %v1543, %v1534
    %v1940 = vpack.c.b16 %v1544, %v1535
    %v1941 = vpack.c.b16 %v1545, %v1536
    %v1942 = vpack.c.b16 %v1546, %v1537
    %v1943 = vpack.c.b16 %v1556, %v1547
    %v1944 = vpack.c.b16 %v1557, %v1548
    %v1945 = vpack.c.b16 %v1558, %v1549
    %v1946 = vpack.c.b16 %v1559, %v1550
    %v1947 = vpack.c.b16 %v1560, %v1551
    %v1948 = vpack.c.b16 %v1561, %v1552
    %v1949 = vpack.c.b16 %v1562, %v1553
    %v1950 = vpack.c.b16 %v1563, %v1554
    %v1951 = vpack.c.b16 %v1564, %v1555
    %v1952 = vpack.c.b16 %v1574, %v1565
    %v1953 = vpack.c.b16 %v1575, %v1566
    %v1954 = vpack.c.b16 %v1576, %v1567
    %v1955 = vpack.c.b16 %v1577, %v1568
    %v1956 = vpack.c.b16 %v1578, %v1569
    %v1957 = vpack.c.b16 %v1579, %v1570
    %v1958 = vpack.c.b16 %v1580, %v1571
    %v1959 = vpack.c.b16 %v1581, %v1572
    %v1960 = vpack.c.b16 %v1582, %v1573
    %v1961 = vpack.c.b16 %v1592, %v1583
    %v1962 = vpack.c.b16 %v1593, %v1584
    %v1963 = vpack.c.b16 %v1594, %v1585
    %v1964 = vpack.c.b16 %v1595, %v1586
    %v1965 = vpack.c.b16 %v1596, %v1587
    %v1966 = vpack.c.b16 %v1597, %v1588
    %v1967 = vpack.c.b16 %v1598, %v1589
    %v1968 = vpack.c.b16 %v1599, %v1590
    %v1969 = vpack.c.b16 %v1600, %v1591
    %v1970 = vpack.c.b16 %v1610, %v1601
    %v1971 = vpack.c.b16 %v1611, %v1602
    %v1972 = vpack.c.b16 %v1612, %v1603
    %v1973 = vpack.c.b16 %v1613, %v1604
    %v1974 = vpack.c.b16 %v1614, %v1605
    %v1975 = vpack.c.b16 %v1615, %v1606
    %v1976 = vpack.c.b16 %v1616, %v1607
    %v1977 = vpack.c.b16 %v1617, %v1608
    %v1978 = vpack.c.b16 %v1618, %v1609
    %v1979 = vpack.c.b16 %v1628, %v1619
    %v1980 = vpack.c.b16 %v1629, %v1620
    %v1981 = vpack.c.b16 %v1630, %v1621
    %v1982 = vpack.c.b16 %v1631, %v1622
    %v1983 = vpack.c.b16 %v1632, %v1623
    %v1984 = vpack.c.b16 %v1633, %v1624
    %v1985 = vpack.c.b16 %v1634, %v1625
    %v1986 = vpack.c.b16 %v1635, %v1626
    %v1987 = vpack.c.b16 %v1636, %v1627
    %v1988 = vpack.c.b16 %v1646, %v1637
    %v1989 = vpack.c.b16 %v1647, %v1638
    %v1990 = vpack.c.b16 %v1648, %v1639
    %v1991 = vpack.c.b16 %v1649, %v1640
    %v1992 = vpack.c.b16 %v1650, %v1641
    %v1993 = vpack.c.b16 %v1651, %v1642
    %v1994 = vpack.c.b16 %v1652, %v1643
    %v1995 = vpack.c.b16 %v1653, %v1644
    %v1996 = vpack.c.b16 %v1654, %v1645
    %v1997 = vpack.c.b16 %v1664, %v1655
    %v1998 = vpack.c.b16 %v1665, %v1656
    %v1999 = vpack.c.b16 %v1666, %v1657
    %v2000 = vpack.c.b16 %v1667, %v1658
    %v2001 = vpack.c.b16 %v1668, %v1659
    %v2002 = vpack.c.b16 %v1669, %v1660
    %v2003 = vpack.c.b16 %v1670, %v1661
    %v2004 = vpack.c.b16 %v1671, %v1662
    %v2005 = vpack.c.b16 %v1672, %v1663
    %v2006 = vpack.c.b16 %v1682, %v1673
    %v2007 = vpack.c.b16 %v1683, %v1674
    %v2008 = vpack.c.b16 %v1684, %v1675
    %v2009 = vpack.c.b16 %v1685, %v1676
    %v2010 = vpack.c.b16 %v1686, %v1677
    %v2011 = vpack.c.b16 %v1687, %v1678
    %v2012 = vpack.c.b16 %v1688, %v1679
    %v2013 = vpack.c.b16 %v1689, %v1680
    %v2014 = vpack.c.b16 %v1690, %v1681
    %v2015 = vpack.c.b16 %v1700, %v1691
    %v2016 = vpack.c.b16 %v1701, %v1692
    %v2017 = vpack.c.b16 %v1702, %v1693
    %v2018 = vpack.c.b16 %v1703, %v1694
    %v2019 = vpack.c.b16 %v1704, %v1695
    %v2020 = vpack.c.b16 %v1705, %v1696
    %v2021 = vpack.c.b16 %v1706, %v1697
    %v2022 = vpack.c.b16 %v1707, %v1698
    %v2023 = vpack.c.b16 %v1708, %v1699
    %v2024 = vpack.c.b16 %v1718, %v1709
    %v2025 = vpack.c.b16 %v1719, %v1710
    %v2026 = vpack.c.b16 %v1720, %v1711
    %v2027 = vpack.c.b16 %v1721, %v1712
    %v2028 = vpack.c.b16 %v1722, %v1713
    %v2029 = vpack.c.b16 %v1723, %v1714
    %v2030 = vpack.c.b16 %v1724, %v1715
    %v2031 = vpack.c.b16 %v1725, %v1716
    %v2032 = vpack.c.b16 %v1726, %v1717
    %v2033 = vpack.c.b16 %v1736, %v1727
    %v2034 = vpack.c.b16 %v1737, %v1728
    %v2035 = vpack.c.b16 %v1738, %v1729
    %v2036 = vpack.c.b16 %v1739, %v1730
    %v2037 = vpack.c.b16 %v1740, %v1731
    %v2038 = vpack.c.b16 %v1741, %v1732
    %v2039 = vpack.c.b16 %v1742, %v1733
    %v2040 = vpack.c.b16 %v1743, %v1734
    %v2041 = vpack.c.b16 %v1744, %v1735
    %v2042 = vpack.c.b16 %v1754, %v1745
    %v2043 = vpack.c.b16 %v1755, %v1746
    %v2044 = vpack.c.b16 %v1756, %v1747
    %v2045 = vpack.c.b16 %v1757, %v1748
    %v2046 = vpack.c.b16 %v1758, %v1749
    %v2047 = vpack.c.b16 %v1759, %v1750
    %v2048 = vpack.c.b16 %v1760, %v1751
    %v2049 = vpack.c.b16 %v1761, %v1752
    %v2050 = vpack.c.b16 %v1762, %v1753
    %v2051 = vpack.c.b16 %v1772, %v1763
    %v2052 = vpack.c.b16 %v1773, %v1764
    %v2053 = vpack.c.b16 %v1774, %v1765
    %v2054 = vpack.c.b16 %v1775, %v1766
    %v2055 = vpack.c.b16 %v1776, %v1767
    %v2056 = vpack.c.b16 %v1777, %v1768
    %v2057 = vpack.c.b16 %v1778, %v1769
    %v2058 = vpack.c.b16 %v1779, %v1770
    %v2059 = vpack.c.b16 %v1780, %v1771
    %v2060 = vpack.c.b16 %v1790, %v1781
    %v2061 = vpack.c.b16 %v1791, %v1782
    %v2062 = vpack.c.b16 %v1792, %v1783
    %v2063 = vpack.c.b16 %v1793, %v1784
    %v2064 = vpack.c.b16 %v1794, %v1785
    %v2065 = vpack.c.b16 %v1795, %v1786
    %v2066 = vpack.c.b16 %v1796, %v1787
    %v2067 = vpack.c.b16 %v1797, %v1788
    %v2068 = vpack.c.b16 %v1798, %v1789
    %v2069 = vpack.c.b16 %v1808, %v1799
    %v2070 = vpack.c.b16 %v1809, %v1800
    %v2071 = vpack.c.b16 %v1810, %v1801
    %v2072 = vpack.c.b16 %v1811, %v1802
    %v2073 = vpack.c.b16 %v1812, %v1803
    %v2074 = vpack.c.b16 %v1813, %v1804
    %v2075 = vpack.c.b16 %v1814, %v1805
    %v2076 = vpack.c.b16 %v1815, %v1806
    %v2077 = vpack.c.b16 %v1816, %v1807
    %v2078 = vpack.c.b16 %v1826, %v1817
    %v2079 = vpack.c.b16 %v1827, %v1818
    %v2080 = vpack.c.b16 %v1828, %v1819
    %v2081 = vpack.c.b16 %v1829, %v1820
    %v2082 = vpack.c.b16 %v1830, %v1821
    %v2083 = vpack.c.b16 %v1831, %v1822
    %v2084 = vpack.c.b16 %v1832, %v1823
    %v2085 = vpack.c.b16 %v1833, %v1824
    %v2086 = vpack.c.b16 %v1834, %v1825
    %v2087 = vpack.c.b16 %v1844, %v1835
    %v2088 = vpack.c.b16 %v1845, %v1836
    %v2089 = vpack.c.b16 %v1846, %v1837
    %v2090 = vpack.c.b16 %v1847, %v1838
    %v2091 = vpack.c.b16 %v1848, %v1839
    %v2092 = vpack.c.b16 %v1849, %v1840
    %v2093 = vpack.c.b16 %v1850, %v1841
    %v2094 = vpack.c.b16 %v1851, %v1842
    %v2095 = vpack.c.b16 %v1852, %v1843
    %v2096 = vpack.c.b16 %v1862, %v1853
    %v2097 = vpack.c.b16 %v1863, %v1854
    %v2098 = vpack.c.b16 %v1864, %v1855
    %v2099 = vpack.c.b16 %v1865, %v1856
    %v2100 = vpack.c.b16 %v1866, %v1857
    %v2101 = vpack.c.b16 %v1867, %v1858
    %v2102 = vpack.c.b16 %v1868, %v1859
    %v2103 = vpack.c.b16 %v1869, %v1860
    %v2104 = vpack.c.b16 %v1870, %v1861
    %v2105 = vpack.c.b16 %v1880, %v1871
    %v2106 = vpack.c.b16 %v1881, %v1872
    %v2107 = vpack.c.b16 %v1882, %v1873
    %v2108 = vpack.c.b16 %v1883, %v1874
    %v2109 = vpack.c.b16 %v1884, %v1875
    %v2110 = vpack.c.b16 %v1885, %v1876
    %v2111 = vpack.c.b16 %v1886, %v1877
    %v2112 = vpack.c.b16 %v1887, %v1878
    %v2113 = vpack.c.b16 %v1888, %v1879
    %v2114 = vpack.c.b16 %v1898, %v1889
    %v2115 = vpack.c.b16 %v1899, %v1890
    %v2116 = vpack.c.b16 %v1900, %v1891
    %v2117 = vpack.c.b16 %v1901, %v1892
    %v2118 = vpack.c.b16 %v1902, %v1893
    %v2119 = vpack.c.b16 %v1903, %v1894
    %v2120 = vpack.c.b16 %v1904, %v1895
    %v2121 = vpack.c.b16 %v1905, %v1896
    %v2122 = vpack.c.b16 %v1906, %v1897
    %2339 = vmatpush.bf16.msra.mxu0 %v1970
    %2340 = vmatpush.bf16.msra.mxu0 %v1961
    %2341 = vmatpush.bf16.msra.mxu0 %v1952
    %2342 = vmatpush.bf16.msra.mxu0 %v1943
    %2343 = vmatpush.bf16.msra.mxu0 %v1934
    %2344 = vmatpush.bf16.msra.mxu0 %v1925
    %2345 = vmatpush.bf16.msra.mxu0 %v1916
    %2346 = vmatpush.bf16.msra.mxu0 %v1907
    %2347 = vmatmul.bf16.gmra.mxu0 %v983
    %v2348 = vpop.f32.mrf.mxu0
    %v2349 = vadd.f32 0.0, %v2348
    %v2350 = vpop.f32.mrf.mxu0
    %v2351 = vadd.f32 0.0, %v2350
    %2352 = vmatmul.bf16.gmra.mxu0 %v986
    %v2353 = vpop.f32.mrf.mxu0
    %v2354 = vadd.f32 0.0, %v2353
    %v2355 = vpop.f32.mrf.mxu0
    %v2356 = vadd.f32 0.0, %v2355
    %2357 = vmatmul.bf16.gmra.mxu0 %v989
    %v2358 = vpop.f32.mrf.mxu0
    %v2359 = vadd.f32 0.0, %v2358
    %v2360 = vpop.f32.mrf.mxu0
    %v2361 = vadd.f32 0.0, %v2360
    %2362 = vmatmul.bf16.gmra.mxu0 %v992
    %v2363 = vpop.f32.mrf.mxu0
    %v2364 = vadd.f32 0.0, %v2363
    %v2365 = vpop.f32.mrf.mxu0
    %v2366 = vadd.f32 0.0, %v2365
    %2367 = vdwg.mxu0
    %2368 = vmatpush.bf16.msra.mxu0 %v2042
    %2369 = vmatpush.bf16.msra.mxu0 %v2033
    %2370 = vmatpush.bf16.msra.mxu0 %v2024
    %2371 = vmatpush.bf16.msra.mxu0 %v2015
    %2372 = vmatpush.bf16.msra.mxu0 %v2006
    %2373 = vmatpush.bf16.msra.mxu0 %v1997
    %2374 = vmatpush.bf16.msra.mxu0 %v1988
    %2375 = vmatpush.bf16.msra.mxu0 %v1979
    %2376 = vmatmul.bf16.gmra.mxu0 %v984
    %v2377 = vpop.f32.mrf.mxu0
    %v2378 = vadd.f32 %v2349, %v2377
    %v2379 = vpop.f32.mrf.mxu0
    %v2380 = vadd.f32 %v2351, %v2379
    %2381 = vmatmul.bf16.gmra.mxu0 %v987
    %v2382 = vpop.f32.mrf.mxu0
    %v2383 = vadd.f32 %v2354, %v2382
    %v2384 = vpop.f32.mrf.mxu0
    %v2385 = vadd.f32 %v2356, %v2384
    %2386 = vmatmul.bf16.gmra.mxu0 %v990
    %v2387 = vpop.f32.mrf.mxu0
    %v2388 = vadd.f32 %v2359, %v2387
    %v2389 = vpop.f32.mrf.mxu0
    %v2390 = vadd.f32 %v2361, %v2389
    %2391 = vmatmul.bf16.gmra.mxu0 %v993
    %v2392 = vpop.f32.mrf.mxu0
    %v2393 = vadd.f32 %v2364, %v2392
    %v2394 = vpop.f32.mrf.mxu0
    %v2395 = vadd.f32 %v2366, %v2394
    %2396 = vdwg.mxu0
    %2397 = vmatpush.bf16.msra.mxu0 %v2114
    %2398 = vmatpush.bf16.msra.mxu0 %v2105
    %2399 = vmatpush.bf16.msra.mxu0 %v2096
    %2400 = vmatpush.bf16.msra.mxu0 %v2087
    %2401 = vmatpush.bf16.msra.mxu0 %v2078
    %2402 = vmatpush.bf16.msra.mxu0 %v2069
    %2403 = vmatpush.bf16.msra.mxu0 %v2060
    %2404 = vmatpush.bf16.msra.mxu0 %v2051
    %2405 = vmatmul.bf16.gmra.mxu0 %v985
    %v2406 = vpop.f32.mrf.mxu0
    %v2407 = vadd.f32 %v2378, %v2406
    %v2408 = vpop.f32.mrf.mxu0
    %v2409 = vadd.f32 %v2380, %v2408
    %2410 = vmatmul.bf16.gmra.mxu0 %v988
    %v2411 = vpop.f32.mrf.mxu0
    %v2412 = vadd.f32 %v2383, %v2411
    %v2413 = vpop.f32.mrf.mxu0
    %v2414 = vadd.f32 %v2385, %v2413
    %2415 = vmatmul.bf16.gmra.mxu0 %v991
    %v2416 = vpop.f32.mrf.mxu0
    %v2417 = vadd.f32 %v2388, %v2416
    %v2418 = vpop.f32.mrf.mxu0
    %v2419 = vadd.f32 %v2390, %v2418
    %2420 = vmatmul.bf16.gmra.mxu0 %v994
    %v2421 = vpop.f32.mrf.mxu0
    %v2422 = vadd.f32 %v2393, %v2421
    %v2423 = vpop.f32.mrf.mxu0
    %v2424 = vadd.f32 %v2395, %v2423
    %2425 = vdwg.mxu0
    %2426 = vmatpush.bf16.msra.mxu0 %v1971
    %2427 = vmatpush.bf16.msra.mxu0 %v1962
    %2428 = vmatpush.bf16.msra.mxu0 %v1953
    %2429 = vmatpush.bf16.msra.mxu0 %v1944
    %2430 = vmatpush.bf16.msra.mxu0 %v1935
    %2431 = vmatpush.bf16.msra.mxu0 %v1926
    %2432 = vmatpush.bf16.msra.mxu0 %v1917
    %2433 = vmatpush.bf16.msra.mxu0 %v1908
    %2434 = vmatmul.bf16.gmra.mxu0 %v983
    %v2435 = vpop.f32.mrf.mxu0
    %v2436 = vadd.f32 0.0, %v2435
    %v2437 = vpop.f32.mrf.mxu0
    %v2438 = vadd.f32 0.0, %v2437
    %2439 = vmatmul.bf16.gmra.mxu0 %v986
    %v2440 = vpop.f32.mrf.mxu0
    %v2441 = vadd.f32 0.0, %v2440
    %v2442 = vpop.f32.mrf.mxu0
    %v2443 = vadd.f32 0.0, %v2442
    %2444 = vmatmul.bf16.gmra.mxu0 %v989
    %v2445 = vpop.f32.mrf.mxu0
    %v2446 = vadd.f32 0.0, %v2445
    %v2447 = vpop.f32.mrf.mxu0
    %v2448 = vadd.f32 0.0, %v2447
    %2449 = vmatmul.bf16.gmra.mxu0 %v992
    %v2450 = vpop.f32.mrf.mxu0
    %v2451 = vadd.f32 0.0, %v2450
    %v2452 = vpop.f32.mrf.mxu0
    %v2453 = vadd.f32 0.0, %v2452
    %2454 = vdwg.mxu0
    %2455 = vmatpush.bf16.msra.mxu0 %v2043
    %2456 = vmatpush.bf16.msra.mxu0 %v2034
    %2457 = vmatpush.bf16.msra.mxu0 %v2025
    %2458 = vmatpush.bf16.msra.mxu0 %v2016
    %2459 = vmatpush.bf16.msra.mxu0 %v2007
    %2460 = vmatpush.bf16.msra.mxu0 %v1998
    %2461 = vmatpush.bf16.msra.mxu0 %v1989
    %2462 = vmatpush.bf16.msra.mxu0 %v1980
    %2463 = vmatmul.bf16.gmra.mxu0 %v984
    %v2464 = vpop.f32.mrf.mxu0
    %v2465 = vadd.f32 %v2436, %v2464
    %v2466 = vpop.f32.mrf.mxu0
    %v2467 = vadd.f32 %v2438, %v2466
    %2468 = vmatmul.bf16.gmra.mxu0 %v987
    %v2469 = vpop.f32.mrf.mxu0
    %v2470 = vadd.f32 %v2441, %v2469
    %v2471 = vpop.f32.mrf.mxu0
    %v2472 = vadd.f32 %v2443, %v2471
    %2473 = vmatmul.bf16.gmra.mxu0 %v990
    %v2474 = vpop.f32.mrf.mxu0
    %v2475 = vadd.f32 %v2446, %v2474
    %v2476 = vpop.f32.mrf.mxu0
    %v2477 = vadd.f32 %v2448, %v2476
    %2478 = vmatmul.bf16.gmra.mxu0 %v993
    %v2479 = vpop.f32.mrf.mxu0
    %v2480 = vadd.f32 %v2451, %v2479
    %v2481 = vpop.f32.mrf.mxu0
    %v2482 = vadd.f32 %v2453, %v2481
    %2483 = vdwg.mxu0
    %2484 = vmatpush.bf16.msra.mxu0 %v2115
    %2485 = vmatpush.bf16.msra.mxu0 %v2106
    %2486 = vmatpush.bf16.msra.mxu0 %v2097
    %2487 = vmatpush.bf16.msra.mxu0 %v2088
    %2488 = vmatpush.bf16.msra.mxu0 %v2079
    %2489 = vmatpush.bf16.msra.mxu0 %v2070
    %2490 = vmatpush.bf16.msra.mxu0 %v2061
    %2491 = vmatpush.bf16.msra.mxu0 %v2052
    %2492 = vmatmul.bf16.gmra.mxu0 %v985
    %v2493 = vpop.f32.mrf.mxu0
    %v2494 = vadd.f32 %v2465, %v2493
    %v2495 = vpop.f32.mrf.mxu0
    %v2496 = vadd.f32 %v2467, %v2495
    %2497 = vmatmul.bf16.gmra.mxu0 %v988
    %v2498 = vpop.f32.mrf.mxu0
    %v2499 = vadd.f32 %v2470, %v2498
    %v2500 = vpop.f32.mrf.mxu0
    %v2501 = vadd.f32 %v2472, %v2500
    %2502 = vmatmul.bf16.gmra.mxu0 %v991
    %v2503 = vpop.f32.mrf.mxu0
    %v2504 = vadd.f32 %v2475, %v2503
    %v2505 = vpop.f32.mrf.mxu0
    %v2506 = vadd.f32 %v2477, %v2505
    %2507 = vmatmul.bf16.gmra.mxu0 %v994
    %v2508 = vpop.f32.mrf.mxu0
    %v2509 = vadd.f32 %v2480, %v2508
    %v2510 = vpop.f32.mrf.mxu0
    %v2511 = vadd.f32 %v2482, %v2510
    %2512 = vdwg.mxu0
    %2513 = vmatpush.bf16.msra.mxu0 %v1972
    %2514 = vmatpush.bf16.msra.mxu0 %v1963
    %2515 = vmatpush.bf16.msra.mxu0 %v1954
    %2516 = vmatpush.bf16.msra.mxu0 %v1945
    %2517 = vmatpush.bf16.msra.mxu0 %v1936
    %2518 = vmatpush.bf16.msra.mxu0 %v1927
    %2519 = vmatpush.bf16.msra.mxu0 %v1918
    %2520 = vmatpush.bf16.msra.mxu0 %v1909
    %2521 = vmatmul.bf16.gmra.mxu0 %v983
    %v2522 = vpop.f32.mrf.mxu0
    %v2523 = vadd.f32 0.0, %v2522
    %v2524 = vpop.f32.mrf.mxu0
    %v2525 = vadd.f32 0.0, %v2524
    %2526 = vmatmul.bf16.gmra.mxu0 %v986
    %v2527 = vpop.f32.mrf.mxu0
    %v2528 = vadd.f32 0.0, %v2527
    %v2529 = vpop.f32.mrf.mxu0
    %v2530 = vadd.f32 0.0, %v2529
    %2531 = vmatmul.bf16.gmra.mxu0 %v989
    %v2532 = vpop.f32.mrf.mxu0
    %v2533 = vadd.f32 0.0, %v2532
    %v2534 = vpop.f32.mrf.mxu0
    %v2535 = vadd.f32 0.0, %v2534
    %2536 = vmatmul.bf16.gmra.mxu0 %v992
    %v2537 = vpop.f32.mrf.mxu0
    %v2538 = vadd.f32 0.0, %v2537
    %v2539 = vpop.f32.mrf.mxu0
    %v2540 = vadd.f32 0.0, %v2539
    %2541 = vdwg.mxu0
    %2542 = vmatpush.bf16.msra.mxu0 %v2044
    %2543 = vmatpush.bf16.msra.mxu0 %v2035
    %2544 = vmatpush.bf16.msra.mxu0 %v2026
    %2545 = vmatpush.bf16.msra.mxu0 %v2017
    %2546 = vmatpush.bf16.msra.mxu0 %v2008
    %2547 = vmatpush.bf16.msra.mxu0 %v1999
    %2548 = vmatpush.bf16.msra.mxu0 %v1990
    %2549 = vmatpush.bf16.msra.mxu0 %v1981
    %2550 = vmatmul.bf16.gmra.mxu0 %v984
    %v2551 = vpop.f32.mrf.mxu0
    %v2552 = vadd.f32 %v2523, %v2551
    %v2553 = vpop.f32.mrf.mxu0
    %v2554 = vadd.f32 %v2525, %v2553
    %2555 = vmatmul.bf16.gmra.mxu0 %v987
    %v2556 = vpop.f32.mrf.mxu0
    %v2557 = vadd.f32 %v2528, %v2556
    %v2558 = vpop.f32.mrf.mxu0
    %v2559 = vadd.f32 %v2530, %v2558
    %2560 = vmatmul.bf16.gmra.mxu0 %v990
    %v2561 = vpop.f32.mrf.mxu0
    %v2562 = vadd.f32 %v2533, %v2561
    %v2563 = vpop.f32.mrf.mxu0
    %v2564 = vadd.f32 %v2535, %v2563
    %2565 = vmatmul.bf16.gmra.mxu0 %v993
    %v2566 = vpop.f32.mrf.mxu0
    %v2567 = vadd.f32 %v2538, %v2566
    %v2568 = vpop.f32.mrf.mxu0
    %v2569 = vadd.f32 %v2540, %v2568
    %2570 = vdwg.mxu0
    %2571 = vmatpush.bf16.msra.mxu0 %v2116
    %2572 = vmatpush.bf16.msra.mxu0 %v2107
    %2573 = vmatpush.bf16.msra.mxu0 %v2098
    %2574 = vmatpush.bf16.msra.mxu0 %v2089
    %2575 = vmatpush.bf16.msra.mxu0 %v2080
    %2576 = vmatpush.bf16.msra.mxu0 %v2071
    %2577 = vmatpush.bf16.msra.mxu0 %v2062
    %2578 = vmatpush.bf16.msra.mxu0 %v2053
    %2579 = vmatmul.bf16.gmra.mxu0 %v985
    %v2580 = vpop.f32.mrf.mxu0
    %v2581 = vadd.f32 %v2552, %v2580
    %v2582 = vpop.f32.mrf.mxu0
    %v2583 = vadd.f32 %v2554, %v2582
    %2584 = vmatmul.bf16.gmra.mxu0 %v988
    %v2585 = vpop.f32.mrf.mxu0
    %v2586 = vadd.f32 %v2557, %v2585
    %v2587 = vpop.f32.mrf.mxu0
    %v2588 = vadd.f32 %v2559, %v2587
    %2589 = vmatmul.bf16.gmra.mxu0 %v991
    %v2590 = vpop.f32.mrf.mxu0
    %v2591 = vadd.f32 %v2562, %v2590
    %v2592 = vpop.f32.mrf.mxu0
    %v2593 = vadd.f32 %v2564, %v2592
    %2594 = vmatmul.bf16.gmra.mxu0 %v994
    %v2595 = vpop.f32.mrf.mxu0
    %v2596 = vadd.f32 %v2567, %v2595
    %v2597 = vpop.f32.mrf.mxu0
    %v2598 = vadd.f32 %v2569, %v2597
    %2599 = vdwg.mxu0
    %2600 = vmatpush.bf16.msra.mxu0 %v1973
    %2601 = vmatpush.bf16.msra.mxu0 %v1964
    %2602 = vmatpush.bf16.msra.mxu0 %v1955
    %2603 = vmatpush.bf16.msra.mxu0 %v1946
    %2604 = vmatpush.bf16.msra.mxu0 %v1937
    %2605 = vmatpush.bf16.msra.mxu0 %v1928
    %2606 = vmatpush.bf16.msra.mxu0 %v1919
    %2607 = vmatpush.bf16.msra.mxu0 %v1910
    %2608 = vmatmul.bf16.gmra.mxu0 %v983
    %v2609 = vpop.f32.mrf.mxu0
    %v2610 = vadd.f32 0.0, %v2609
    %v2611 = vpop.f32.mrf.mxu0
    %v2612 = vadd.f32 0.0, %v2611
    %2613 = vmatmul.bf16.gmra.mxu0 %v986
    %v2614 = vpop.f32.mrf.mxu0
    %v2615 = vadd.f32 0.0, %v2614
    %v2616 = vpop.f32.mrf.mxu0
    %v2617 = vadd.f32 0.0, %v2616
    %2618 = vmatmul.bf16.gmra.mxu0 %v989
    %v2619 = vpop.f32.mrf.mxu0
    %v2620 = vadd.f32 0.0, %v2619
    %v2621 = vpop.f32.mrf.mxu0
    %v2622 = vadd.f32 0.0, %v2621
    %2623 = vmatmul.bf16.gmra.mxu0 %v992
    %v2624 = vpop.f32.mrf.mxu0
    %v2625 = vadd.f32 0.0, %v2624
    %v2626 = vpop.f32.mrf.mxu0
    %v2627 = vadd.f32 0.0, %v2626
    %2628 = vdwg.mxu0
    %2629 = vmatpush.bf16.msra.mxu0 %v2045
    %2630 = vmatpush.bf16.msra.mxu0 %v2036
    %2631 = vmatpush.bf16.msra.mxu0 %v2027
    %2632 = vmatpush.bf16.msra.mxu0 %v2018
    %2633 = vmatpush.bf16.msra.mxu0 %v2009
    %2634 = vmatpush.bf16.msra.mxu0 %v2000
    %2635 = vmatpush.bf16.msra.mxu0 %v1991
    %2636 = vmatpush.bf16.msra.mxu0 %v1982
    %2637 = vmatmul.bf16.gmra.mxu0 %v984
    %v2638 = vpop.f32.mrf.mxu0
    %v2639 = vadd.f32 %v2610, %v2638
    %v2640 = vpop.f32.mrf.mxu0
    %v2641 = vadd.f32 %v2612, %v2640
    %2642 = vmatmul.bf16.gmra.mxu0 %v987
    %v2643 = vpop.f32.mrf.mxu0
    %v2644 = vadd.f32 %v2615, %v2643
    %v2645 = vpop.f32.mrf.mxu0
    %v2646 = vadd.f32 %v2617, %v2645
    %2647 = vmatmul.bf16.gmra.mxu0 %v990
    %v2648 = vpop.f32.mrf.mxu0
    %v2649 = vadd.f32 %v2620, %v2648
    %v2650 = vpop.f32.mrf.mxu0
    %v2651 = vadd.f32 %v2622, %v2650
    %2652 = vmatmul.bf16.gmra.mxu0 %v993
    %v2653 = vpop.f32.mrf.mxu0
    %v2654 = vadd.f32 %v2625, %v2653
    %v2655 = vpop.f32.mrf.mxu0
    %v2656 = vadd.f32 %v2627, %v2655
    %2657 = vdwg.mxu0
    %2658 = vmatpush.bf16.msra.mxu0 %v2117
    %2659 = vmatpush.bf16.msra.mxu0 %v2108
    %2660 = vmatpush.bf16.msra.mxu0 %v2099
    %2661 = vmatpush.bf16.msra.mxu0 %v2090
    %2662 = vmatpush.bf16.msra.mxu0 %v2081
    %2663 = vmatpush.bf16.msra.mxu0 %v2072
    %2664 = vmatpush.bf16.msra.mxu0 %v2063
    %2665 = vmatpush.bf16.msra.mxu0 %v2054
    %2666 = vmatmul.bf16.gmra.mxu0 %v985
    %v2667 = vpop.f32.mrf.mxu0
    %v2668 = vadd.f32 %v2639, %v2667
    %v2669 = vpop.f32.mrf.mxu0
    %v2670 = vadd.f32 %v2641, %v2669
    %2671 = vmatmul.bf16.gmra.mxu0 %v988
    %v2672 = vpop.f32.mrf.mxu0
    %v2673 = vadd.f32 %v2644, %v2672
    %v2674 = vpop.f32.mrf.mxu0
    %v2675 = vadd.f32 %v2646, %v2674
    %2676 = vmatmul.bf16.gmra.mxu0 %v991
    %v2677 = vpop.f32.mrf.mxu0
    %v2678 = vadd.f32 %v2649, %v2677
    %v2679 = vpop.f32.mrf.mxu0
    %v2680 = vadd.f32 %v2651, %v2679
    %2681 = vmatmul.bf16.gmra.mxu0 %v994
    %v2682 = vpop.f32.mrf.mxu0
    %v2683 = vadd.f32 %v2654, %v2682
    %v2684 = vpop.f32.mrf.mxu0
    %v2685 = vadd.f32 %v2656, %v2684
    %2686 = vdwg.mxu0
    %2687 = vmatpush.bf16.msra.mxu0 %v1974
    %2688 = vmatpush.bf16.msra.mxu0 %v1965
    %2689 = vmatpush.bf16.msra.mxu0 %v1956
    %2690 = vmatpush.bf16.msra.mxu0 %v1947
    %2691 = vmatpush.bf16.msra.mxu0 %v1938
    %2692 = vmatpush.bf16.msra.mxu0 %v1929
    %2693 = vmatpush.bf16.msra.mxu0 %v1920
    %2694 = vmatpush.bf16.msra.mxu0 %v1911
    %2695 = vmatmul.bf16.gmra.mxu0 %v983
    %v2696 = vpop.f32.mrf.mxu0
    %v2697 = vadd.f32 0.0, %v2696
    %v2698 = vpop.f32.mrf.mxu0
    %v2699 = vadd.f32 0.0, %v2698
    %2700 = vmatmul.bf16.gmra.mxu0 %v986
    %v2701 = vpop.f32.mrf.mxu0
    %v2702 = vadd.f32 0.0, %v2701
    %v2703 = vpop.f32.mrf.mxu0
    %v2704 = vadd.f32 0.0, %v2703
    %2705 = vmatmul.bf16.gmra.mxu0 %v989
    %v2706 = vpop.f32.mrf.mxu0
    %v2707 = vadd.f32 0.0, %v2706
    %v2708 = vpop.f32.mrf.mxu0
    %v2709 = vadd.f32 0.0, %v2708
    %2710 = vmatmul.bf16.gmra.mxu0 %v992
    %v2711 = vpop.f32.mrf.mxu0
    %v2712 = vadd.f32 0.0, %v2711
    %v2713 = vpop.f32.mrf.mxu0
    %v2714 = vadd.f32 0.0, %v2713
    %2715 = vdwg.mxu0
    %2716 = vmatpush.bf16.msra.mxu0 %v2046
    %2717 = vmatpush.bf16.msra.mxu0 %v2037
    %2718 = vmatpush.bf16.msra.mxu0 %v2028
    %2719 = vmatpush.bf16.msra.mxu0 %v2019
    %2720 = vmatpush.bf16.msra.mxu0 %v2010
    %2721 = vmatpush.bf16.msra.mxu0 %v2001
    %2722 = vmatpush.bf16.msra.mxu0 %v1992
    %2723 = vmatpush.bf16.msra.mxu0 %v1983
    %2724 = vmatmul.bf16.gmra.mxu0 %v984
    %v2725 = vpop.f32.mrf.mxu0
    %v2726 = vadd.f32 %v2697, %v2725
    %v2727 = vpop.f32.mrf.mxu0
    %v2728 = vadd.f32 %v2699, %v2727
    %2729 = vmatmul.bf16.gmra.mxu0 %v987
    %v2730 = vpop.f32.mrf.mxu0
    %v2731 = vadd.f32 %v2702, %v2730
    %v2732 = vpop.f32.mrf.mxu0
    %v2733 = vadd.f32 %v2704, %v2732
    %2734 = vmatmul.bf16.gmra.mxu0 %v990
    %v2735 = vpop.f32.mrf.mxu0
    %v2736 = vadd.f32 %v2707, %v2735
    %v2737 = vpop.f32.mrf.mxu0
    %v2738 = vadd.f32 %v2709, %v2737
    %2739 = vmatmul.bf16.gmra.mxu0 %v993
    %v2740 = vpop.f32.mrf.mxu0
    %v2741 = vadd.f32 %v2712, %v2740
    %v2742 = vpop.f32.mrf.mxu0
    %v2743 = vadd.f32 %v2714, %v2742
    %2744 = vdwg.mxu0
    %2745 = vmatpush.bf16.msra.mxu0 %v2118
    %2746 = vmatpush.bf16.msra.mxu0 %v2109
    %2747 = vmatpush.bf16.msra.mxu0 %v2100
    %2748 = vmatpush.bf16.msra.mxu0 %v2091
    %2749 = vmatpush.bf16.msra.mxu0 %v2082
    %2750 = vmatpush.bf16.msra.mxu0 %v2073
    %2751 = vmatpush.bf16.msra.mxu0 %v2064
    %2752 = vmatpush.bf16.msra.mxu0 %v2055
    %2753 = vmatmul.bf16.gmra.mxu0 %v985
    %v2754 = vpop.f32.mrf.mxu0
    %v2755 = vadd.f32 %v2726, %v2754
    %v2756 = vpop.f32.mrf.mxu0
    %v2757 = vadd.f32 %v2728, %v2756
    %2758 = vmatmul.bf16.gmra.mxu0 %v988
    %v2759 = vpop.f32.mrf.mxu0
    %v2760 = vadd.f32 %v2731, %v2759
    %v2761 = vpop.f32.mrf.mxu0
    %v2762 = vadd.f32 %v2733, %v2761
    %2763 = vmatmul.bf16.gmra.mxu0 %v991
    %v2764 = vpop.f32.mrf.mxu0
    %v2765 = vadd.f32 %v2736, %v2764
    %v2766 = vpop.f32.mrf.mxu0
    %v2767 = vadd.f32 %v2738, %v2766
    %2768 = vmatmul.bf16.gmra.mxu0 %v994
    %v2769 = vpop.f32.mrf.mxu0
    %v2770 = vadd.f32 %v2741, %v2769
    %v2771 = vpop.f32.mrf.mxu0
    %v2772 = vadd.f32 %v2743, %v2771
    %2773 = vdwg.mxu0
    %2774 = vmatpush.bf16.msra.mxu0 %v1975
    %2775 = vmatpush.bf16.msra.mxu0 %v1966
    %2776 = vmatpush.bf16.msra.mxu0 %v1957
    %2777 = vmatpush.bf16.msra.mxu0 %v1948
    %2778 = vmatpush.bf16.msra.mxu0 %v1939
    %2779 = vmatpush.bf16.msra.mxu0 %v1930
    %2780 = vmatpush.bf16.msra.mxu0 %v1921
    %2781 = vmatpush.bf16.msra.mxu0 %v1912
    %2782 = vmatmul.bf16.gmra.mxu0 %v983
    %v2783 = vpop.f32.mrf.mxu0
    %v2784 = vadd.f32 0.0, %v2783
    %v2785 = vpop.f32.mrf.mxu0
    %v2786 = vadd.f32 0.0, %v2785
    %2787 = vmatmul.bf16.gmra.mxu0 %v986
    %v2788 = vpop.f32.mrf.mxu0
    %v2789 = vadd.f32 0.0, %v2788
    %v2790 = vpop.f32.mrf.mxu0
    %v2791 = vadd.f32 0.0, %v2790
    %2792 = vmatmul.bf16.gmra.mxu0 %v989
    %v2793 = vpop.f32.mrf.mxu0
    %v2794 = vadd.f32 0.0, %v2793
    %v2795 = vpop.f32.mrf.mxu0
    %v2796 = vadd.f32 0.0, %v2795
    %2797 = vmatmul.bf16.gmra.mxu0 %v992
    %v2798 = vpop.f32.mrf.mxu0
    %v2799 = vadd.f32 0.0, %v2798
    %v2800 = vpop.f32.mrf.mxu0
    %v2801 = vadd.f32 0.0, %v2800
    %2802 = vdwg.mxu0
    %2803 = vmatpush.bf16.msra.mxu0 %v2047
    %2804 = vmatpush.bf16.msra.mxu0 %v2038
    %2805 = vmatpush.bf16.msra.mxu0 %v2029
    %2806 = vmatpush.bf16.msra.mxu0 %v2020
    %2807 = vmatpush.bf16.msra.mxu0 %v2011
    %2808 = vmatpush.bf16.msra.mxu0 %v2002
    %2809 = vmatpush.bf16.msra.mxu0 %v1993
    %2810 = vmatpush.bf16.msra.mxu0 %v1984
    %2811 = vmatmul.bf16.gmra.mxu0 %v984
    %v2812 = vpop.f32.mrf.mxu0
    %v2813 = vadd.f32 %v2784, %v2812
    %v2814 = vpop.f32.mrf.mxu0
    %v2815 = vadd.f32 %v2786, %v2814
    %2816 = vmatmul.bf16.gmra.mxu0 %v987
    %v2817 = vpop.f32.mrf.mxu0
    %v2818 = vadd.f32 %v2789, %v2817
    %v2819 = vpop.f32.mrf.mxu0
    %v2820 = vadd.f32 %v2791, %v2819
    %2821 = vmatmul.bf16.gmra.mxu0 %v990
    %v2822 = vpop.f32.mrf.mxu0
    %v2823 = vadd.f32 %v2794, %v2822
    %v2824 = vpop.f32.mrf.mxu0
    %v2825 = vadd.f32 %v2796, %v2824
    %2826 = vmatmul.bf16.gmra.mxu0 %v993
    %v2827 = vpop.f32.mrf.mxu0
    %v2828 = vadd.f32 %v2799, %v2827
    %v2829 = vpop.f32.mrf.mxu0
    %v2830 = vadd.f32 %v2801, %v2829
    %2831 = vdwg.mxu0
    %2832 = vmatpush.bf16.msra.mxu0 %v2119
    %2833 = vmatpush.bf16.msra.mxu0 %v2110
    %2834 = vmatpush.bf16.msra.mxu0 %v2101
    %2835 = vmatpush.bf16.msra.mxu0 %v2092
    %2836 = vmatpush.bf16.msra.mxu0 %v2083
    %2837 = vmatpush.bf16.msra.mxu0 %v2074
    %2838 = vmatpush.bf16.msra.mxu0 %v2065
    %2839 = vmatpush.bf16.msra.mxu0 %v2056
    %2840 = vmatmul.bf16.gmra.mxu0 %v985
    %v2841 = vpop.f32.mrf.mxu0
    %v2842 = vadd.f32 %v2813, %v2841
    %v2843 = vpop.f32.mrf.mxu0
    %v2844 = vadd.f32 %v2815, %v2843
    %2845 = vmatmul.bf16.gmra.mxu0 %v988
    %v2846 = vpop.f32.mrf.mxu0
    %v2847 = vadd.f32 %v2818, %v2846
    %v2848 = vpop.f32.mrf.mxu0
    %v2849 = vadd.f32 %v2820, %v2848
    %2850 = vmatmul.bf16.gmra.mxu0 %v991
    %v2851 = vpop.f32.mrf.mxu0
    %v2852 = vadd.f32 %v2823, %v2851
    %v2853 = vpop.f32.mrf.mxu0
    %v2854 = vadd.f32 %v2825, %v2853
    %2855 = vmatmul.bf16.gmra.mxu0 %v994
    %v2856 = vpop.f32.mrf.mxu0
    %v2857 = vadd.f32 %v2828, %v2856
    %v2858 = vpop.f32.mrf.mxu0
    %v2859 = vadd.f32 %v2830, %v2858
    %2860 = vdwg.mxu0
    %2861 = vmatpush.bf16.msra.mxu0 %v1976
    %2862 = vmatpush.bf16.msra.mxu0 %v1967
    %2863 = vmatpush.bf16.msra.mxu0 %v1958
    %2864 = vmatpush.bf16.msra.mxu0 %v1949
    %2865 = vmatpush.bf16.msra.mxu0 %v1940
    %2866 = vmatpush.bf16.msra.mxu0 %v1931
    %2867 = vmatpush.bf16.msra.mxu0 %v1922
    %2868 = vmatpush.bf16.msra.mxu0 %v1913
    %2869 = vmatmul.bf16.gmra.mxu0 %v983
    %v2870 = vpop.f32.mrf.mxu0
    %v2871 = vadd.f32 0.0, %v2870
    %v2872 = vpop.f32.mrf.mxu0
    %v2873 = vadd.f32 0.0, %v2872
    %2874 = vmatmul.bf16.gmra.mxu0 %v986
    %v2875 = vpop.f32.mrf.mxu0
    %v2876 = vadd.f32 0.0, %v2875
    %v2877 = vpop.f32.mrf.mxu0
    %v2878 = vadd.f32 0.0, %v2877
    %2879 = vmatmul.bf16.gmra.mxu0 %v989
    %v2880 = vpop.f32.mrf.mxu0
    %v2881 = vadd.f32 0.0, %v2880
    %v2882 = vpop.f32.mrf.mxu0
    %v2883 = vadd.f32 0.0, %v2882
    %2884 = vmatmul.bf16.gmra.mxu0 %v992
    %v2885 = vpop.f32.mrf.mxu0
    %v2886 = vadd.f32 0.0, %v2885
    %v2887 = vpop.f32.mrf.mxu0
    %v2888 = vadd.f32 0.0, %v2887
    %2889 = vdwg.mxu0
    %2890 = vmatpush.bf16.msra.mxu0 %v2048
    %2891 = vmatpush.bf16.msra.mxu0 %v2039
    %2892 = vmatpush.bf16.msra.mxu0 %v2030
    %2893 = vmatpush.bf16.msra.mxu0 %v2021
    %2894 = vmatpush.bf16.msra.mxu0 %v2012
    %2895 = vmatpush.bf16.msra.mxu0 %v2003
    %2896 = vmatpush.bf16.msra.mxu0 %v1994
    %2897 = vmatpush.bf16.msra.mxu0 %v1985
    %2898 = vmatmul.bf16.gmra.mxu0 %v984
    %v2899 = vpop.f32.mrf.mxu0
    %v2900 = vadd.f32 %v2871, %v2899
    %v2901 = vpop.f32.mrf.mxu0
    %v2902 = vadd.f32 %v2873, %v2901
    %2903 = vmatmul.bf16.gmra.mxu0 %v987
    %v2904 = vpop.f32.mrf.mxu0
    %v2905 = vadd.f32 %v2876, %v2904
    %v2906 = vpop.f32.mrf.mxu0
    %v2907 = vadd.f32 %v2878, %v2906
    %2908 = vmatmul.bf16.gmra.mxu0 %v990
    %v2909 = vpop.f32.mrf.mxu0
    %v2910 = vadd.f32 %v2881, %v2909
    %v2911 = vpop.f32.mrf.mxu0
    %v2912 = vadd.f32 %v2883, %v2911
    %2913 = vmatmul.bf16.gmra.mxu0 %v993
    %v2914 = vpop.f32.mrf.mxu0
    %v2915 = vadd.f32 %v2886, %v2914
    %v2916 = vpop.f32.mrf.mxu0
    %v2917 = vadd.f32 %v2888, %v2916
    %2918 = vdwg.mxu0
    %2919 = vmatpush.bf16.msra.mxu0 %v2120
    %2920 = vmatpush.bf16.msra.mxu0 %v2111
    %2921 = vmatpush.bf16.msra.mxu0 %v2102
    %2922 = vmatpush.bf16.msra.mxu0 %v2093
    %2923 = vmatpush.bf16.msra.mxu0 %v2084
    %2924 = vmatpush.bf16.msra.mxu0 %v2075
    %2925 = vmatpush.bf16.msra.mxu0 %v2066
    %2926 = vmatpush.bf16.msra.mxu0 %v2057
    %2927 = vmatmul.bf16.gmra.mxu0 %v985
    %v2928 = vpop.f32.mrf.mxu0
    %v2929 = vadd.f32 %v2900, %v2928
    %v2930 = vpop.f32.mrf.mxu0
    %v2931 = vadd.f32 %v2902, %v2930
    %2932 = vmatmul.bf16.gmra.mxu0 %v988
    %v2933 = vpop.f32.mrf.mxu0
    %v2934 = vadd.f32 %v2905, %v2933
    %v2935 = vpop.f32.mrf.mxu0
    %v2936 = vadd.f32 %v2907, %v2935
    %2937 = vmatmul.bf16.gmra.mxu0 %v991
    %v2938 = vpop.f32.mrf.mxu0
    %v2939 = vadd.f32 %v2910, %v2938
    %v2940 = vpop.f32.mrf.mxu0
    %v2941 = vadd.f32 %v2912, %v2940
    %2942 = vmatmul.bf16.gmra.mxu0 %v994
    %v2943 = vpop.f32.mrf.mxu0
    %v2944 = vadd.f32 %v2915, %v2943
    %v2945 = vpop.f32.mrf.mxu0
    %v2946 = vadd.f32 %v2917, %v2945
    %2947 = vdwg.mxu0
    %2948 = vmatpush.bf16.msra.mxu0 %v1977
    %2949 = vmatpush.bf16.msra.mxu0 %v1968
    %2950 = vmatpush.bf16.msra.mxu0 %v1959
    %2951 = vmatpush.bf16.msra.mxu0 %v1950
    %2952 = vmatpush.bf16.msra.mxu0 %v1941
    %2953 = vmatpush.bf16.msra.mxu0 %v1932
    %2954 = vmatpush.bf16.msra.mxu0 %v1923
    %2955 = vmatpush.bf16.msra.mxu0 %v1914
    %2956 = vmatmul.bf16.gmra.mxu0 %v983
    %v2957 = vpop.f32.mrf.mxu0
    %v2958 = vadd.f32 0.0, %v2957
    %v2959 = vpop.f32.mrf.mxu0
    %v2960 = vadd.f32 0.0, %v2959
    %2961 = vmatmul.bf16.gmra.mxu0 %v986
    %v2962 = vpop.f32.mrf.mxu0
    %v2963 = vadd.f32 0.0, %v2962
    %v2964 = vpop.f32.mrf.mxu0
    %v2965 = vadd.f32 0.0, %v2964
    %2966 = vmatmul.bf16.gmra.mxu0 %v989
    %v2967 = vpop.f32.mrf.mxu0
    %v2968 = vadd.f32 0.0, %v2967
    %v2969 = vpop.f32.mrf.mxu0
    %v2970 = vadd.f32 0.0, %v2969
    %2971 = vmatmul.bf16.gmra.mxu0 %v992
    %v2972 = vpop.f32.mrf.mxu0
    %v2973 = vadd.f32 0.0, %v2972
    %v2974 = vpop.f32.mrf.mxu0
    %v2975 = vadd.f32 0.0, %v2974
    %2976 = vdwg.mxu0
    %2977 = vmatpush.bf16.msra.mxu0 %v2049
    %2978 = vmatpush.bf16.msra.mxu0 %v2040
    %2979 = vmatpush.bf16.msra.mxu0 %v2031
    %2980 = vmatpush.bf16.msra.mxu0 %v2022
    %2981 = vmatpush.bf16.msra.mxu0 %v2013
    %2982 = vmatpush.bf16.msra.mxu0 %v2004
    %2983 = vmatpush.bf16.msra.mxu0 %v1995
    %2984 = vmatpush.bf16.msra.mxu0 %v1986
    %2985 = vmatmul.bf16.gmra.mxu0 %v984
    %v2986 = vpop.f32.mrf.mxu0
    %v2987 = vadd.f32 %v2958, %v2986
    %v2988 = vpop.f32.mrf.mxu0
    %v2989 = vadd.f32 %v2960, %v2988
    %2990 = vmatmul.bf16.gmra.mxu0 %v987
    %v2991 = vpop.f32.mrf.mxu0
    %v2992 = vadd.f32 %v2963, %v2991
    %v2993 = vpop.f32.mrf.mxu0
    %v2994 = vadd.f32 %v2965, %v2993
    %2995 = vmatmul.bf16.gmra.mxu0 %v990
    %v2996 = vpop.f32.mrf.mxu0
    %v2997 = vadd.f32 %v2968, %v2996
    %v2998 = vpop.f32.mrf.mxu0
    %v2999 = vadd.f32 %v2970, %v2998
    %3000 = vmatmul.bf16.gmra.mxu0 %v993
    %v3001 = vpop.f32.mrf.mxu0
    %v3002 = vadd.f32 %v2973, %v3001
    %v3003 = vpop.f32.mrf.mxu0
    %v3004 = vadd.f32 %v2975, %v3003
    %3005 = vdwg.mxu0
    %3006 = vmatpush.bf16.msra.mxu0 %v2121
    %3007 = vmatpush.bf16.msra.mxu0 %v2112
    %3008 = vmatpush.bf16.msra.mxu0 %v2103
    %3009 = vmatpush.bf16.msra.mxu0 %v2094
    %3010 = vmatpush.bf16.msra.mxu0 %v2085
    %3011 = vmatpush.bf16.msra.mxu0 %v2076
    %3012 = vmatpush.bf16.msra.mxu0 %v2067
    %3013 = vmatpush.bf16.msra.mxu0 %v2058
    %3014 = vmatmul.bf16.gmra.mxu0 %v985
    %v3015 = vpop.f32.mrf.mxu0
    %v3016 = vadd.f32 %v2987, %v3015
    %v3017 = vpop.f32.mrf.mxu0
    %v3018 = vadd.f32 %v2989, %v3017
    %3019 = vmatmul.bf16.gmra.mxu0 %v988
    %v3020 = vpop.f32.mrf.mxu0
    %v3021 = vadd.f32 %v2992, %v3020
    %v3022 = vpop.f32.mrf.mxu0
    %v3023 = vadd.f32 %v2994, %v3022
    %3024 = vmatmul.bf16.gmra.mxu0 %v991
    %v3025 = vpop.f32.mrf.mxu0
    %v3026 = vadd.f32 %v2997, %v3025
    %v3027 = vpop.f32.mrf.mxu0
    %v3028 = vadd.f32 %v2999, %v3027
    %3029 = vmatmul.bf16.gmra.mxu0 %v994
    %v3030 = vpop.f32.mrf.mxu0
    %v3031 = vadd.f32 %v3002, %v3030
    %v3032 = vpop.f32.mrf.mxu0
    %v3033 = vadd.f32 %v3004, %v3032
    %3034 = vdwg.mxu0
    %3035 = vmatpush.bf16.msra.mxu0 %v1978
    %3036 = vmatpush.bf16.msra.mxu0 %v1969
    %3037 = vmatpush.bf16.msra.mxu0 %v1960
    %3038 = vmatpush.bf16.msra.mxu0 %v1951
    %3039 = vmatpush.bf16.msra.mxu0 %v1942
    %3040 = vmatpush.bf16.msra.mxu0 %v1933
    %3041 = vmatpush.bf16.msra.mxu0 %v1924
    %3042 = vmatpush.bf16.msra.mxu0 %v1915
    %3043 = vmatmul.bf16.gmra.mxu0 %v983
    %v3044 = vpop.f32.mrf.mxu0
    %v3045 = vadd.f32 0.0, %v3044
    %v3046 = vpop.f32.mrf.mxu0
    %v3047 = vadd.f32 0.0, %v3046
    %3048 = vmatmul.bf16.gmra.mxu0 %v986
    %v3049 = vpop.f32.mrf.mxu0
    %v3050 = vadd.f32 0.0, %v3049
    %v3051 = vpop.f32.mrf.mxu0
    %v3052 = vadd.f32 0.0, %v3051
    %3053 = vmatmul.bf16.gmra.mxu0 %v989
    %v3054 = vpop.f32.mrf.mxu0
    %v3055 = vadd.f32 0.0, %v3054
    %v3056 = vpop.f32.mrf.mxu0
    %v3057 = vadd.f32 0.0, %v3056
    %3058 = vmatmul.bf16.gmra.mxu0 %v992
    %v3059 = vpop.f32.mrf.mxu0
    %v3060 = vadd.f32 0.0, %v3059
    %v3061 = vpop.f32.mrf.mxu0
    %v3062 = vadd.f32 0.0, %v3061
    %3063 = vdwg.mxu0
    %3064 = vmatpush.bf16.msra.mxu0 %v2050
    %3065 = vmatpush.bf16.msra.mxu0 %v2041
    %3066 = vmatpush.bf16.msra.mxu0 %v2032
    %3067 = vmatpush.bf16.msra.mxu0 %v2023
    %3068 = vmatpush.bf16.msra.mxu0 %v2014
    %3069 = vmatpush.bf16.msra.mxu0 %v2005
    %3070 = vmatpush.bf16.msra.mxu0 %v1996
    %3071 = vmatpush.bf16.msra.mxu0 %v1987
    %3072 = vmatmul.bf16.gmra.mxu0 %v984
    %v3073 = vpop.f32.mrf.mxu0
    %v3074 = vadd.f32 %v3045, %v3073
    %v3075 = vpop.f32.mrf.mxu0
    %v3076 = vadd.f32 %v3047, %v3075
    %3077 = vmatmul.bf16.gmra.mxu0 %v987
    %v3078 = vpop.f32.mrf.mxu0
    %v3079 = vadd.f32 %v3050, %v3078
    %v3080 = vpop.f32.mrf.mxu0
    %v3081 = vadd.f32 %v3052, %v3080
    %3082 = vmatmul.bf16.gmra.mxu0 %v990
    %v3083 = vpop.f32.mrf.mxu0
    %v3084 = vadd.f32 %v3055, %v3083
    %v3085 = vpop.f32.mrf.mxu0
    %v3086 = vadd.f32 %v3057, %v3085
    %3087 = vmatmul.bf16.gmra.mxu0 %v993
    %v3088 = vpop.f32.mrf.mxu0
    %v3089 = vadd.f32 %v3060, %v3088
    %v3090 = vpop.f32.mrf.mxu0
    %v3091 = vadd.f32 %v3062, %v3090
    %3092 = vdwg.mxu0
    %3093 = vmatpush.bf16.msra.mxu0 %v2122
    %3094 = vmatpush.bf16.msra.mxu0 %v2113
    %3095 = vmatpush.bf16.msra.mxu0 %v2104
    %3096 = vmatpush.bf16.msra.mxu0 %v2095
    %3097 = vmatpush.bf16.msra.mxu0 %v2086
    %3098 = vmatpush.bf16.msra.mxu0 %v2077
    %3099 = vmatpush.bf16.msra.mxu0 %v2068
    %3100 = vmatpush.bf16.msra.mxu0 %v2059
    %3101 = vmatmul.bf16.gmra.mxu0 %v985
    %v3102 = vpop.f32.mrf.mxu0
    %v3103 = vadd.f32 %v3074, %v3102
    %v3104 = vpop.f32.mrf.mxu0
    %v3105 = vadd.f32 %v3076, %v3104
    %3106 = vmatmul.bf16.gmra.mxu0 %v988
    %v3107 = vpop.f32.mrf.mxu0
    %v3108 = vadd.f32 %v3079, %v3107
    %v3109 = vpop.f32.mrf.mxu0
    %v3110 = vadd.f32 %v3081, %v3109
    %3111 = vmatmul.bf16.gmra.mxu0 %v991
    %v3112 = vpop.f32.mrf.mxu0
    %v3113 = vadd.f32 %v3084, %v3112
    %v3114 = vpop.f32.mrf.mxu0
    %v3115 = vadd.f32 %v3086, %v3114
    %3116 = vmatmul.bf16.gmra.mxu0 %v994
    %v3117 = vpop.f32.mrf.mxu0
    %v3118 = vadd.f32 %v3089, %v3117
    %v3119 = vpop.f32.mrf.mxu0
    %v3120 = vadd.f32 %v3091, %v3119
    %3121 = vdwg.mxu0
    %v3362 = vunpack.c.l.b16 %v743
    %v3363 = vunpack.c.h.b16 %v743
    %v3364 = vunpack.c.l.b16 %v744
    %v3365 = vunpack.c.h.b16 %v744
    %v3366 = vunpack.c.l.b16 %v745
    %v3367 = vunpack.c.h.b16 %v745
    %v3368 = vunpack.c.l.b16 %v746
    %v3369 = vunpack.c.h.b16 %v746
    %v3370 = vunpack.c.l.b16 %v747
    %v3371 = vunpack.c.l.b16 %v748
    %v3372 = vunpack.c.h.b16 %v748
    %v3373 = vunpack.c.l.b16 %v749
    %v3374 = vunpack.c.h.b16 %v749
    %v3375 = vunpack.c.l.b16 %v750
    %v3376 = vunpack.c.h.b16 %v750
    %v3377 = vunpack.c.l.b16 %v751
    %v3378 = vunpack.c.h.b16 %v751
    %v3379 = vunpack.c.l.b16 %v752
    %v3380 = vunpack.c.l.b16 %v753
    %v3381 = vunpack.c.h.b16 %v753
    %v3382 = vunpack.c.l.b16 %v754
    %v3383 = vunpack.c.h.b16 %v754
    %v3384 = vunpack.c.l.b16 %v755
    %v3385 = vunpack.c.h.b16 %v755
    %v3386 = vunpack.c.l.b16 %v756
    %v3387 = vunpack.c.h.b16 %v756
    %v3388 = vunpack.c.l.b16 %v757
    %v3389 = vunpack.c.l.b16 %v758
    %v3390 = vunpack.c.h.b16 %v758
    %v3391 = vunpack.c.l.b16 %v759
    %v3392 = vunpack.c.h.b16 %v759
    %v3393 = vunpack.c.l.b16 %v760
    %v3394 = vunpack.c.h.b16 %v760
    %v3395 = vunpack.c.l.b16 %v761
    %v3396 = vunpack.c.h.b16 %v761
    %v3397 = vunpack.c.l.b16 %v762
    %v3398 = vunpack.c.l.b16 %v763
    %v3399 = vunpack.c.h.b16 %v763
    %v3400 = vunpack.c.l.b16 %v764
    %v3401 = vunpack.c.h.b16 %v764
    %v3402 = vunpack.c.l.b16 %v765
    %v3403 = vunpack.c.h.b16 %v765
    %v3404 = vunpack.c.l.b16 %v766
    %v3405 = vunpack.c.h.b16 %v766
    %v3406 = vunpack.c.l.b16 %v767
    %v3407 = vunpack.c.l.b16 %v768
    %v3408 = vunpack.c.h.b16 %v768
    %v3409 = vunpack.c.l.b16 %v769
    %v3410 = vunpack.c.h.b16 %v769
    %v3411 = vunpack.c.l.b16 %v770
    %v3412 = vunpack.c.h.b16 %v770
    %v3413 = vunpack.c.l.b16 %v771
    %v3414 = vunpack.c.h.b16 %v771
    %v3415 = vunpack.c.l.b16 %v772
    %v3416 = vunpack.c.l.b16 %v773
    %v3417 = vunpack.c.h.b16 %v773
    %v3418 = vunpack.c.l.b16 %v774
    %v3419 = vunpack.c.h.b16 %v774
    %v3420 = vunpack.c.l.b16 %v775
    %v3421 = vunpack.c.h.b16 %v775
    %v3422 = vunpack.c.l.b16 %v776
    %v3423 = vunpack.c.h.b16 %v776
    %v3424 = vunpack.c.l.b16 %v777
    %v3425 = vunpack.c.l.b16 %v778
    %v3426 = vunpack.c.h.b16 %v778
    %v3427 = vunpack.c.l.b16 %v779
    %v3428 = vunpack.c.h.b16 %v779
    %v3429 = vunpack.c.l.b16 %v780
    %v3430 = vunpack.c.h.b16 %v780
    %v3431 = vunpack.c.l.b16 %v781
    %v3432 = vunpack.c.h.b16 %v781
    %v3433 = vunpack.c.l.b16 %v782
    %v3434 = vunpack.c.l.b16 %v783
    %v3435 = vunpack.c.h.b16 %v783
    %v3436 = vunpack.c.l.b16 %v784
    %v3437 = vunpack.c.h.b16 %v784
    %v3438 = vunpack.c.l.b16 %v785
    %v3439 = vunpack.c.h.b16 %v785
    %v3440 = vunpack.c.l.b16 %v786
    %v3441 = vunpack.c.h.b16 %v786
    %v3442 = vunpack.c.l.b16 %v787
    %v3443 = vunpack.c.l.b16 %v788
    %v3444 = vunpack.c.h.b16 %v788
    %v3445 = vunpack.c.l.b16 %v789
    %v3446 = vunpack.c.h.b16 %v789
    %v3447 = vunpack.c.l.b16 %v790
    %v3448 = vunpack.c.h.b16 %v790
    %v3449 = vunpack.c.l.b16 %v791
    %v3450 = vunpack.c.h.b16 %v791
    %v3451 = vunpack.c.l.b16 %v792
    %v3452 = vunpack.c.l.b16 %v793
    %v3453 = vunpack.c.h.b16 %v793
    %v3454 = vunpack.c.l.b16 %v794
    %v3455 = vunpack.c.h.b16 %v794
    %v3456 = vunpack.c.l.b16 %v795
    %v3457 = vunpack.c.h.b16 %v795
    %v3458 = vunpack.c.l.b16 %v796
    %v3459 = vunpack.c.h.b16 %v796
    %v3460 = vunpack.c.l.b16 %v797
    %v3461 = vunpack.c.l.b16 %v798
    %v3462 = vunpack.c.h.b16 %v798
    %v3463 = vunpack.c.l.b16 %v799
    %v3464 = vunpack.c.h.b16 %v799
    %v3465 = vunpack.c.l.b16 %v800
    %v3466 = vunpack.c.h.b16 %v800
    %v3467 = vunpack.c.l.b16 %v801
    %v3468 = vunpack.c.h.b16 %v801
    %v3469 = vunpack.c.l.b16 %v802
    %v3470 = vunpack.c.l.b16 %v803
    %v3471 = vunpack.c.h.b16 %v803
    %v3472 = vunpack.c.l.b16 %v804
    %v3473 = vunpack.c.h.b16 %v804
    %v3474 = vunpack.c.l.b16 %v805
    %v3475 = vunpack.c.h.b16 %v805
    %v3476 = vunpack.c.l.b16 %v806
    %v3477 = vunpack.c.h.b16 %v806
    %v3478 = vunpack.c.l.b16 %v807
    %v3479 = vunpack.c.l.b16 %v808
    %v3480 = vunpack.c.h.b16 %v808
    %v3481 = vunpack.c.l.b16 %v809
    %v3482 = vunpack.c.h.b16 %v809
    %v3483 = vunpack.c.l.b16 %v810
    %v3484 = vunpack.c.h.b16 %v810
    %v3485 = vunpack.c.l.b16 %v811
    %v3486 = vunpack.c.h.b16 %v811
    %v3487 = vunpack.c.l.b16 %v812
    %v3488 = vunpack.c.l.b16 %v813
    %v3489 = vunpack.c.h.b16 %v813
    %v3490 = vunpack.c.l.b16 %v814
    %v3491 = vunpack.c.h.b16 %v814
    %v3492 = vunpack.c.l.b16 %v815
    %v3493 = vunpack.c.h.b16 %v815
    %v3494 = vunpack.c.l.b16 %v816
    %v3495 = vunpack.c.h.b16 %v816
    %v3496 = vunpack.c.l.b16 %v817
    %v3497 = vunpack.c.l.b16 %v818
    %v3498 = vunpack.c.h.b16 %v818
    %v3499 = vunpack.c.l.b16 %v819
    %v3500 = vunpack.c.h.b16 %v819
    %v3501 = vunpack.c.l.b16 %v820
    %v3502 = vunpack.c.h.b16 %v820
    %v3503 = vunpack.c.l.b16 %v821
    %v3504 = vunpack.c.h.b16 %v821
    %v3505 = vunpack.c.l.b16 %v822
    %v3506 = vunpack.c.l.b16 %v823
    %v3507 = vunpack.c.h.b16 %v823
    %v3508 = vunpack.c.l.b16 %v824
    %v3509 = vunpack.c.h.b16 %v824
    %v3510 = vunpack.c.l.b16 %v825
    %v3511 = vunpack.c.h.b16 %v825
    %v3512 = vunpack.c.l.b16 %v826
    %v3513 = vunpack.c.h.b16 %v826
    %v3514 = vunpack.c.l.b16 %v827
    %v3515 = vunpack.c.l.b16 %v828
    %v3516 = vunpack.c.h.b16 %v828
    %v3517 = vunpack.c.l.b16 %v829
    %v3518 = vunpack.c.h.b16 %v829
    %v3519 = vunpack.c.l.b16 %v830
    %v3520 = vunpack.c.h.b16 %v830
    %v3521 = vunpack.c.l.b16 %v831
    %v3522 = vunpack.c.h.b16 %v831
    %v3523 = vunpack.c.l.b16 %v832
    %v3524 = vunpack.c.l.b16 %v833
    %v3525 = vunpack.c.h.b16 %v833
    %v3526 = vunpack.c.l.b16 %v834
    %v3527 = vunpack.c.h.b16 %v834
    %v3528 = vunpack.c.l.b16 %v835
    %v3529 = vunpack.c.h.b16 %v835
    %v3530 = vunpack.c.l.b16 %v836
    %v3531 = vunpack.c.h.b16 %v836
    %v3532 = vunpack.c.l.b16 %v837
    %v3533 = vunpack.c.l.b16 %v838
    %v3534 = vunpack.c.h.b16 %v838
    %v3535 = vunpack.c.l.b16 %v839
    %v3536 = vunpack.c.h.b16 %v839
    %v3537 = vunpack.c.l.b16 %v840
    %v3538 = vunpack.c.h.b16 %v840
    %v3539 = vunpack.c.l.b16 %v841
    %v3540 = vunpack.c.h.b16 %v841
    %v3541 = vunpack.c.l.b16 %v842
    %v3542 = vunpack.c.l.b16 %v843
    %v3543 = vunpack.c.h.b16 %v843
    %v3544 = vunpack.c.l.b16 %v844
    %v3545 = vunpack.c.h.b16 %v844
    %v3546 = vunpack.c.l.b16 %v845
    %v3547 = vunpack.c.h.b16 %v845
    %v3548 = vunpack.c.l.b16 %v846
    %v3549 = vunpack.c.h.b16 %v846
    %v3550 = vunpack.c.l.b16 %v847
    %v3551 = vunpack.c.l.b16 %v848
    %v3552 = vunpack.c.h.b16 %v848
    %v3553 = vunpack.c.l.b16 %v849
    %v3554 = vunpack.c.h.b16 %v849
    %v3555 = vunpack.c.l.b16 %v850
    %v3556 = vunpack.c.h.b16 %v850
    %v3557 = vunpack.c.l.b16 %v851
    %v3558 = vunpack.c.h.b16 %v851
    %v3559 = vunpack.c.l.b16 %v852
    %v3560 = vunpack.c.l.b16 %v853
    %v3561 = vunpack.c.h.b16 %v853
    %v3562 = vunpack.c.l.b16 %v854
    %v3563 = vunpack.c.h.b16 %v854
    %v3564 = vunpack.c.l.b16 %v855
    %v3565 = vunpack.c.h.b16 %v855
    %v3566 = vunpack.c.l.b16 %v856
    %v3567 = vunpack.c.h.b16 %v856
    %v3568 = vunpack.c.l.b16 %v857
    %v3569 = vunpack.c.l.b16 %v858
    %v3570 = vunpack.c.h.b16 %v858
    %v3571 = vunpack.c.l.b16 %v859
    %v3572 = vunpack.c.h.b16 %v859
    %v3573 = vunpack.c.l.b16 %v860
    %v3574 = vunpack.c.h.b16 %v860
    %v3575 = vunpack.c.l.b16 %v861
    %v3576 = vunpack.c.h.b16 %v861
    %v3577 = vunpack.c.l.b16 %v862
    %v3578 = vunpack.c.l.b16 %v863
    %v3579 = vunpack.c.h.b16 %v863
    %v3580 = vunpack.c.l.b16 %v864
    %v3581 = vunpack.c.h.b16 %v864
    %v3582 = vunpack.c.l.b16 %v865
    %v3583 = vunpack.c.h.b16 %v865
    %v3584 = vunpack.c.l.b16 %v866
    %v3585 = vunpack.c.h.b16 %v866
    %v3586 = vunpack.c.l.b16 %v867
    %v3587 = vunpack.c.l.b16 %v868
    %v3588 = vunpack.c.h.b16 %v868
    %v3589 = vunpack.c.l.b16 %v869
    %v3590 = vunpack.c.h.b16 %v869
    %v3591 = vunpack.c.l.b16 %v870
    %v3592 = vunpack.c.h.b16 %v870
    %v3593 = vunpack.c.l.b16 %v871
    %v3594 = vunpack.c.h.b16 %v871
    %v3595 = vunpack.c.l.b16 %v872
    %v3596 = vunpack.c.l.b16 %v873
    %v3597 = vunpack.c.h.b16 %v873
    %v3598 = vunpack.c.l.b16 %v874
    %v3599 = vunpack.c.h.b16 %v874
    %v3600 = vunpack.c.l.b16 %v875
    %v3601 = vunpack.c.h.b16 %v875
    %v3602 = vunpack.c.l.b16 %v876
    %v3603 = vunpack.c.h.b16 %v876
    %v3604 = vunpack.c.l.b16 %v877
    %v3605 = vunpack.c.l.b16 %v878
    %v3606 = vunpack.c.h.b16 %v878
    %v3607 = vunpack.c.l.b16 %v879
    %v3608 = vunpack.c.h.b16 %v879
    %v3609 = vunpack.c.l.b16 %v880
    %v3610 = vunpack.c.h.b16 %v880
    %v3611 = vunpack.c.l.b16 %v881
    %v3612 = vunpack.c.h.b16 %v881
    %v3613 = vunpack.c.l.b16 %v882
    %v3614 = vunpack.c.l.b16 %v883
    %v3615 = vunpack.c.h.b16 %v883
    %v3616 = vunpack.c.l.b16 %v884
    %v3617 = vunpack.c.h.b16 %v884
    %v3618 = vunpack.c.l.b16 %v885
    %v3619 = vunpack.c.h.b16 %v885
    %v3620 = vunpack.c.l.b16 %v886
    %v3621 = vunpack.c.h.b16 %v886
    %v3622 = vunpack.c.l.b16 %v887
    %v3623 = vunpack.c.l.b16 %v888
    %v3624 = vunpack.c.h.b16 %v888
    %v3625 = vunpack.c.l.b16 %v889
    %v3626 = vunpack.c.h.b16 %v889
    %v3627 = vunpack.c.l.b16 %v890
    %v3628 = vunpack.c.h.b16 %v890
    %v3629 = vunpack.c.l.b16 %v891
    %v3630 = vunpack.c.h.b16 %v891
    %v3631 = vunpack.c.l.b16 %v892
    %v3632 = vunpack.c.l.b16 %v893
    %v3633 = vunpack.c.h.b16 %v893
    %v3634 = vunpack.c.l.b16 %v894
    %v3635 = vunpack.c.h.b16 %v894
    %v3636 = vunpack.c.l.b16 %v895
    %v3637 = vunpack.c.h.b16 %v895
    %v3638 = vunpack.c.l.b16 %v896
    %v3639 = vunpack.c.h.b16 %v896
    %v3640 = vunpack.c.l.b16 %v897
    %v3641 = vunpack.c.l.b16 %v898
    %v3642 = vunpack.c.h.b16 %v898
    %v3643 = vunpack.c.l.b16 %v899
    %v3644 = vunpack.c.h.b16 %v899
    %v3645 = vunpack.c.l.b16 %v900
    %v3646 = vunpack.c.h.b16 %v900
    %v3647 = vunpack.c.l.b16 %v901
    %v3648 = vunpack.c.h.b16 %v901
    %v3649 = vunpack.c.l.b16 %v902
    %v3650 = vunpack.c.l.b16 %v903
    %v3651 = vunpack.c.h.b16 %v903
    %v3652 = vunpack.c.l.b16 %v904
    %v3653 = vunpack.c.h.b16 %v904
    %v3654 = vunpack.c.l.b16 %v905
    %v3655 = vunpack.c.h.b16 %v905
    %v3656 = vunpack.c.l.b16 %v906
    %v3657 = vunpack.c.h.b16 %v906
    %v3658 = vunpack.c.l.b16 %v907
    %v3659 = vunpack.c.l.b16 %v908
    %v3660 = vunpack.c.h.b16 %v908
    %v3661 = vunpack.c.l.b16 %v909
    %v3662 = vunpack.c.h.b16 %v909
    %v3663 = vunpack.c.l.b16 %v910
    %v3664 = vunpack.c.h.b16 %v910
    %v3665 = vunpack.c.l.b16 %v911
    %v3666 = vunpack.c.h.b16 %v911
    %v3667 = vunpack.c.l.b16 %v912
    %v3668 = vunpack.c.l.b16 %v913
    %v3669 = vunpack.c.h.b16 %v913
    %v3670 = vunpack.c.l.b16 %v914
    %v3671 = vunpack.c.h.b16 %v914
    %v3672 = vunpack.c.l.b16 %v915
    %v3673 = vunpack.c.h.b16 %v915
    %v3674 = vunpack.c.l.b16 %v916
    %v3675 = vunpack.c.h.b16 %v916
    %v3676 = vunpack.c.l.b16 %v917
    %v3677 = vunpack.c.l.b16 %v918
    %v3678 = vunpack.c.h.b16 %v918
    %v3679 = vunpack.c.l.b16 %v919
    %v3680 = vunpack.c.h.b16 %v919
    %v3681 = vunpack.c.l.b16 %v920
    %v3682 = vunpack.c.h.b16 %v920
    %v3683 = vunpack.c.l.b16 %v921
    %v3684 = vunpack.c.h.b16 %v921
    %v3685 = vunpack.c.l.b16 %v922
    %v3686 = vunpack.c.l.b16 %v923
    %v3687 = vunpack.c.h.b16 %v923
    %v3688 = vunpack.c.l.b16 %v924
    %v3689 = vunpack.c.h.b16 %v924
    %v3690 = vunpack.c.l.b16 %v925
    %v3691 = vunpack.c.h.b16 %v925
    %v3692 = vunpack.c.l.b16 %v926
    %v3693 = vunpack.c.h.b16 %v926
    %v3694 = vunpack.c.l.b16 %v927
    %v3695 = vunpack.c.l.b16 %v928
    %v3696 = vunpack.c.h.b16 %v928
    %v3697 = vunpack.c.l.b16 %v929
    %v3698 = vunpack.c.h.b16 %v929
    %v3699 = vunpack.c.l.b16 %v930
    %v3700 = vunpack.c.h.b16 %v930
    %v3701 = vunpack.c.l.b16 %v931
    %v3702 = vunpack.c.h.b16 %v931
    %v3703 = vunpack.c.l.b16 %v932
    %v3704 = vunpack.c.l.b16 %v933
    %v3705 = vunpack.c.h.b16 %v933
    %v3706 = vunpack.c.l.b16 %v934
    %v3707 = vunpack.c.h.b16 %v934
    %v3708 = vunpack.c.l.b16 %v935
    %v3709 = vunpack.c.h.b16 %v935
    %v3710 = vunpack.c.l.b16 %v936
    %v3711 = vunpack.c.h.b16 %v936
    %v3712 = vunpack.c.l.b16 %v937
    %v3713 = vunpack.c.l.b16 %v938
    %v3714 = vunpack.c.h.b16 %v938
    %v3715 = vunpack.c.l.b16 %v939
    %v3716 = vunpack.c.h.b16 %v939
    %v3717 = vunpack.c.l.b16 %v940
    %v3718 = vunpack.c.h.b16 %v940
    %v3719 = vunpack.c.l.b16 %v941
    %v3720 = vunpack.c.h.b16 %v941
    %v3721 = vunpack.c.l.b16 %v942
    %v3722 = vunpack.c.l.b16 %v943
    %v3723 = vunpack.c.h.b16 %v943
    %v3724 = vunpack.c.l.b16 %v944
    %v3725 = vunpack.c.h.b16 %v944
    %v3726 = vunpack.c.l.b16 %v945
    %v3727 = vunpack.c.h.b16 %v945
    %v3728 = vunpack.c.l.b16 %v946
    %v3729 = vunpack.c.h.b16 %v946
    %v3730 = vunpack.c.l.b16 %v947
    %v3731 = vunpack.c.l.b16 %v948
    %v3732 = vunpack.c.h.b16 %v948
    %v3733 = vunpack.c.l.b16 %v949
    %v3734 = vunpack.c.h.b16 %v949
    %v3735 = vunpack.c.l.b16 %v950
    %v3736 = vunpack.c.h.b16 %v950
    %v3737 = vunpack.c.l.b16 %v951
    %v3738 = vunpack.c.h.b16 %v951
    %v3739 = vunpack.c.l.b16 %v952
    %v3740 = vunpack.c.l.b16 %v953
    %v3741 = vunpack.c.h.b16 %v953
    %v3742 = vunpack.c.l.b16 %v954
    %v3743 = vunpack.c.h.b16 %v954
    %v3744 = vunpack.c.l.b16 %v955
    %v3745 = vunpack.c.h.b16 %v955
    %v3746 = vunpack.c.l.b16 %v956
    %v3747 = vunpack.c.h.b16 %v956
    %v3748 = vunpack.c.l.b16 %v957
    %v3749 = vunpack.c.l.b16 %v958
    %v3750 = vunpack.c.h.b16 %v958
    %v3751 = vunpack.c.l.b16 %v959
    %v3752 = vunpack.c.h.b16 %v959
    %v3753 = vunpack.c.l.b16 %v960
    %v3754 = vunpack.c.h.b16 %v960
    %v3755 = vunpack.c.l.b16 %v961
    %v3756 = vunpack.c.h.b16 %v961
    %v3757 = vunpack.c.l.b16 %v962
    %v3758 = vunpack.c.l.b16 %v963
    %v3759 = vunpack.c.h.b16 %v963
    %v3760 = vunpack.c.l.b16 %v964
    %v3761 = vunpack.c.h.b16 %v964
    %v3762 = vunpack.c.l.b16 %v965
    %v3763 = vunpack.c.h.b16 %v965
    %v3764 = vunpack.c.l.b16 %v966
    %v3765 = vunpack.c.h.b16 %v966
    %v3766 = vunpack.c.l.b16 %v967
    %v3767 = vunpack.c.l.b16 %v968
    %v3768 = vunpack.c.h.b16 %v968
    %v3769 = vunpack.c.l.b16 %v969
    %v3770 = vunpack.c.h.b16 %v969
    %v3771 = vunpack.c.l.b16 %v970
    %v3772 = vunpack.c.h.b16 %v970
    %v3773 = vunpack.c.l.b16 %v971
    %v3774 = vunpack.c.h.b16 %v971
    %v3775 = vunpack.c.l.b16 %v972
    %v3776 = vunpack.c.l.b16 %v973
    %v3777 = vunpack.c.h.b16 %v973
    %v3778 = vunpack.c.l.b16 %v974
    %v3779 = vunpack.c.h.b16 %v974
    %v3780 = vunpack.c.l.b16 %v975
    %v3781 = vunpack.c.h.b16 %v975
    %v3782 = vunpack.c.l.b16 %v976
    %v3783 = vunpack.c.h.b16 %v976
    %v3784 = vunpack.c.l.b16 %v977
    %v3785 = vunpack.c.l.b16 %v978
    %v3786 = vunpack.c.h.b16 %v978
    %v3787 = vunpack.c.l.b16 %v979
    %v3788 = vunpack.c.h.b16 %v979
    %v3789 = vunpack.c.l.b16 %v980
    %v3790 = vunpack.c.h.b16 %v980
    %v3791 = vunpack.c.l.b16 %v981
    %v3792 = vunpack.c.h.b16 %v981
    %v3793 = vunpack.c.l.b16 %v982
    %v3794 = vpack.c.b16 %v3371, %v3362
    %v3795 = vpack.c.b16 %v3372, %v3363
    %v3796 = vpack.c.b16 %v3373, %v3364
    %v3797 = vpack.c.b16 %v3374, %v3365
    %v3798 = vpack.c.b16 %v3375, %v3366
    %v3799 = vpack.c.b16 %v3376, %v3367
    %v3800 = vpack.c.b16 %v3377, %v3368
    %v3801 = vpack.c.b16 %v3378, %v3369
    %v3802 = vpack.c.b16 %v3379, %v3370
    %v3803 = vpack.c.b16 %v3389, %v3380
    %v3804 = vpack.c.b16 %v3390, %v3381
    %v3805 = vpack.c.b16 %v3391, %v3382
    %v3806 = vpack.c.b16 %v3392, %v3383
    %v3807 = vpack.c.b16 %v3393, %v3384
    %v3808 = vpack.c.b16 %v3394, %v3385
    %v3809 = vpack.c.b16 %v3395, %v3386
    %v3810 = vpack.c.b16 %v3396, %v3387
    %v3811 = vpack.c.b16 %v3397, %v3388
    %v3812 = vpack.c.b16 %v3407, %v3398
    %v3813 = vpack.c.b16 %v3408, %v3399
    %v3814 = vpack.c.b16 %v3409, %v3400
    %v3815 = vpack.c.b16 %v3410, %v3401
    %v3816 = vpack.c.b16 %v3411, %v3402
    %v3817 = vpack.c.b16 %v3412, %v3403
    %v3818 = vpack.c.b16 %v3413, %v3404
    %v3819 = vpack.c.b16 %v3414, %v3405
    %v3820 = vpack.c.b16 %v3415, %v3406
    %v3821 = vpack.c.b16 %v3425, %v3416
    %v3822 = vpack.c.b16 %v3426, %v3417
    %v3823 = vpack.c.b16 %v3427, %v3418
    %v3824 = vpack.c.b16 %v3428, %v3419
    %v3825 = vpack.c.b16 %v3429, %v3420
    %v3826 = vpack.c.b16 %v3430, %v3421
    %v3827 = vpack.c.b16 %v3431, %v3422
    %v3828 = vpack.c.b16 %v3432, %v3423
    %v3829 = vpack.c.b16 %v3433, %v3424
    %v3830 = vpack.c.b16 %v3443, %v3434
    %v3831 = vpack.c.b16 %v3444, %v3435
    %v3832 = vpack.c.b16 %v3445, %v3436
    %v3833 = vpack.c.b16 %v3446, %v3437
    %v3834 = vpack.c.b16 %v3447, %v3438
    %v3835 = vpack.c.b16 %v3448, %v3439
    %v3836 = vpack.c.b16 %v3449, %v3440
    %v3837 = vpack.c.b16 %v3450, %v3441
    %v3838 = vpack.c.b16 %v3451, %v3442
    %v3839 = vpack.c.b16 %v3461, %v3452
    %v3840 = vpack.c.b16 %v3462, %v3453
    %v3841 = vpack.c.b16 %v3463, %v3454
    %v3842 = vpack.c.b16 %v3464, %v3455
    %v3843 = vpack.c.b16 %v3465, %v3456
    %v3844 = vpack.c.b16 %v3466, %v3457
    %v3845 = vpack.c.b16 %v3467, %v3458
    %v3846 = vpack.c.b16 %v3468, %v3459
    %v3847 = vpack.c.b16 %v3469, %v3460
    %v3848 = vpack.c.b16 %v3479, %v3470
    %v3849 = vpack.c.b16 %v3480, %v3471
    %v3850 = vpack.c.b16 %v3481, %v3472
    %v3851 = vpack.c.b16 %v3482, %v3473
    %v3852 = vpack.c.b16 %v3483, %v3474
    %v3853 = vpack.c.b16 %v3484, %v3475
    %v3854 = vpack.c.b16 %v3485, %v3476
    %v3855 = vpack.c.b16 %v3486, %v3477
    %v3856 = vpack.c.b16 %v3487, %v3478
    %v3857 = vpack.c.b16 %v3497, %v3488
    %v3858 = vpack.c.b16 %v3498, %v3489
    %v3859 = vpack.c.b16 %v3499, %v3490
    %v3860 = vpack.c.b16 %v3500, %v3491
    %v3861 = vpack.c.b16 %v3501, %v3492
    %v3862 = vpack.c.b16 %v3502, %v3493
    %v3863 = vpack.c.b16 %v3503, %v3494
    %v3864 = vpack.c.b16 %v3504, %v3495
    %v3865 = vpack.c.b16 %v3505, %v3496
    %v3866 = vpack.c.b16 %v3515, %v3506
    %v3867 = vpack.c.b16 %v3516, %v3507
    %v3868 = vpack.c.b16 %v3517, %v3508
    %v3869 = vpack.c.b16 %v3518, %v3509
    %v3870 = vpack.c.b16 %v3519, %v3510
    %v3871 = vpack.c.b16 %v3520, %v3511
    %v3872 = vpack.c.b16 %v3521, %v3512
    %v3873 = vpack.c.b16 %v3522, %v3513
    %v3874 = vpack.c.b16 %v3523, %v3514
    %v3875 = vpack.c.b16 %v3533, %v3524
    %v3876 = vpack.c.b16 %v3534, %v3525
    %v3877 = vpack.c.b16 %v3535, %v3526
    %v3878 = vpack.c.b16 %v3536, %v3527
    %v3879 = vpack.c.b16 %v3537, %v3528
    %v3880 = vpack.c.b16 %v3538, %v3529
    %v3881 = vpack.c.b16 %v3539, %v3530
    %v3882 = vpack.c.b16 %v3540, %v3531
    %v3883 = vpack.c.b16 %v3541, %v3532
    %v3884 = vpack.c.b16 %v3551, %v3542
    %v3885 = vpack.c.b16 %v3552, %v3543
    %v3886 = vpack.c.b16 %v3553, %v3544
    %v3887 = vpack.c.b16 %v3554, %v3545
    %v3888 = vpack.c.b16 %v3555, %v3546
    %v3889 = vpack.c.b16 %v3556, %v3547
    %v3890 = vpack.c.b16 %v3557, %v3548
    %v3891 = vpack.c.b16 %v3558, %v3549
    %v3892 = vpack.c.b16 %v3559, %v3550
    %v3893 = vpack.c.b16 %v3569, %v3560
    %v3894 = vpack.c.b16 %v3570, %v3561
    %v3895 = vpack.c.b16 %v3571, %v3562
    %v3896 = vpack.c.b16 %v3572, %v3563
    %v3897 = vpack.c.b16 %v3573, %v3564
    %v3898 = vpack.c.b16 %v3574, %v3565
    %v3899 = vpack.c.b16 %v3575, %v3566
    %v3900 = vpack.c.b16 %v3576, %v3567
    %v3901 = vpack.c.b16 %v3577, %v3568
    %v3902 = vpack.c.b16 %v3587, %v3578
    %v3903 = vpack.c.b16 %v3588, %v3579
    %v3904 = vpack.c.b16 %v3589, %v3580
    %v3905 = vpack.c.b16 %v3590, %v3581
    %v3906 = vpack.c.b16 %v3591, %v3582
    %v3907 = vpack.c.b16 %v3592, %v3583
    %v3908 = vpack.c.b16 %v3593, %v3584
    %v3909 = vpack.c.b16 %v3594, %v3585
    %v3910 = vpack.c.b16 %v3595, %v3586
    %v3911 = vpack.c.b16 %v3605, %v3596
    %v3912 = vpack.c.b16 %v3606, %v3597
    %v3913 = vpack.c.b16 %v3607, %v3598
    %v3914 = vpack.c.b16 %v3608, %v3599
    %v3915 = vpack.c.b16 %v3609, %v3600
    %v3916 = vpack.c.b16 %v3610, %v3601
    %v3917 = vpack.c.b16 %v3611, %v3602
    %v3918 = vpack.c.b16 %v3612, %v3603
    %v3919 = vpack.c.b16 %v3613, %v3604
    %v3920 = vpack.c.b16 %v3623, %v3614
    %v3921 = vpack.c.b16 %v3624, %v3615
    %v3922 = vpack.c.b16 %v3625, %v3616
    %v3923 = vpack.c.b16 %v3626, %v3617
    %v3924 = vpack.c.b16 %v3627, %v3618
    %v3925 = vpack.c.b16 %v3628, %v3619
    %v3926 = vpack.c.b16 %v3629, %v3620
    %v3927 = vpack.c.b16 %v3630, %v3621
    %v3928 = vpack.c.b16 %v3631, %v3622
    %v3929 = vpack.c.b16 %v3641, %v3632
    %v3930 = vpack.c.b16 %v3642, %v3633
    %v3931 = vpack.c.b16 %v3643, %v3634
    %v3932 = vpack.c.b16 %v3644, %v3635
    %v3933 = vpack.c.b16 %v3645, %v3636
    %v3934 = vpack.c.b16 %v3646, %v3637
    %v3935 = vpack.c.b16 %v3647, %v3638
    %v3936 = vpack.c.b16 %v3648, %v3639
    %v3937 = vpack.c.b16 %v3649, %v3640
    %v3938 = vpack.c.b16 %v3659, %v3650
    %v3939 = vpack.c.b16 %v3660, %v3651
    %v3940 = vpack.c.b16 %v3661, %v3652
    %v3941 = vpack.c.b16 %v3662, %v3653
    %v3942 = vpack.c.b16 %v3663, %v3654
    %v3943 = vpack.c.b16 %v3664, %v3655
    %v3944 = vpack.c.b16 %v3665, %v3656
    %v3945 = vpack.c.b16 %v3666, %v3657
    %v3946 = vpack.c.b16 %v3667, %v3658
    %v3947 = vpack.c.b16 %v3677, %v3668
    %v3948 = vpack.c.b16 %v3678, %v3669
    %v3949 = vpack.c.b16 %v3679, %v3670
    %v3950 = vpack.c.b16 %v3680, %v3671
    %v3951 = vpack.c.b16 %v3681, %v3672
    %v3952 = vpack.c.b16 %v3682, %v3673
    %v3953 = vpack.c.b16 %v3683, %v3674
    %v3954 = vpack.c.b16 %v3684, %v3675
    %v3955 = vpack.c.b16 %v3685, %v3676
    %v3956 = vpack.c.b16 %v3695, %v3686
    %v3957 = vpack.c.b16 %v3696, %v3687
    %v3958 = vpack.c.b16 %v3697, %v3688
    %v3959 = vpack.c.b16 %v3698, %v3689
    %v3960 = vpack.c.b16 %v3699, %v3690
    %v3961 = vpack.c.b16 %v3700, %v3691
    %v3962 = vpack.c.b16 %v3701, %v3692
    %v3963 = vpack.c.b16 %v3702, %v3693
    %v3964 = vpack.c.b16 %v3703, %v3694
    %v3965 = vpack.c.b16 %v3713, %v3704
    %v3966 = vpack.c.b16 %v3714, %v3705
    %v3967 = vpack.c.b16 %v3715, %v3706
    %v3968 = vpack.c.b16 %v3716, %v3707
    %v3969 = vpack.c.b16 %v3717, %v3708
    %v3970 = vpack.c.b16 %v3718, %v3709
    %v3971 = vpack.c.b16 %v3719, %v3710
    %v3972 = vpack.c.b16 %v3720, %v3711
    %v3973 = vpack.c.b16 %v3721, %v3712
    %v3974 = vpack.c.b16 %v3731, %v3722
    %v3975 = vpack.c.b16 %v3732, %v3723
    %v3976 = vpack.c.b16 %v3733, %v3724
    %v3977 = vpack.c.b16 %v3734, %v3725
    %v3978 = vpack.c.b16 %v3735, %v3726
    %v3979 = vpack.c.b16 %v3736, %v3727
    %v3980 = vpack.c.b16 %v3737, %v3728
    %v3981 = vpack.c.b16 %v3738, %v3729
    %v3982 = vpack.c.b16 %v3739, %v3730
    %v3983 = vpack.c.b16 %v3749, %v3740
    %v3984 = vpack.c.b16 %v3750, %v3741
    %v3985 = vpack.c.b16 %v3751, %v3742
    %v3986 = vpack.c.b16 %v3752, %v3743
    %v3987 = vpack.c.b16 %v3753, %v3744
    %v3988 = vpack.c.b16 %v3754, %v3745
    %v3989 = vpack.c.b16 %v3755, %v3746
    %v3990 = vpack.c.b16 %v3756, %v3747
    %v3991 = vpack.c.b16 %v3757, %v3748
    %v3992 = vpack.c.b16 %v3767, %v3758
    %v3993 = vpack.c.b16 %v3768, %v3759
    %v3994 = vpack.c.b16 %v3769, %v3760
    %v3995 = vpack.c.b16 %v3770, %v3761
    %v3996 = vpack.c.b16 %v3771, %v3762
    %v3997 = vpack.c.b16 %v3772, %v3763
    %v3998 = vpack.c.b16 %v3773, %v3764
    %v3999 = vpack.c.b16 %v3774, %v3765
    %v4000 = vpack.c.b16 %v3775, %v3766
    %v4001 = vpack.c.b16 %v3785, %v3776
    %v4002 = vpack.c.b16 %v3786, %v3777
    %v4003 = vpack.c.b16 %v3787, %v3778
    %v4004 = vpack.c.b16 %v3788, %v3779
    %v4005 = vpack.c.b16 %v3789, %v3780
    %v4006 = vpack.c.b16 %v3790, %v3781
    %v4007 = vpack.c.b16 %v3791, %v3782
    %v4008 = vpack.c.b16 %v3792, %v3783
    %v4009 = vpack.c.b16 %v3793, %v3784
    %4226 = vmatpush.bf16.msra.mxu0 %v3857
    %4227 = vmatpush.bf16.msra.mxu0 %v3848
    %4228 = vmatpush.bf16.msra.mxu0 %v3839
    %4229 = vmatpush.bf16.msra.mxu0 %v3830
    %4230 = vmatpush.bf16.msra.mxu0 %v3821
    %4231 = vmatpush.bf16.msra.mxu0 %v3812
    %4232 = vmatpush.bf16.msra.mxu0 %v3803
    %4233 = vmatpush.bf16.msra.mxu0 %v3794
    %4234 = vmatmul.bf16.gmra.mxu0 %v123
    %v4235 = vpop.f32.mrf.mxu0
    %v4236 = vadd.f32 %v2407, %v4235
    %v4237 = vpop.f32.mrf.mxu0
    %v4238 = vadd.f32 %v2409, %v4237
    %4239 = vmatmul.bf16.gmra.mxu0 %v126
    %v4240 = vpop.f32.mrf.mxu0
    %v4241 = vadd.f32 %v2412, %v4240
    %v4242 = vpop.f32.mrf.mxu0
    %v4243 = vadd.f32 %v2414, %v4242
    %4244 = vmatmul.bf16.gmra.mxu0 %v129
    %v4245 = vpop.f32.mrf.mxu0
    %v4246 = vadd.f32 %v2417, %v4245
    %v4247 = vpop.f32.mrf.mxu0
    %v4248 = vadd.f32 %v2419, %v4247
    %4249 = vmatmul.bf16.gmra.mxu0 %v132
    %v4250 = vpop.f32.mrf.mxu0
    %v4251 = vadd.f32 %v2422, %v4250
    %v4252 = vpop.f32.mrf.mxu0
    %v4253 = vadd.f32 %v2424, %v4252
    %4254 = vdwg.mxu0
    %4255 = vmatpush.bf16.msra.mxu0 %v3929
    %4256 = vmatpush.bf16.msra.mxu0 %v3920
    %4257 = vmatpush.bf16.msra.mxu0 %v3911
    %4258 = vmatpush.bf16.msra.mxu0 %v3902
    %4259 = vmatpush.bf16.msra.mxu0 %v3893
    %4260 = vmatpush.bf16.msra.mxu0 %v3884
    %4261 = vmatpush.bf16.msra.mxu0 %v3875
    %4262 = vmatpush.bf16.msra.mxu0 %v3866
    %4263 = vmatmul.bf16.gmra.mxu0 %v124
    %v4264 = vpop.f32.mrf.mxu0
    %v4265 = vadd.f32 %v4236, %v4264
    %v4266 = vpop.f32.mrf.mxu0
    %v4267 = vadd.f32 %v4238, %v4266
    %4268 = vmatmul.bf16.gmra.mxu0 %v127
    %v4269 = vpop.f32.mrf.mxu0
    %v4270 = vadd.f32 %v4241, %v4269
    %v4271 = vpop.f32.mrf.mxu0
    %v4272 = vadd.f32 %v4243, %v4271
    %4273 = vmatmul.bf16.gmra.mxu0 %v130
    %v4274 = vpop.f32.mrf.mxu0
    %v4275 = vadd.f32 %v4246, %v4274
    %v4276 = vpop.f32.mrf.mxu0
    %v4277 = vadd.f32 %v4248, %v4276
    %4278 = vmatmul.bf16.gmra.mxu0 %v133
    %v4279 = vpop.f32.mrf.mxu0
    %v4280 = vadd.f32 %v4251, %v4279
    %v4281 = vpop.f32.mrf.mxu0
    %v4282 = vadd.f32 %v4253, %v4281
    %4283 = vdwg.mxu0
    %4284 = vmatpush.bf16.msra.mxu0 %v4001
    %4285 = vmatpush.bf16.msra.mxu0 %v3992
    %4286 = vmatpush.bf16.msra.mxu0 %v3983
    %4287 = vmatpush.bf16.msra.mxu0 %v3974
    %4288 = vmatpush.bf16.msra.mxu0 %v3965
    %4289 = vmatpush.bf16.msra.mxu0 %v3956
    %4290 = vmatpush.bf16.msra.mxu0 %v3947
    %4291 = vmatpush.bf16.msra.mxu0 %v3938
    %4292 = vmatmul.bf16.gmra.mxu0 %v125
    %v4293 = vpop.f32.mrf.mxu0
    %v4294 = vadd.f32 %v4265, %v4293
    %v4295 = vpop.f32.mrf.mxu0
    %v4296 = vadd.f32 %v4267, %v4295
    %4297 = vmatmul.bf16.gmra.mxu0 %v128
    %v4298 = vpop.f32.mrf.mxu0
    %v4299 = vadd.f32 %v4270, %v4298
    %v4300 = vpop.f32.mrf.mxu0
    %v4301 = vadd.f32 %v4272, %v4300
    %4302 = vmatmul.bf16.gmra.mxu0 %v131
    %v4303 = vpop.f32.mrf.mxu0
    %v4304 = vadd.f32 %v4275, %v4303
    %v4305 = vpop.f32.mrf.mxu0
    %v4306 = vadd.f32 %v4277, %v4305
    %4307 = vmatmul.bf16.gmra.mxu0 %v134
    %v4308 = vpop.f32.mrf.mxu0
    %v4309 = vadd.f32 %v4280, %v4308
    %v4310 = vpop.f32.mrf.mxu0
    %v4311 = vadd.f32 %v4282, %v4310
    %4312 = vdwg.mxu0
    %4313 = vmatpush.bf16.msra.mxu0 %v3858
    %4314 = vmatpush.bf16.msra.mxu0 %v3849
    %4315 = vmatpush.bf16.msra.mxu0 %v3840
    %4316 = vmatpush.bf16.msra.mxu0 %v3831
    %4317 = vmatpush.bf16.msra.mxu0 %v3822
    %4318 = vmatpush.bf16.msra.mxu0 %v3813
    %4319 = vmatpush.bf16.msra.mxu0 %v3804
    %4320 = vmatpush.bf16.msra.mxu0 %v3795
    %4321 = vmatmul.bf16.gmra.mxu0 %v123
    %v4322 = vpop.f32.mrf.mxu0
    %v4323 = vadd.f32 %v2494, %v4322
    %v4324 = vpop.f32.mrf.mxu0
    %v4325 = vadd.f32 %v2496, %v4324
    %4326 = vmatmul.bf16.gmra.mxu0 %v126
    %v4327 = vpop.f32.mrf.mxu0
    %v4328 = vadd.f32 %v2499, %v4327
    %v4329 = vpop.f32.mrf.mxu0
    %v4330 = vadd.f32 %v2501, %v4329
    %4331 = vmatmul.bf16.gmra.mxu0 %v129
    %v4332 = vpop.f32.mrf.mxu0
    %v4333 = vadd.f32 %v2504, %v4332
    %v4334 = vpop.f32.mrf.mxu0
    %v4335 = vadd.f32 %v2506, %v4334
    %4336 = vmatmul.bf16.gmra.mxu0 %v132
    %v4337 = vpop.f32.mrf.mxu0
    %v4338 = vadd.f32 %v2509, %v4337
    %v4339 = vpop.f32.mrf.mxu0
    %v4340 = vadd.f32 %v2511, %v4339
    %4341 = vdwg.mxu0
    %4342 = vmatpush.bf16.msra.mxu0 %v3930
    %4343 = vmatpush.bf16.msra.mxu0 %v3921
    %4344 = vmatpush.bf16.msra.mxu0 %v3912
    %4345 = vmatpush.bf16.msra.mxu0 %v3903
    %4346 = vmatpush.bf16.msra.mxu0 %v3894
    %4347 = vmatpush.bf16.msra.mxu0 %v3885
    %4348 = vmatpush.bf16.msra.mxu0 %v3876
    %4349 = vmatpush.bf16.msra.mxu0 %v3867
    %4350 = vmatmul.bf16.gmra.mxu0 %v124
    %v4351 = vpop.f32.mrf.mxu0
    %v4352 = vadd.f32 %v4323, %v4351
    %v4353 = vpop.f32.mrf.mxu0
    %v4354 = vadd.f32 %v4325, %v4353
    %4355 = vmatmul.bf16.gmra.mxu0 %v127
    %v4356 = vpop.f32.mrf.mxu0
    %v4357 = vadd.f32 %v4328, %v4356
    %v4358 = vpop.f32.mrf.mxu0
    %v4359 = vadd.f32 %v4330, %v4358
    %4360 = vmatmul.bf16.gmra.mxu0 %v130
    %v4361 = vpop.f32.mrf.mxu0
    %v4362 = vadd.f32 %v4333, %v4361
    %v4363 = vpop.f32.mrf.mxu0
    %v4364 = vadd.f32 %v4335, %v4363
    %4365 = vmatmul.bf16.gmra.mxu0 %v133
    %v4366 = vpop.f32.mrf.mxu0
    %v4367 = vadd.f32 %v4338, %v4366
    %v4368 = vpop.f32.mrf.mxu0
    %v4369 = vadd.f32 %v4340, %v4368
    %4370 = vdwg.mxu0
    %4371 = vmatpush.bf16.msra.mxu0 %v4002
    %4372 = vmatpush.bf16.msra.mxu0 %v3993
    %4373 = vmatpush.bf16.msra.mxu0 %v3984
    %4374 = vmatpush.bf16.msra.mxu0 %v3975
    %4375 = vmatpush.bf16.msra.mxu0 %v3966
    %4376 = vmatpush.bf16.msra.mxu0 %v3957
    %4377 = vmatpush.bf16.msra.mxu0 %v3948
    %4378 = vmatpush.bf16.msra.mxu0 %v3939
    %4379 = vmatmul.bf16.gmra.mxu0 %v125
    %v4380 = vpop.f32.mrf.mxu0
    %v4381 = vadd.f32 %v4352, %v4380
    %v4382 = vpop.f32.mrf.mxu0
    %v4383 = vadd.f32 %v4354, %v4382
    %4384 = vmatmul.bf16.gmra.mxu0 %v128
    %v4385 = vpop.f32.mrf.mxu0
    %v4386 = vadd.f32 %v4357, %v4385
    %v4387 = vpop.f32.mrf.mxu0
    %v4388 = vadd.f32 %v4359, %v4387
    %4389 = vmatmul.bf16.gmra.mxu0 %v131
    %v4390 = vpop.f32.mrf.mxu0
    %v4391 = vadd.f32 %v4362, %v4390
    %v4392 = vpop.f32.mrf.mxu0
    %v4393 = vadd.f32 %v4364, %v4392
    %4394 = vmatmul.bf16.gmra.mxu0 %v134
    %v4395 = vpop.f32.mrf.mxu0
    %v4396 = vadd.f32 %v4367, %v4395
    %v4397 = vpop.f32.mrf.mxu0
    %v4398 = vadd.f32 %v4369, %v4397
    %4399 = vdwg.mxu0
    %4400 = vmatpush.bf16.msra.mxu0 %v3859
    %4401 = vmatpush.bf16.msra.mxu0 %v3850
    %4402 = vmatpush.bf16.msra.mxu0 %v3841
    %4403 = vmatpush.bf16.msra.mxu0 %v3832
    %4404 = vmatpush.bf16.msra.mxu0 %v3823
    %4405 = vmatpush.bf16.msra.mxu0 %v3814
    %4406 = vmatpush.bf16.msra.mxu0 %v3805
    %4407 = vmatpush.bf16.msra.mxu0 %v3796
    %4408 = vmatmul.bf16.gmra.mxu0 %v123
    %v4409 = vpop.f32.mrf.mxu0
    %v4410 = vadd.f32 %v2581, %v4409
    %v4411 = vpop.f32.mrf.mxu0
    %v4412 = vadd.f32 %v2583, %v4411
    %4413 = vmatmul.bf16.gmra.mxu0 %v126
    %v4414 = vpop.f32.mrf.mxu0
    %v4415 = vadd.f32 %v2586, %v4414
    %v4416 = vpop.f32.mrf.mxu0
    %v4417 = vadd.f32 %v2588, %v4416
    %4418 = vmatmul.bf16.gmra.mxu0 %v129
    %v4419 = vpop.f32.mrf.mxu0
    %v4420 = vadd.f32 %v2591, %v4419
    %v4421 = vpop.f32.mrf.mxu0
    %v4422 = vadd.f32 %v2593, %v4421
    %4423 = vmatmul.bf16.gmra.mxu0 %v132
    %v4424 = vpop.f32.mrf.mxu0
    %v4425 = vadd.f32 %v2596, %v4424
    %v4426 = vpop.f32.mrf.mxu0
    %v4427 = vadd.f32 %v2598, %v4426
    %4428 = vdwg.mxu0
    %4429 = vmatpush.bf16.msra.mxu0 %v3931
    %4430 = vmatpush.bf16.msra.mxu0 %v3922
    %4431 = vmatpush.bf16.msra.mxu0 %v3913
    %4432 = vmatpush.bf16.msra.mxu0 %v3904
    %4433 = vmatpush.bf16.msra.mxu0 %v3895
    %4434 = vmatpush.bf16.msra.mxu0 %v3886
    %4435 = vmatpush.bf16.msra.mxu0 %v3877
    %4436 = vmatpush.bf16.msra.mxu0 %v3868
    %4437 = vmatmul.bf16.gmra.mxu0 %v124
    %v4438 = vpop.f32.mrf.mxu0
    %v4439 = vadd.f32 %v4410, %v4438
    %v4440 = vpop.f32.mrf.mxu0
    %v4441 = vadd.f32 %v4412, %v4440
    %4442 = vmatmul.bf16.gmra.mxu0 %v127
    %v4443 = vpop.f32.mrf.mxu0
    %v4444 = vadd.f32 %v4415, %v4443
    %v4445 = vpop.f32.mrf.mxu0
    %v4446 = vadd.f32 %v4417, %v4445
    %4447 = vmatmul.bf16.gmra.mxu0 %v130
    %v4448 = vpop.f32.mrf.mxu0
    %v4449 = vadd.f32 %v4420, %v4448
    %v4450 = vpop.f32.mrf.mxu0
    %v4451 = vadd.f32 %v4422, %v4450
    %4452 = vmatmul.bf16.gmra.mxu0 %v133
    %v4453 = vpop.f32.mrf.mxu0
    %v4454 = vadd.f32 %v4425, %v4453
    %v4455 = vpop.f32.mrf.mxu0
    %v4456 = vadd.f32 %v4427, %v4455
    %4457 = vdwg.mxu0
    %4458 = vmatpush.bf16.msra.mxu0 %v4003
    %4459 = vmatpush.bf16.msra.mxu0 %v3994
    %4460 = vmatpush.bf16.msra.mxu0 %v3985
    %4461 = vmatpush.bf16.msra.mxu0 %v3976
    %4462 = vmatpush.bf16.msra.mxu0 %v3967
    %4463 = vmatpush.bf16.msra.mxu0 %v3958
    %4464 = vmatpush.bf16.msra.mxu0 %v3949
    %4465 = vmatpush.bf16.msra.mxu0 %v3940
    %4466 = vmatmul.bf16.gmra.mxu0 %v125
    %v4467 = vpop.f32.mrf.mxu0
    %v4468 = vadd.f32 %v4439, %v4467
    %v4469 = vpop.f32.mrf.mxu0
    %v4470 = vadd.f32 %v4441, %v4469
    %4471 = vmatmul.bf16.gmra.mxu0 %v128
    %v4472 = vpop.f32.mrf.mxu0
    %v4473 = vadd.f32 %v4444, %v4472
    %v4474 = vpop.f32.mrf.mxu0
    %v4475 = vadd.f32 %v4446, %v4474
    %4476 = vmatmul.bf16.gmra.mxu0 %v131
    %v4477 = vpop.f32.mrf.mxu0
    %v4478 = vadd.f32 %v4449, %v4477
    %v4479 = vpop.f32.mrf.mxu0
    %v4480 = vadd.f32 %v4451, %v4479
    %4481 = vmatmul.bf16.gmra.mxu0 %v134
    %v4482 = vpop.f32.mrf.mxu0
    %v4483 = vadd.f32 %v4454, %v4482
    %v4484 = vpop.f32.mrf.mxu0
    %v4485 = vadd.f32 %v4456, %v4484
    %4486 = vdwg.mxu0
    %4487 = vmatpush.bf16.msra.mxu0 %v3860
    %4488 = vmatpush.bf16.msra.mxu0 %v3851
    %4489 = vmatpush.bf16.msra.mxu0 %v3842
    %4490 = vmatpush.bf16.msra.mxu0 %v3833
    %4491 = vmatpush.bf16.msra.mxu0 %v3824
    %4492 = vmatpush.bf16.msra.mxu0 %v3815
    %4493 = vmatpush.bf16.msra.mxu0 %v3806
    %4494 = vmatpush.bf16.msra.mxu0 %v3797
    %4495 = vmatmul.bf16.gmra.mxu0 %v123
    %v4496 = vpop.f32.mrf.mxu0
    %v4497 = vadd.f32 %v2668, %v4496
    %v4498 = vpop.f32.mrf.mxu0
    %v4499 = vadd.f32 %v2670, %v4498
    %4500 = vmatmul.bf16.gmra.mxu0 %v126
    %v4501 = vpop.f32.mrf.mxu0
    %v4502 = vadd.f32 %v2673, %v4501
    %v4503 = vpop.f32.mrf.mxu0
    %v4504 = vadd.f32 %v2675, %v4503
    %4505 = vmatmul.bf16.gmra.mxu0 %v129
    %v4506 = vpop.f32.mrf.mxu0
    %v4507 = vadd.f32 %v2678, %v4506
    %v4508 = vpop.f32.mrf.mxu0
    %v4509 = vadd.f32 %v2680, %v4508
    %4510 = vmatmul.bf16.gmra.mxu0 %v132
    %v4511 = vpop.f32.mrf.mxu0
    %v4512 = vadd.f32 %v2683, %v4511
    %v4513 = vpop.f32.mrf.mxu0
    %v4514 = vadd.f32 %v2685, %v4513
    %4515 = vdwg.mxu0
    %4516 = vmatpush.bf16.msra.mxu0 %v3932
    %4517 = vmatpush.bf16.msra.mxu0 %v3923
    %4518 = vmatpush.bf16.msra.mxu0 %v3914
    %4519 = vmatpush.bf16.msra.mxu0 %v3905
    %4520 = vmatpush.bf16.msra.mxu0 %v3896
    %4521 = vmatpush.bf16.msra.mxu0 %v3887
    %4522 = vmatpush.bf16.msra.mxu0 %v3878
    %4523 = vmatpush.bf16.msra.mxu0 %v3869
    %4524 = vmatmul.bf16.gmra.mxu0 %v124
    %v4525 = vpop.f32.mrf.mxu0
    %v4526 = vadd.f32 %v4497, %v4525
    %v4527 = vpop.f32.mrf.mxu0
    %v4528 = vadd.f32 %v4499, %v4527
    %4529 = vmatmul.bf16.gmra.mxu0 %v127
    %v4530 = vpop.f32.mrf.mxu0
    %v4531 = vadd.f32 %v4502, %v4530
    %v4532 = vpop.f32.mrf.mxu0
    %v4533 = vadd.f32 %v4504, %v4532
    %4534 = vmatmul.bf16.gmra.mxu0 %v130
    %v4535 = vpop.f32.mrf.mxu0
    %v4536 = vadd.f32 %v4507, %v4535
    %v4537 = vpop.f32.mrf.mxu0
    %v4538 = vadd.f32 %v4509, %v4537
    %4539 = vmatmul.bf16.gmra.mxu0 %v133
    %v4540 = vpop.f32.mrf.mxu0
    %v4541 = vadd.f32 %v4512, %v4540
    %v4542 = vpop.f32.mrf.mxu0
    %v4543 = vadd.f32 %v4514, %v4542
    %4544 = vdwg.mxu0
    %4545 = vmatpush.bf16.msra.mxu0 %v4004
    %4546 = vmatpush.bf16.msra.mxu0 %v3995
    %4547 = vmatpush.bf16.msra.mxu0 %v3986
    %4548 = vmatpush.bf16.msra.mxu0 %v3977
    %4549 = vmatpush.bf16.msra.mxu0 %v3968
    %4550 = vmatpush.bf16.msra.mxu0 %v3959
    %4551 = vmatpush.bf16.msra.mxu0 %v3950
    %4552 = vmatpush.bf16.msra.mxu0 %v3941
    %4553 = vmatmul.bf16.gmra.mxu0 %v125
    %v4554 = vpop.f32.mrf.mxu0
    %v4555 = vadd.f32 %v4526, %v4554
    %v4556 = vpop.f32.mrf.mxu0
    %v4557 = vadd.f32 %v4528, %v4556
    %4558 = vmatmul.bf16.gmra.mxu0 %v128
    %v4559 = vpop.f32.mrf.mxu0
    %v4560 = vadd.f32 %v4531, %v4559
    %v4561 = vpop.f32.mrf.mxu0
    %v4562 = vadd.f32 %v4533, %v4561
    %4563 = vmatmul.bf16.gmra.mxu0 %v131
    %v4564 = vpop.f32.mrf.mxu0
    %v4565 = vadd.f32 %v4536, %v4564
    %v4566 = vpop.f32.mrf.mxu0
    %v4567 = vadd.f32 %v4538, %v4566
    %4568 = vmatmul.bf16.gmra.mxu0 %v134
    %v4569 = vpop.f32.mrf.mxu0
    %v4570 = vadd.f32 %v4541, %v4569
    %v4571 = vpop.f32.mrf.mxu0
    %v4572 = vadd.f32 %v4543, %v4571
    %4573 = vdwg.mxu0
    %4574 = vmatpush.bf16.msra.mxu0 %v3861
    %4575 = vmatpush.bf16.msra.mxu0 %v3852
    %4576 = vmatpush.bf16.msra.mxu0 %v3843
    %4577 = vmatpush.bf16.msra.mxu0 %v3834
    %4578 = vmatpush.bf16.msra.mxu0 %v3825
    %4579 = vmatpush.bf16.msra.mxu0 %v3816
    %4580 = vmatpush.bf16.msra.mxu0 %v3807
    %4581 = vmatpush.bf16.msra.mxu0 %v3798
    %4582 = vmatmul.bf16.gmra.mxu0 %v123
    %v4583 = vpop.f32.mrf.mxu0
    %v4584 = vadd.f32 %v2755, %v4583
    %v4585 = vpop.f32.mrf.mxu0
    %v4586 = vadd.f32 %v2757, %v4585
    %4587 = vmatmul.bf16.gmra.mxu0 %v126
    %v4588 = vpop.f32.mrf.mxu0
    %v4589 = vadd.f32 %v2760, %v4588
    %v4590 = vpop.f32.mrf.mxu0
    %v4591 = vadd.f32 %v2762, %v4590
    %4592 = vmatmul.bf16.gmra.mxu0 %v129
    %v4593 = vpop.f32.mrf.mxu0
    %v4594 = vadd.f32 %v2765, %v4593
    %v4595 = vpop.f32.mrf.mxu0
    %v4596 = vadd.f32 %v2767, %v4595
    %4597 = vmatmul.bf16.gmra.mxu0 %v132
    %v4598 = vpop.f32.mrf.mxu0
    %v4599 = vadd.f32 %v2770, %v4598
    %v4600 = vpop.f32.mrf.mxu0
    %v4601 = vadd.f32 %v2772, %v4600
    %4602 = vdwg.mxu0
    %4603 = vmatpush.bf16.msra.mxu0 %v3933
    %4604 = vmatpush.bf16.msra.mxu0 %v3924
    %4605 = vmatpush.bf16.msra.mxu0 %v3915
    %4606 = vmatpush.bf16.msra.mxu0 %v3906
    %4607 = vmatpush.bf16.msra.mxu0 %v3897
    %4608 = vmatpush.bf16.msra.mxu0 %v3888
    %4609 = vmatpush.bf16.msra.mxu0 %v3879
    %4610 = vmatpush.bf16.msra.mxu0 %v3870
    %4611 = vmatmul.bf16.gmra.mxu0 %v124
    %v4612 = vpop.f32.mrf.mxu0
    %v4613 = vadd.f32 %v4584, %v4612
    %v4614 = vpop.f32.mrf.mxu0
    %v4615 = vadd.f32 %v4586, %v4614
    %4616 = vmatmul.bf16.gmra.mxu0 %v127
    %v4617 = vpop.f32.mrf.mxu0
    %v4618 = vadd.f32 %v4589, %v4617
    %v4619 = vpop.f32.mrf.mxu0
    %v4620 = vadd.f32 %v4591, %v4619
    %4621 = vmatmul.bf16.gmra.mxu0 %v130
    %v4622 = vpop.f32.mrf.mxu0
    %v4623 = vadd.f32 %v4594, %v4622
    %v4624 = vpop.f32.mrf.mxu0
    %v4625 = vadd.f32 %v4596, %v4624
    %4626 = vmatmul.bf16.gmra.mxu0 %v133
    %v4627 = vpop.f32.mrf.mxu0
    %v4628 = vadd.f32 %v4599, %v4627
    %v4629 = vpop.f32.mrf.mxu0
    %v4630 = vadd.f32 %v4601, %v4629
    %4631 = vdwg.mxu0
    %4632 = vmatpush.bf16.msra.mxu0 %v4005
    %4633 = vmatpush.bf16.msra.mxu0 %v3996
    %4634 = vmatpush.bf16.msra.mxu0 %v3987
    %4635 = vmatpush.bf16.msra.mxu0 %v3978
    %4636 = vmatpush.bf16.msra.mxu0 %v3969
    %4637 = vmatpush.bf16.msra.mxu0 %v3960
    %4638 = vmatpush.bf16.msra.mxu0 %v3951
    %4639 = vmatpush.bf16.msra.mxu0 %v3942
    %4640 = vmatmul.bf16.gmra.mxu0 %v125
    %v4641 = vpop.f32.mrf.mxu0
    %v4642 = vadd.f32 %v4613, %v4641
    %v4643 = vpop.f32.mrf.mxu0
    %v4644 = vadd.f32 %v4615, %v4643
    %4645 = vmatmul.bf16.gmra.mxu0 %v128
    %v4646 = vpop.f32.mrf.mxu0
    %v4647 = vadd.f32 %v4618, %v4646
    %v4648 = vpop.f32.mrf.mxu0
    %v4649 = vadd.f32 %v4620, %v4648
    %4650 = vmatmul.bf16.gmra.mxu0 %v131
    %v4651 = vpop.f32.mrf.mxu0
    %v4652 = vadd.f32 %v4623, %v4651
    %v4653 = vpop.f32.mrf.mxu0
    %v4654 = vadd.f32 %v4625, %v4653
    %4655 = vmatmul.bf16.gmra.mxu0 %v134
    %v4656 = vpop.f32.mrf.mxu0
    %v4657 = vadd.f32 %v4628, %v4656
    %v4658 = vpop.f32.mrf.mxu0
    %v4659 = vadd.f32 %v4630, %v4658
    %4660 = vdwg.mxu0
    %4661 = vmatpush.bf16.msra.mxu0 %v3862
    %4662 = vmatpush.bf16.msra.mxu0 %v3853
    %4663 = vmatpush.bf16.msra.mxu0 %v3844
    %4664 = vmatpush.bf16.msra.mxu0 %v3835
    %4665 = vmatpush.bf16.msra.mxu0 %v3826
    %4666 = vmatpush.bf16.msra.mxu0 %v3817
    %4667 = vmatpush.bf16.msra.mxu0 %v3808
    %4668 = vmatpush.bf16.msra.mxu0 %v3799
    %4669 = vmatmul.bf16.gmra.mxu0 %v123
    %v4670 = vpop.f32.mrf.mxu0
    %v4671 = vadd.f32 %v2842, %v4670
    %v4672 = vpop.f32.mrf.mxu0
    %v4673 = vadd.f32 %v2844, %v4672
    %4674 = vmatmul.bf16.gmra.mxu0 %v126
    %v4675 = vpop.f32.mrf.mxu0
    %v4676 = vadd.f32 %v2847, %v4675
    %v4677 = vpop.f32.mrf.mxu0
    %v4678 = vadd.f32 %v2849, %v4677
    %4679 = vmatmul.bf16.gmra.mxu0 %v129
    %v4680 = vpop.f32.mrf.mxu0
    %v4681 = vadd.f32 %v2852, %v4680
    %v4682 = vpop.f32.mrf.mxu0
    %v4683 = vadd.f32 %v2854, %v4682
    %4684 = vmatmul.bf16.gmra.mxu0 %v132
    %v4685 = vpop.f32.mrf.mxu0
    %v4686 = vadd.f32 %v2857, %v4685
    %v4687 = vpop.f32.mrf.mxu0
    %v4688 = vadd.f32 %v2859, %v4687
    %4689 = vdwg.mxu0
    %4690 = vmatpush.bf16.msra.mxu0 %v3934
    %4691 = vmatpush.bf16.msra.mxu0 %v3925
    %4692 = vmatpush.bf16.msra.mxu0 %v3916
    %4693 = vmatpush.bf16.msra.mxu0 %v3907
    %4694 = vmatpush.bf16.msra.mxu0 %v3898
    %4695 = vmatpush.bf16.msra.mxu0 %v3889
    %4696 = vmatpush.bf16.msra.mxu0 %v3880
    %4697 = vmatpush.bf16.msra.mxu0 %v3871
    %4698 = vmatmul.bf16.gmra.mxu0 %v124
    %v4699 = vpop.f32.mrf.mxu0
    %v4700 = vadd.f32 %v4671, %v4699
    %v4701 = vpop.f32.mrf.mxu0
    %v4702 = vadd.f32 %v4673, %v4701
    %4703 = vmatmul.bf16.gmra.mxu0 %v127
    %v4704 = vpop.f32.mrf.mxu0
    %v4705 = vadd.f32 %v4676, %v4704
    %v4706 = vpop.f32.mrf.mxu0
    %v4707 = vadd.f32 %v4678, %v4706
    %4708 = vmatmul.bf16.gmra.mxu0 %v130
    %v4709 = vpop.f32.mrf.mxu0
    %v4710 = vadd.f32 %v4681, %v4709
    %v4711 = vpop.f32.mrf.mxu0
    %v4712 = vadd.f32 %v4683, %v4711
    %4713 = vmatmul.bf16.gmra.mxu0 %v133
    %v4714 = vpop.f32.mrf.mxu0
    %v4715 = vadd.f32 %v4686, %v4714
    %v4716 = vpop.f32.mrf.mxu0
    %v4717 = vadd.f32 %v4688, %v4716
    %4718 = vdwg.mxu0
    %4719 = vmatpush.bf16.msra.mxu0 %v4006
    %4720 = vmatpush.bf16.msra.mxu0 %v3997
    %4721 = vmatpush.bf16.msra.mxu0 %v3988
    %4722 = vmatpush.bf16.msra.mxu0 %v3979
    %4723 = vmatpush.bf16.msra.mxu0 %v3970
    %4724 = vmatpush.bf16.msra.mxu0 %v3961
    %4725 = vmatpush.bf16.msra.mxu0 %v3952
    %4726 = vmatpush.bf16.msra.mxu0 %v3943
    %4727 = vmatmul.bf16.gmra.mxu0 %v125
    %v4728 = vpop.f32.mrf.mxu0
    %v4729 = vadd.f32 %v4700, %v4728
    %v4730 = vpop.f32.mrf.mxu0
    %v4731 = vadd.f32 %v4702, %v4730
    %4732 = vmatmul.bf16.gmra.mxu0 %v128
    %v4733 = vpop.f32.mrf.mxu0
    %v4734 = vadd.f32 %v4705, %v4733
    %v4735 = vpop.f32.mrf.mxu0
    %v4736 = vadd.f32 %v4707, %v4735
    %4737 = vmatmul.bf16.gmra.mxu0 %v131
    %v4738 = vpop.f32.mrf.mxu0
    %v4739 = vadd.f32 %v4710, %v4738
    %v4740 = vpop.f32.mrf.mxu0
    %v4741 = vadd.f32 %v4712, %v4740
    %4742 = vmatmul.bf16.gmra.mxu0 %v134
    %v4743 = vpop.f32.mrf.mxu0
    %v4744 = vadd.f32 %v4715, %v4743
    %v4745 = vpop.f32.mrf.mxu0
    %v4746 = vadd.f32 %v4717, %v4745
    %4747 = vdwg.mxu0
    %4748 = vmatpush.bf16.msra.mxu0 %v3863
    %4749 = vmatpush.bf16.msra.mxu0 %v3854
    %4750 = vmatpush.bf16.msra.mxu0 %v3845
    %4751 = vmatpush.bf16.msra.mxu0 %v3836
    %4752 = vmatpush.bf16.msra.mxu0 %v3827
    %4753 = vmatpush.bf16.msra.mxu0 %v3818
    %4754 = vmatpush.bf16.msra.mxu0 %v3809
    %4755 = vmatpush.bf16.msra.mxu0 %v3800
    %4756 = vmatmul.bf16.gmra.mxu0 %v123
    %v4757 = vpop.f32.mrf.mxu0
    %v4758 = vadd.f32 %v2929, %v4757
    %v4759 = vpop.f32.mrf.mxu0
    %v4760 = vadd.f32 %v2931, %v4759
    %4761 = vmatmul.bf16.gmra.mxu0 %v126
    %v4762 = vpop.f32.mrf.mxu0
    %v4763 = vadd.f32 %v2934, %v4762
    %v4764 = vpop.f32.mrf.mxu0
    %v4765 = vadd.f32 %v2936, %v4764
    %4766 = vmatmul.bf16.gmra.mxu0 %v129
    %v4767 = vpop.f32.mrf.mxu0
    %v4768 = vadd.f32 %v2939, %v4767
    %v4769 = vpop.f32.mrf.mxu0
    %v4770 = vadd.f32 %v2941, %v4769
    %4771 = vmatmul.bf16.gmra.mxu0 %v132
    %v4772 = vpop.f32.mrf.mxu0
    %v4773 = vadd.f32 %v2944, %v4772
    %v4774 = vpop.f32.mrf.mxu0
    %v4775 = vadd.f32 %v2946, %v4774
    %4776 = vdwg.mxu0
    %4777 = vmatpush.bf16.msra.mxu0 %v3935
    %4778 = vmatpush.bf16.msra.mxu0 %v3926
    %4779 = vmatpush.bf16.msra.mxu0 %v3917
    %4780 = vmatpush.bf16.msra.mxu0 %v3908
    %4781 = vmatpush.bf16.msra.mxu0 %v3899
    %4782 = vmatpush.bf16.msra.mxu0 %v3890
    %4783 = vmatpush.bf16.msra.mxu0 %v3881
    %4784 = vmatpush.bf16.msra.mxu0 %v3872
    %4785 = vmatmul.bf16.gmra.mxu0 %v124
    %v4786 = vpop.f32.mrf.mxu0
    %v4787 = vadd.f32 %v4758, %v4786
    %v4788 = vpop.f32.mrf.mxu0
    %v4789 = vadd.f32 %v4760, %v4788
    %4790 = vmatmul.bf16.gmra.mxu0 %v127
    %v4791 = vpop.f32.mrf.mxu0
    %v4792 = vadd.f32 %v4763, %v4791
    %v4793 = vpop.f32.mrf.mxu0
    %v4794 = vadd.f32 %v4765, %v4793
    %4795 = vmatmul.bf16.gmra.mxu0 %v130
    %v4796 = vpop.f32.mrf.mxu0
    %v4797 = vadd.f32 %v4768, %v4796
    %v4798 = vpop.f32.mrf.mxu0
    %v4799 = vadd.f32 %v4770, %v4798
    %4800 = vmatmul.bf16.gmra.mxu0 %v133
    %v4801 = vpop.f32.mrf.mxu0
    %v4802 = vadd.f32 %v4773, %v4801
    %v4803 = vpop.f32.mrf.mxu0
    %v4804 = vadd.f32 %v4775, %v4803
    %4805 = vdwg.mxu0
    %4806 = vmatpush.bf16.msra.mxu0 %v4007
    %4807 = vmatpush.bf16.msra.mxu0 %v3998
    %4808 = vmatpush.bf16.msra.mxu0 %v3989
    %4809 = vmatpush.bf16.msra.mxu0 %v3980
    %4810 = vmatpush.bf16.msra.mxu0 %v3971
    %4811 = vmatpush.bf16.msra.mxu0 %v3962
    %4812 = vmatpush.bf16.msra.mxu0 %v3953
    %4813 = vmatpush.bf16.msra.mxu0 %v3944
    %4814 = vmatmul.bf16.gmra.mxu0 %v125
    %v4815 = vpop.f32.mrf.mxu0
    %v4816 = vadd.f32 %v4787, %v4815
    %v4817 = vpop.f32.mrf.mxu0
    %v4818 = vadd.f32 %v4789, %v4817
    %4819 = vmatmul.bf16.gmra.mxu0 %v128
    %v4820 = vpop.f32.mrf.mxu0
    %v4821 = vadd.f32 %v4792, %v4820
    %v4822 = vpop.f32.mrf.mxu0
    %v4823 = vadd.f32 %v4794, %v4822
    %4824 = vmatmul.bf16.gmra.mxu0 %v131
    %v4825 = vpop.f32.mrf.mxu0
    %v4826 = vadd.f32 %v4797, %v4825
    %v4827 = vpop.f32.mrf.mxu0
    %v4828 = vadd.f32 %v4799, %v4827
    %4829 = vmatmul.bf16.gmra.mxu0 %v134
    %v4830 = vpop.f32.mrf.mxu0
    %v4831 = vadd.f32 %v4802, %v4830
    %v4832 = vpop.f32.mrf.mxu0
    %v4833 = vadd.f32 %v4804, %v4832
    %4834 = vdwg.mxu0
    %4835 = vmatpush.bf16.msra.mxu0 %v3864
    %4836 = vmatpush.bf16.msra.mxu0 %v3855
    %4837 = vmatpush.bf16.msra.mxu0 %v3846
    %4838 = vmatpush.bf16.msra.mxu0 %v3837
    %4839 = vmatpush.bf16.msra.mxu0 %v3828
    %4840 = vmatpush.bf16.msra.mxu0 %v3819
    %4841 = vmatpush.bf16.msra.mxu0 %v3810
    %4842 = vmatpush.bf16.msra.mxu0 %v3801
    %4843 = vmatmul.bf16.gmra.mxu0 %v123
    %v4844 = vpop.f32.mrf.mxu0
    %v4845 = vadd.f32 %v3016, %v4844
    %v4846 = vpop.f32.mrf.mxu0
    %v4847 = vadd.f32 %v3018, %v4846
    %4848 = vmatmul.bf16.gmra.mxu0 %v126
    %v4849 = vpop.f32.mrf.mxu0
    %v4850 = vadd.f32 %v3021, %v4849
    %v4851 = vpop.f32.mrf.mxu0
    %v4852 = vadd.f32 %v3023, %v4851
    %4853 = vmatmul.bf16.gmra.mxu0 %v129
    %v4854 = vpop.f32.mrf.mxu0
    %v4855 = vadd.f32 %v3026, %v4854
    %v4856 = vpop.f32.mrf.mxu0
    %v4857 = vadd.f32 %v3028, %v4856
    %4858 = vmatmul.bf16.gmra.mxu0 %v132
    %v4859 = vpop.f32.mrf.mxu0
    %v4860 = vadd.f32 %v3031, %v4859
    %v4861 = vpop.f32.mrf.mxu0
    %v4862 = vadd.f32 %v3033, %v4861
    %4863 = vdwg.mxu0
    %4864 = vmatpush.bf16.msra.mxu0 %v3936
    %4865 = vmatpush.bf16.msra.mxu0 %v3927
    %4866 = vmatpush.bf16.msra.mxu0 %v3918
    %4867 = vmatpush.bf16.msra.mxu0 %v3909
    %4868 = vmatpush.bf16.msra.mxu0 %v3900
    %4869 = vmatpush.bf16.msra.mxu0 %v3891
    %4870 = vmatpush.bf16.msra.mxu0 %v3882
    %4871 = vmatpush.bf16.msra.mxu0 %v3873
    %4872 = vmatmul.bf16.gmra.mxu0 %v124
    %v4873 = vpop.f32.mrf.mxu0
    %v4874 = vadd.f32 %v4845, %v4873
    %v4875 = vpop.f32.mrf.mxu0
    %v4876 = vadd.f32 %v4847, %v4875
    %4877 = vmatmul.bf16.gmra.mxu0 %v127
    %v4878 = vpop.f32.mrf.mxu0
    %v4879 = vadd.f32 %v4850, %v4878
    %v4880 = vpop.f32.mrf.mxu0
    %v4881 = vadd.f32 %v4852, %v4880
    %4882 = vmatmul.bf16.gmra.mxu0 %v130
    %v4883 = vpop.f32.mrf.mxu0
    %v4884 = vadd.f32 %v4855, %v4883
    %v4885 = vpop.f32.mrf.mxu0
    %v4886 = vadd.f32 %v4857, %v4885
    %4887 = vmatmul.bf16.gmra.mxu0 %v133
    %v4888 = vpop.f32.mrf.mxu0
    %v4889 = vadd.f32 %v4860, %v4888
    %v4890 = vpop.f32.mrf.mxu0
    %v4891 = vadd.f32 %v4862, %v4890
    %4892 = vdwg.mxu0
    %4893 = vmatpush.bf16.msra.mxu0 %v4008
    %4894 = vmatpush.bf16.msra.mxu0 %v3999
    %4895 = vmatpush.bf16.msra.mxu0 %v3990
    %4896 = vmatpush.bf16.msra.mxu0 %v3981
    %4897 = vmatpush.bf16.msra.mxu0 %v3972
    %4898 = vmatpush.bf16.msra.mxu0 %v3963
    %4899 = vmatpush.bf16.msra.mxu0 %v3954
    %4900 = vmatpush.bf16.msra.mxu0 %v3945
    %4901 = vmatmul.bf16.gmra.mxu0 %v125
    %v4902 = vpop.f32.mrf.mxu0
    %v4903 = vadd.f32 %v4874, %v4902
    %v4904 = vpop.f32.mrf.mxu0
    %v4905 = vadd.f32 %v4876, %v4904
    %4906 = vmatmul.bf16.gmra.mxu0 %v128
    %v4907 = vpop.f32.mrf.mxu0
    %v4908 = vadd.f32 %v4879, %v4907
    %v4909 = vpop.f32.mrf.mxu0
    %v4910 = vadd.f32 %v4881, %v4909
    %4911 = vmatmul.bf16.gmra.mxu0 %v131
    %v4912 = vpop.f32.mrf.mxu0
    %v4913 = vadd.f32 %v4884, %v4912
    %v4914 = vpop.f32.mrf.mxu0
    %v4915 = vadd.f32 %v4886, %v4914
    %4916 = vmatmul.bf16.gmra.mxu0 %v134
    %v4917 = vpop.f32.mrf.mxu0
    %v4918 = vadd.f32 %v4889, %v4917
    %v4919 = vpop.f32.mrf.mxu0
    %v4920 = vadd.f32 %v4891, %v4919
    %4921 = vdwg.mxu0
    %4922 = vmatpush.bf16.msra.mxu0 %v3865
    %4923 = vmatpush.bf16.msra.mxu0 %v3856
    %4924 = vmatpush.bf16.msra.mxu0 %v3847
    %4925 = vmatpush.bf16.msra.mxu0 %v3838
    %4926 = vmatpush.bf16.msra.mxu0 %v3829
    %4927 = vmatpush.bf16.msra.mxu0 %v3820
    %4928 = vmatpush.bf16.msra.mxu0 %v3811
    %4929 = vmatpush.bf16.msra.mxu0 %v3802
    %4930 = vmatmul.bf16.gmra.mxu0 %v123
    %v4931 = vpop.f32.mrf.mxu0
    %v4932 = vadd.f32 %v3103, %v4931
    %v4933 = vpop.f32.mrf.mxu0
    %v4934 = vadd.f32 %v3105, %v4933
    %4935 = vmatmul.bf16.gmra.mxu0 %v126
    %v4936 = vpop.f32.mrf.mxu0
    %v4937 = vadd.f32 %v3108, %v4936
    %v4938 = vpop.f32.mrf.mxu0
    %v4939 = vadd.f32 %v3110, %v4938
    %4940 = vmatmul.bf16.gmra.mxu0 %v129
    %v4941 = vpop.f32.mrf.mxu0
    %v4942 = vadd.f32 %v3113, %v4941
    %v4943 = vpop.f32.mrf.mxu0
    %v4944 = vadd.f32 %v3115, %v4943
    %4945 = vmatmul.bf16.gmra.mxu0 %v132
    %v4946 = vpop.f32.mrf.mxu0
    %v4947 = vadd.f32 %v3118, %v4946
    %v4948 = vpop.f32.mrf.mxu0
    %v4949 = vadd.f32 %v3120, %v4948
    %4950 = vdwg.mxu0
    %4951 = vmatpush.bf16.msra.mxu0 %v3937
    %4952 = vmatpush.bf16.msra.mxu0 %v3928
    %4953 = vmatpush.bf16.msra.mxu0 %v3919
    %4954 = vmatpush.bf16.msra.mxu0 %v3910
    %4955 = vmatpush.bf16.msra.mxu0 %v3901
    %4956 = vmatpush.bf16.msra.mxu0 %v3892
    %4957 = vmatpush.bf16.msra.mxu0 %v3883
    %4958 = vmatpush.bf16.msra.mxu0 %v3874
    %4959 = vmatmul.bf16.gmra.mxu0 %v124
    %v4960 = vpop.f32.mrf.mxu0
    %v4961 = vadd.f32 %v4932, %v4960
    %v4962 = vpop.f32.mrf.mxu0
    %v4963 = vadd.f32 %v4934, %v4962
    %4964 = vmatmul.bf16.gmra.mxu0 %v127
    %v4965 = vpop.f32.mrf.mxu0
    %v4966 = vadd.f32 %v4937, %v4965
    %v4967 = vpop.f32.mrf.mxu0
    %v4968 = vadd.f32 %v4939, %v4967
    %4969 = vmatmul.bf16.gmra.mxu0 %v130
    %v4970 = vpop.f32.mrf.mxu0
    %v4971 = vadd.f32 %v4942, %v4970
    %v4972 = vpop.f32.mrf.mxu0
    %v4973 = vadd.f32 %v4944, %v4972
    %4974 = vmatmul.bf16.gmra.mxu0 %v133
    %v4975 = vpop.f32.mrf.mxu0
    %v4976 = vadd.f32 %v4947, %v4975
    %v4977 = vpop.f32.mrf.mxu0
    %v4978 = vadd.f32 %v4949, %v4977
    %4979 = vdwg.mxu0
    %4980 = vmatpush.bf16.msra.mxu0 %v4009
    %4981 = vmatpush.bf16.msra.mxu0 %v4000
    %4982 = vmatpush.bf16.msra.mxu0 %v3991
    %4983 = vmatpush.bf16.msra.mxu0 %v3982
    %4984 = vmatpush.bf16.msra.mxu0 %v3973
    %4985 = vmatpush.bf16.msra.mxu0 %v3964
    %4986 = vmatpush.bf16.msra.mxu0 %v3955
    %4987 = vmatpush.bf16.msra.mxu0 %v3946
    %4988 = vmatmul.bf16.gmra.mxu0 %v125
    %v4989 = vpop.f32.mrf.mxu0
    %v4990 = vadd.f32 %v4961, %v4989
    %v4991 = vpop.f32.mrf.mxu0
    %v4992 = vadd.f32 %v4963, %v4991
    %4993 = vmatmul.bf16.gmra.mxu0 %v128
    %v4994 = vpop.f32.mrf.mxu0
    %v4995 = vadd.f32 %v4966, %v4994
    %v4996 = vpop.f32.mrf.mxu0
    %v4997 = vadd.f32 %v4968, %v4996
    %4998 = vmatmul.bf16.gmra.mxu0 %v131
    %v4999 = vpop.f32.mrf.mxu0
    %v5000 = vadd.f32 %v4971, %v4999
    %v5001 = vpop.f32.mrf.mxu0
    %v5002 = vadd.f32 %v4973, %v5001
    %5003 = vmatmul.bf16.gmra.mxu0 %v134
    %v5004 = vpop.f32.mrf.mxu0
    %v5005 = vadd.f32 %v4976, %v5004
    %v5006 = vpop.f32.mrf.mxu0
    %v5007 = vadd.f32 %v4978, %v5006
    %5008 = vdwg.mxu0
    %v5009 = vld [vmem:[%s6] sm:$0xff]
    %v5010 = vld [vmem:[%s6 + $0x8] sm:$0x1]
    %v5013 = vperm.slane %v5009, 0
    %v5014 = vperm.slane %v5009, 1
    %v5015 = vperm.slane %v5009, 2
    %v5016 = vperm.slane %v5009, 3
    %v5017 = vperm.slane %v5009, 4
    %v5018 = vperm.slane %v5009, 5
    %v5019 = vperm.slane %v5009, 6
    %v5020 = vperm.slane %v5009, 7
    %v5021 = vperm.slane %v5010, 0
    %v5031 = vadd.f32 %v4294, %v5013
    %v5032 = vadd.f32 %v4381, %v5014
    %v5033 = vadd.f32 %v4468, %v5015
    %v5034 = vadd.f32 %v4555, %v5016
    %v5035 = vadd.f32 %v4642, %v5017
    %v5036 = vadd.f32 %v4729, %v5018
    %v5037 = vadd.f32 %v4816, %v5019
    %v5038 = vadd.f32 %v4903, %v5020
    %v5039 = vadd.f32 %v4990, %v5021
    %v5040 = vadd.f32 %v4296, %v5013
    %v5041 = vadd.f32 %v4383, %v5014
    %v5042 = vadd.f32 %v4470, %v5015
    %v5043 = vadd.f32 %v4557, %v5016
    %v5044 = vadd.f32 %v4644, %v5017
    %v5045 = vadd.f32 %v4731, %v5018
    %v5046 = vadd.f32 %v4818, %v5019
    %v5047 = vadd.f32 %v4905, %v5020
    %v5048 = vadd.f32 %v4992, %v5021
    %v5049 = vadd.f32 %v4299, %v5013
    %v5050 = vadd.f32 %v4386, %v5014
    %v5051 = vadd.f32 %v4473, %v5015
    %v5052 = vadd.f32 %v4560, %v5016
    %v5053 = vadd.f32 %v4647, %v5017
    %v5054 = vadd.f32 %v4734, %v5018
    %v5055 = vadd.f32 %v4821, %v5019
    %v5056 = vadd.f32 %v4908, %v5020
    %v5057 = vadd.f32 %v4995, %v5021
    %v5058 = vadd.f32 %v4301, %v5013
    %v5059 = vadd.f32 %v4388, %v5014
    %v5060 = vadd.f32 %v4475, %v5015
    %v5061 = vadd.f32 %v4562, %v5016
    %v5062 = vadd.f32 %v4649, %v5017
    %v5063 = vadd.f32 %v4736, %v5018
    %v5064 = vadd.f32 %v4823, %v5019
    %v5065 = vadd.f32 %v4910, %v5020
    %v5066 = vadd.f32 %v4997, %v5021
    %v5067 = vadd.f32 %v4304, %v5013
    %v5068 = vadd.f32 %v4391, %v5014
    %v5069 = vadd.f32 %v4478, %v5015
    %v5070 = vadd.f32 %v4565, %v5016
    %v5071 = vadd.f32 %v4652, %v5017
    %v5072 = vadd.f32 %v4739, %v5018
    %v5073 = vadd.f32 %v4826, %v5019
    %v5074 = vadd.f32 %v4913, %v5020
    %v5075 = vadd.f32 %v5000, %v5021
    %v5076 = vadd.f32 %v4306, %v5013
    %v5077 = vadd.f32 %v4393, %v5014
    %v5078 = vadd.f32 %v4480, %v5015
    %v5079 = vadd.f32 %v4567, %v5016
    %v5080 = vadd.f32 %v4654, %v5017
    %v5081 = vadd.f32 %v4741, %v5018
    %v5082 = vadd.f32 %v4828, %v5019
    %v5083 = vadd.f32 %v4915, %v5020
    %v5084 = vadd.f32 %v5002, %v5021
    %v5085 = vadd.f32 %v4309, %v5013
    %v5086 = vadd.f32 %v4396, %v5014
    %v5087 = vadd.f32 %v4483, %v5015
    %v5088 = vadd.f32 %v4570, %v5016
    %v5089 = vadd.f32 %v4657, %v5017
    %v5090 = vadd.f32 %v4744, %v5018
    %v5091 = vadd.f32 %v4831, %v5019
    %v5092 = vadd.f32 %v4918, %v5020
    %v5093 = vadd.f32 %v5005, %v5021
    %v5094 = vadd.f32 %v4311, %v5013
    %v5095 = vadd.f32 %v4398, %v5014
    %v5096 = vadd.f32 %v4485, %v5015
    %v5097 = vadd.f32 %v4572, %v5016
    %v5098 = vadd.f32 %v4659, %v5017
    %v5099 = vadd.f32 %v4746, %v5018
    %v5100 = vadd.f32 %v4833, %v5019
    %v5101 = vadd.f32 %v4920, %v5020
    %v5102 = vadd.f32 %v5007, %v5021
    %5103 = vst [vmem:[#allocation2] sm:$0xff] %v5031
    %5104 = vst [vmem:[#allocation2 + $0x8] sm:$0xff] %v5032
    %5105 = vst [vmem:[#allocation2 + $0x10] sm:$0xff] %v5033
    %5106 = vst [vmem:[#allocation2 + $0x18] sm:$0xff] %v5034
    %5107 = vst [vmem:[#allocation2 + $0x20] sm:$0xff] %v5035
    %5108 = vst [vmem:[#allocation2 + $0x28] sm:$0xff] %v5036
    %5109 = vst [vmem:[#allocation2 + $0x30] sm:$0xff] %v5037
    %5110 = vst [vmem:[#allocation2 + $0x38] sm:$0xff] %v5038
    %5111 = vst [vmem:[#allocation2 + $0x40] sm:$0xff] %v5039
    %5112 = vst [vmem:[#allocation2 + $0x48] sm:$0xff] %v5040
    %5113 = vst [vmem:[#allocation2 + $0x50] sm:$0xff] %v5041
    %5114 = vst [vmem:[#allocation2 + $0x58] sm:$0xff] %v5042
    %5115 = vst [vmem:[#allocation2 + $0x60] sm:$0xff] %v5043
    %5116 = vst [vmem:[#allocation2 + $0x68] sm:$0xff] %v5044
    %5117 = vst [vmem:[#allocation2 + $0x70] sm:$0xff] %v5045
    %5118 = vst [vmem:[#allocation2 + $0x78] sm:$0xff] %v5046
    %5119 = vst [vmem:[#allocation2 + $0x80] sm:$0xff] %v5047
    %5120 = vst [vmem:[#allocation2 + $0x88] sm:$0xff] %v5048
    %5121 = vst [vmem:[#allocation2 + $0x90] sm:$0xff] %v5049
    %5122 = vst [vmem:[#allocation2 + $0x98] sm:$0xff] %v5050
    %5123 = vst [vmem:[#allocation2 + $0xa0] sm:$0xff] %v5051
    %5124 = vst [vmem:[#allocation2 + $0xa8] sm:$0xff] %v5052
    %5125 = vst [vmem:[#allocation2 + $0xb0] sm:$0xff] %v5053
    %5126 = vst [vmem:[#allocation2 + $0xb8] sm:$0xff] %v5054
    %5127 = vst [vmem:[#allocation2 + $0xc0] sm:$0xff] %v5055
    %5128 = vst [vmem:[#allocation2 + $0xc8] sm:$0xff] %v5056
    %5129 = vst [vmem:[#allocation2 + $0xd0] sm:$0xff] %v5057
    %5130 = vst [vmem:[#allocation2 + $0xd8] sm:$0xff] %v5058
    %5131 = vst [vmem:[#allocation2 + $0xe0] sm:$0xff] %v5059
    %5132 = vst [vmem:[#allocation2 + $0xe8] sm:$0xff] %v5060
    %5133 = vst [vmem:[#allocation2 + $0xf0] sm:$0xff] %v5061
    %5134 = vst [vmem:[#allocation2 + $0xf8] sm:$0xff] %v5062
    %5135 = vst [vmem:[#allocation2 + $0x100] sm:$0xff] %v5063
    %5136 = vst [vmem:[#allocation2 + $0x108] sm:$0xff] %v5064
    %5137 = vst [vmem:[#allocation2 + $0x110] sm:$0xff] %v5065
    %5138 = vst [vmem:[#allocation2 + $0x118] sm:$0xff] %v5066
    %5139 = vst [vmem:[#allocation2 + $0x120] sm:$0xff] %v5067
    %5140 = vst [vmem:[#allocation2 + $0x128] sm:$0xff] %v5068
    %5141 = vst [vmem:[#allocation2 + $0x130] sm:$0xff] %v5069
    %5142 = vst [vmem:[#allocation2 + $0x138] sm:$0xff] %v5070
    %5143 = vst [vmem:[#allocation2 + $0x140] sm:$0xff] %v5071
    %5144 = vst [vmem:[#allocation2 + $0x148] sm:$0xff] %v5072
    %5145 = vst [vmem:[#allocation2 + $0x150] sm:$0xff] %v5073
    %5146 = vst [vmem:[#allocation2 + $0x158] sm:$0xff] %v5074
    %5147 = vst [vmem:[#allocation2 + $0x160] sm:$0xff] %v5075
    %5148 = vst [vmem:[#allocation2 + $0x168] sm:$0xff] %v5076
    %5149 = vst [vmem:[#allocation2 + $0x170] sm:$0xff] %v5077
    %5150 = vst [vmem:[#allocation2 + $0x178] sm:$0xff] %v5078
    %5151 = vst [vmem:[#allocation2 + $0x180] sm:$0xff] %v5079
    %5152 = vst [vmem:[#allocation2 + $0x188] sm:$0xff] %v5080
    %5153 = vst [vmem:[#allocation2 + $0x190] sm:$0xff] %v5081
    %5154 = vst [vmem:[#allocation2 + $0x198] sm:$0xff] %v5082
    %5155 = vst [vmem:[#allocation2 + $0x1a0] sm:$0xff] %v5083
    %5156 = vst [vmem:[#allocation2 + $0x1a8] sm:$0xff] %v5084
    %5157 = vst [vmem:[#allocation2 + $0x1b0] sm:$0xff] %v5085
    %5158 = vst [vmem:[#allocation2 + $0x1b8] sm:$0xff] %v5086
    %5159 = vst [vmem:[#allocation2 + $0x1c0] sm:$0xff] %v5087
    %5160 = vst [vmem:[#allocation2 + $0x1c8] sm:$0xff] %v5088
    %5161 = vst [vmem:[#allocation2 + $0x1d0] sm:$0xff] %v5089
    %5162 = vst [vmem:[#allocation2 + $0x1d8] sm:$0xff] %v5090
    %5163 = vst [vmem:[#allocation2 + $0x1e0] sm:$0xff] %v5091
    %5164 = vst [vmem:[#allocation2 + $0x1e8] sm:$0xff] %v5092
    %5165 = vst [vmem:[#allocation2 + $0x1f0] sm:$0xff] %v5093
    %5166 = vst [vmem:[#allocation2 + $0x1f8] sm:$0xff] %v5094
    %5167 = vst [vmem:[#allocation2 + $0x200] sm:$0xff] %v5095
    %5168 = vst [vmem:[#allocation2 + $0x208] sm:$0xff] %v5096
    %5169 = vst [vmem:[#allocation2 + $0x210] sm:$0xff] %v5097
    %5170 = vst [vmem:[#allocation2 + $0x218] sm:$0xff] %v5098
    %5171 = vst [vmem:[#allocation2 + $0x220] sm:$0xff] %v5099
    %5172 = vst [vmem:[#allocation2 + $0x228] sm:$0xff] %v5100
    %5173 = vst [vmem:[#allocation2 + $0x230] sm:$0xff] %v5101
    %5174 = vst [vmem:[#allocation2 + $0x238] sm:$0xff] %v5102
    %v5175 = vld [vmem:[#allocation9] sm:$0xff]
    %v5176 = vld [vmem:[#allocation9 + $0x8] sm:$0xff]
    %v5177 = vld [vmem:[#allocation9 + $0x10] sm:$0xff]
    %v5178 = vld [vmem:[#allocation9 + $0x18] sm:$0xff]
    %v5179 = vld [vmem:[#allocation9 + $0x20] sm:$0xf]
    %v5180 = vld [vmem:[#allocation9 + $0x24] sm:$0xff]
    %v5181 = vld [vmem:[#allocation9 + $0x2c] sm:$0xff]
    %v5182 = vld [vmem:[#allocation9 + $0x34] sm:$0xff]
    %v5183 = vld [vmem:[#allocation9 + $0x3c] sm:$0xff]
    %v5184 = vld [vmem:[#allocation9 + $0x44] sm:$0xf]
    %v5185 = vld [vmem:[#allocation9 + $0x48] sm:$0xff]
    %v5186 = vld [vmem:[#allocation9 + $0x50] sm:$0xff]
    %v5187 = vld [vmem:[#allocation9 + $0x58] sm:$0xff]
    %v5188 = vld [vmem:[#allocation9 + $0x60] sm:$0xff]
    %v5189 = vld [vmem:[#allocation9 + $0x68] sm:$0xf]
    %v5190 = vld [vmem:[#allocation9 + $0x6c] sm:$0xff]
    %v5191 = vld [vmem:[#allocation9 + $0x74] sm:$0xff]
    %v5192 = vld [vmem:[#allocation9 + $0x7c] sm:$0xff]
    %v5193 = vld [vmem:[#allocation9 + $0x84] sm:$0xff]
    %v5194 = vld [vmem:[#allocation9 + $0x8c] sm:$0xf]
    %v5195 = vld [vmem:[#allocation9 + $0x90] sm:$0xff]
    %v5196 = vld [vmem:[#allocation9 + $0x98] sm:$0xff]
    %v5197 = vld [vmem:[#allocation9 + $0xa0] sm:$0xff]
    %v5198 = vld [vmem:[#allocation9 + $0xa8] sm:$0xff]
    %v5199 = vld [vmem:[#allocation9 + $0xb0] sm:$0xf]
    %v5200 = vld [vmem:[#allocation9 + $0xb4] sm:$0xff]
    %v5201 = vld [vmem:[#allocation9 + $0xbc] sm:$0xff]
    %v5202 = vld [vmem:[#allocation9 + $0xc4] sm:$0xff]
    %v5203 = vld [vmem:[#allocation9 + $0xcc] sm:$0xff]
    %v5204 = vld [vmem:[#allocation9 + $0xd4] sm:$0xf]
    %v5205 = vld [vmem:[#allocation9 + $0xd8] sm:$0xff]
    %v5206 = vld [vmem:[#allocation9 + $0xe0] sm:$0xff]
    %v5207 = vld [vmem:[#allocation9 + $0xe8] sm:$0xff]
    %v5208 = vld [vmem:[#allocation9 + $0xf0] sm:$0xff]
    %v5209 = vld [vmem:[#allocation9 + $0xf8] sm:$0xf]
    %v5210 = vld [vmem:[#allocation9 + $0xfc] sm:$0xff]
    %v5211 = vld [vmem:[#allocation9 + $0x104] sm:$0xff]
    %v5212 = vld [vmem:[#allocation9 + $0x10c] sm:$0xff]
    %v5213 = vld [vmem:[#allocation9 + $0x114] sm:$0xff]
    %v5214 = vld [vmem:[#allocation9 + $0x11c] sm:$0xf]
    %v5215 = vld [vmem:[#allocation9 + $0x120] sm:$0xff]
    %v5216 = vld [vmem:[#allocation9 + $0x128] sm:$0xff]
    %v5217 = vld [vmem:[#allocation9 + $0x130] sm:$0xff]
    %v5218 = vld [vmem:[#allocation9 + $0x138] sm:$0xff]
    %v5219 = vld [vmem:[#allocation9 + $0x140] sm:$0xf]
    %v5220 = vld [vmem:[#allocation9 + $0x144] sm:$0xff]
    %v5221 = vld [vmem:[#allocation9 + $0x14c] sm:$0xff]
    %v5222 = vld [vmem:[#allocation9 + $0x154] sm:$0xff]
    %v5223 = vld [vmem:[#allocation9 + $0x15c] sm:$0xff]
    %v5224 = vld [vmem:[#allocation9 + $0x164] sm:$0xf]
    %v5225 = vld [vmem:[#allocation9 + $0x168] sm:$0xff]
    %v5226 = vld [vmem:[#allocation9 + $0x170] sm:$0xff]
    %v5227 = vld [vmem:[#allocation9 + $0x178] sm:$0xff]
    %v5228 = vld [vmem:[#allocation9 + $0x180] sm:$0xff]
    %v5229 = vld [vmem:[#allocation9 + $0x188] sm:$0xf]
    %v5230 = vld [vmem:[#allocation9 + $0x18c] sm:$0xff]
    %v5231 = vld [vmem:[#allocation9 + $0x194] sm:$0xff]
    %v5232 = vld [vmem:[#allocation9 + $0x19c] sm:$0xff]
    %v5233 = vld [vmem:[#allocation9 + $0x1a4] sm:$0xff]
    %v5234 = vld [vmem:[#allocation9 + $0x1ac] sm:$0xf]
    %v5235 = vld [vmem:[#allocation9 + $0x1b0] sm:$0xff]
    %v5236 = vld [vmem:[#allocation9 + $0x1b8] sm:$0xff]
    %v5237 = vld [vmem:[#allocation9 + $0x1c0] sm:$0xff]
    %v5238 = vld [vmem:[#allocation9 + $0x1c8] sm:$0xff]
    %v5239 = vld [vmem:[#allocation9 + $0x1d0] sm:$0xf]
    %v5240 = vld [vmem:[#allocation9 + $0x1d4] sm:$0xff]
    %v5241 = vld [vmem:[#allocation9 + $0x1dc] sm:$0xff]
    %v5242 = vld [vmem:[#allocation9 + $0x1e4] sm:$0xff]
    %v5243 = vld [vmem:[#allocation9 + $0x1ec] sm:$0xff]
    %v5244 = vld [vmem:[#allocation9 + $0x1f4] sm:$0xf]
    %v5245 = vld [vmem:[#allocation9 + $0x1f8] sm:$0xff]
    %v5246 = vld [vmem:[#allocation9 + $0x200] sm:$0xff]
    %v5247 = vld [vmem:[#allocation9 + $0x208] sm:$0xff]
    %v5248 = vld [vmem:[#allocation9 + $0x210] sm:$0xff]
    %v5249 = vld [vmem:[#allocation9 + $0x218] sm:$0xf]
    %v5250 = vld [vmem:[#allocation9 + $0x21c] sm:$0xff]
    %v5251 = vld [vmem:[#allocation9 + $0x224] sm:$0xff]
    %v5252 = vld [vmem:[#allocation9 + $0x22c] sm:$0xff]
    %v5253 = vld [vmem:[#allocation9 + $0x234] sm:$0xff]
    %v5254 = vld [vmem:[#allocation9 + $0x23c] sm:$0xf]
    %v5255 = vld [vmem:[#allocation9 + $0x240] sm:$0xff]
    %v5256 = vld [vmem:[#allocation9 + $0x248] sm:$0xff]
    %v5257 = vld [vmem:[#allocation9 + $0x250] sm:$0xff]
    %v5258 = vld [vmem:[#allocation9 + $0x258] sm:$0xff]
    %v5259 = vld [vmem:[#allocation9 + $0x260] sm:$0xf]
    %v5260 = vld [vmem:[#allocation9 + $0x264] sm:$0xff]
    %v5261 = vld [vmem:[#allocation9 + $0x26c] sm:$0xff]
    %v5262 = vld [vmem:[#allocation9 + $0x274] sm:$0xff]
    %v5263 = vld [vmem:[#allocation9 + $0x27c] sm:$0xff]
    %v5264 = vld [vmem:[#allocation9 + $0x284] sm:$0xf]
    %v5265 = vld [vmem:[#allocation9 + $0x288] sm:$0xff]
    %v5266 = vld [vmem:[#allocation9 + $0x290] sm:$0xff]
    %v5267 = vld [vmem:[#allocation9 + $0x298] sm:$0xff]
    %v5268 = vld [vmem:[#allocation9 + $0x2a0] sm:$0xff]
    %v5269 = vld [vmem:[#allocation9 + $0x2a8] sm:$0xf]
    %v5270 = vld [vmem:[#allocation9 + $0x2ac] sm:$0xff]
    %v5271 = vld [vmem:[#allocation9 + $0x2b4] sm:$0xff]
    %v5272 = vld [vmem:[#allocation9 + $0x2bc] sm:$0xff]
    %v5273 = vld [vmem:[#allocation9 + $0x2c4] sm:$0xff]
    %v5274 = vld [vmem:[#allocation9 + $0x2cc] sm:$0xf]
    %v5275 = vld [vmem:[#allocation9 + $0x2d0] sm:$0xff]
    %v5276 = vld [vmem:[#allocation9 + $0x2d8] sm:$0xff]
    %v5277 = vld [vmem:[#allocation9 + $0x2e0] sm:$0xff]
    %v5278 = vld [vmem:[#allocation9 + $0x2e8] sm:$0xff]
    %v5279 = vld [vmem:[#allocation9 + $0x2f0] sm:$0xf]
    %v5280 = vld [vmem:[#allocation9 + $0x2f4] sm:$0xff]
    %v5281 = vld [vmem:[#allocation9 + $0x2fc] sm:$0xff]
    %v5282 = vld [vmem:[#allocation9 + $0x304] sm:$0xff]
    %v5283 = vld [vmem:[#allocation9 + $0x30c] sm:$0xff]
    %v5284 = vld [vmem:[#allocation9 + $0x314] sm:$0xf]
    %v5285 = vld [vmem:[#allocation9 + $0x318] sm:$0xff]
    %v5286 = vld [vmem:[#allocation9 + $0x320] sm:$0xff]
    %v5287 = vld [vmem:[#allocation9 + $0x328] sm:$0xff]
    %v5288 = vld [vmem:[#allocation9 + $0x330] sm:$0xff]
    %v5289 = vld [vmem:[#allocation9 + $0x338] sm:$0xf]
    %v5290 = vld [vmem:[#allocation9 + $0x33c] sm:$0xff]
    %v5291 = vld [vmem:[#allocation9 + $0x344] sm:$0xff]
    %v5292 = vld [vmem:[#allocation9 + $0x34c] sm:$0xff]
    %v5293 = vld [vmem:[#allocation9 + $0x354] sm:$0xff]
    %v5294 = vld [vmem:[#allocation9 + $0x35c] sm:$0xf]
    %v5295 = vld [vmem:[#allocation9 + $0x360] sm:$0xff]
    %v5296 = vld [vmem:[#allocation9 + $0x368] sm:$0xff]
    %v5297 = vld [vmem:[#allocation9 + $0x370] sm:$0xff]
    %v5298 = vld [vmem:[#allocation9 + $0x378] sm:$0xff]
    %v5299 = vld [vmem:[#allocation9 + $0x380] sm:$0xf]
    %v5300 = vld [vmem:[#allocation9 + $0x384] sm:$0xff]
    %v5301 = vld [vmem:[#allocation9 + $0x38c] sm:$0xff]
    %v5302 = vld [vmem:[#allocation9 + $0x394] sm:$0xff]
    %v5303 = vld [vmem:[#allocation9 + $0x39c] sm:$0xff]
    %v5304 = vld [vmem:[#allocation9 + $0x3a4] sm:$0xf]
    %v5305 = vld [vmem:[#allocation9 + $0x3a8] sm:$0xff]
    %v5306 = vld [vmem:[#allocation9 + $0x3b0] sm:$0xff]
    %v5307 = vld [vmem:[#allocation9 + $0x3b8] sm:$0xff]
    %v5308 = vld [vmem:[#allocation9 + $0x3c0] sm:$0xff]
    %v5309 = vld [vmem:[#allocation9 + $0x3c8] sm:$0xf]
    %v5310 = vld [vmem:[#allocation9 + $0x3cc] sm:$0xff]
    %v5311 = vld [vmem:[#allocation9 + $0x3d4] sm:$0xff]
    %v5312 = vld [vmem:[#allocation9 + $0x3dc] sm:$0xff]
    %v5313 = vld [vmem:[#allocation9 + $0x3e4] sm:$0xff]
    %v5314 = vld [vmem:[#allocation9 + $0x3ec] sm:$0xf]
    %v5315 = vld [vmem:[#allocation9 + $0x3f0] sm:$0xff]
    %v5316 = vld [vmem:[#allocation9 + $0x3f8] sm:$0xff]
    %v5317 = vld [vmem:[#allocation9 + $0x400] sm:$0xff]
    %v5318 = vld [vmem:[#allocation9 + $0x408] sm:$0xff]
    %v5319 = vld [vmem:[#allocation9 + $0x410] sm:$0xf]
    %v5320 = vld [vmem:[#allocation9 + $0x414] sm:$0xff]
    %v5321 = vld [vmem:[#allocation9 + $0x41c] sm:$0xff]
    %v5322 = vld [vmem:[#allocation9 + $0x424] sm:$0xff]
    %v5323 = vld [vmem:[#allocation9 + $0x42c] sm:$0xff]
    %v5324 = vld [vmem:[#allocation9 + $0x434] sm:$0xf]
    %v5325 = vld [vmem:[#allocation9 + $0x438] sm:$0xff]
    %v5326 = vld [vmem:[#allocation9 + $0x440] sm:$0xff]
    %v5327 = vld [vmem:[#allocation9 + $0x448] sm:$0xff]
    %v5328 = vld [vmem:[#allocation9 + $0x450] sm:$0xff]
    %v5329 = vld [vmem:[#allocation9 + $0x458] sm:$0xf]
    %v5330 = vld [vmem:[#allocation9 + $0x45c] sm:$0xff]
    %v5331 = vld [vmem:[#allocation9 + $0x464] sm:$0xff]
    %v5332 = vld [vmem:[#allocation9 + $0x46c] sm:$0xff]
    %v5333 = vld [vmem:[#allocation9 + $0x474] sm:$0xff]
    %v5334 = vld [vmem:[#allocation9 + $0x47c] sm:$0xf]
    %v5335 = vld [vmem:[#allocation9 + $0x480] sm:$0xff]
    %v5336 = vld [vmem:[#allocation9 + $0x488] sm:$0xff]
    %v5337 = vld [vmem:[#allocation9 + $0x490] sm:$0xff]
    %v5338 = vld [vmem:[#allocation9 + $0x498] sm:$0xff]
    %v5339 = vld [vmem:[#allocation9 + $0x4a0] sm:$0xf]
    %v5340 = vld [vmem:[#allocation9 + $0x4a4] sm:$0xff]
    %v5341 = vld [vmem:[#allocation9 + $0x4ac] sm:$0xff]
    %v5342 = vld [vmem:[#allocation9 + $0x4b4] sm:$0xff]
    %v5343 = vld [vmem:[#allocation9 + $0x4bc] sm:$0xff]
    %v5344 = vld [vmem:[#allocation9 + $0x4c4] sm:$0xf]
    %v5345 = vld [vmem:[#allocation9 + $0x4c8] sm:$0xff]
    %v5346 = vld [vmem:[#allocation9 + $0x4d0] sm:$0xff]
    %v5347 = vld [vmem:[#allocation9 + $0x4d8] sm:$0xff]
    %v5348 = vld [vmem:[#allocation9 + $0x4e0] sm:$0xff]
    %v5349 = vld [vmem:[#allocation9 + $0x4e8] sm:$0xf]
    %v5350 = vld [vmem:[#allocation9 + $0x4ec] sm:$0xff]
    %v5351 = vld [vmem:[#allocation9 + $0x4f4] sm:$0xff]
    %v5352 = vld [vmem:[#allocation9 + $0x4fc] sm:$0xff]
    %v5353 = vld [vmem:[#allocation9 + $0x504] sm:$0xff]
    %v5354 = vld [vmem:[#allocation9 + $0x50c] sm:$0xf]
    %v5355 = vld [vmem:[#allocation9 + $0x510] sm:$0xff]
    %v5356 = vld [vmem:[#allocation9 + $0x518] sm:$0xff]
    %v5357 = vld [vmem:[#allocation9 + $0x520] sm:$0xff]
    %v5358 = vld [vmem:[#allocation9 + $0x528] sm:$0xff]
    %v5359 = vld [vmem:[#allocation9 + $0x530] sm:$0xf]
    %v5360 = vld [vmem:[#allocation9 + $0x534] sm:$0xff]
    %v5361 = vld [vmem:[#allocation9 + $0x53c] sm:$0xff]
    %v5362 = vld [vmem:[#allocation9 + $0x544] sm:$0xff]
    %v5363 = vld [vmem:[#allocation9 + $0x54c] sm:$0xff]
    %v5364 = vld [vmem:[#allocation9 + $0x554] sm:$0xf]
    %v5365 = vld [vmem:[#allocation9 + $0x558] sm:$0xff]
    %v5366 = vld [vmem:[#allocation9 + $0x560] sm:$0xff]
    %v5367 = vld [vmem:[#allocation9 + $0x568] sm:$0xff]
    %v5368 = vld [vmem:[#allocation9 + $0x570] sm:$0xff]
    %v5369 = vld [vmem:[#allocation9 + $0x578] sm:$0xf]
    %v5370 = vld [vmem:[#allocation9 + $0x57c] sm:$0xff]
    %v5371 = vld [vmem:[#allocation9 + $0x584] sm:$0xff]
    %v5372 = vld [vmem:[#allocation9 + $0x58c] sm:$0xff]
    %v5373 = vld [vmem:[#allocation9 + $0x594] sm:$0xff]
    %v5374 = vld [vmem:[#allocation9 + $0x59c] sm:$0xf]
    %v5375 = vld [vmem:[#allocation9 + $0x5a0] sm:$0xff]
    %v5376 = vld [vmem:[#allocation9 + $0x5a8] sm:$0xff]
    %v5377 = vld [vmem:[#allocation9 + $0x5b0] sm:$0xff]
    %v5378 = vld [vmem:[#allocation9 + $0x5b8] sm:$0xff]
    %v5379 = vld [vmem:[#allocation9 + $0x5c0] sm:$0xf]
    %v5380 = vld [vmem:[#allocation9 + $0x5c4] sm:$0xff]
    %v5381 = vld [vmem:[#allocation9 + $0x5cc] sm:$0xff]
    %v5382 = vld [vmem:[#allocation9 + $0x5d4] sm:$0xff]
    %v5383 = vld [vmem:[#allocation9 + $0x5dc] sm:$0xff]
    %v5384 = vld [vmem:[#allocation9 + $0x5e4] sm:$0xf]
    %v5385 = vld [vmem:[#allocation9 + $0x5e8] sm:$0xff]
    %v5386 = vld [vmem:[#allocation9 + $0x5f0] sm:$0xff]
    %v5387 = vld [vmem:[#allocation9 + $0x5f8] sm:$0xff]
    %v5388 = vld [vmem:[#allocation9 + $0x600] sm:$0xff]
    %v5389 = vld [vmem:[#allocation9 + $0x608] sm:$0xf]
    %v5390 = vld [vmem:[#allocation9 + $0x60c] sm:$0xff]
    %v5391 = vld [vmem:[#allocation9 + $0x614] sm:$0xff]
    %v5392 = vld [vmem:[#allocation9 + $0x61c] sm:$0xff]
    %v5393 = vld [vmem:[#allocation9 + $0x624] sm:$0xff]
    %v5394 = vld [vmem:[#allocation9 + $0x62c] sm:$0xf]
    %v5395 = vld [vmem:[#allocation9 + $0x630] sm:$0xff]
    %v5396 = vld [vmem:[#allocation9 + $0x638] sm:$0xff]
    %v5397 = vld [vmem:[#allocation9 + $0x640] sm:$0xff]
    %v5398 = vld [vmem:[#allocation9 + $0x648] sm:$0xff]
    %v5399 = vld [vmem:[#allocation9 + $0x650] sm:$0xf]
    %v5400 = vld [vmem:[#allocation9 + $0x654] sm:$0xff]
    %v5401 = vld [vmem:[#allocation9 + $0x65c] sm:$0xff]
    %v5402 = vld [vmem:[#allocation9 + $0x664] sm:$0xff]
    %v5403 = vld [vmem:[#allocation9 + $0x66c] sm:$0xff]
    %v5404 = vld [vmem:[#allocation9 + $0x674] sm:$0xf]
    %v5405 = vld [vmem:[#allocation9 + $0x678] sm:$0xff]
    %v5406 = vld [vmem:[#allocation9 + $0x680] sm:$0xff]
    %v5407 = vld [vmem:[#allocation9 + $0x688] sm:$0xff]
    %v5408 = vld [vmem:[#allocation9 + $0x690] sm:$0xff]
    %v5409 = vld [vmem:[#allocation9 + $0x698] sm:$0xf]
    %v5410 = vld [vmem:[#allocation9 + $0x69c] sm:$0xff]
    %v5411 = vld [vmem:[#allocation9 + $0x6a4] sm:$0xff]
    %v5412 = vld [vmem:[#allocation9 + $0x6ac] sm:$0xff]
    %v5413 = vld [vmem:[#allocation9 + $0x6b4] sm:$0xff]
    %v5414 = vld [vmem:[#allocation9 + $0x6bc] sm:$0xf]
    %v5415 = vld [vmem:[%s8] sm:$0x7]
    %v5417 = vperm.slane %v5415, 0
    %v5418 = vperm.slane %v5415, 1
    %v5419 = vperm.slane %v5415, 2
    %v5423 = vld [vmem:[#allocation2] sm:$0xff]
    %v5424 = vld [vmem:[#allocation2 + $0x8] sm:$0xff]
    %v5425 = vld [vmem:[#allocation2 + $0x10] sm:$0xff]
    %v5426 = vld [vmem:[#allocation2 + $0x18] sm:$0xff]
    %v5427 = vld [vmem:[#allocation2 + $0x20] sm:$0xff]
    %v5428 = vld [vmem:[#allocation2 + $0x28] sm:$0xff]
    %v5429 = vld [vmem:[#allocation2 + $0x30] sm:$0xff]
    %v5430 = vld [vmem:[#allocation2 + $0x38] sm:$0xff]
    %v5431 = vld [vmem:[#allocation2 + $0x40] sm:$0xff]
    %v5672 = vunpack.c.l.b16 %v5175
    %v5673 = vunpack.c.h.b16 %v5175
    %v5674 = vunpack.c.l.b16 %v5176
    %v5675 = vunpack.c.h.b16 %v5176
    %v5676 = vunpack.c.l.b16 %v5177
    %v5677 = vunpack.c.h.b16 %v5177
    %v5678 = vunpack.c.l.b16 %v5178
    %v5679 = vunpack.c.h.b16 %v5178
    %v5680 = vunpack.c.l.b16 %v5179
    %v5681 = vunpack.c.l.b16 %v5180
    %v5682 = vunpack.c.h.b16 %v5180
    %v5683 = vunpack.c.l.b16 %v5181
    %v5684 = vunpack.c.h.b16 %v5181
    %v5685 = vunpack.c.l.b16 %v5182
    %v5686 = vunpack.c.h.b16 %v5182
    %v5687 = vunpack.c.l.b16 %v5183
    %v5688 = vunpack.c.h.b16 %v5183
    %v5689 = vunpack.c.l.b16 %v5184
    %v5690 = vunpack.c.l.b16 %v5185
    %v5691 = vunpack.c.h.b16 %v5185
    %v5692 = vunpack.c.l.b16 %v5186
    %v5693 = vunpack.c.h.b16 %v5186
    %v5694 = vunpack.c.l.b16 %v5187
    %v5695 = vunpack.c.h.b16 %v5187
    %v5696 = vunpack.c.l.b16 %v5188
    %v5697 = vunpack.c.h.b16 %v5188
    %v5698 = vunpack.c.l.b16 %v5189
    %v5699 = vunpack.c.l.b16 %v5190
    %v5700 = vunpack.c.h.b16 %v5190
    %v5701 = vunpack.c.l.b16 %v5191
    %v5702 = vunpack.c.h.b16 %v5191
    %v5703 = vunpack.c.l.b16 %v5192
    %v5704 = vunpack.c.h.b16 %v5192
    %v5705 = vunpack.c.l.b16 %v5193
    %v5706 = vunpack.c.h.b16 %v5193
    %v5707 = vunpack.c.l.b16 %v5194
    %v5708 = vunpack.c.l.b16 %v5195
    %v5709 = vunpack.c.h.b16 %v5195
    %v5710 = vunpack.c.l.b16 %v5196
    %v5711 = vunpack.c.h.b16 %v5196
    %v5712 = vunpack.c.l.b16 %v5197
    %v5713 = vunpack.c.h.b16 %v5197
    %v5714 = vunpack.c.l.b16 %v5198
    %v5715 = vunpack.c.h.b16 %v5198
    %v5716 = vunpack.c.l.b16 %v5199
    %v5717 = vunpack.c.l.b16 %v5200
    %v5718 = vunpack.c.h.b16 %v5200
    %v5719 = vunpack.c.l.b16 %v5201
    %v5720 = vunpack.c.h.b16 %v5201
    %v5721 = vunpack.c.l.b16 %v5202
    %v5722 = vunpack.c.h.b16 %v5202
    %v5723 = vunpack.c.l.b16 %v5203
    %v5724 = vunpack.c.h.b16 %v5203
    %v5725 = vunpack.c.l.b16 %v5204
    %v5726 = vunpack.c.l.b16 %v5205
    %v5727 = vunpack.c.h.b16 %v5205
    %v5728 = vunpack.c.l.b16 %v5206
    %v5729 = vunpack.c.h.b16 %v5206
    %v5730 = vunpack.c.l.b16 %v5207
    %v5731 = vunpack.c.h.b16 %v5207
    %v5732 = vunpack.c.l.b16 %v5208
    %v5733 = vunpack.c.h.b16 %v5208
    %v5734 = vunpack.c.l.b16 %v5209
    %v5735 = vunpack.c.l.b16 %v5210
    %v5736 = vunpack.c.h.b16 %v5210
    %v5737 = vunpack.c.l.b16 %v5211
    %v5738 = vunpack.c.h.b16 %v5211
    %v5739 = vunpack.c.l.b16 %v5212
    %v5740 = vunpack.c.h.b16 %v5212
    %v5741 = vunpack.c.l.b16 %v5213
    %v5742 = vunpack.c.h.b16 %v5213
    %v5743 = vunpack.c.l.b16 %v5214
    %v5744 = vunpack.c.l.b16 %v5215
    %v5745 = vunpack.c.h.b16 %v5215
    %v5746 = vunpack.c.l.b16 %v5216
    %v5747 = vunpack.c.h.b16 %v5216
    %v5748 = vunpack.c.l.b16 %v5217
    %v5749 = vunpack.c.h.b16 %v5217
    %v5750 = vunpack.c.l.b16 %v5218
    %v5751 = vunpack.c.h.b16 %v5218
    %v5752 = vunpack.c.l.b16 %v5219
    %v5753 = vunpack.c.l.b16 %v5220
    %v5754 = vunpack.c.h.b16 %v5220
    %v5755 = vunpack.c.l.b16 %v5221
    %v5756 = vunpack.c.h.b16 %v5221
    %v5757 = vunpack.c.l.b16 %v5222
    %v5758 = vunpack.c.h.b16 %v5222
    %v5759 = vunpack.c.l.b16 %v5223
    %v5760 = vunpack.c.h.b16 %v5223
    %v5761 = vunpack.c.l.b16 %v5224
    %v5762 = vunpack.c.l.b16 %v5225
    %v5763 = vunpack.c.h.b16 %v5225
    %v5764 = vunpack.c.l.b16 %v5226
    %v5765 = vunpack.c.h.b16 %v5226
    %v5766 = vunpack.c.l.b16 %v5227
    %v5767 = vunpack.c.h.b16 %v5227
    %v5768 = vunpack.c.l.b16 %v5228
    %v5769 = vunpack.c.h.b16 %v5228
    %v5770 = vunpack.c.l.b16 %v5229
    %v5771 = vunpack.c.l.b16 %v5230
    %v5772 = vunpack.c.h.b16 %v5230
    %v5773 = vunpack.c.l.b16 %v5231
    %v5774 = vunpack.c.h.b16 %v5231
    %v5775 = vunpack.c.l.b16 %v5232
    %v5776 = vunpack.c.h.b16 %v5232
    %v5777 = vunpack.c.l.b16 %v5233
    %v5778 = vunpack.c.h.b16 %v5233
    %v5779 = vunpack.c.l.b16 %v5234
    %v5780 = vunpack.c.l.b16 %v5235
    %v5781 = vunpack.c.h.b16 %v5235
    %v5782 = vunpack.c.l.b16 %v5236
    %v5783 = vunpack.c.h.b16 %v5236
    %v5784 = vunpack.c.l.b16 %v5237
    %v5785 = vunpack.c.h.b16 %v5237
    %v5786 = vunpack.c.l.b16 %v5238
    %v5787 = vunpack.c.h.b16 %v5238
    %v5788 = vunpack.c.l.b16 %v5239
    %v5789 = vunpack.c.l.b16 %v5240
    %v5790 = vunpack.c.h.b16 %v5240
    %v5791 = vunpack.c.l.b16 %v5241
    %v5792 = vunpack.c.h.b16 %v5241
    %v5793 = vunpack.c.l.b16 %v5242
    %v5794 = vunpack.c.h.b16 %v5242
    %v5795 = vunpack.c.l.b16 %v5243
    %v5796 = vunpack.c.h.b16 %v5243
    %v5797 = vunpack.c.l.b16 %v5244
    %v5798 = vunpack.c.l.b16 %v5245
    %v5799 = vunpack.c.h.b16 %v5245
    %v5800 = vunpack.c.l.b16 %v5246
    %v5801 = vunpack.c.h.b16 %v5246
    %v5802 = vunpack.c.l.b16 %v5247
    %v5803 = vunpack.c.h.b16 %v5247
    %v5804 = vunpack.c.l.b16 %v5248
    %v5805 = vunpack.c.h.b16 %v5248
    %v5806 = vunpack.c.l.b16 %v5249
    %v5807 = vunpack.c.l.b16 %v5250
    %v5808 = vunpack.c.h.b16 %v5250
    %v5809 = vunpack.c.l.b16 %v5251
    %v5810 = vunpack.c.h.b16 %v5251
    %v5811 = vunpack.c.l.b16 %v5252
    %v5812 = vunpack.c.h.b16 %v5252
    %v5813 = vunpack.c.l.b16 %v5253
    %v5814 = vunpack.c.h.b16 %v5253
    %v5815 = vunpack.c.l.b16 %v5254
    %v5816 = vunpack.c.l.b16 %v5255
    %v5817 = vunpack.c.h.b16 %v5255
    %v5818 = vunpack.c.l.b16 %v5256
    %v5819 = vunpack.c.h.b16 %v5256
    %v5820 = vunpack.c.l.b16 %v5257
    %v5821 = vunpack.c.h.b16 %v5257
    %v5822 = vunpack.c.l.b16 %v5258
    %v5823 = vunpack.c.h.b16 %v5258
    %v5824 = vunpack.c.l.b16 %v5259
    %v5825 = vunpack.c.l.b16 %v5260
    %v5826 = vunpack.c.h.b16 %v5260
    %v5827 = vunpack.c.l.b16 %v5261
    %v5828 = vunpack.c.h.b16 %v5261
    %v5829 = vunpack.c.l.b16 %v5262
    %v5830 = vunpack.c.h.b16 %v5262
    %v5831 = vunpack.c.l.b16 %v5263
    %v5832 = vunpack.c.h.b16 %v5263
    %v5833 = vunpack.c.l.b16 %v5264
    %v5834 = vunpack.c.l.b16 %v5265
    %v5835 = vunpack.c.h.b16 %v5265
    %v5836 = vunpack.c.l.b16 %v5266
    %v5837 = vunpack.c.h.b16 %v5266
    %v5838 = vunpack.c.l.b16 %v5267
    %v5839 = vunpack.c.h.b16 %v5267
    %v5840 = vunpack.c.l.b16 %v5268
    %v5841 = vunpack.c.h.b16 %v5268
    %v5842 = vunpack.c.l.b16 %v5269
    %v5843 = vunpack.c.l.b16 %v5270
    %v5844 = vunpack.c.h.b16 %v5270
    %v5845 = vunpack.c.l.b16 %v5271
    %v5846 = vunpack.c.h.b16 %v5271
    %v5847 = vunpack.c.l.b16 %v5272
    %v5848 = vunpack.c.h.b16 %v5272
    %v5849 = vunpack.c.l.b16 %v5273
    %v5850 = vunpack.c.h.b16 %v5273
    %v5851 = vunpack.c.l.b16 %v5274
    %v5852 = vunpack.c.l.b16 %v5275
    %v5853 = vunpack.c.h.b16 %v5275
    %v5854 = vunpack.c.l.b16 %v5276
    %v5855 = vunpack.c.h.b16 %v5276
    %v5856 = vunpack.c.l.b16 %v5277
    %v5857 = vunpack.c.h.b16 %v5277
    %v5858 = vunpack.c.l.b16 %v5278
    %v5859 = vunpack.c.h.b16 %v5278
    %v5860 = vunpack.c.l.b16 %v5279
    %v5861 = vunpack.c.l.b16 %v5280
    %v5862 = vunpack.c.h.b16 %v5280
    %v5863 = vunpack.c.l.b16 %v5281
    %v5864 = vunpack.c.h.b16 %v5281
    %v5865 = vunpack.c.l.b16 %v5282
    %v5866 = vunpack.c.h.b16 %v5282
    %v5867 = vunpack.c.l.b16 %v5283
    %v5868 = vunpack.c.h.b16 %v5283
    %v5869 = vunpack.c.l.b16 %v5284
    %v5870 = vunpack.c.l.b16 %v5285
    %v5871 = vunpack.c.h.b16 %v5285
    %v5872 = vunpack.c.l.b16 %v5286
    %v5873 = vunpack.c.h.b16 %v5286
    %v5874 = vunpack.c.l.b16 %v5287
    %v5875 = vunpack.c.h.b16 %v5287
    %v5876 = vunpack.c.l.b16 %v5288
    %v5877 = vunpack.c.h.b16 %v5288
    %v5878 = vunpack.c.l.b16 %v5289
    %v5879 = vunpack.c.l.b16 %v5290
    %v5880 = vunpack.c.h.b16 %v5290
    %v5881 = vunpack.c.l.b16 %v5291
    %v5882 = vunpack.c.h.b16 %v5291
    %v5883 = vunpack.c.l.b16 %v5292
    %v5884 = vunpack.c.h.b16 %v5292
    %v5885 = vunpack.c.l.b16 %v5293
    %v5886 = vunpack.c.h.b16 %v5293
    %v5887 = vunpack.c.l.b16 %v5294
    %v5888 = vunpack.c.l.b16 %v5295
    %v5889 = vunpack.c.h.b16 %v5295
    %v5890 = vunpack.c.l.b16 %v5296
    %v5891 = vunpack.c.h.b16 %v5296
    %v5892 = vunpack.c.l.b16 %v5297
    %v5893 = vunpack.c.h.b16 %v5297
    %v5894 = vunpack.c.l.b16 %v5298
    %v5895 = vunpack.c.h.b16 %v5298
    %v5896 = vunpack.c.l.b16 %v5299
    %v5897 = vunpack.c.l.b16 %v5300
    %v5898 = vunpack.c.h.b16 %v5300
    %v5899 = vunpack.c.l.b16 %v5301
    %v5900 = vunpack.c.h.b16 %v5301
    %v5901 = vunpack.c.l.b16 %v5302
    %v5902 = vunpack.c.h.b16 %v5302
    %v5903 = vunpack.c.l.b16 %v5303
    %v5904 = vunpack.c.h.b16 %v5303
    %v5905 = vunpack.c.l.b16 %v5304
    %v5906 = vunpack.c.l.b16 %v5305
    %v5907 = vunpack.c.h.b16 %v5305
    %v5908 = vunpack.c.l.b16 %v5306
    %v5909 = vunpack.c.h.b16 %v5306
    %v5910 = vunpack.c.l.b16 %v5307
    %v5911 = vunpack.c.h.b16 %v5307
    %v5912 = vunpack.c.l.b16 %v5308
    %v5913 = vunpack.c.h.b16 %v5308
    %v5914 = vunpack.c.l.b16 %v5309
    %v5915 = vunpack.c.l.b16 %v5310
    %v5916 = vunpack.c.h.b16 %v5310
    %v5917 = vunpack.c.l.b16 %v5311
    %v5918 = vunpack.c.h.b16 %v5311
    %v5919 = vunpack.c.l.b16 %v5312
    %v5920 = vunpack.c.h.b16 %v5312
    %v5921 = vunpack.c.l.b16 %v5313
    %v5922 = vunpack.c.h.b16 %v5313
    %v5923 = vunpack.c.l.b16 %v5314
    %v5924 = vunpack.c.l.b16 %v5315
    %v5925 = vunpack.c.h.b16 %v5315
    %v5926 = vunpack.c.l.b16 %v5316
    %v5927 = vunpack.c.h.b16 %v5316
    %v5928 = vunpack.c.l.b16 %v5317
    %v5929 = vunpack.c.h.b16 %v5317
    %v5930 = vunpack.c.l.b16 %v5318
    %v5931 = vunpack.c.h.b16 %v5318
    %v5932 = vunpack.c.l.b16 %v5319
    %v5933 = vunpack.c.l.b16 %v5320
    %v5934 = vunpack.c.h.b16 %v5320
    %v5935 = vunpack.c.l.b16 %v5321
    %v5936 = vunpack.c.h.b16 %v5321
    %v5937 = vunpack.c.l.b16 %v5322
    %v5938 = vunpack.c.h.b16 %v5322
    %v5939 = vunpack.c.l.b16 %v5323
    %v5940 = vunpack.c.h.b16 %v5323
    %v5941 = vunpack.c.l.b16 %v5324
    %v5942 = vunpack.c.l.b16 %v5325
    %v5943 = vunpack.c.h.b16 %v5325
    %v5944 = vunpack.c.l.b16 %v5326
    %v5945 = vunpack.c.h.b16 %v5326
    %v5946 = vunpack.c.l.b16 %v5327
    %v5947 = vunpack.c.h.b16 %v5327
    %v5948 = vunpack.c.l.b16 %v5328
    %v5949 = vunpack.c.h.b16 %v5328
    %v5950 = vunpack.c.l.b16 %v5329
    %v5951 = vunpack.c.l.b16 %v5330
    %v5952 = vunpack.c.h.b16 %v5330
    %v5953 = vunpack.c.l.b16 %v5331
    %v5954 = vunpack.c.h.b16 %v5331
    %v5955 = vunpack.c.l.b16 %v5332
    %v5956 = vunpack.c.h.b16 %v5332
    %v5957 = vunpack.c.l.b16 %v5333
    %v5958 = vunpack.c.h.b16 %v5333
    %v5959 = vunpack.c.l.b16 %v5334
    %v5960 = vunpack.c.l.b16 %v5335
    %v5961 = vunpack.c.h.b16 %v5335
    %v5962 = vunpack.c.l.b16 %v5336
    %v5963 = vunpack.c.h.b16 %v5336
    %v5964 = vunpack.c.l.b16 %v5337
    %v5965 = vunpack.c.h.b16 %v5337
    %v5966 = vunpack.c.l.b16 %v5338
    %v5967 = vunpack.c.h.b16 %v5338
    %v5968 = vunpack.c.l.b16 %v5339
    %v5969 = vunpack.c.l.b16 %v5340
    %v5970 = vunpack.c.h.b16 %v5340
    %v5971 = vunpack.c.l.b16 %v5341
    %v5972 = vunpack.c.h.b16 %v5341
    %v5973 = vunpack.c.l.b16 %v5342
    %v5974 = vunpack.c.h.b16 %v5342
    %v5975 = vunpack.c.l.b16 %v5343
    %v5976 = vunpack.c.h.b16 %v5343
    %v5977 = vunpack.c.l.b16 %v5344
    %v5978 = vunpack.c.l.b16 %v5345
    %v5979 = vunpack.c.h.b16 %v5345
    %v5980 = vunpack.c.l.b16 %v5346
    %v5981 = vunpack.c.h.b16 %v5346
    %v5982 = vunpack.c.l.b16 %v5347
    %v5983 = vunpack.c.h.b16 %v5347
    %v5984 = vunpack.c.l.b16 %v5348
    %v5985 = vunpack.c.h.b16 %v5348
    %v5986 = vunpack.c.l.b16 %v5349
    %v5987 = vunpack.c.l.b16 %v5350
    %v5988 = vunpack.c.h.b16 %v5350
    %v5989 = vunpack.c.l.b16 %v5351
    %v5990 = vunpack.c.h.b16 %v5351
    %v5991 = vunpack.c.l.b16 %v5352
    %v5992 = vunpack.c.h.b16 %v5352
    %v5993 = vunpack.c.l.b16 %v5353
    %v5994 = vunpack.c.h.b16 %v5353
    %v5995 = vunpack.c.l.b16 %v5354
    %v5996 = vunpack.c.l.b16 %v5355
    %v5997 = vunpack.c.h.b16 %v5355
    %v5998 = vunpack.c.l.b16 %v5356
    %v5999 = vunpack.c.h.b16 %v5356
    %v6000 = vunpack.c.l.b16 %v5357
    %v6001 = vunpack.c.h.b16 %v5357
    %v6002 = vunpack.c.l.b16 %v5358
    %v6003 = vunpack.c.h.b16 %v5358
    %v6004 = vunpack.c.l.b16 %v5359
    %v6005 = vunpack.c.l.b16 %v5360
    %v6006 = vunpack.c.h.b16 %v5360
    %v6007 = vunpack.c.l.b16 %v5361
    %v6008 = vunpack.c.h.b16 %v5361
    %v6009 = vunpack.c.l.b16 %v5362
    %v6010 = vunpack.c.h.b16 %v5362
    %v6011 = vunpack.c.l.b16 %v5363
    %v6012 = vunpack.c.h.b16 %v5363
    %v6013 = vunpack.c.l.b16 %v5364
    %v6014 = vunpack.c.l.b16 %v5365
    %v6015 = vunpack.c.h.b16 %v5365
    %v6016 = vunpack.c.l.b16 %v5366
    %v6017 = vunpack.c.h.b16 %v5366
    %v6018 = vunpack.c.l.b16 %v5367
    %v6019 = vunpack.c.h.b16 %v5367
    %v6020 = vunpack.c.l.b16 %v5368
    %v6021 = vunpack.c.h.b16 %v5368
    %v6022 = vunpack.c.l.b16 %v5369
    %v6023 = vunpack.c.l.b16 %v5370
    %v6024 = vunpack.c.h.b16 %v5370
    %v6025 = vunpack.c.l.b16 %v5371
    %v6026 = vunpack.c.h.b16 %v5371
    %v6027 = vunpack.c.l.b16 %v5372
    %v6028 = vunpack.c.h.b16 %v5372
    %v6029 = vunpack.c.l.b16 %v5373
    %v6030 = vunpack.c.h.b16 %v5373
    %v6031 = vunpack.c.l.b16 %v5374
    %v6032 = vunpack.c.l.b16 %v5375
    %v6033 = vunpack.c.h.b16 %v5375
    %v6034 = vunpack.c.l.b16 %v5376
    %v6035 = vunpack.c.h.b16 %v5376
    %v6036 = vunpack.c.l.b16 %v5377
    %v6037 = vunpack.c.h.b16 %v5377
    %v6038 = vunpack.c.l.b16 %v5378
    %v6039 = vunpack.c.h.b16 %v5378
    %v6040 = vunpack.c.l.b16 %v5379
    %v6041 = vunpack.c.l.b16 %v5380
    %v6042 = vunpack.c.h.b16 %v5380
    %v6043 = vunpack.c.l.b16 %v5381
    %v6044 = vunpack.c.h.b16 %v5381
    %v6045 = vunpack.c.l.b16 %v5382
    %v6046 = vunpack.c.h.b16 %v5382
    %v6047 = vunpack.c.l.b16 %v5383
    %v6048 = vunpack.c.h.b16 %v5383
    %v6049 = vunpack.c.l.b16 %v5384
    %v6050 = vunpack.c.l.b16 %v5385
    %v6051 = vunpack.c.h.b16 %v5385
    %v6052 = vunpack.c.l.b16 %v5386
    %v6053 = vunpack.c.h.b16 %v5386
    %v6054 = vunpack.c.l.b16 %v5387
    %v6055 = vunpack.c.h.b16 %v5387
    %v6056 = vunpack.c.l.b16 %v5388
    %v6057 = vunpack.c.h.b16 %v5388
    %v6058 = vunpack.c.l.b16 %v5389
    %v6059 = vunpack.c.l.b16 %v5390
    %v6060 = vunpack.c.h.b16 %v5390
    %v6061 = vunpack.c.l.b16 %v5391
    %v6062 = vunpack.c.h.b16 %v5391
    %v6063 = vunpack.c.l.b16 %v5392
    %v6064 = vunpack.c.h.b16 %v5392
    %v6065 = vunpack.c.l.b16 %v5393
    %v6066 = vunpack.c.h.b16 %v5393
    %v6067 = vunpack.c.l.b16 %v5394
    %v6068 = vunpack.c.l.b16 %v5395
    %v6069 = vunpack.c.h.b16 %v5395
    %v6070 = vunpack.c.l.b16 %v5396
    %v6071 = vunpack.c.h.b16 %v5396
    %v6072 = vunpack.c.l.b16 %v5397
    %v6073 = vunpack.c.h.b16 %v5397
    %v6074 = vunpack.c.l.b16 %v5398
    %v6075 = vunpack.c.h.b16 %v5398
    %v6076 = vunpack.c.l.b16 %v5399
    %v6077 = vunpack.c.l.b16 %v5400
    %v6078 = vunpack.c.h.b16 %v5400
    %v6079 = vunpack.c.l.b16 %v5401
    %v6080 = vunpack.c.h.b16 %v5401
    %v6081 = vunpack.c.l.b16 %v5402
    %v6082 = vunpack.c.h.b16 %v5402
    %v6083 = vunpack.c.l.b16 %v5403
    %v6084 = vunpack.c.h.b16 %v5403
    %v6085 = vunpack.c.l.b16 %v5404
    %v6086 = vunpack.c.l.b16 %v5405
    %v6087 = vunpack.c.h.b16 %v5405
    %v6088 = vunpack.c.l.b16 %v5406
    %v6089 = vunpack.c.h.b16 %v5406
    %v6090 = vunpack.c.l.b16 %v5407
    %v6091 = vunpack.c.h.b16 %v5407
    %v6092 = vunpack.c.l.b16 %v5408
    %v6093 = vunpack.c.h.b16 %v5408
    %v6094 = vunpack.c.l.b16 %v5409
    %v6095 = vunpack.c.l.b16 %v5410
    %v6096 = vunpack.c.h.b16 %v5410
    %v6097 = vunpack.c.l.b16 %v5411
    %v6098 = vunpack.c.h.b16 %v5411
    %v6099 = vunpack.c.l.b16 %v5412
    %v6100 = vunpack.c.h.b16 %v5412
    %v6101 = vunpack.c.l.b16 %v5413
    %v6102 = vunpack.c.h.b16 %v5413
    %v6103 = vunpack.c.l.b16 %v5414
    %v6104 = vpack.c.b16 %v5681, %v5672
    %v6105 = vpack.c.b16 %v5682, %v5673
    %v6106 = vpack.c.b16 %v5683, %v5674
    %v6107 = vpack.c.b16 %v5684, %v5675
    %v6108 = vpack.c.b16 %v5685, %v5676
    %v6109 = vpack.c.b16 %v5686, %v5677
    %v6110 = vpack.c.b16 %v5687, %v5678
    %v6111 = vpack.c.b16 %v5688, %v5679
    %v6112 = vpack.c.b16 %v5689, %v5680
    %v6113 = vpack.c.b16 %v5699, %v5690
    %v6114 = vpack.c.b16 %v5700, %v5691
    %v6115 = vpack.c.b16 %v5701, %v5692
    %v6116 = vpack.c.b16 %v5702, %v5693
    %v6117 = vpack.c.b16 %v5703, %v5694
    %v6118 = vpack.c.b16 %v5704, %v5695
    %v6119 = vpack.c.b16 %v5705, %v5696
    %v6120 = vpack.c.b16 %v5706, %v5697
    %v6121 = vpack.c.b16 %v5707, %v5698
    %v6122 = vpack.c.b16 %v5717, %v5708
    %v6123 = vpack.c.b16 %v5718, %v5709
    %v6124 = vpack.c.b16 %v5719, %v5710
    %v6125 = vpack.c.b16 %v5720, %v5711
    %v6126 = vpack.c.b16 %v5721, %v5712
    %v6127 = vpack.c.b16 %v5722, %v5713
    %v6128 = vpack.c.b16 %v5723, %v5714
    %v6129 = vpack.c.b16 %v5724, %v5715
    %v6130 = vpack.c.b16 %v5725, %v5716
    %v6131 = vpack.c.b16 %v5735, %v5726
    %v6132 = vpack.c.b16 %v5736, %v5727
    %v6133 = vpack.c.b16 %v5737, %v5728
    %v6134 = vpack.c.b16 %v5738, %v5729
    %v6135 = vpack.c.b16 %v5739, %v5730
    %v6136 = vpack.c.b16 %v5740, %v5731
    %v6137 = vpack.c.b16 %v5741, %v5732
    %v6138 = vpack.c.b16 %v5742, %v5733
    %v6139 = vpack.c.b16 %v5743, %v5734
    %v6140 = vpack.c.b16 %v5753, %v5744
    %v6141 = vpack.c.b16 %v5754, %v5745
    %v6142 = vpack.c.b16 %v5755, %v5746
    %v6143 = vpack.c.b16 %v5756, %v5747
    %v6144 = vpack.c.b16 %v5757, %v5748
    %v6145 = vpack.c.b16 %v5758, %v5749
    %v6146 = vpack.c.b16 %v5759, %v5750
    %v6147 = vpack.c.b16 %v5760, %v5751
    %v6148 = vpack.c.b16 %v5761, %v5752
    %v6149 = vpack.c.b16 %v5771, %v5762
    %v6150 = vpack.c.b16 %v5772, %v5763
    %v6151 = vpack.c.b16 %v5773, %v5764
    %v6152 = vpack.c.b16 %v5774, %v5765
    %v6153 = vpack.c.b16 %v5775, %v5766
    %v6154 = vpack.c.b16 %v5776, %v5767
    %v6155 = vpack.c.b16 %v5777, %v5768
    %v6156 = vpack.c.b16 %v5778, %v5769
    %v6157 = vpack.c.b16 %v5779, %v5770
    %v6158 = vpack.c.b16 %v5789, %v5780
    %v6159 = vpack.c.b16 %v5790, %v5781
    %v6160 = vpack.c.b16 %v5791, %v5782
    %v6161 = vpack.c.b16 %v5792, %v5783
    %v6162 = vpack.c.b16 %v5793, %v5784
    %v6163 = vpack.c.b16 %v5794, %v5785
    %v6164 = vpack.c.b16 %v5795, %v5786
    %v6165 = vpack.c.b16 %v5796, %v5787
    %v6166 = vpack.c.b16 %v5797, %v5788
    %v6167 = vpack.c.b16 %v5807, %v5798
    %v6168 = vpack.c.b16 %v5808, %v5799
    %v6169 = vpack.c.b16 %v5809, %v5800
    %v6170 = vpack.c.b16 %v5810, %v5801
    %v6171 = vpack.c.b16 %v5811, %v5802
    %v6172 = vpack.c.b16 %v5812, %v5803
    %v6173 = vpack.c.b16 %v5813, %v5804
    %v6174 = vpack.c.b16 %v5814, %v5805
    %v6175 = vpack.c.b16 %v5815, %v5806
    %v6176 = vpack.c.b16 %v5825, %v5816
    %v6177 = vpack.c.b16 %v5826, %v5817
    %v6178 = vpack.c.b16 %v5827, %v5818
    %v6179 = vpack.c.b16 %v5828, %v5819
    %v6180 = vpack.c.b16 %v5829, %v5820
    %v6181 = vpack.c.b16 %v5830, %v5821
    %v6182 = vpack.c.b16 %v5831, %v5822
    %v6183 = vpack.c.b16 %v5832, %v5823
    %v6184 = vpack.c.b16 %v5833, %v5824
    %v6185 = vpack.c.b16 %v5843, %v5834
    %v6186 = vpack.c.b16 %v5844, %v5835
    %v6187 = vpack.c.b16 %v5845, %v5836
    %v6188 = vpack.c.b16 %v5846, %v5837
    %v6189 = vpack.c.b16 %v5847, %v5838
    %v6190 = vpack.c.b16 %v5848, %v5839
    %v6191 = vpack.c.b16 %v5849, %v5840
    %v6192 = vpack.c.b16 %v5850, %v5841
    %v6193 = vpack.c.b16 %v5851, %v5842
    %v6194 = vpack.c.b16 %v5861, %v5852
    %v6195 = vpack.c.b16 %v5862, %v5853
    %v6196 = vpack.c.b16 %v5863, %v5854
    %v6197 = vpack.c.b16 %v5864, %v5855
    %v6198 = vpack.c.b16 %v5865, %v5856
    %v6199 = vpack.c.b16 %v5866, %v5857
    %v6200 = vpack.c.b16 %v5867, %v5858
    %v6201 = vpack.c.b16 %v5868, %v5859
    %v6202 = vpack.c.b16 %v5869, %v5860
    %v6203 = vpack.c.b16 %v5879, %v5870
    %v6204 = vpack.c.b16 %v5880, %v5871
    %v6205 = vpack.c.b16 %v5881, %v5872
    %v6206 = vpack.c.b16 %v5882, %v5873
    %v6207 = vpack.c.b16 %v5883, %v5874
    %v6208 = vpack.c.b16 %v5884, %v5875
    %v6209 = vpack.c.b16 %v5885, %v5876
    %v6210 = vpack.c.b16 %v5886, %v5877
    %v6211 = vpack.c.b16 %v5887, %v5878
    %v6212 = vpack.c.b16 %v5897, %v5888
    %v6213 = vpack.c.b16 %v5898, %v5889
    %v6214 = vpack.c.b16 %v5899, %v5890
    %v6215 = vpack.c.b16 %v5900, %v5891
    %v6216 = vpack.c.b16 %v5901, %v5892
    %v6217 = vpack.c.b16 %v5902, %v5893
    %v6218 = vpack.c.b16 %v5903, %v5894
    %v6219 = vpack.c.b16 %v5904, %v5895
    %v6220 = vpack.c.b16 %v5905, %v5896
    %v6221 = vpack.c.b16 %v5915, %v5906
    %v6222 = vpack.c.b16 %v5916, %v5907
    %v6223 = vpack.c.b16 %v5917, %v5908
    %v6224 = vpack.c.b16 %v5918, %v5909
    %v6225 = vpack.c.b16 %v5919, %v5910
    %v6226 = vpack.c.b16 %v5920, %v5911
    %v6227 = vpack.c.b16 %v5921, %v5912
    %v6228 = vpack.c.b16 %v5922, %v5913
    %v6229 = vpack.c.b16 %v5923, %v5914
    %v6230 = vpack.c.b16 %v5933, %v5924
    %v6231 = vpack.c.b16 %v5934, %v5925
    %v6232 = vpack.c.b16 %v5935, %v5926
    %v6233 = vpack.c.b16 %v5936, %v5927
    %v6234 = vpack.c.b16 %v5937, %v5928
    %v6235 = vpack.c.b16 %v5938, %v5929
    %v6236 = vpack.c.b16 %v5939, %v5930
    %v6237 = vpack.c.b16 %v5940, %v5931
    %v6238 = vpack.c.b16 %v5941, %v5932
    %v6239 = vpack.c.b16 %v5951, %v5942
    %v6240 = vpack.c.b16 %v5952, %v5943
    %v6241 = vpack.c.b16 %v5953, %v5944
    %v6242 = vpack.c.b16 %v5954, %v5945
    %v6243 = vpack.c.b16 %v5955, %v5946
    %v6244 = vpack.c.b16 %v5956, %v5947
    %v6245 = vpack.c.b16 %v5957, %v5948
    %v6246 = vpack.c.b16 %v5958, %v5949
    %v6247 = vpack.c.b16 %v5959, %v5950
    %v6248 = vpack.c.b16 %v5969, %v5960
    %v6249 = vpack.c.b16 %v5970, %v5961
    %v6250 = vpack.c.b16 %v5971, %v5962
    %v6251 = vpack.c.b16 %v5972, %v5963
    %v6252 = vpack.c.b16 %v5973, %v5964
    %v6253 = vpack.c.b16 %v5974, %v5965
    %v6254 = vpack.c.b16 %v5975, %v5966
    %v6255 = vpack.c.b16 %v5976, %v5967
    %v6256 = vpack.c.b16 %v5977, %v5968
    %v6257 = vpack.c.b16 %v5987, %v5978
    %v6258 = vpack.c.b16 %v5988, %v5979
    %v6259 = vpack.c.b16 %v5989, %v5980
    %v6260 = vpack.c.b16 %v5990, %v5981
    %v6261 = vpack.c.b16 %v5991, %v5982
    %v6262 = vpack.c.b16 %v5992, %v5983
    %v6263 = vpack.c.b16 %v5993, %v5984
    %v6264 = vpack.c.b16 %v5994, %v5985
    %v6265 = vpack.c.b16 %v5995, %v5986
    %v6266 = vpack.c.b16 %v6005, %v5996
    %v6267 = vpack.c.b16 %v6006, %v5997
    %v6268 = vpack.c.b16 %v6007, %v5998
    %v6269 = vpack.c.b16 %v6008, %v5999
    %v6270 = vpack.c.b16 %v6009, %v6000
    %v6271 = vpack.c.b16 %v6010, %v6001
    %v6272 = vpack.c.b16 %v6011, %v6002
    %v6273 = vpack.c.b16 %v6012, %v6003
    %v6274 = vpack.c.b16 %v6013, %v6004
    %v6275 = vpack.c.b16 %v6023, %v6014
    %v6276 = vpack.c.b16 %v6024, %v6015
    %v6277 = vpack.c.b16 %v6025, %v6016
    %v6278 = vpack.c.b16 %v6026, %v6017
    %v6279 = vpack.c.b16 %v6027, %v6018
    %v6280 = vpack.c.b16 %v6028, %v6019
    %v6281 = vpack.c.b16 %v6029, %v6020
    %v6282 = vpack.c.b16 %v6030, %v6021
    %v6283 = vpack.c.b16 %v6031, %v6022
    %v6284 = vpack.c.b16 %v6041, %v6032
    %v6285 = vpack.c.b16 %v6042, %v6033
    %v6286 = vpack.c.b16 %v6043, %v6034
    %v6287 = vpack.c.b16 %v6044, %v6035
    %v6288 = vpack.c.b16 %v6045, %v6036
    %v6289 = vpack.c.b16 %v6046, %v6037
    %v6290 = vpack.c.b16 %v6047, %v6038
    %v6291 = vpack.c.b16 %v6048, %v6039
    %v6292 = vpack.c.b16 %v6049, %v6040
    %v6293 = vpack.c.b16 %v6059, %v6050
    %v6294 = vpack.c.b16 %v6060, %v6051
    %v6295 = vpack.c.b16 %v6061, %v6052
    %v6296 = vpack.c.b16 %v6062, %v6053
    %v6297 = vpack.c.b16 %v6063, %v6054
    %v6298 = vpack.c.b16 %v6064, %v6055
    %v6299 = vpack.c.b16 %v6065, %v6056
    %v6300 = vpack.c.b16 %v6066, %v6057
    %v6301 = vpack.c.b16 %v6067, %v6058
    %v6302 = vpack.c.b16 %v6077, %v6068
    %v6303 = vpack.c.b16 %v6078, %v6069
    %v6304 = vpack.c.b16 %v6079, %v6070
    %v6305 = vpack.c.b16 %v6080, %v6071
    %v6306 = vpack.c.b16 %v6081, %v6072
    %v6307 = vpack.c.b16 %v6082, %v6073
    %v6308 = vpack.c.b16 %v6083, %v6074
    %v6309 = vpack.c.b16 %v6084, %v6075
    %v6310 = vpack.c.b16 %v6085, %v6076
    %v6311 = vpack.c.b16 %v6095, %v6086
    %v6312 = vpack.c.b16 %v6096, %v6087
    %v6313 = vpack.c.b16 %v6097, %v6088
    %v6314 = vpack.c.b16 %v6098, %v6089
    %v6315 = vpack.c.b16 %v6099, %v6090
    %v6316 = vpack.c.b16 %v6100, %v6091
    %v6317 = vpack.c.b16 %v6101, %v6092
    %v6318 = vpack.c.b16 %v6102, %v6093
    %v6319 = vpack.c.b16 %v6103, %v6094
    %6536 = vmatpush.bf16.msra.mxu0 %v6167
    %6537 = vmatpush.bf16.msra.mxu0 %v6158
    %6538 = vmatpush.bf16.msra.mxu0 %v6149
    %6539 = vmatpush.bf16.msra.mxu0 %v6140
    %6540 = vmatpush.bf16.msra.mxu0 %v6131
    %6541 = vmatpush.bf16.msra.mxu0 %v6122
    %6542 = vmatpush.bf16.msra.mxu0 %v6113
    %6543 = vmatpush.bf16.msra.mxu0 %v6104
    %6544 = vmatmul.bf16.gmra.mxu0 0
    %v6545 = vpop.f32.mrf.mxu0
    %v6546 = vadd.f32 0.0, %v6545
    %v6547 = vpop.f32.mrf.mxu0
    %6548 = vdwg.mxu0
    %6549 = vmatpush.bf16.msra.mxu0 %v6239
    %6550 = vmatpush.bf16.msra.mxu0 %v6230
    %6551 = vmatpush.bf16.msra.mxu0 %v6221
    %6552 = vmatpush.bf16.msra.mxu0 %v6212
    %6553 = vmatpush.bf16.msra.mxu0 %v6203
    %6554 = vmatpush.bf16.msra.mxu0 %v6194
    %6555 = vmatpush.bf16.msra.mxu0 %v6185
    %6556 = vmatpush.bf16.msra.mxu0 %v6176
    %6557 = vmatmul.bf16.gmra.mxu0 0
    %v6558 = vpop.f32.mrf.mxu0
    %v6559 = vadd.f32 %v6546, %v6558
    %v6560 = vpop.f32.mrf.mxu0
    %6561 = vdwg.mxu0
    %6562 = vmatpush.bf16.msra.mxu0 %v6311
    %6563 = vmatpush.bf16.msra.mxu0 %v6302
    %6564 = vmatpush.bf16.msra.mxu0 %v6293
    %6565 = vmatpush.bf16.msra.mxu0 %v6284
    %6566 = vmatpush.bf16.msra.mxu0 %v6275
    %6567 = vmatpush.bf16.msra.mxu0 %v6266
    %6568 = vmatpush.bf16.msra.mxu0 %v6257
    %6569 = vmatpush.bf16.msra.mxu0 %v6248
    %6570 = vmatmul.bf16.gmra.mxu0 0
    %v6571 = vpop.f32.mrf.mxu0
    %v6572 = vadd.f32 %v6559, %v6571
    %v6573 = vpop.f32.mrf.mxu0
    %6574 = vdwg.mxu0
    %6575 = vmatpush.bf16.msra.mxu0 %v6168
    %6576 = vmatpush.bf16.msra.mxu0 %v6159
    %6577 = vmatpush.bf16.msra.mxu0 %v6150
    %6578 = vmatpush.bf16.msra.mxu0 %v6141
    %6579 = vmatpush.bf16.msra.mxu0 %v6132
    %6580 = vmatpush.bf16.msra.mxu0 %v6123
    %6581 = vmatpush.bf16.msra.mxu0 %v6114
    %6582 = vmatpush.bf16.msra.mxu0 %v6105
    %6583 = vmatmul.bf16.gmra.mxu0 0
    %v6584 = vpop.f32.mrf.mxu0
    %v6585 = vadd.f32 0.0, %v6584
    %v6586 = vpop.f32.mrf.mxu0
    %6587 = vdwg.mxu0
    %6588 = vmatpush.bf16.msra.mxu0 %v6240
    %6589 = vmatpush.bf16.msra.mxu0 %v6231
    %6590 = vmatpush.bf16.msra.mxu0 %v6222
    %6591 = vmatpush.bf16.msra.mxu0 %v6213
    %6592 = vmatpush.bf16.msra.mxu0 %v6204
    %6593 = vmatpush.bf16.msra.mxu0 %v6195
    %6594 = vmatpush.bf16.msra.mxu0 %v6186
    %6595 = vmatpush.bf16.msra.mxu0 %v6177
    %6596 = vmatmul.bf16.gmra.mxu0 0
    %v6597 = vpop.f32.mrf.mxu0
    %v6598 = vadd.f32 %v6585, %v6597
    %v6599 = vpop.f32.mrf.mxu0
    %6600 = vdwg.mxu0
    %6601 = vmatpush.bf16.msra.mxu0 %v6312
    %6602 = vmatpush.bf16.msra.mxu0 %v6303
    %6603 = vmatpush.bf16.msra.mxu0 %v6294
    %6604 = vmatpush.bf16.msra.mxu0 %v6285
    %6605 = vmatpush.bf16.msra.mxu0 %v6276
    %6606 = vmatpush.bf16.msra.mxu0 %v6267
    %6607 = vmatpush.bf16.msra.mxu0 %v6258
    %6608 = vmatpush.bf16.msra.mxu0 %v6249
    %6609 = vmatmul.bf16.gmra.mxu0 0
    %v6610 = vpop.f32.mrf.mxu0
    %v6611 = vadd.f32 %v6598, %v6610
    %v6612 = vpop.f32.mrf.mxu0
    %6613 = vdwg.mxu0
    %6614 = vmatpush.bf16.msra.mxu0 %v6169
    %6615 = vmatpush.bf16.msra.mxu0 %v6160
    %6616 = vmatpush.bf16.msra.mxu0 %v6151
    %6617 = vmatpush.bf16.msra.mxu0 %v6142
    %6618 = vmatpush.bf16.msra.mxu0 %v6133
    %6619 = vmatpush.bf16.msra.mxu0 %v6124
    %6620 = vmatpush.bf16.msra.mxu0 %v6115
    %6621 = vmatpush.bf16.msra.mxu0 %v6106
    %6622 = vmatmul.bf16.gmra.mxu0 0
    %v6623 = vpop.f32.mrf.mxu0
    %v6624 = vadd.f32 0.0, %v6623
    %v6625 = vpop.f32.mrf.mxu0
    %6626 = vdwg.mxu0
    %6627 = vmatpush.bf16.msra.mxu0 %v6241
    %6628 = vmatpush.bf16.msra.mxu0 %v6232
    %6629 = vmatpush.bf16.msra.mxu0 %v6223
    %6630 = vmatpush.bf16.msra.mxu0 %v6214
    %6631 = vmatpush.bf16.msra.mxu0 %v6205
    %6632 = vmatpush.bf16.msra.mxu0 %v6196
    %6633 = vmatpush.bf16.msra.mxu0 %v6187
    %6634 = vmatpush.bf16.msra.mxu0 %v6178
    %6635 = vmatmul.bf16.gmra.mxu0 0
    %v6636 = vpop.f32.mrf.mxu0
    %v6637 = vadd.f32 %v6624, %v6636
    %v6638 = vpop.f32.mrf.mxu0
    %6639 = vdwg.mxu0
    %6640 = vmatpush.bf16.msra.mxu0 %v6313
    %6641 = vmatpush.bf16.msra.mxu0 %v6304
    %6642 = vmatpush.bf16.msra.mxu0 %v6295
    %6643 = vmatpush.bf16.msra.mxu0 %v6286
    %6644 = vmatpush.bf16.msra.mxu0 %v6277
    %6645 = vmatpush.bf16.msra.mxu0 %v6268
    %6646 = vmatpush.bf16.msra.mxu0 %v6259
    %6647 = vmatpush.bf16.msra.mxu0 %v6250
    %6648 = vmatmul.bf16.gmra.mxu0 0
    %v6649 = vpop.f32.mrf.mxu0
    %v6650 = vadd.f32 %v6637, %v6649
    %v6651 = vpop.f32.mrf.mxu0
    %6652 = vdwg.mxu0
    %6653 = vmatpush.bf16.msra.mxu0 %v6170
    %6654 = vmatpush.bf16.msra.mxu0 %v6161
    %6655 = vmatpush.bf16.msra.mxu0 %v6152
    %6656 = vmatpush.bf16.msra.mxu0 %v6143
    %6657 = vmatpush.bf16.msra.mxu0 %v6134
    %6658 = vmatpush.bf16.msra.mxu0 %v6125
    %6659 = vmatpush.bf16.msra.mxu0 %v6116
    %6660 = vmatpush.bf16.msra.mxu0 %v6107
    %6661 = vmatmul.bf16.gmra.mxu0 0
    %v6662 = vpop.f32.mrf.mxu0
    %v6663 = vadd.f32 0.0, %v6662
    %v6664 = vpop.f32.mrf.mxu0
    %6665 = vdwg.mxu0
    %6666 = vmatpush.bf16.msra.mxu0 %v6242
    %6667 = vmatpush.bf16.msra.mxu0 %v6233
    %6668 = vmatpush.bf16.msra.mxu0 %v6224
    %6669 = vmatpush.bf16.msra.mxu0 %v6215
    %6670 = vmatpush.bf16.msra.mxu0 %v6206
    %6671 = vmatpush.bf16.msra.mxu0 %v6197
    %6672 = vmatpush.bf16.msra.mxu0 %v6188
    %6673 = vmatpush.bf16.msra.mxu0 %v6179
    %6674 = vmatmul.bf16.gmra.mxu0 0
    %v6675 = vpop.f32.mrf.mxu0
    %v6676 = vadd.f32 %v6663, %v6675
    %v6677 = vpop.f32.mrf.mxu0
    %6678 = vdwg.mxu0
    %6679 = vmatpush.bf16.msra.mxu0 %v6314
    %6680 = vmatpush.bf16.msra.mxu0 %v6305
    %6681 = vmatpush.bf16.msra.mxu0 %v6296
    %6682 = vmatpush.bf16.msra.mxu0 %v6287
    %6683 = vmatpush.bf16.msra.mxu0 %v6278
    %6684 = vmatpush.bf16.msra.mxu0 %v6269
    %6685 = vmatpush.bf16.msra.mxu0 %v6260
    %6686 = vmatpush.bf16.msra.mxu0 %v6251
    %6687 = vmatmul.bf16.gmra.mxu0 0
    %v6688 = vpop.f32.mrf.mxu0
    %v6689 = vadd.f32 %v6676, %v6688
    %v6690 = vpop.f32.mrf.mxu0
    %6691 = vdwg.mxu0
    %6692 = vmatpush.bf16.msra.mxu0 %v6171
    %6693 = vmatpush.bf16.msra.mxu0 %v6162
    %6694 = vmatpush.bf16.msra.mxu0 %v6153
    %6695 = vmatpush.bf16.msra.mxu0 %v6144
    %6696 = vmatpush.bf16.msra.mxu0 %v6135
    %6697 = vmatpush.bf16.msra.mxu0 %v6126
    %6698 = vmatpush.bf16.msra.mxu0 %v6117
    %6699 = vmatpush.bf16.msra.mxu0 %v6108
    %6700 = vmatmul.bf16.gmra.mxu0 0
    %v6701 = vpop.f32.mrf.mxu0
    %v6702 = vadd.f32 0.0, %v6701
    %v6703 = vpop.f32.mrf.mxu0
    %6704 = vdwg.mxu0
    %6705 = vmatpush.bf16.msra.mxu0 %v6243
    %6706 = vmatpush.bf16.msra.mxu0 %v6234
    %6707 = vmatpush.bf16.msra.mxu0 %v6225
    %6708 = vmatpush.bf16.msra.mxu0 %v6216
    %6709 = vmatpush.bf16.msra.mxu0 %v6207
    %6710 = vmatpush.bf16.msra.mxu0 %v6198
    %6711 = vmatpush.bf16.msra.mxu0 %v6189
    %6712 = vmatpush.bf16.msra.mxu0 %v6180
    %6713 = vmatmul.bf16.gmra.mxu0 0
    %v6714 = vpop.f32.mrf.mxu0
    %v6715 = vadd.f32 %v6702, %v6714
    %v6716 = vpop.f32.mrf.mxu0
    %6717 = vdwg.mxu0
    %6718 = vmatpush.bf16.msra.mxu0 %v6315
    %6719 = vmatpush.bf16.msra.mxu0 %v6306
    %6720 = vmatpush.bf16.msra.mxu0 %v6297
    %6721 = vmatpush.bf16.msra.mxu0 %v6288
    %6722 = vmatpush.bf16.msra.mxu0 %v6279
    %6723 = vmatpush.bf16.msra.mxu0 %v6270
    %6724 = vmatpush.bf16.msra.mxu0 %v6261
    %6725 = vmatpush.bf16.msra.mxu0 %v6252
    %6726 = vmatmul.bf16.gmra.mxu0 0
    %v6727 = vpop.f32.mrf.mxu0
    %v6728 = vadd.f32 %v6715, %v6727
    %v6729 = vpop.f32.mrf.mxu0
    %6730 = vdwg.mxu0
    %6731 = vmatpush.bf16.msra.mxu0 %v6172
    %6732 = vmatpush.bf16.msra.mxu0 %v6163
    %6733 = vmatpush.bf16.msra.mxu0 %v6154
    %6734 = vmatpush.bf16.msra.mxu0 %v6145
    %6735 = vmatpush.bf16.msra.mxu0 %v6136
    %6736 = vmatpush.bf16.msra.mxu0 %v6127
    %6737 = vmatpush.bf16.msra.mxu0 %v6118
    %6738 = vmatpush.bf16.msra.mxu0 %v6109
    %6739 = vmatmul.bf16.gmra.mxu0 0
    %v6740 = vpop.f32.mrf.mxu0
    %v6741 = vadd.f32 0.0, %v6740
    %v6742 = vpop.f32.mrf.mxu0
    %6743 = vdwg.mxu0
    %6744 = vmatpush.bf16.msra.mxu0 %v6244
    %6745 = vmatpush.bf16.msra.mxu0 %v6235
    %6746 = vmatpush.bf16.msra.mxu0 %v6226
    %6747 = vmatpush.bf16.msra.mxu0 %v6217
    %6748 = vmatpush.bf16.msra.mxu0 %v6208
    %6749 = vmatpush.bf16.msra.mxu0 %v6199
    %6750 = vmatpush.bf16.msra.mxu0 %v6190
    %6751 = vmatpush.bf16.msra.mxu0 %v6181
    %6752 = vmatmul.bf16.gmra.mxu0 0
    %v6753 = vpop.f32.mrf.mxu0
    %v6754 = vadd.f32 %v6741, %v6753
    %v6755 = vpop.f32.mrf.mxu0
    %6756 = vdwg.mxu0
    %6757 = vmatpush.bf16.msra.mxu0 %v6316
    %6758 = vmatpush.bf16.msra.mxu0 %v6307
    %6759 = vmatpush.bf16.msra.mxu0 %v6298
    %6760 = vmatpush.bf16.msra.mxu0 %v6289
    %6761 = vmatpush.bf16.msra.mxu0 %v6280
    %6762 = vmatpush.bf16.msra.mxu0 %v6271
    %6763 = vmatpush.bf16.msra.mxu0 %v6262
    %6764 = vmatpush.bf16.msra.mxu0 %v6253
    %6765 = vmatmul.bf16.gmra.mxu0 0
    %v6766 = vpop.f32.mrf.mxu0
    %v6767 = vadd.f32 %v6754, %v6766
    %v6768 = vpop.f32.mrf.mxu0
    %6769 = vdwg.mxu0
    %6770 = vmatpush.bf16.msra.mxu0 %v6173
    %6771 = vmatpush.bf16.msra.mxu0 %v6164
    %6772 = vmatpush.bf16.msra.mxu0 %v6155
    %6773 = vmatpush.bf16.msra.mxu0 %v6146
    %6774 = vmatpush.bf16.msra.mxu0 %v6137
    %6775 = vmatpush.bf16.msra.mxu0 %v6128
    %6776 = vmatpush.bf16.msra.mxu0 %v6119
    %6777 = vmatpush.bf16.msra.mxu0 %v6110
    %6778 = vmatmul.bf16.gmra.mxu0 0
    %v6779 = vpop.f32.mrf.mxu0
    %v6780 = vadd.f32 0.0, %v6779
    %v6781 = vpop.f32.mrf.mxu0
    %6782 = vdwg.mxu0
    %6783 = vmatpush.bf16.msra.mxu0 %v6245
    %6784 = vmatpush.bf16.msra.mxu0 %v6236
    %6785 = vmatpush.bf16.msra.mxu0 %v6227
    %6786 = vmatpush.bf16.msra.mxu0 %v6218
    %6787 = vmatpush.bf16.msra.mxu0 %v6209
    %6788 = vmatpush.bf16.msra.mxu0 %v6200
    %6789 = vmatpush.bf16.msra.mxu0 %v6191
    %6790 = vmatpush.bf16.msra.mxu0 %v6182
    %6791 = vmatmul.bf16.gmra.mxu0 0
    %v6792 = vpop.f32.mrf.mxu0
    %v6793 = vadd.f32 %v6780, %v6792
    %v6794 = vpop.f32.mrf.mxu0
    %6795 = vdwg.mxu0
    %6796 = vmatpush.bf16.msra.mxu0 %v6317
    %6797 = vmatpush.bf16.msra.mxu0 %v6308
    %6798 = vmatpush.bf16.msra.mxu0 %v6299
    %6799 = vmatpush.bf16.msra.mxu0 %v6290
    %6800 = vmatpush.bf16.msra.mxu0 %v6281
    %6801 = vmatpush.bf16.msra.mxu0 %v6272
    %6802 = vmatpush.bf16.msra.mxu0 %v6263
    %6803 = vmatpush.bf16.msra.mxu0 %v6254
    %6804 = vmatmul.bf16.gmra.mxu0 0
    %v6805 = vpop.f32.mrf.mxu0
    %v6806 = vadd.f32 %v6793, %v6805
    %v6807 = vpop.f32.mrf.mxu0
    %6808 = vdwg.mxu0
    %6809 = vmatpush.bf16.msra.mxu0 %v6174
    %6810 = vmatpush.bf16.msra.mxu0 %v6165
    %6811 = vmatpush.bf16.msra.mxu0 %v6156
    %6812 = vmatpush.bf16.msra.mxu0 %v6147
    %6813 = vmatpush.bf16.msra.mxu0 %v6138
    %6814 = vmatpush.bf16.msra.mxu0 %v6129
    %6815 = vmatpush.bf16.msra.mxu0 %v6120
    %6816 = vmatpush.bf16.msra.mxu0 %v6111
    %6817 = vmatmul.bf16.gmra.mxu0 0
    %v6818 = vpop.f32.mrf.mxu0
    %v6819 = vadd.f32 0.0, %v6818
    %v6820 = vpop.f32.mrf.mxu0
    %6821 = vdwg.mxu0
    %6822 = vmatpush.bf16.msra.mxu0 %v6246
    %6823 = vmatpush.bf16.msra.mxu0 %v6237
    %6824 = vmatpush.bf16.msra.mxu0 %v6228
    %6825 = vmatpush.bf16.msra.mxu0 %v6219
    %6826 = vmatpush.bf16.msra.mxu0 %v6210
    %6827 = vmatpush.bf16.msra.mxu0 %v6201
    %6828 = vmatpush.bf16.msra.mxu0 %v6192
    %6829 = vmatpush.bf16.msra.mxu0 %v6183
    %6830 = vmatmul.bf16.gmra.mxu0 0
    %v6831 = vpop.f32.mrf.mxu0
    %v6832 = vadd.f32 %v6819, %v6831
    %v6833 = vpop.f32.mrf.mxu0
    %6834 = vdwg.mxu0
    %6835 = vmatpush.bf16.msra.mxu0 %v6318
    %6836 = vmatpush.bf16.msra.mxu0 %v6309
    %6837 = vmatpush.bf16.msra.mxu0 %v6300
    %6838 = vmatpush.bf16.msra.mxu0 %v6291
    %6839 = vmatpush.bf16.msra.mxu0 %v6282
    %6840 = vmatpush.bf16.msra.mxu0 %v6273
    %6841 = vmatpush.bf16.msra.mxu0 %v6264
    %6842 = vmatpush.bf16.msra.mxu0 %v6255
    %6843 = vmatmul.bf16.gmra.mxu0 0
    %v6844 = vpop.f32.mrf.mxu0
    %v6845 = vadd.f32 %v6832, %v6844
    %v6846 = vpop.f32.mrf.mxu0
    %6847 = vdwg.mxu0
    %6848 = vmatpush.bf16.msra.mxu0 %v6175
    %6849 = vmatpush.bf16.msra.mxu0 %v6166
    %6850 = vmatpush.bf16.msra.mxu0 %v6157
    %6851 = vmatpush.bf16.msra.mxu0 %v6148
    %6852 = vmatpush.bf16.msra.mxu0 %v6139
    %6853 = vmatpush.bf16.msra.mxu0 %v6130
    %6854 = vmatpush.bf16.msra.mxu0 %v6121
    %6855 = vmatpush.bf16.msra.mxu0 %v6112
    %6856 = vmatmul.bf16.gmra.mxu0 0
    %v6857 = vpop.f32.mrf.mxu0
    %v6858 = vadd.f32 0.0, %v6857
    %v6859 = vpop.f32.mrf.mxu0
    %6860 = vdwg.mxu0
    %6861 = vmatpush.bf16.msra.mxu0 %v6247
    %6862 = vmatpush.bf16.msra.mxu0 %v6238
    %6863 = vmatpush.bf16.msra.mxu0 %v6229
    %6864 = vmatpush.bf16.msra.mxu0 %v6220
    %6865 = vmatpush.bf16.msra.mxu0 %v6211
    %6866 = vmatpush.bf16.msra.mxu0 %v6202
    %6867 = vmatpush.bf16.msra.mxu0 %v6193
    %6868 = vmatpush.bf16.msra.mxu0 %v6184
    %6869 = vmatmul.bf16.gmra.mxu0 0
    %v6870 = vpop.f32.mrf.mxu0
    %v6871 = vadd.f32 %v6858, %v6870
    %v6872 = vpop.f32.mrf.mxu0
    %6873 = vdwg.mxu0
    %6874 = vmatpush.bf16.msra.mxu0 %v6319
    %6875 = vmatpush.bf16.msra.mxu0 %v6310
    %6876 = vmatpush.bf16.msra.mxu0 %v6301
    %6877 = vmatpush.bf16.msra.mxu0 %v6292
    %6878 = vmatpush.bf16.msra.mxu0 %v6283
    %6879 = vmatpush.bf16.msra.mxu0 %v6274
    %6880 = vmatpush.bf16.msra.mxu0 %v6265
    %6881 = vmatpush.bf16.msra.mxu0 %v6256
    %6882 = vmatmul.bf16.gmra.mxu0 0
    %v6883 = vpop.f32.mrf.mxu0
    %v6884 = vadd.f32 %v6871, %v6883
    %v6885 = vpop.f32.mrf.mxu0
    %6886 = vdwg.mxu0
    %v6887 = vadd.f32 %v5423, %v6572
    %v6888 = vadd.f32 %v5424, %v6611
    %v6889 = vadd.f32 %v5425, %v6650
    %v6890 = vxor.u32 %v6887, 2147483648
    %v6891 = vxor.u32 %v6888, 2147483648
    %v6892 = vxor.u32 %v6889, 2147483648
    %v6893 = vmul.f32 %v6890, 1.442695
    %v6894 = vpow.pop %v6893
    %v6895 = vmul.f32 %v6891, 1.442695
    %v6896 = vpow.pop %v6895
    %v6897 = vmul.f32 %v6892, 1.442695
    %v6898 = vpow.pop %v6897
    %v6899 = vadd.f32 %v6894, 1.0
    %v6900 = vadd.f32 %v6896, 1.0
    %v6901 = vadd.f32 %v6898, 1.0
    %v6902 = vrcp.pop %v6899
    %v6903 = vmul.f32 %v6899, %v6902
    %v6904 = vsub.f32 1.0, %v6903
    %v6905 = vmul.f32 %v6902, %v6904
    %v6906 = vadd.f32 %v6902, %v6905
    %vm6907 = vweird.f32 %v6899
    %vm6908 = vweird.f32 %v6902
    %vm6909 = vmor %vm6907, %vm6908
    %v6910 = vsel %vm6909, %v6902, %v6906
    %v6911 = vand.u32 2147483647, %v6899
    %vm6912 = vcmp.eq.f32.partialorder %v6911, 8.507059e+37
    %v6913 = vand.u32 %v6899, 2147483648
    %v6914 = vor.u32 1.1754944e-38, %v6913
    %v6915 = vsel %vm6912, %v6914, %v6910
    %v6916 = vmul.f32 1.0, %v6915
    %v6917 = vrcp.pop %v6900
    %v6918 = vmul.f32 %v6900, %v6917
    %v6919 = vsub.f32 1.0, %v6918
    %v6920 = vmul.f32 %v6917, %v6919
    %v6921 = vadd.f32 %v6917, %v6920
    %vm6922 = vweird.f32 %v6900
    %vm6923 = vweird.f32 %v6917
    %vm6924 = vmor %vm6922, %vm6923
    %v6925 = vsel %vm6924, %v6917, %v6921
    %v6926 = vand.u32 2147483647, %v6900
    %vm6927 = vcmp.eq.f32.partialorder %v6926, 8.507059e+37
    %v6928 = vand.u32 %v6900, 2147483648
    %v6929 = vor.u32 1.1754944e-38, %v6928
    %v6930 = vsel %vm6927, %v6929, %v6925
    %v6931 = vmul.f32 1.0, %v6930
    %v6932 = vrcp.pop %v6901
    %v6933 = vmul.f32 %v6901, %v6932
    %v6934 = vsub.f32 1.0, %v6933
    %v6935 = vmul.f32 %v6932, %v6934
    %v6936 = vadd.f32 %v6932, %v6935
    %vm6937 = vweird.f32 %v6901
    %vm6938 = vweird.f32 %v6932
    %vm6939 = vmor %vm6937, %vm6938
    %v6940 = vsel %vm6939, %v6932, %v6936
    %v6941 = vand.u32 2147483647, %v6901
    %vm6942 = vcmp.eq.f32.partialorder %v6941, 8.507059e+37
    %v6943 = vand.u32 %v6901, 2147483648
    %v6944 = vor.u32 1.1754944e-38, %v6943
    %v6945 = vsel %vm6942, %v6944, %v6940
    %v6946 = vmul.f32 1.0, %v6945
    %v6947 = vadd.f32 %v5426, %v6689
    %v6948 = vadd.f32 %v5427, %v6728
    %v6949 = vadd.f32 %v5428, %v6767
    %v6950 = vxor.u32 %v6947, 2147483648
    %v6951 = vxor.u32 %v6948, 2147483648
    %v6952 = vxor.u32 %v6949, 2147483648
    %v6953 = vmul.f32 %v6950, 1.442695
    %v6954 = vpow.pop %v6953
    %v6955 = vmul.f32 %v6951, 1.442695
    %v6956 = vpow.pop %v6955
    %v6957 = vmul.f32 %v6952, 1.442695
    %v6958 = vpow.pop %v6957
    %v6959 = vadd.f32 %v6954, 1.0
    %v6960 = vadd.f32 %v6956, 1.0
    %v6961 = vadd.f32 %v6958, 1.0
    %v6962 = vrcp.pop %v6959
    %v6963 = vmul.f32 %v6959, %v6962
    %v6964 = vsub.f32 1.0, %v6963
    %v6965 = vmul.f32 %v6962, %v6964
    %v6966 = vadd.f32 %v6962, %v6965
    %vm6967 = vweird.f32 %v6959
    %vm6968 = vweird.f32 %v6962
    %vm6969 = vmor %vm6967, %vm6968
    %v6970 = vsel %vm6969, %v6962, %v6966
    %v6971 = vand.u32 2147483647, %v6959
    %vm6972 = vcmp.eq.f32.partialorder %v6971, 8.507059e+37
    %v6973 = vand.u32 %v6959, 2147483648
    %v6974 = vor.u32 1.1754944e-38, %v6973
    %v6975 = vsel %vm6972, %v6974, %v6970
    %v6976 = vmul.f32 1.0, %v6975
    %v6977 = vrcp.pop %v6960
    %v6978 = vmul.f32 %v6960, %v6977
    %v6979 = vsub.f32 1.0, %v6978
    %v6980 = vmul.f32 %v6977, %v6979
    %v6981 = vadd.f32 %v6977, %v6980
    %vm6982 = vweird.f32 %v6960
    %vm6983 = vweird.f32 %v6977
    %vm6984 = vmor %vm6982, %vm6983
    %v6985 = vsel %vm6984, %v6977, %v6981
    %v6986 = vand.u32 2147483647, %v6960
    %vm6987 = vcmp.eq.f32.partialorder %v6986, 8.507059e+37
    %v6988 = vand.u32 %v6960, 2147483648
    %v6989 = vor.u32 1.1754944e-38, %v6988
    %v6990 = vsel %vm6987, %v6989, %v6985
    %v6991 = vmul.f32 1.0, %v6990
    %v6992 = vrcp.pop %v6961
    %v6993 = vmul.f32 %v6961, %v6992
    %v6994 = vsub.f32 1.0, %v6993
    %v6995 = vmul.f32 %v6992, %v6994
    %v6996 = vadd.f32 %v6992, %v6995
    %vm6997 = vweird.f32 %v6961
    %vm6998 = vweird.f32 %v6992
    %vm6999 = vmor %vm6997, %vm6998
    %v7000 = vsel %vm6999, %v6992, %v6996
    %v7001 = vand.u32 2147483647, %v6961
    %vm7002 = vcmp.eq.f32.partialorder %v7001, 8.507059e+37
    %v7003 = vand.u32 %v6961, 2147483648
    %v7004 = vor.u32 1.1754944e-38, %v7003
    %v7005 = vsel %vm7002, %v7004, %v7000
    %v7006 = vmul.f32 1.0, %v7005
    %v7007 = vadd.f32 %v6806, %v5417
    %v7008 = vadd.f32 %v6845, %v5418
    %v7009 = vadd.f32 %v6884, %v5419
    %v7010 = vmul.f32 %v6916, %v7007
    %v7011 = vmul.f32 %v6931, %v7008
    %v7012 = vmul.f32 %v6946, %v7009
    %v7013 = vadd.f32 %v5429, %v7010
    %v7014 = vadd.f32 %v5430, %v7011
    %v7015 = vadd.f32 %v5431, %v7012
    %v7016 = vtanh.pop %v7013
    %v7017 = vtanh.pop %v7014
    %v7018 = vtanh.pop %v7015
    %v7019 = vsub.f32 1.0, %v6976
    %v7020 = vsub.f32 1.0, %v6991
    %v7021 = vsub.f32 1.0, %v7006
    %v7022 = vmul.f32 %v7019, %v7016
    %v7023 = vmul.f32 %v7020, %v7017
    %v7024 = vmul.f32 %v7021, %v7018
    %v7025 = vmul.f32 %v6976, 0.0
    %v7026 = vmul.f32 %v6991, 0.0
    %v7027 = vmul.f32 %v7006, 0.0
    %v7028 = vadd.f32 %v7022, %v7025
    %v7029 = vadd.f32 %v7023, %v7026
    %v7030 = vadd.f32 %v7024, %v7027
    %7031 = vst [vmem:[#allocation3] sm:$0xff] %v7028
    %7032 = vst [vmem:[#allocation3 + $0x8] sm:$0xff] %v7029
    %7033 = vst [vmem:[#allocation3 + $0x10] sm:$0xff] %v7030
    %v7034 = vld [vmem:[#allocation2 + $0x48] sm:$0xff]
    %v7035 = vld [vmem:[#allocation2 + $0x50] sm:$0xff]
    %v7036 = vld [vmem:[#allocation2 + $0x58] sm:$0xff]
    %v7037 = vld [vmem:[#allocation2 + $0x60] sm:$0xff]
    %v7038 = vld [vmem:[#allocation2 + $0x68] sm:$0xff]
    %v7039 = vld [vmem:[#allocation2 + $0x70] sm:$0xff]
    %v7040 = vld [vmem:[#allocation2 + $0x78] sm:$0xff]
    %v7041 = vld [vmem:[#allocation2 + $0x80] sm:$0xff]
    %v7042 = vld [vmem:[#allocation2 + $0x88] sm:$0xff]
    %v7043 = vpack.c.bf16 %v7028, %v7028
    %v7044 = vpack.c.bf16 %v7029, %v7029
    %v7045 = vpack.c.bf16 %v7030, %v7030
    %7046 = vmatpush.bf16.msra.mxu0 %v6167
    %7047 = vmatpush.bf16.msra.mxu0 %v6158
    %7048 = vmatpush.bf16.msra.mxu0 %v6149
    %7049 = vmatpush.bf16.msra.mxu0 %v6140
    %7050 = vmatpush.bf16.msra.mxu0 %v6131
    %7051 = vmatpush.bf16.msra.mxu0 %v6122
    %7052 = vmatpush.bf16.msra.mxu0 %v6113
    %7053 = vmatpush.bf16.msra.mxu0 %v6104
    %7054 = vmatmul.bf16.gmra.mxu0 %v7043
    %v7055 = vpop.f32.mrf.mxu0
    %v7056 = vadd.f32 0.0, %v7055
    %v7057 = vpop.f32.mrf.mxu0
    %7058 = vdwg.mxu0
    %7059 = vmatpush.bf16.msra.mxu0 %v6239
    %7060 = vmatpush.bf16.msra.mxu0 %v6230
    %7061 = vmatpush.bf16.msra.mxu0 %v6221
    %7062 = vmatpush.bf16.msra.mxu0 %v6212
    %7063 = vmatpush.bf16.msra.mxu0 %v6203
    %7064 = vmatpush.bf16.msra.mxu0 %v6194
    %7065 = vmatpush.bf16.msra.mxu0 %v6185
    %7066 = vmatpush.bf16.msra.mxu0 %v6176
    %7067 = vmatmul.bf16.gmra.mxu0 %v7044
    %v7068 = vpop.f32.mrf.mxu0
    %v7069 = vadd.f32 %v7056, %v7068
    %v7070 = vpop.f32.mrf.mxu0
    %7071 = vdwg.mxu0
    %7072 = vmatpush.bf16.msra.mxu0 %v6311
    %7073 = vmatpush.bf16.msra.mxu0 %v6302
    %7074 = vmatpush.bf16.msra.mxu0 %v6293
    %7075 = vmatpush.bf16.msra.mxu0 %v6284
    %7076 = vmatpush.bf16.msra.mxu0 %v6275
    %7077 = vmatpush.bf16.msra.mxu0 %v6266
    %7078 = vmatpush.bf16.msra.mxu0 %v6257
    %7079 = vmatpush.bf16.msra.mxu0 %v6248
    %7080 = vmatmul.bf16.gmra.mxu0 %v7045
    %v7081 = vpop.f32.mrf.mxu0
    %v7082 = vadd.f32 %v7069, %v7081
    %v7083 = vpop.f32.mrf.mxu0
    %7084 = vdwg.mxu0
    %7085 = vmatpush.bf16.msra.mxu0 %v6168
    %7086 = vmatpush.bf16.msra.mxu0 %v6159
    %7087 = vmatpush.bf16.msra.mxu0 %v6150
    %7088 = vmatpush.bf16.msra.mxu0 %v6141
    %7089 = vmatpush.bf16.msra.mxu0 %v6132
    %7090 = vmatpush.bf16.msra.mxu0 %v6123
    %7091 = vmatpush.bf16.msra.mxu0 %v6114
    %7092 = vmatpush.bf16.msra.mxu0 %v6105
    %7093 = vmatmul.bf16.gmra.mxu0 %v7043
    %v7094 = vpop.f32.mrf.mxu0
    %v7095 = vadd.f32 0.0, %v7094
    %v7096 = vpop.f32.mrf.mxu0
    %7097 = vdwg.mxu0
    %7098 = vmatpush.bf16.msra.mxu0 %v6240
    %7099 = vmatpush.bf16.msra.mxu0 %v6231
    %7100 = vmatpush.bf16.msra.mxu0 %v6222
    %7101 = vmatpush.bf16.msra.mxu0 %v6213
    %7102 = vmatpush.bf16.msra.mxu0 %v6204
    %7103 = vmatpush.bf16.msra.mxu0 %v6195
    %7104 = vmatpush.bf16.msra.mxu0 %v6186
    %7105 = vmatpush.bf16.msra.mxu0 %v6177
    %7106 = vmatmul.bf16.gmra.mxu0 %v7044
    %v7107 = vpop.f32.mrf.mxu0
    %v7108 = vadd.f32 %v7095, %v7107
    %v7109 = vpop.f32.mrf.mxu0
    %7110 = vdwg.mxu0
    %7111 = vmatpush.bf16.msra.mxu0 %v6312
    %7112 = vmatpush.bf16.msra.mxu0 %v6303
    %7113 = vmatpush.bf16.msra.mxu0 %v6294
    %7114 = vmatpush.bf16.msra.mxu0 %v6285
    %7115 = vmatpush.bf16.msra.mxu0 %v6276
    %7116 = vmatpush.bf16.msra.mxu0 %v6267
    %7117 = vmatpush.bf16.msra.mxu0 %v6258
    %7118 = vmatpush.bf16.msra.mxu0 %v6249
    %7119 = vmatmul.bf16.gmra.mxu0 %v7045
    %v7120 = vpop.f32.mrf.mxu0
    %v7121 = vadd.f32 %v7108, %v7120
    %v7122 = vpop.f32.mrf.mxu0
    %7123 = vdwg.mxu0
    %7124 = vmatpush.bf16.msra.mxu0 %v6169
    %7125 = vmatpush.bf16.msra.mxu0 %v6160
    %7126 = vmatpush.bf16.msra.mxu0 %v6151
    %7127 = vmatpush.bf16.msra.mxu0 %v6142
    %7128 = vmatpush.bf16.msra.mxu0 %v6133
    %7129 = vmatpush.bf16.msra.mxu0 %v6124
    %7130 = vmatpush.bf16.msra.mxu0 %v6115
    %7131 = vmatpush.bf16.msra.mxu0 %v6106
    %7132 = vmatmul.bf16.gmra.mxu0 %v7043
    %v7133 = vpop.f32.mrf.mxu0
    %v7134 = vadd.f32 0.0, %v7133
    %v7135 = vpop.f32.mrf.mxu0
    %7136 = vdwg.mxu0
    %7137 = vmatpush.bf16.msra.mxu0 %v6241
    %7138 = vmatpush.bf16.msra.mxu0 %v6232
    %7139 = vmatpush.bf16.msra.mxu0 %v6223
    %7140 = vmatpush.bf16.msra.mxu0 %v6214
    %7141 = vmatpush.bf16.msra.mxu0 %v6205
    %7142 = vmatpush.bf16.msra.mxu0 %v6196
    %7143 = vmatpush.bf16.msra.mxu0 %v6187
    %7144 = vmatpush.bf16.msra.mxu0 %v6178
    %7145 = vmatmul.bf16.gmra.mxu0 %v7044
    %v7146 = vpop.f32.mrf.mxu0
    %v7147 = vadd.f32 %v7134, %v7146
    %v7148 = vpop.f32.mrf.mxu0
    %7149 = vdwg.mxu0
    %7150 = vmatpush.bf16.msra.mxu0 %v6313
    %7151 = vmatpush.bf16.msra.mxu0 %v6304
    %7152 = vmatpush.bf16.msra.mxu0 %v6295
    %7153 = vmatpush.bf16.msra.mxu0 %v6286
    %7154 = vmatpush.bf16.msra.mxu0 %v6277
    %7155 = vmatpush.bf16.msra.mxu0 %v6268
    %7156 = vmatpush.bf16.msra.mxu0 %v6259
    %7157 = vmatpush.bf16.msra.mxu0 %v6250
    %7158 = vmatmul.bf16.gmra.mxu0 %v7045
    %v7159 = vpop.f32.mrf.mxu0
    %v7160 = vadd.f32 %v7147, %v7159
    %v7161 = vpop.f32.mrf.mxu0
    %7162 = vdwg.mxu0
    %7163 = vmatpush.bf16.msra.mxu0 %v6170
    %7164 = vmatpush.bf16.msra.mxu0 %v6161
    %7165 = vmatpush.bf16.msra.mxu0 %v6152
    %7166 = vmatpush.bf16.msra.mxu0 %v6143
    %7167 = vmatpush.bf16.msra.mxu0 %v6134
    %7168 = vmatpush.bf16.msra.mxu0 %v6125
    %7169 = vmatpush.bf16.msra.mxu0 %v6116
    %7170 = vmatpush.bf16.msra.mxu0 %v6107
    %7171 = vmatmul.bf16.gmra.mxu0 %v7043
    %v7172 = vpop.f32.mrf.mxu0
    %v7173 = vadd.f32 0.0, %v7172
    %v7174 = vpop.f32.mrf.mxu0
    %7175 = vdwg.mxu0
    %7176 = vmatpush.bf16.msra.mxu0 %v6242
    %7177 = vmatpush.bf16.msra.mxu0 %v6233
    %7178 = vmatpush.bf16.msra.mxu0 %v6224
    %7179 = vmatpush.bf16.msra.mxu0 %v6215
    %7180 = vmatpush.bf16.msra.mxu0 %v6206
    %7181 = vmatpush.bf16.msra.mxu0 %v6197
    %7182 = vmatpush.bf16.msra.mxu0 %v6188
    %7183 = vmatpush.bf16.msra.mxu0 %v6179
    %7184 = vmatmul.bf16.gmra.mxu0 %v7044
    %v7185 = vpop.f32.mrf.mxu0
    %v7186 = vadd.f32 %v7173, %v7185
    %v7187 = vpop.f32.mrf.mxu0
    %7188 = vdwg.mxu0
    %7189 = vmatpush.bf16.msra.mxu0 %v6314
    %7190 = vmatpush.bf16.msra.mxu0 %v6305
    %7191 = vmatpush.bf16.msra.mxu0 %v6296
    %7192 = vmatpush.bf16.msra.mxu0 %v6287
    %7193 = vmatpush.bf16.msra.mxu0 %v6278
    %7194 = vmatpush.bf16.msra.mxu0 %v6269
    %7195 = vmatpush.bf16.msra.mxu0 %v6260
    %7196 = vmatpush.bf16.msra.mxu0 %v6251
    %7197 = vmatmul.bf16.gmra.mxu0 %v7045
    %v7198 = vpop.f32.mrf.mxu0
    %v7199 = vadd.f32 %v7186, %v7198
    %v7200 = vpop.f32.mrf.mxu0
    %7201 = vdwg.mxu0
    %7202 = vmatpush.bf16.msra.mxu0 %v6171
    %7203 = vmatpush.bf16.msra.mxu0 %v6162
    %7204 = vmatpush.bf16.msra.mxu0 %v6153
    %7205 = vmatpush.bf16.msra.mxu0 %v6144
    %7206 = vmatpush.bf16.msra.mxu0 %v6135
    %7207 = vmatpush.bf16.msra.mxu0 %v6126
    %7208 = vmatpush.bf16.msra.mxu0 %v6117
    %7209 = vmatpush.bf16.msra.mxu0 %v6108
    %7210 = vmatmul.bf16.gmra.mxu0 %v7043
    %v7211 = vpop.f32.mrf.mxu0
    %v7212 = vadd.f32 0.0, %v7211
    %v7213 = vpop.f32.mrf.mxu0
    %7214 = vdwg.mxu0
    %7215 = vmatpush.bf16.msra.mxu0 %v6243
    %7216 = vmatpush.bf16.msra.mxu0 %v6234
    %7217 = vmatpush.bf16.msra.mxu0 %v6225
    %7218 = vmatpush.bf16.msra.mxu0 %v6216
    %7219 = vmatpush.bf16.msra.mxu0 %v6207
    %7220 = vmatpush.bf16.msra.mxu0 %v6198
    %7221 = vmatpush.bf16.msra.mxu0 %v6189
    %7222 = vmatpush.bf16.msra.mxu0 %v6180
    %7223 = vmatmul.bf16.gmra.mxu0 %v7044
    %v7224 = vpop.f32.mrf.mxu0
    %v7225 = vadd.f32 %v7212, %v7224
    %v7226 = vpop.f32.mrf.mxu0
    %7227 = vdwg.mxu0
    %7228 = vmatpush.bf16.msra.mxu0 %v6315
    %7229 = vmatpush.bf16.msra.mxu0 %v6306
    %7230 = vmatpush.bf16.msra.mxu0 %v6297
    %7231 = vmatpush.bf16.msra.mxu0 %v6288
    %7232 = vmatpush.bf16.msra.mxu0 %v6279
    %7233 = vmatpush.bf16.msra.mxu0 %v6270
    %7234 = vmatpush.bf16.msra.mxu0 %v6261
    %7235 = vmatpush.bf16.msra.mxu0 %v6252
    %7236 = vmatmul.bf16.gmra.mxu0 %v7045
    %v7237 = vpop.f32.mrf.mxu0
    %v7238 = vadd.f32 %v7225, %v7237
    %v7239 = vpop.f32.mrf.mxu0
    %7240 = vdwg.mxu0
    %7241 = vmatpush.bf16.msra.mxu0 %v6172
    %7242 = vmatpush.bf16.msra.mxu0 %v6163
    %7243 = vmatpush.bf16.msra.mxu0 %v6154
    %7244 = vmatpush.bf16.msra.mxu0 %v6145
    %7245 = vmatpush.bf16.msra.mxu0 %v6136
    %7246 = vmatpush.bf16.msra.mxu0 %v6127
    %7247 = vmatpush.bf16.msra.mxu0 %v6118
    %7248 = vmatpush.bf16.msra.mxu0 %v6109
    %7249 = vmatmul.bf16.gmra.mxu0 %v7043
    %v7250 = vpop.f32.mrf.mxu0
    %v7251 = vadd.f32 0.0, %v7250
    %v7252 = vpop.f32.mrf.mxu0
    %7253 = vdwg.mxu0
    %7254 = vmatpush.bf16.msra.mxu0 %v6244
    %7255 = vmatpush.bf16.msra.mxu0 %v6235
    %7256 = vmatpush.bf16.msra.mxu0 %v6226
    %7257 = vmatpush.bf16.msra.mxu0 %v6217
    %7258 = vmatpush.bf16.msra.mxu0 %v6208
    %7259 = vmatpush.bf16.msra.mxu0 %v6199
    %7260 = vmatpush.bf16.msra.mxu0 %v6190
    %7261 = vmatpush.bf16.msra.mxu0 %v6181
    %7262 = vmatmul.bf16.gmra.mxu0 %v7044
    %v7263 = vpop.f32.mrf.mxu0
    %v7264 = vadd.f32 %v7251, %v7263
    %v7265 = vpop.f32.mrf.mxu0
    %7266 = vdwg.mxu0
    %7267 = vmatpush.bf16.msra.mxu0 %v6316
    %7268 = vmatpush.bf16.msra.mxu0 %v6307
    %7269 = vmatpush.bf16.msra.mxu0 %v6298
    %7270 = vmatpush.bf16.msra.mxu0 %v6289
    %7271 = vmatpush.bf16.msra.mxu0 %v6280
    %7272 = vmatpush.bf16.msra.mxu0 %v6271
    %7273 = vmatpush.bf16.msra.mxu0 %v6262
    %7274 = vmatpush.bf16.msra.mxu0 %v6253
    %7275 = vmatmul.bf16.gmra.mxu0 %v7045
    %v7276 = vpop.f32.mrf.mxu0
    %v7277 = vadd.f32 %v7264, %v7276
    %v7278 = vpop.f32.mrf.mxu0
    %7279 = vdwg.mxu0
    %7280 = vmatpush.bf16.msra.mxu0 %v6173
    %7281 = vmatpush.bf16.msra.mxu0 %v6164
    %7282 = vmatpush.bf16.msra.mxu0 %v6155
    %7283 = vmatpush.bf16.msra.mxu0 %v6146
    %7284 = vmatpush.bf16.msra.mxu0 %v6137
    %7285 = vmatpush.bf16.msra.mxu0 %v6128
    %7286 = vmatpush.bf16.msra.mxu0 %v6119
    %7287 = vmatpush.bf16.msra.mxu0 %v6110
    %7288 = vmatmul.bf16.gmra.mxu0 %v7043
    %v7289 = vpop.f32.mrf.mxu0
    %v7290 = vadd.f32 0.0, %v7289
    %v7291 = vpop.f32.mrf.mxu0
    %7292 = vdwg.mxu0
    %7293 = vmatpush.bf16.msra.mxu0 %v6245
    %7294 = vmatpush.bf16.msra.mxu0 %v6236
    %7295 = vmatpush.bf16.msra.mxu0 %v6227
    %7296 = vmatpush.bf16.msra.mxu0 %v6218
    %7297 = vmatpush.bf16.msra.mxu0 %v6209
    %7298 = vmatpush.bf16.msra.mxu0 %v6200
    %7299 = vmatpush.bf16.msra.mxu0 %v6191
    %7300 = vmatpush.bf16.msra.mxu0 %v6182
    %7301 = vmatmul.bf16.gmra.mxu0 %v7044
    %v7302 = vpop.f32.mrf.mxu0
    %v7303 = vadd.f32 %v7290, %v7302
    %v7304 = vpop.f32.mrf.mxu0
    %7305 = vdwg.mxu0
    %7306 = vmatpush.bf16.msra.mxu0 %v6317
    %7307 = vmatpush.bf16.msra.mxu0 %v6308
    %7308 = vmatpush.bf16.msra.mxu0 %v6299
    %7309 = vmatpush.bf16.msra.mxu0 %v6290
    %7310 = vmatpush.bf16.msra.mxu0 %v6281
    %7311 = vmatpush.bf16.msra.mxu0 %v6272
    %7312 = vmatpush.bf16.msra.mxu0 %v6263
    %7313 = vmatpush.bf16.msra.mxu0 %v6254
    %7314 = vmatmul.bf16.gmra.mxu0 %v7045
    %v7315 = vpop.f32.mrf.mxu0
    %v7316 = vadd.f32 %v7303, %v7315
    %v7317 = vpop.f32.mrf.mxu0
    %7318 = vdwg.mxu0
    %7319 = vmatpush.bf16.msra.mxu0 %v6174
    %7320 = vmatpush.bf16.msra.mxu0 %v6165
    %7321 = vmatpush.bf16.msra.mxu0 %v6156
    %7322 = vmatpush.bf16.msra.mxu0 %v6147
    %7323 = vmatpush.bf16.msra.mxu0 %v6138
    %7324 = vmatpush.bf16.msra.mxu0 %v6129
    %7325 = vmatpush.bf16.msra.mxu0 %v6120
    %7326 = vmatpush.bf16.msra.mxu0 %v6111
    %7327 = vmatmul.bf16.gmra.mxu0 %v7043
    %v7328 = vpop.f32.mrf.mxu0
    %v7329 = vadd.f32 0.0, %v7328
    %v7330 = vpop.f32.mrf.mxu0
    %7331 = vdwg.mxu0
    %7332 = vmatpush.bf16.msra.mxu0 %v6246
    %7333 = vmatpush.bf16.msra.mxu0 %v6237
    %7334 = vmatpush.bf16.msra.mxu0 %v6228
    %7335 = vmatpush.bf16.msra.mxu0 %v6219
    %7336 = vmatpush.bf16.msra.mxu0 %v6210
    %7337 = vmatpush.bf16.msra.mxu0 %v6201
    %7338 = vmatpush.bf16.msra.mxu0 %v6192
    %7339 = vmatpush.bf16.msra.mxu0 %v6183
    %7340 = vmatmul.bf16.gmra.mxu0 %v7044
    %v7341 = vpop.f32.mrf.mxu0
    %v7342 = vadd.f32 %v7329, %v7341
    %v7343 = vpop.f32.mrf.mxu0
    %7344 = vdwg.mxu0
    %7345 = vmatpush.bf16.msra.mxu0 %v6318
    %7346 = vmatpush.bf16.msra.mxu0 %v6309
    %7347 = vmatpush.bf16.msra.mxu0 %v6300
    %7348 = vmatpush.bf16.msra.mxu0 %v6291
    %7349 = vmatpush.bf16.msra.mxu0 %v6282
    %7350 = vmatpush.bf16.msra.mxu0 %v6273
    %7351 = vmatpush.bf16.msra.mxu0 %v6264
    %7352 = vmatpush.bf16.msra.mxu0 %v6255
    %7353 = vmatmul.bf16.gmra.mxu0 %v7045
    %v7354 = vpop.f32.mrf.mxu0
    %v7355 = vadd.f32 %v7342, %v7354
    %v7356 = vpop.f32.mrf.mxu0
    %7357 = vdwg.mxu0
    %7358 = vmatpush.bf16.msra.mxu0 %v6175
    %7359 = vmatpush.bf16.msra.mxu0 %v6166
    %7360 = vmatpush.bf16.msra.mxu0 %v6157
    %7361 = vmatpush.bf16.msra.mxu0 %v6148
    %7362 = vmatpush.bf16.msra.mxu0 %v6139
    %7363 = vmatpush.bf16.msra.mxu0 %v6130
    %7364 = vmatpush.bf16.msra.mxu0 %v6121
    %7365 = vmatpush.bf16.msra.mxu0 %v6112
    %7366 = vmatmul.bf16.gmra.mxu0 %v7043
    %v7367 = vpop.f32.mrf.mxu0
    %v7368 = vadd.f32 0.0, %v7367
    %v7369 = vpop.f32.mrf.mxu0
    %7370 = vdwg.mxu0
    %7371 = vmatpush.bf16.msra.mxu0 %v6247
    %7372 = vmatpush.bf16.msra.mxu0 %v6238
    %7373 = vmatpush.bf16.msra.mxu0 %v6229
    %7374 = vmatpush.bf16.msra.mxu0 %v6220
    %7375 = vmatpush.bf16.msra.mxu0 %v6211
    %7376 = vmatpush.bf16.msra.mxu0 %v6202
    %7377 = vmatpush.bf16.msra.mxu0 %v6193
    %7378 = vmatpush.bf16.msra.mxu0 %v6184
    %7379 = vmatmul.bf16.gmra.mxu0 %v7044
    %v7380 = vpop.f32.mrf.mxu0
    %v7381 = vadd.f32 %v7368, %v7380
    %v7382 = vpop.f32.mrf.mxu0
    %7383 = vdwg.mxu0
    %7384 = vmatpush.bf16.msra.mxu0 %v6319
    %7385 = vmatpush.bf16.msra.mxu0 %v6310
    %7386 = vmatpush.bf16.msra.mxu0 %v6301
    %7387 = vmatpush.bf16.msra.mxu0 %v6292
    %7388 = vmatpush.bf16.msra.mxu0 %v6283
    %7389 = vmatpush.bf16.msra.mxu0 %v6274
    %7390 = vmatpush.bf16.msra.mxu0 %v6265
    %7391 = vmatpush.bf16.msra.mxu0 %v6256
    %7392 = vmatmul.bf16.gmra.mxu0 %v7045
    %v7393 = vpop.f32.mrf.mxu0
    %v7394 = vadd.f32 %v7381, %v7393
    %v7395 = vpop.f32.mrf.mxu0
    %7396 = vdwg.mxu0
    %v7397 = vadd.f32 %v7034, %v7082
    %v7398 = vadd.f32 %v7035, %v7121
    %v7399 = vadd.f32 %v7036, %v7160
    %v7400 = vxor.u32 %v7397, 2147483648
    %v7401 = vxor.u32 %v7398, 2147483648
    %v7402 = vxor.u32 %v7399, 2147483648
    %v7403 = vmul.f32 %v7400, 1.442695
    %v7404 = vpow.pop %v7403
    %v7405 = vmul.f32 %v7401, 1.442695
    %v7406 = vpow.pop %v7405
    %v7407 = vmul.f32 %v7402, 1.442695
    %v7408 = vpow.pop %v7407
    %v7409 = vadd.f32 %v7404, 1.0
    %v7410 = vadd.f32 %v7406, 1.0
    %v7411 = vadd.f32 %v7408, 1.0
    %v7412 = vrcp.pop %v7409
    %v7413 = vmul.f32 %v7409, %v7412
    %v7414 = vsub.f32 1.0, %v7413
    %v7415 = vmul.f32 %v7412, %v7414
    %v7416 = vadd.f32 %v7412, %v7415
    %vm7417 = vweird.f32 %v7409
    %vm7418 = vweird.f32 %v7412
    %vm7419 = vmor %vm7417, %vm7418
    %v7420 = vsel %vm7419, %v7412, %v7416
    %v7421 = vand.u32 2147483647, %v7409
    %vm7422 = vcmp.eq.f32.partialorder %v7421, 8.507059e+37
    %v7423 = vand.u32 %v7409, 2147483648
    %v7424 = vor.u32 1.1754944e-38, %v7423
    %v7425 = vsel %vm7422, %v7424, %v7420
    %v7426 = vmul.f32 1.0, %v7425
    %v7427 = vrcp.pop %v7410
    %v7428 = vmul.f32 %v7410, %v7427
    %v7429 = vsub.f32 1.0, %v7428
    %v7430 = vmul.f32 %v7427, %v7429
    %v7431 = vadd.f32 %v7427, %v7430
    %vm7432 = vweird.f32 %v7410
    %vm7433 = vweird.f32 %v7427
    %vm7434 = vmor %vm7432, %vm7433
    %v7435 = vsel %vm7434, %v7427, %v7431
    %v7436 = vand.u32 2147483647, %v7410
    %vm7437 = vcmp.eq.f32.partialorder %v7436, 8.507059e+37
    %v7438 = vand.u32 %v7410, 2147483648
    %v7439 = vor.u32 1.1754944e-38, %v7438
    %v7440 = vsel %vm7437, %v7439, %v7435
    %v7441 = vmul.f32 1.0, %v7440
    %v7442 = vrcp.pop %v7411
    %v7443 = vmul.f32 %v7411, %v7442
    %v7444 = vsub.f32 1.0, %v7443
    %v7445 = vmul.f32 %v7442, %v7444
    %v7446 = vadd.f32 %v7442, %v7445
    %vm7447 = vweird.f32 %v7411
    %vm7448 = vweird.f32 %v7442
    %vm7449 = vmor %vm7447, %vm7448
    %v7450 = vsel %vm7449, %v7442, %v7446
    %v7451 = vand.u32 2147483647, %v7411
    %vm7452 = vcmp.eq.f32.partialorder %v7451, 8.507059e+37
    %v7453 = vand.u32 %v7411, 2147483648
    %v7454 = vor.u32 1.1754944e-38, %v7453
    %v7455 = vsel %vm7452, %v7454, %v7450
    %v7456 = vmul.f32 1.0, %v7455
    %v7457 = vadd.f32 %v7037, %v7199
    %v7458 = vadd.f32 %v7038, %v7238
    %v7459 = vadd.f32 %v7039, %v7277
    %v7460 = vxor.u32 %v7457, 2147483648
    %v7461 = vxor.u32 %v7458, 2147483648
    %v7462 = vxor.u32 %v7459, 2147483648
    %v7463 = vmul.f32 %v7460, 1.442695
    %v7464 = vpow.pop %v7463
    %v7465 = vmul.f32 %v7461, 1.442695
    %v7466 = vpow.pop %v7465
    %v7467 = vmul.f32 %v7462, 1.442695
    %v7468 = vpow.pop %v7467
    %v7469 = vadd.f32 %v7464, 1.0
    %v7470 = vadd.f32 %v7466, 1.0
    %v7471 = vadd.f32 %v7468, 1.0
    %v7472 = vrcp.pop %v7469
    %v7473 = vmul.f32 %v7469, %v7472
    %v7474 = vsub.f32 1.0, %v7473
    %v7475 = vmul.f32 %v7472, %v7474
    %v7476 = vadd.f32 %v7472, %v7475
    %vm7477 = vweird.f32 %v7469
    %vm7478 = vweird.f32 %v7472
    %vm7479 = vmor %vm7477, %vm7478
    %v7480 = vsel %vm7479, %v7472, %v7476
    %v7481 = vand.u32 2147483647, %v7469
    %vm7482 = vcmp.eq.f32.partialorder %v7481, 8.507059e+37
    %v7483 = vand.u32 %v7469, 2147483648
    %v7484 = vor.u32 1.1754944e-38, %v7483
    %v7485 = vsel %vm7482, %v7484, %v7480
    %v7486 = vmul.f32 1.0, %v7485
    %v7487 = vrcp.pop %v7470
    %v7488 = vmul.f32 %v7470, %v7487
    %v7489 = vsub.f32 1.0, %v7488
    %v7490 = vmul.f32 %v7487, %v7489
    %v7491 = vadd.f32 %v7487, %v7490
    %vm7492 = vweird.f32 %v7470
    %vm7493 = vweird.f32 %v7487
    %vm7494 = vmor %vm7492, %vm7493
    %v7495 = vsel %vm7494, %v7487, %v7491
    %v7496 = vand.u32 2147483647, %v7470
    %vm7497 = vcmp.eq.f32.partialorder %v7496, 8.507059e+37
    %v7498 = vand.u32 %v7470, 2147483648
    %v7499 = vor.u32 1.1754944e-38, %v7498
    %v7500 = vsel %vm7497, %v7499, %v7495
    %v7501 = vmul.f32 1.0, %v7500
    %v7502 = vrcp.pop %v7471
    %v7503 = vmul.f32 %v7471, %v7502
    %v7504 = vsub.f32 1.0, %v7503
    %v7505 = vmul.f32 %v7502, %v7504
    %v7506 = vadd.f32 %v7502, %v7505
    %vm7507 = vweird.f32 %v7471
    %vm7508 = vweird.f32 %v7502
    %vm7509 = vmor %vm7507, %vm7508
    %v7510 = vsel %vm7509, %v7502, %v7506
    %v7511 = vand.u32 2147483647, %v7471
    %vm7512 = vcmp.eq.f32.partialorder %v7511, 8.507059e+37
    %v7513 = vand.u32 %v7471, 2147483648
    %v7514 = vor.u32 1.1754944e-38, %v7513
    %v7515 = vsel %vm7512, %v7514, %v7510
    %v7516 = vmul.f32 1.0, %v7515
    %v7517 = vadd.f32 %v7316, %v5417
    %v7518 = vadd.f32 %v7355, %v5418
    %v7519 = vadd.f32 %v7394, %v5419
    %v7520 = vmul.f32 %v7426, %v7517
    %v7521 = vmul.f32 %v7441, %v7518
    %v7522 = vmul.f32 %v7456, %v7519
    %v7523 = vadd.f32 %v7040, %v7520
    %v7524 = vadd.f32 %v7041, %v7521
    %v7525 = vadd.f32 %v7042, %v7522
    %v7526 = vtanh.pop %v7523
    %v7527 = vtanh.pop %v7524
    %v7528 = vtanh.pop %v7525
    %v7529 = vsub.f32 1.0, %v7486
    %v7530 = vsub.f32 1.0, %v7501
    %v7531 = vsub.f32 1.0, %v7516
    %v7532 = vmul.f32 %v7529, %v7526
    %v7533 = vmul.f32 %v7530, %v7527
    %v7534 = vmul.f32 %v7531, %v7528
    %v7535 = vmul.f32 %v7486, %v7028
    %v7536 = vmul.f32 %v7501, %v7029
    %v7537 = vmul.f32 %v7516, %v7030
    %v7538 = vadd.f32 %v7532, %v7535
    %v7539 = vadd.f32 %v7533, %v7536
    %v7540 = vadd.f32 %v7534, %v7537
    %7541 = vst [vmem:[#allocation3 + $0x18] sm:$0xff] %v7538
    %7542 = vst [vmem:[#allocation3 + $0x20] sm:$0xff] %v7539
    %7543 = vst [vmem:[#allocation3 + $0x28] sm:$0xff] %v7540
    %v7544 = vld [vmem:[#allocation2 + $0x90] sm:$0xff]
    %v7545 = vld [vmem:[#allocation2 + $0x98] sm:$0xff]
    %v7546 = vld [vmem:[#allocation2 + $0xa0] sm:$0xff]
    %v7547 = vld [vmem:[#allocation2 + $0xa8] sm:$0xff]
    %v7548 = vld [vmem:[#allocation2 + $0xb0] sm:$0xff]
    %v7549 = vld [vmem:[#allocation2 + $0xb8] sm:$0xff]
    %v7550 = vld [vmem:[#allocation2 + $0xc0] sm:$0xff]
    %v7551 = vld [vmem:[#allocation2 + $0xc8] sm:$0xff]
    %v7552 = vld [vmem:[#allocation2 + $0xd0] sm:$0xff]
    %v7553 = vpack.c.bf16 %v7538, %v7538
    %v7554 = vpack.c.bf16 %v7539, %v7539
    %v7555 = vpack.c.bf16 %v7540, %v7540
    %7556 = vmatpush.bf16.msra.mxu0 %v6167
    %7557 = vmatpush.bf16.msra.mxu0 %v6158
    %7558 = vmatpush.bf16.msra.mxu0 %v6149
    %7559 = vmatpush.bf16.msra.mxu0 %v6140
    %7560 = vmatpush.bf16.msra.mxu0 %v6131
    %7561 = vmatpush.bf16.msra.mxu0 %v6122
    %7562 = vmatpush.bf16.msra.mxu0 %v6113
    %7563 = vmatpush.bf16.msra.mxu0 %v6104
    %7564 = vmatmul.bf16.gmra.mxu0 %v7553
    %v7565 = vpop.f32.mrf.mxu0
    %v7566 = vadd.f32 0.0, %v7565
    %v7567 = vpop.f32.mrf.mxu0
    %7568 = vdwg.mxu0
    %7569 = vmatpush.bf16.msra.mxu0 %v6239
    %7570 = vmatpush.bf16.msra.mxu0 %v6230
    %7571 = vmatpush.bf16.msra.mxu0 %v6221
    %7572 = vmatpush.bf16.msra.mxu0 %v6212
    %7573 = vmatpush.bf16.msra.mxu0 %v6203
    %7574 = vmatpush.bf16.msra.mxu0 %v6194
    %7575 = vmatpush.bf16.msra.mxu0 %v6185
    %7576 = vmatpush.bf16.msra.mxu0 %v6176
    %7577 = vmatmul.bf16.gmra.mxu0 %v7554
    %v7578 = vpop.f32.mrf.mxu0
    %v7579 = vadd.f32 %v7566, %v7578
    %v7580 = vpop.f32.mrf.mxu0
    %7581 = vdwg.mxu0
    %7582 = vmatpush.bf16.msra.mxu0 %v6311
    %7583 = vmatpush.bf16.msra.mxu0 %v6302
    %7584 = vmatpush.bf16.msra.mxu0 %v6293
    %7585 = vmatpush.bf16.msra.mxu0 %v6284
    %7586 = vmatpush.bf16.msra.mxu0 %v6275
    %7587 = vmatpush.bf16.msra.mxu0 %v6266
    %7588 = vmatpush.bf16.msra.mxu0 %v6257
    %7589 = vmatpush.bf16.msra.mxu0 %v6248
    %7590 = vmatmul.bf16.gmra.mxu0 %v7555
    %v7591 = vpop.f32.mrf.mxu0
    %v7592 = vadd.f32 %v7579, %v7591
    %v7593 = vpop.f32.mrf.mxu0
    %7594 = vdwg.mxu0
    %7595 = vmatpush.bf16.msra.mxu0 %v6168
    %7596 = vmatpush.bf16.msra.mxu0 %v6159
    %7597 = vmatpush.bf16.msra.mxu0 %v6150
    %7598 = vmatpush.bf16.msra.mxu0 %v6141
    %7599 = vmatpush.bf16.msra.mxu0 %v6132
    %7600 = vmatpush.bf16.msra.mxu0 %v6123
    %7601 = vmatpush.bf16.msra.mxu0 %v6114
    %7602 = vmatpush.bf16.msra.mxu0 %v6105
    %7603 = vmatmul.bf16.gmra.mxu0 %v7553
    %v7604 = vpop.f32.mrf.mxu0
    %v7605 = vadd.f32 0.0, %v7604
    %v7606 = vpop.f32.mrf.mxu0
    %7607 = vdwg.mxu0
    %7608 = vmatpush.bf16.msra.mxu0 %v6240
    %7609 = vmatpush.bf16.msra.mxu0 %v6231
    %7610 = vmatpush.bf16.msra.mxu0 %v6222
    %7611 = vmatpush.bf16.msra.mxu0 %v6213
    %7612 = vmatpush.bf16.msra.mxu0 %v6204
    %7613 = vmatpush.bf16.msra.mxu0 %v6195
    %7614 = vmatpush.bf16.msra.mxu0 %v6186
    %7615 = vmatpush.bf16.msra.mxu0 %v6177
    %7616 = vmatmul.bf16.gmra.mxu0 %v7554
    %v7617 = vpop.f32.mrf.mxu0
    %v7618 = vadd.f32 %v7605, %v7617
    %v7619 = vpop.f32.mrf.mxu0
    %7620 = vdwg.mxu0
    %7621 = vmatpush.bf16.msra.mxu0 %v6312
    %7622 = vmatpush.bf16.msra.mxu0 %v6303
    %7623 = vmatpush.bf16.msra.mxu0 %v6294
    %7624 = vmatpush.bf16.msra.mxu0 %v6285
    %7625 = vmatpush.bf16.msra.mxu0 %v6276
    %7626 = vmatpush.bf16.msra.mxu0 %v6267
    %7627 = vmatpush.bf16.msra.mxu0 %v6258
    %7628 = vmatpush.bf16.msra.mxu0 %v6249
    %7629 = vmatmul.bf16.gmra.mxu0 %v7555
    %v7630 = vpop.f32.mrf.mxu0
    %v7631 = vadd.f32 %v7618, %v7630
    %v7632 = vpop.f32.mrf.mxu0
    %7633 = vdwg.mxu0
    %7634 = vmatpush.bf16.msra.mxu0 %v6169
    %7635 = vmatpush.bf16.msra.mxu0 %v6160
    %7636 = vmatpush.bf16.msra.mxu0 %v6151
    %7637 = vmatpush.bf16.msra.mxu0 %v6142
    %7638 = vmatpush.bf16.msra.mxu0 %v6133
    %7639 = vmatpush.bf16.msra.mxu0 %v6124
    %7640 = vmatpush.bf16.msra.mxu0 %v6115
    %7641 = vmatpush.bf16.msra.mxu0 %v6106
    %7642 = vmatmul.bf16.gmra.mxu0 %v7553
    %v7643 = vpop.f32.mrf.mxu0
    %v7644 = vadd.f32 0.0, %v7643
    %v7645 = vpop.f32.mrf.mxu0
    %7646 = vdwg.mxu0
    %7647 = vmatpush.bf16.msra.mxu0 %v6241
    %7648 = vmatpush.bf16.msra.mxu0 %v6232
    %7649 = vmatpush.bf16.msra.mxu0 %v6223
    %7650 = vmatpush.bf16.msra.mxu0 %v6214
    %7651 = vmatpush.bf16.msra.mxu0 %v6205
    %7652 = vmatpush.bf16.msra.mxu0 %v6196
    %7653 = vmatpush.bf16.msra.mxu0 %v6187
    %7654 = vmatpush.bf16.msra.mxu0 %v6178
    %7655 = vmatmul.bf16.gmra.mxu0 %v7554
    %v7656 = vpop.f32.mrf.mxu0
    %v7657 = vadd.f32 %v7644, %v7656
    %v7658 = vpop.f32.mrf.mxu0
    %7659 = vdwg.mxu0
    %7660 = vmatpush.bf16.msra.mxu0 %v6313
    %7661 = vmatpush.bf16.msra.mxu0 %v6304
    %7662 = vmatpush.bf16.msra.mxu0 %v6295
    %7663 = vmatpush.bf16.msra.mxu0 %v6286
    %7664 = vmatpush.bf16.msra.mxu0 %v6277
    %7665 = vmatpush.bf16.msra.mxu0 %v6268
    %7666 = vmatpush.bf16.msra.mxu0 %v6259
    %7667 = vmatpush.bf16.msra.mxu0 %v6250
    %7668 = vmatmul.bf16.gmra.mxu0 %v7555
    %v7669 = vpop.f32.mrf.mxu0
    %v7670 = vadd.f32 %v7657, %v7669
    %v7671 = vpop.f32.mrf.mxu0
    %7672 = vdwg.mxu0
    %7673 = vmatpush.bf16.msra.mxu0 %v6170
    %7674 = vmatpush.bf16.msra.mxu0 %v6161
    %7675 = vmatpush.bf16.msra.mxu0 %v6152
    %7676 = vmatpush.bf16.msra.mxu0 %v6143
    %7677 = vmatpush.bf16.msra.mxu0 %v6134
    %7678 = vmatpush.bf16.msra.mxu0 %v6125
    %7679 = vmatpush.bf16.msra.mxu0 %v6116
    %7680 = vmatpush.bf16.msra.mxu0 %v6107
    %7681 = vmatmul.bf16.gmra.mxu0 %v7553
    %v7682 = vpop.f32.mrf.mxu0
    %v7683 = vadd.f32 0.0, %v7682
    %v7684 = vpop.f32.mrf.mxu0
    %7685 = vdwg.mxu0
    %7686 = vmatpush.bf16.msra.mxu0 %v6242
    %7687 = vmatpush.bf16.msra.mxu0 %v6233
    %7688 = vmatpush.bf16.msra.mxu0 %v6224
    %7689 = vmatpush.bf16.msra.mxu0 %v6215
    %7690 = vmatpush.bf16.msra.mxu0 %v6206
    %7691 = vmatpush.bf16.msra.mxu0 %v6197
    %7692 = vmatpush.bf16.msra.mxu0 %v6188
    %7693 = vmatpush.bf16.msra.mxu0 %v6179
    %7694 = vmatmul.bf16.gmra.mxu0 %v7554
    %v7695 = vpop.f32.mrf.mxu0
    %v7696 = vadd.f32 %v7683, %v7695
    %v7697 = vpop.f32.mrf.mxu0
    %7698 = vdwg.mxu0
    %7699 = vmatpush.bf16.msra.mxu0 %v6314
    %7700 = vmatpush.bf16.msra.mxu0 %v6305
    %7701 = vmatpush.bf16.msra.mxu0 %v6296
    %7702 = vmatpush.bf16.msra.mxu0 %v6287
    %7703 = vmatpush.bf16.msra.mxu0 %v6278
    %7704 = vmatpush.bf16.msra.mxu0 %v6269
    %7705 = vmatpush.bf16.msra.mxu0 %v6260
    %7706 = vmatpush.bf16.msra.mxu0 %v6251
    %7707 = vmatmul.bf16.gmra.mxu0 %v7555
    %v7708 = vpop.f32.mrf.mxu0
    %v7709 = vadd.f32 %v7696, %v7708
    %v7710 = vpop.f32.mrf.mxu0
    %7711 = vdwg.mxu0
    %7712 = vmatpush.bf16.msra.mxu0 %v6171
    %7713 = vmatpush.bf16.msra.mxu0 %v6162
    %7714 = vmatpush.bf16.msra.mxu0 %v6153
    %7715 = vmatpush.bf16.msra.mxu0 %v6144
    %7716 = vmatpush.bf16.msra.mxu0 %v6135
    %7717 = vmatpush.bf16.msra.mxu0 %v6126
    %7718 = vmatpush.bf16.msra.mxu0 %v6117
    %7719 = vmatpush.bf16.msra.mxu0 %v6108
    %7720 = vmatmul.bf16.gmra.mxu0 %v7553
    %v7721 = vpop.f32.mrf.mxu0
    %v7722 = vadd.f32 0.0, %v7721
    %v7723 = vpop.f32.mrf.mxu0
    %7724 = vdwg.mxu0
    %7725 = vmatpush.bf16.msra.mxu0 %v6243
    %7726 = vmatpush.bf16.msra.mxu0 %v6234
    %7727 = vmatpush.bf16.msra.mxu0 %v6225
    %7728 = vmatpush.bf16.msra.mxu0 %v6216
    %7729 = vmatpush.bf16.msra.mxu0 %v6207
    %7730 = vmatpush.bf16.msra.mxu0 %v6198
    %7731 = vmatpush.bf16.msra.mxu0 %v6189
    %7732 = vmatpush.bf16.msra.mxu0 %v6180
    %7733 = vmatmul.bf16.gmra.mxu0 %v7554
    %v7734 = vpop.f32.mrf.mxu0
    %v7735 = vadd.f32 %v7722, %v7734
    %v7736 = vpop.f32.mrf.mxu0
    %7737 = vdwg.mxu0
    %7738 = vmatpush.bf16.msra.mxu0 %v6315
    %7739 = vmatpush.bf16.msra.mxu0 %v6306
    %7740 = vmatpush.bf16.msra.mxu0 %v6297
    %7741 = vmatpush.bf16.msra.mxu0 %v6288
    %7742 = vmatpush.bf16.msra.mxu0 %v6279
    %7743 = vmatpush.bf16.msra.mxu0 %v6270
    %7744 = vmatpush.bf16.msra.mxu0 %v6261
    %7745 = vmatpush.bf16.msra.mxu0 %v6252
    %7746 = vmatmul.bf16.gmra.mxu0 %v7555
    %v7747 = vpop.f32.mrf.mxu0
    %v7748 = vadd.f32 %v7735, %v7747
    %v7749 = vpop.f32.mrf.mxu0
    %7750 = vdwg.mxu0
    %7751 = vmatpush.bf16.msra.mxu0 %v6172
    %7752 = vmatpush.bf16.msra.mxu0 %v6163
    %7753 = vmatpush.bf16.msra.mxu0 %v6154
    %7754 = vmatpush.bf16.msra.mxu0 %v6145
    %7755 = vmatpush.bf16.msra.mxu0 %v6136
    %7756 = vmatpush.bf16.msra.mxu0 %v6127
    %7757 = vmatpush.bf16.msra.mxu0 %v6118
    %7758 = vmatpush.bf16.msra.mxu0 %v6109
    %7759 = vmatmul.bf16.gmra.mxu0 %v7553
    %v7760 = vpop.f32.mrf.mxu0
    %v7761 = vadd.f32 0.0, %v7760
    %v7762 = vpop.f32.mrf.mxu0
    %7763 = vdwg.mxu0
    %7764 = vmatpush.bf16.msra.mxu0 %v6244
    %7765 = vmatpush.bf16.msra.mxu0 %v6235
    %7766 = vmatpush.bf16.msra.mxu0 %v6226
    %7767 = vmatpush.bf16.msra.mxu0 %v6217
    %7768 = vmatpush.bf16.msra.mxu0 %v6208
    %7769 = vmatpush.bf16.msra.mxu0 %v6199
    %7770 = vmatpush.bf16.msra.mxu0 %v6190
    %7771 = vmatpush.bf16.msra.mxu0 %v6181
    %7772 = vmatmul.bf16.gmra.mxu0 %v7554
    %v7773 = vpop.f32.mrf.mxu0
    %v7774 = vadd.f32 %v7761, %v7773
    %v7775 = vpop.f32.mrf.mxu0
    %7776 = vdwg.mxu0
    %7777 = vmatpush.bf16.msra.mxu0 %v6316
    %7778 = vmatpush.bf16.msra.mxu0 %v6307
    %7779 = vmatpush.bf16.msra.mxu0 %v6298
    %7780 = vmatpush.bf16.msra.mxu0 %v6289
    %7781 = vmatpush.bf16.msra.mxu0 %v6280
    %7782 = vmatpush.bf16.msra.mxu0 %v6271
    %7783 = vmatpush.bf16.msra.mxu0 %v6262
    %7784 = vmatpush.bf16.msra.mxu0 %v6253
    %7785 = vmatmul.bf16.gmra.mxu0 %v7555
    %v7786 = vpop.f32.mrf.mxu0
    %v7787 = vadd.f32 %v7774, %v7786
    %v7788 = vpop.f32.mrf.mxu0
    %7789 = vdwg.mxu0
    %7790 = vmatpush.bf16.msra.mxu0 %v6173
    %7791 = vmatpush.bf16.msra.mxu0 %v6164
    %7792 = vmatpush.bf16.msra.mxu0 %v6155
    %7793 = vmatpush.bf16.msra.mxu0 %v6146
    %7794 = vmatpush.bf16.msra.mxu0 %v6137
    %7795 = vmatpush.bf16.msra.mxu0 %v6128
    %7796 = vmatpush.bf16.msra.mxu0 %v6119
    %7797 = vmatpush.bf16.msra.mxu0 %v6110
    %7798 = vmatmul.bf16.gmra.mxu0 %v7553
    %v7799 = vpop.f32.mrf.mxu0
    %v7800 = vadd.f32 0.0, %v7799
    %v7801 = vpop.f32.mrf.mxu0
    %7802 = vdwg.mxu0
    %7803 = vmatpush.bf16.msra.mxu0 %v6245
    %7804 = vmatpush.bf16.msra.mxu0 %v6236
    %7805 = vmatpush.bf16.msra.mxu0 %v6227
    %7806 = vmatpush.bf16.msra.mxu0 %v6218
    %7807 = vmatpush.bf16.msra.mxu0 %v6209
    %7808 = vmatpush.bf16.msra.mxu0 %v6200
    %7809 = vmatpush.bf16.msra.mxu0 %v6191
    %7810 = vmatpush.bf16.msra.mxu0 %v6182
    %7811 = vmatmul.bf16.gmra.mxu0 %v7554
    %v7812 = vpop.f32.mrf.mxu0
    %v7813 = vadd.f32 %v7800, %v7812
    %v7814 = vpop.f32.mrf.mxu0
    %7815 = vdwg.mxu0
    %7816 = vmatpush.bf16.msra.mxu0 %v6317
    %7817 = vmatpush.bf16.msra.mxu0 %v6308
    %7818 = vmatpush.bf16.msra.mxu0 %v6299
    %7819 = vmatpush.bf16.msra.mxu0 %v6290
    %7820 = vmatpush.bf16.msra.mxu0 %v6281
    %7821 = vmatpush.bf16.msra.mxu0 %v6272
    %7822 = vmatpush.bf16.msra.mxu0 %v6263
    %7823 = vmatpush.bf16.msra.mxu0 %v6254
    %7824 = vmatmul.bf16.gmra.mxu0 %v7555
    %v7825 = vpop.f32.mrf.mxu0
    %v7826 = vadd.f32 %v7813, %v7825
    %v7827 = vpop.f32.mrf.mxu0
    %7828 = vdwg.mxu0
    %7829 = vmatpush.bf16.msra.mxu0 %v6174
    %7830 = vmatpush.bf16.msra.mxu0 %v6165
    %7831 = vmatpush.bf16.msra.mxu0 %v6156
    %7832 = vmatpush.bf16.msra.mxu0 %v6147
    %7833 = vmatpush.bf16.msra.mxu0 %v6138
    %7834 = vmatpush.bf16.msra.mxu0 %v6129
    %7835 = vmatpush.bf16.msra.mxu0 %v6120
    %7836 = vmatpush.bf16.msra.mxu0 %v6111
    %7837 = vmatmul.bf16.gmra.mxu0 %v7553
    %v7838 = vpop.f32.mrf.mxu0
    %v7839 = vadd.f32 0.0, %v7838
    %v7840 = vpop.f32.mrf.mxu0
    %7841 = vdwg.mxu0
    %7842 = vmatpush.bf16.msra.mxu0 %v6246
    %7843 = vmatpush.bf16.msra.mxu0 %v6237
    %7844 = vmatpush.bf16.msra.mxu0 %v6228
    %7845 = vmatpush.bf16.msra.mxu0 %v6219
    %7846 = vmatpush.bf16.msra.mxu0 %v6210
    %7847 = vmatpush.bf16.msra.mxu0 %v6201
    %7848 = vmatpush.bf16.msra.mxu0 %v6192
    %7849 = vmatpush.bf16.msra.mxu0 %v6183
    %7850 = vmatmul.bf16.gmra.mxu0 %v7554
    %v7851 = vpop.f32.mrf.mxu0
    %v7852 = vadd.f32 %v7839, %v7851
    %v7853 = vpop.f32.mrf.mxu0
    %7854 = vdwg.mxu0
    %7855 = vmatpush.bf16.msra.mxu0 %v6318
    %7856 = vmatpush.bf16.msra.mxu0 %v6309
    %7857 = vmatpush.bf16.msra.mxu0 %v6300
    %7858 = vmatpush.bf16.msra.mxu0 %v6291
    %7859 = vmatpush.bf16.msra.mxu0 %v6282
    %7860 = vmatpush.bf16.msra.mxu0 %v6273
    %7861 = vmatpush.bf16.msra.mxu0 %v6264
    %7862 = vmatpush.bf16.msra.mxu0 %v6255
    %7863 = vmatmul.bf16.gmra.mxu0 %v7555
    %v7864 = vpop.f32.mrf.mxu0
    %v7865 = vadd.f32 %v7852, %v7864
    %v7866 = vpop.f32.mrf.mxu0
    %7867 = vdwg.mxu0
    %7868 = vmatpush.bf16.msra.mxu0 %v6175
    %7869 = vmatpush.bf16.msra.mxu0 %v6166
    %7870 = vmatpush.bf16.msra.mxu0 %v6157
    %7871 = vmatpush.bf16.msra.mxu0 %v6148
    %7872 = vmatpush.bf16.msra.mxu0 %v6139
    %7873 = vmatpush.bf16.msra.mxu0 %v6130
    %7874 = vmatpush.bf16.msra.mxu0 %v6121
    %7875 = vmatpush.bf16.msra.mxu0 %v6112
    %7876 = vmatmul.bf16.gmra.mxu0 %v7553
    %v7877 = vpop.f32.mrf.mxu0
    %v7878 = vadd.f32 0.0, %v7877
    %v7879 = vpop.f32.mrf.mxu0
    %7880 = vdwg.mxu0
    %7881 = vmatpush.bf16.msra.mxu0 %v6247
    %7882 = vmatpush.bf16.msra.mxu0 %v6238
    %7883 = vmatpush.bf16.msra.mxu0 %v6229
    %7884 = vmatpush.bf16.msra.mxu0 %v6220
    %7885 = vmatpush.bf16.msra.mxu0 %v6211
    %7886 = vmatpush.bf16.msra.mxu0 %v6202
    %7887 = vmatpush.bf16.msra.mxu0 %v6193
    %7888 = vmatpush.bf16.msra.mxu0 %v6184
    %7889 = vmatmul.bf16.gmra.mxu0 %v7554
    %v7890 = vpop.f32.mrf.mxu0
    %v7891 = vadd.f32 %v7878, %v7890
    %v7892 = vpop.f32.mrf.mxu0
    %7893 = vdwg.mxu0
    %7894 = vmatpush.bf16.msra.mxu0 %v6319
    %7895 = vmatpush.bf16.msra.mxu0 %v6310
    %7896 = vmatpush.bf16.msra.mxu0 %v6301
    %7897 = vmatpush.bf16.msra.mxu0 %v6292
    %7898 = vmatpush.bf16.msra.mxu0 %v6283
    %7899 = vmatpush.bf16.msra.mxu0 %v6274
    %7900 = vmatpush.bf16.msra.mxu0 %v6265
    %7901 = vmatpush.bf16.msra.mxu0 %v6256
    %7902 = vmatmul.bf16.gmra.mxu0 %v7555
    %v7903 = vpop.f32.mrf.mxu0
    %v7904 = vadd.f32 %v7891, %v7903
    %v7905 = vpop.f32.mrf.mxu0
    %7906 = vdwg.mxu0
    %v7907 = vadd.f32 %v7544, %v7592
    %v7908 = vadd.f32 %v7545, %v7631
    %v7909 = vadd.f32 %v7546, %v7670
    %v7910 = vxor.u32 %v7907, 2147483648
    %v7911 = vxor.u32 %v7908, 2147483648
    %v7912 = vxor.u32 %v7909, 2147483648
    %v7913 = vmul.f32 %v7910, 1.442695
    %v7914 = vpow.pop %v7913
    %v7915 = vmul.f32 %v7911, 1.442695
    %v7916 = vpow.pop %v7915
    %v7917 = vmul.f32 %v7912, 1.442695
    %v7918 = vpow.pop %v7917
    %v7919 = vadd.f32 %v7914, 1.0
    %v7920 = vadd.f32 %v7916, 1.0
    %v7921 = vadd.f32 %v7918, 1.0
    %v7922 = vrcp.pop %v7919
    %v7923 = vmul.f32 %v7919, %v7922
    %v7924 = vsub.f32 1.0, %v7923
    %v7925 = vmul.f32 %v7922, %v7924
    %v7926 = vadd.f32 %v7922, %v7925
    %vm7927 = vweird.f32 %v7919
    %vm7928 = vweird.f32 %v7922
    %vm7929 = vmor %vm7927, %vm7928
    %v7930 = vsel %vm7929, %v7922, %v7926
    %v7931 = vand.u32 2147483647, %v7919
    %vm7932 = vcmp.eq.f32.partialorder %v7931, 8.507059e+37
    %v7933 = vand.u32 %v7919, 2147483648
    %v7934 = vor.u32 1.1754944e-38, %v7933
    %v7935 = vsel %vm7932, %v7934, %v7930
    %v7936 = vmul.f32 1.0, %v7935
    %v7937 = vrcp.pop %v7920
    %v7938 = vmul.f32 %v7920, %v7937
    %v7939 = vsub.f32 1.0, %v7938
    %v7940 = vmul.f32 %v7937, %v7939
    %v7941 = vadd.f32 %v7937, %v7940
    %vm7942 = vweird.f32 %v7920
    %vm7943 = vweird.f32 %v7937
    %vm7944 = vmor %vm7942, %vm7943
    %v7945 = vsel %vm7944, %v7937, %v7941
    %v7946 = vand.u32 2147483647, %v7920
    %vm7947 = vcmp.eq.f32.partialorder %v7946, 8.507059e+37
    %v7948 = vand.u32 %v7920, 2147483648
    %v7949 = vor.u32 1.1754944e-38, %v7948
    %v7950 = vsel %vm7947, %v7949, %v7945
    %v7951 = vmul.f32 1.0, %v7950
    %v7952 = vrcp.pop %v7921
    %v7953 = vmul.f32 %v7921, %v7952
    %v7954 = vsub.f32 1.0, %v7953
    %v7955 = vmul.f32 %v7952, %v7954
    %v7956 = vadd.f32 %v7952, %v7955
    %vm7957 = vweird.f32 %v7921
    %vm7958 = vweird.f32 %v7952
    %vm7959 = vmor %vm7957, %vm7958
    %v7960 = vsel %vm7959, %v7952, %v7956
    %v7961 = vand.u32 2147483647, %v7921
    %vm7962 = vcmp.eq.f32.partialorder %v7961, 8.507059e+37
    %v7963 = vand.u32 %v7921, 2147483648
    %v7964 = vor.u32 1.1754944e-38, %v7963
    %v7965 = vsel %vm7962, %v7964, %v7960
    %v7966 = vmul.f32 1.0, %v7965
    %v7967 = vadd.f32 %v7547, %v7709
    %v7968 = vadd.f32 %v7548, %v7748
    %v7969 = vadd.f32 %v7549, %v7787
    %v7970 = vxor.u32 %v7967, 2147483648
    %v7971 = vxor.u32 %v7968, 2147483648
    %v7972 = vxor.u32 %v7969, 2147483648
    %v7973 = vmul.f32 %v7970, 1.442695
    %v7974 = vpow.pop %v7973
    %v7975 = vmul.f32 %v7971, 1.442695
    %v7976 = vpow.pop %v7975
    %v7977 = vmul.f32 %v7972, 1.442695
    %v7978 = vpow.pop %v7977
    %v7979 = vadd.f32 %v7974, 1.0
    %v7980 = vadd.f32 %v7976, 1.0
    %v7981 = vadd.f32 %v7978, 1.0
    %v7982 = vrcp.pop %v7979
    %v7983 = vmul.f32 %v7979, %v7982
    %v7984 = vsub.f32 1.0, %v7983
    %v7985 = vmul.f32 %v7982, %v7984
    %v7986 = vadd.f32 %v7982, %v7985
    %vm7987 = vweird.f32 %v7979
    %vm7988 = vweird.f32 %v7982
    %vm7989 = vmor %vm7987, %vm7988
    %v7990 = vsel %vm7989, %v7982, %v7986
    %v7991 = vand.u32 2147483647, %v7979
    %vm7992 = vcmp.eq.f32.partialorder %v7991, 8.507059e+37
    %v7993 = vand.u32 %v7979, 2147483648
    %v7994 = vor.u32 1.1754944e-38, %v7993
    %v7995 = vsel %vm7992, %v7994, %v7990
    %v7996 = vmul.f32 1.0, %v7995
    %v7997 = vrcp.pop %v7980
    %v7998 = vmul.f32 %v7980, %v7997
    %v7999 = vsub.f32 1.0, %v7998
    %v8000 = vmul.f32 %v7997, %v7999
    %v8001 = vadd.f32 %v7997, %v8000
    %vm8002 = vweird.f32 %v7980
    %vm8003 = vweird.f32 %v7997
    %vm8004 = vmor %vm8002, %vm8003
    %v8005 = vsel %vm8004, %v7997, %v8001
    %v8006 = vand.u32 2147483647, %v7980
    %vm8007 = vcmp.eq.f32.partialorder %v8006, 8.507059e+37
    %v8008 = vand.u32 %v7980, 2147483648
    %v8009 = vor.u32 1.1754944e-38, %v8008
    %v8010 = vsel %vm8007, %v8009, %v8005
    %v8011 = vmul.f32 1.0, %v8010
    %v8012 = vrcp.pop %v7981
    %v8013 = vmul.f32 %v7981, %v8012
    %v8014 = vsub.f32 1.0, %v8013
    %v8015 = vmul.f32 %v8012, %v8014
    %v8016 = vadd.f32 %v8012, %v8015
    %vm8017 = vweird.f32 %v7981
    %vm8018 = vweird.f32 %v8012
    %vm8019 = vmor %vm8017, %vm8018
    %v8020 = vsel %vm8019, %v8012, %v8016
    %v8021 = vand.u32 2147483647, %v7981
    %vm8022 = vcmp.eq.f32.partialorder %v8021, 8.507059e+37
    %v8023 = vand.u32 %v7981, 2147483648
    %v8024 = vor.u32 1.1754944e-38, %v8023
    %v8025 = vsel %vm8022, %v8024, %v8020
    %v8026 = vmul.f32 1.0, %v8025
    %v8027 = vadd.f32 %v7826, %v5417
    %v8028 = vadd.f32 %v7865, %v5418
    %v8029 = vadd.f32 %v7904, %v5419
    %v8030 = vmul.f32 %v7936, %v8027
    %v8031 = vmul.f32 %v7951, %v8028
    %v8032 = vmul.f32 %v7966, %v8029
    %v8033 = vadd.f32 %v7550, %v8030
    %v8034 = vadd.f32 %v7551, %v8031
    %v8035 = vadd.f32 %v7552, %v8032
    %v8036 = vtanh.pop %v8033
    %v8037 = vtanh.pop %v8034
    %v8038 = vtanh.pop %v8035
    %v8039 = vsub.f32 1.0, %v7996
    %v8040 = vsub.f32 1.0, %v8011
    %v8041 = vsub.f32 1.0, %v8026
    %v8042 = vmul.f32 %v8039, %v8036
    %v8043 = vmul.f32 %v8040, %v8037
    %v8044 = vmul.f32 %v8041, %v8038
    %v8045 = vmul.f32 %v7996, %v7538
    %v8046 = vmul.f32 %v8011, %v7539
    %v8047 = vmul.f32 %v8026, %v7540
    %v8048 = vadd.f32 %v8042, %v8045
    %v8049 = vadd.f32 %v8043, %v8046
    %v8050 = vadd.f32 %v8044, %v8047
    %8051 = vst [vmem:[#allocation3 + $0x30] sm:$0xff] %v8048
    %8052 = vst [vmem:[#allocation3 + $0x38] sm:$0xff] %v8049
    %8053 = vst [vmem:[#allocation3 + $0x40] sm:$0xff] %v8050
    %v8054 = vld [vmem:[#allocation2 + $0xd8] sm:$0xff]
    %v8055 = vld [vmem:[#allocation2 + $0xe0] sm:$0xff]
    %v8056 = vld [vmem:[#allocation2 + $0xe8] sm:$0xff]
    %v8057 = vld [vmem:[#allocation2 + $0xf0] sm:$0xff]
    %v8058 = vld [vmem:[#allocation2 + $0xf8] sm:$0xff]
    %v8059 = vld [vmem:[#allocation2 + $0x100] sm:$0xff]
    %v8060 = vld [vmem:[#allocation2 + $0x108] sm:$0xff]
    %v8061 = vld [vmem:[#allocation2 + $0x110] sm:$0xff]
    %v8062 = vld [vmem:[#allocation2 + $0x118] sm:$0xff]
    %v8063 = vpack.c.bf16 %v8048, %v8048
    %v8064 = vpack.c.bf16 %v8049, %v8049
    %v8065 = vpack.c.bf16 %v8050, %v8050
    %8066 = vmatpush.bf16.msra.mxu0 %v6167
    %8067 = vmatpush.bf16.msra.mxu0 %v6158
    %8068 = vmatpush.bf16.msra.mxu0 %v6149
    %8069 = vmatpush.bf16.msra.mxu0 %v6140
    %8070 = vmatpush.bf16.msra.mxu0 %v6131
    %8071 = vmatpush.bf16.msra.mxu0 %v6122
    %8072 = vmatpush.bf16.msra.mxu0 %v6113
    %8073 = vmatpush.bf16.msra.mxu0 %v6104
    %8074 = vmatmul.bf16.gmra.mxu0 %v8063
    %v8075 = vpop.f32.mrf.mxu0
    %v8076 = vadd.f32 0.0, %v8075
    %v8077 = vpop.f32.mrf.mxu0
    %8078 = vdwg.mxu0
    %8079 = vmatpush.bf16.msra.mxu0 %v6239
    %8080 = vmatpush.bf16.msra.mxu0 %v6230
    %8081 = vmatpush.bf16.msra.mxu0 %v6221
    %8082 = vmatpush.bf16.msra.mxu0 %v6212
    %8083 = vmatpush.bf16.msra.mxu0 %v6203
    %8084 = vmatpush.bf16.msra.mxu0 %v6194
    %8085 = vmatpush.bf16.msra.mxu0 %v6185
    %8086 = vmatpush.bf16.msra.mxu0 %v6176
    %8087 = vmatmul.bf16.gmra.mxu0 %v8064
    %v8088 = vpop.f32.mrf.mxu0
    %v8089 = vadd.f32 %v8076, %v8088
    %v8090 = vpop.f32.mrf.mxu0
    %8091 = vdwg.mxu0
    %8092 = vmatpush.bf16.msra.mxu0 %v6311
    %8093 = vmatpush.bf16.msra.mxu0 %v6302
    %8094 = vmatpush.bf16.msra.mxu0 %v6293
    %8095 = vmatpush.bf16.msra.mxu0 %v6284
    %8096 = vmatpush.bf16.msra.mxu0 %v6275
    %8097 = vmatpush.bf16.msra.mxu0 %v6266
    %8098 = vmatpush.bf16.msra.mxu0 %v6257
    %8099 = vmatpush.bf16.msra.mxu0 %v6248
    %8100 = vmatmul.bf16.gmra.mxu0 %v8065
    %v8101 = vpop.f32.mrf.mxu0
    %v8102 = vadd.f32 %v8089, %v8101
    %v8103 = vpop.f32.mrf.mxu0
    %8104 = vdwg.mxu0
    %8105 = vmatpush.bf16.msra.mxu0 %v6168
    %8106 = vmatpush.bf16.msra.mxu0 %v6159
    %8107 = vmatpush.bf16.msra.mxu0 %v6150
    %8108 = vmatpush.bf16.msra.mxu0 %v6141
    %8109 = vmatpush.bf16.msra.mxu0 %v6132
    %8110 = vmatpush.bf16.msra.mxu0 %v6123
    %8111 = vmatpush.bf16.msra.mxu0 %v6114
    %8112 = vmatpush.bf16.msra.mxu0 %v6105
    %8113 = vmatmul.bf16.gmra.mxu0 %v8063
    %v8114 = vpop.f32.mrf.mxu0
    %v8115 = vadd.f32 0.0, %v8114
    %v8116 = vpop.f32.mrf.mxu0
    %8117 = vdwg.mxu0
    %8118 = vmatpush.bf16.msra.mxu0 %v6240
    %8119 = vmatpush.bf16.msra.mxu0 %v6231
    %8120 = vmatpush.bf16.msra.mxu0 %v6222
    %8121 = vmatpush.bf16.msra.mxu0 %v6213
    %8122 = vmatpush.bf16.msra.mxu0 %v6204
    %8123 = vmatpush.bf16.msra.mxu0 %v6195
    %8124 = vmatpush.bf16.msra.mxu0 %v6186
    %8125 = vmatpush.bf16.msra.mxu0 %v6177
    %8126 = vmatmul.bf16.gmra.mxu0 %v8064
    %v8127 = vpop.f32.mrf.mxu0
    %v8128 = vadd.f32 %v8115, %v8127
    %v8129 = vpop.f32.mrf.mxu0
    %8130 = vdwg.mxu0
    %8131 = vmatpush.bf16.msra.mxu0 %v6312
    %8132 = vmatpush.bf16.msra.mxu0 %v6303
    %8133 = vmatpush.bf16.msra.mxu0 %v6294
    %8134 = vmatpush.bf16.msra.mxu0 %v6285
    %8135 = vmatpush.bf16.msra.mxu0 %v6276
    %8136 = vmatpush.bf16.msra.mxu0 %v6267
    %8137 = vmatpush.bf16.msra.mxu0 %v6258
    %8138 = vmatpush.bf16.msra.mxu0 %v6249
    %8139 = vmatmul.bf16.gmra.mxu0 %v8065
    %v8140 = vpop.f32.mrf.mxu0
    %v8141 = vadd.f32 %v8128, %v8140
    %v8142 = vpop.f32.mrf.mxu0
    %8143 = vdwg.mxu0
    %8144 = vmatpush.bf16.msra.mxu0 %v6169
    %8145 = vmatpush.bf16.msra.mxu0 %v6160
    %8146 = vmatpush.bf16.msra.mxu0 %v6151
    %8147 = vmatpush.bf16.msra.mxu0 %v6142
    %8148 = vmatpush.bf16.msra.mxu0 %v6133
    %8149 = vmatpush.bf16.msra.mxu0 %v6124
    %8150 = vmatpush.bf16.msra.mxu0 %v6115
    %8151 = vmatpush.bf16.msra.mxu0 %v6106
    %8152 = vmatmul.bf16.gmra.mxu0 %v8063
    %v8153 = vpop.f32.mrf.mxu0
    %v8154 = vadd.f32 0.0, %v8153
    %v8155 = vpop.f32.mrf.mxu0
    %8156 = vdwg.mxu0
    %8157 = vmatpush.bf16.msra.mxu0 %v6241
    %8158 = vmatpush.bf16.msra.mxu0 %v6232
    %8159 = vmatpush.bf16.msra.mxu0 %v6223
    %8160 = vmatpush.bf16.msra.mxu0 %v6214
    %8161 = vmatpush.bf16.msra.mxu0 %v6205
    %8162 = vmatpush.bf16.msra.mxu0 %v6196
    %8163 = vmatpush.bf16.msra.mxu0 %v6187
    %8164 = vmatpush.bf16.msra.mxu0 %v6178
    %8165 = vmatmul.bf16.gmra.mxu0 %v8064
    %v8166 = vpop.f32.mrf.mxu0
    %v8167 = vadd.f32 %v8154, %v8166
    %v8168 = vpop.f32.mrf.mxu0
    %8169 = vdwg.mxu0
    %8170 = vmatpush.bf16.msra.mxu0 %v6313
    %8171 = vmatpush.bf16.msra.mxu0 %v6304
    %8172 = vmatpush.bf16.msra.mxu0 %v6295
    %8173 = vmatpush.bf16.msra.mxu0 %v6286
    %8174 = vmatpush.bf16.msra.mxu0 %v6277
    %8175 = vmatpush.bf16.msra.mxu0 %v6268
    %8176 = vmatpush.bf16.msra.mxu0 %v6259
    %8177 = vmatpush.bf16.msra.mxu0 %v6250
    %8178 = vmatmul.bf16.gmra.mxu0 %v8065
    %v8179 = vpop.f32.mrf.mxu0
    %v8180 = vadd.f32 %v8167, %v8179
    %v8181 = vpop.f32.mrf.mxu0
    %8182 = vdwg.mxu0
    %8183 = vmatpush.bf16.msra.mxu0 %v6170
    %8184 = vmatpush.bf16.msra.mxu0 %v6161
    %8185 = vmatpush.bf16.msra.mxu0 %v6152
    %8186 = vmatpush.bf16.msra.mxu0 %v6143
    %8187 = vmatpush.bf16.msra.mxu0 %v6134
    %8188 = vmatpush.bf16.msra.mxu0 %v6125
    %8189 = vmatpush.bf16.msra.mxu0 %v6116
    %8190 = vmatpush.bf16.msra.mxu0 %v6107
    %8191 = vmatmul.bf16.gmra.mxu0 %v8063
    %v8192 = vpop.f32.mrf.mxu0
    %v8193 = vadd.f32 0.0, %v8192
    %v8194 = vpop.f32.mrf.mxu0
    %8195 = vdwg.mxu0
    %8196 = vmatpush.bf16.msra.mxu0 %v6242
    %8197 = vmatpush.bf16.msra.mxu0 %v6233
    %8198 = vmatpush.bf16.msra.mxu0 %v6224
    %8199 = vmatpush.bf16.msra.mxu0 %v6215
    %8200 = vmatpush.bf16.msra.mxu0 %v6206
    %8201 = vmatpush.bf16.msra.mxu0 %v6197
    %8202 = vmatpush.bf16.msra.mxu0 %v6188
    %8203 = vmatpush.bf16.msra.mxu0 %v6179
    %8204 = vmatmul.bf16.gmra.mxu0 %v8064
    %v8205 = vpop.f32.mrf.mxu0
    %v8206 = vadd.f32 %v8193, %v8205
    %v8207 = vpop.f32.mrf.mxu0
    %8208 = vdwg.mxu0
    %8209 = vmatpush.bf16.msra.mxu0 %v6314
    %8210 = vmatpush.bf16.msra.mxu0 %v6305
    %8211 = vmatpush.bf16.msra.mxu0 %v6296
    %8212 = vmatpush.bf16.msra.mxu0 %v6287
    %8213 = vmatpush.bf16.msra.mxu0 %v6278
    %8214 = vmatpush.bf16.msra.mxu0 %v6269
    %8215 = vmatpush.bf16.msra.mxu0 %v6260
    %8216 = vmatpush.bf16.msra.mxu0 %v6251
    %8217 = vmatmul.bf16.gmra.mxu0 %v8065
    %v8218 = vpop.f32.mrf.mxu0
    %v8219 = vadd.f32 %v8206, %v8218
    %v8220 = vpop.f32.mrf.mxu0
    %8221 = vdwg.mxu0
    %8222 = vmatpush.bf16.msra.mxu0 %v6171
    %8223 = vmatpush.bf16.msra.mxu0 %v6162
    %8224 = vmatpush.bf16.msra.mxu0 %v6153
    %8225 = vmatpush.bf16.msra.mxu0 %v6144
    %8226 = vmatpush.bf16.msra.mxu0 %v6135
    %8227 = vmatpush.bf16.msra.mxu0 %v6126
    %8228 = vmatpush.bf16.msra.mxu0 %v6117
    %8229 = vmatpush.bf16.msra.mxu0 %v6108
    %8230 = vmatmul.bf16.gmra.mxu0 %v8063
    %v8231 = vpop.f32.mrf.mxu0
    %v8232 = vadd.f32 0.0, %v8231
    %v8233 = vpop.f32.mrf.mxu0
    %8234 = vdwg.mxu0
    %8235 = vmatpush.bf16.msra.mxu0 %v6243
    %8236 = vmatpush.bf16.msra.mxu0 %v6234
    %8237 = vmatpush.bf16.msra.mxu0 %v6225
    %8238 = vmatpush.bf16.msra.mxu0 %v6216
    %8239 = vmatpush.bf16.msra.mxu0 %v6207
    %8240 = vmatpush.bf16.msra.mxu0 %v6198
    %8241 = vmatpush.bf16.msra.mxu0 %v6189
    %8242 = vmatpush.bf16.msra.mxu0 %v6180
    %8243 = vmatmul.bf16.gmra.mxu0 %v8064
    %v8244 = vpop.f32.mrf.mxu0
    %v8245 = vadd.f32 %v8232, %v8244
    %v8246 = vpop.f32.mrf.mxu0
    %8247 = vdwg.mxu0
    %8248 = vmatpush.bf16.msra.mxu0 %v6315
    %8249 = vmatpush.bf16.msra.mxu0 %v6306
    %8250 = vmatpush.bf16.msra.mxu0 %v6297
    %8251 = vmatpush.bf16.msra.mxu0 %v6288
    %8252 = vmatpush.bf16.msra.mxu0 %v6279
    %8253 = vmatpush.bf16.msra.mxu0 %v6270
    %8254 = vmatpush.bf16.msra.mxu0 %v6261
    %8255 = vmatpush.bf16.msra.mxu0 %v6252
    %8256 = vmatmul.bf16.gmra.mxu0 %v8065
    %v8257 = vpop.f32.mrf.mxu0
    %v8258 = vadd.f32 %v8245, %v8257
    %v8259 = vpop.f32.mrf.mxu0
    %8260 = vdwg.mxu0
    %8261 = vmatpush.bf16.msra.mxu0 %v6172
    %8262 = vmatpush.bf16.msra.mxu0 %v6163
    %8263 = vmatpush.bf16.msra.mxu0 %v6154
    %8264 = vmatpush.bf16.msra.mxu0 %v6145
    %8265 = vmatpush.bf16.msra.mxu0 %v6136
    %8266 = vmatpush.bf16.msra.mxu0 %v6127
    %8267 = vmatpush.bf16.msra.mxu0 %v6118
    %8268 = vmatpush.bf16.msra.mxu0 %v6109
    %8269 = vmatmul.bf16.gmra.mxu0 %v8063
    %v8270 = vpop.f32.mrf.mxu0
    %v8271 = vadd.f32 0.0, %v8270
    %v8272 = vpop.f32.mrf.mxu0
    %8273 = vdwg.mxu0
    %8274 = vmatpush.bf16.msra.mxu0 %v6244
    %8275 = vmatpush.bf16.msra.mxu0 %v6235
    %8276 = vmatpush.bf16.msra.mxu0 %v6226
    %8277 = vmatpush.bf16.msra.mxu0 %v6217
    %8278 = vmatpush.bf16.msra.mxu0 %v6208
    %8279 = vmatpush.bf16.msra.mxu0 %v6199
    %8280 = vmatpush.bf16.msra.mxu0 %v6190
    %8281 = vmatpush.bf16.msra.mxu0 %v6181
    %8282 = vmatmul.bf16.gmra.mxu0 %v8064
    %v8283 = vpop.f32.mrf.mxu0
    %v8284 = vadd.f32 %v8271, %v8283
    %v8285 = vpop.f32.mrf.mxu0
    %8286 = vdwg.mxu0
    %8287 = vmatpush.bf16.msra.mxu0 %v6316
    %8288 = vmatpush.bf16.msra.mxu0 %v6307
    %8289 = vmatpush.bf16.msra.mxu0 %v6298
    %8290 = vmatpush.bf16.msra.mxu0 %v6289
    %8291 = vmatpush.bf16.msra.mxu0 %v6280
    %8292 = vmatpush.bf16.msra.mxu0 %v6271
    %8293 = vmatpush.bf16.msra.mxu0 %v6262
    %8294 = vmatpush.bf16.msra.mxu0 %v6253
    %8295 = vmatmul.bf16.gmra.mxu0 %v8065
    %v8296 = vpop.f32.mrf.mxu0
    %v8297 = vadd.f32 %v8284, %v8296
    %v8298 = vpop.f32.mrf.mxu0
    %8299 = vdwg.mxu0
    %8300 = vmatpush.bf16.msra.mxu0 %v6173
    %8301 = vmatpush.bf16.msra.mxu0 %v6164
    %8302 = vmatpush.bf16.msra.mxu0 %v6155
    %8303 = vmatpush.bf16.msra.mxu0 %v6146
    %8304 = vmatpush.bf16.msra.mxu0 %v6137
    %8305 = vmatpush.bf16.msra.mxu0 %v6128
    %8306 = vmatpush.bf16.msra.mxu0 %v6119
    %8307 = vmatpush.bf16.msra.mxu0 %v6110
    %8308 = vmatmul.bf16.gmra.mxu0 %v8063
    %v8309 = vpop.f32.mrf.mxu0
    %v8310 = vadd.f32 0.0, %v8309
    %v8311 = vpop.f32.mrf.mxu0
    %8312 = vdwg.mxu0
    %8313 = vmatpush.bf16.msra.mxu0 %v6245
    %8314 = vmatpush.bf16.msra.mxu0 %v6236
    %8315 = vmatpush.bf16.msra.mxu0 %v6227
    %8316 = vmatpush.bf16.msra.mxu0 %v6218
    %8317 = vmatpush.bf16.msra.mxu0 %v6209
    %8318 = vmatpush.bf16.msra.mxu0 %v6200
    %8319 = vmatpush.bf16.msra.mxu0 %v6191
    %8320 = vmatpush.bf16.msra.mxu0 %v6182
    %8321 = vmatmul.bf16.gmra.mxu0 %v8064
    %v8322 = vpop.f32.mrf.mxu0
    %v8323 = vadd.f32 %v8310, %v8322
    %v8324 = vpop.f32.mrf.mxu0
    %8325 = vdwg.mxu0
    %8326 = vmatpush.bf16.msra.mxu0 %v6317
    %8327 = vmatpush.bf16.msra.mxu0 %v6308
    %8328 = vmatpush.bf16.msra.mxu0 %v6299
    %8329 = vmatpush.bf16.msra.mxu0 %v6290
    %8330 = vmatpush.bf16.msra.mxu0 %v6281
    %8331 = vmatpush.bf16.msra.mxu0 %v6272
    %8332 = vmatpush.bf16.msra.mxu0 %v6263
    %8333 = vmatpush.bf16.msra.mxu0 %v6254
    %8334 = vmatmul.bf16.gmra.mxu0 %v8065
    %v8335 = vpop.f32.mrf.mxu0
    %v8336 = vadd.f32 %v8323, %v8335
    %v8337 = vpop.f32.mrf.mxu0
    %8338 = vdwg.mxu0
    %8339 = vmatpush.bf16.msra.mxu0 %v6174
    %8340 = vmatpush.bf16.msra.mxu0 %v6165
    %8341 = vmatpush.bf16.msra.mxu0 %v6156
    %8342 = vmatpush.bf16.msra.mxu0 %v6147
    %8343 = vmatpush.bf16.msra.mxu0 %v6138
    %8344 = vmatpush.bf16.msra.mxu0 %v6129
    %8345 = vmatpush.bf16.msra.mxu0 %v6120
    %8346 = vmatpush.bf16.msra.mxu0 %v6111
    %8347 = vmatmul.bf16.gmra.mxu0 %v8063
    %v8348 = vpop.f32.mrf.mxu0
    %v8349 = vadd.f32 0.0, %v8348
    %v8350 = vpop.f32.mrf.mxu0
    %8351 = vdwg.mxu0
    %8352 = vmatpush.bf16.msra.mxu0 %v6246
    %8353 = vmatpush.bf16.msra.mxu0 %v6237
    %8354 = vmatpush.bf16.msra.mxu0 %v6228
    %8355 = vmatpush.bf16.msra.mxu0 %v6219
    %8356 = vmatpush.bf16.msra.mxu0 %v6210
    %8357 = vmatpush.bf16.msra.mxu0 %v6201
    %8358 = vmatpush.bf16.msra.mxu0 %v6192
    %8359 = vmatpush.bf16.msra.mxu0 %v6183
    %8360 = vmatmul.bf16.gmra.mxu0 %v8064
    %v8361 = vpop.f32.mrf.mxu0
    %v8362 = vadd.f32 %v8349, %v8361
    %v8363 = vpop.f32.mrf.mxu0
    %8364 = vdwg.mxu0
    %8365 = vmatpush.bf16.msra.mxu0 %v6318
    %8366 = vmatpush.bf16.msra.mxu0 %v6309
    %8367 = vmatpush.bf16.msra.mxu0 %v6300
    %8368 = vmatpush.bf16.msra.mxu0 %v6291
    %8369 = vmatpush.bf16.msra.mxu0 %v6282
    %8370 = vmatpush.bf16.msra.mxu0 %v6273
    %8371 = vmatpush.bf16.msra.mxu0 %v6264
    %8372 = vmatpush.bf16.msra.mxu0 %v6255
    %8373 = vmatmul.bf16.gmra.mxu0 %v8065
    %v8374 = vpop.f32.mrf.mxu0
    %v8375 = vadd.f32 %v8362, %v8374
    %v8376 = vpop.f32.mrf.mxu0
    %8377 = vdwg.mxu0
    %8378 = vmatpush.bf16.msra.mxu0 %v6175
    %8379 = vmatpush.bf16.msra.mxu0 %v6166
    %8380 = vmatpush.bf16.msra.mxu0 %v6157
    %8381 = vmatpush.bf16.msra.mxu0 %v6148
    %8382 = vmatpush.bf16.msra.mxu0 %v6139
    %8383 = vmatpush.bf16.msra.mxu0 %v6130
    %8384 = vmatpush.bf16.msra.mxu0 %v6121
    %8385 = vmatpush.bf16.msra.mxu0 %v6112
    %8386 = vmatmul.bf16.gmra.mxu0 %v8063
    %v8387 = vpop.f32.mrf.mxu0
    %v8388 = vadd.f32 0.0, %v8387
    %v8389 = vpop.f32.mrf.mxu0
    %8390 = vdwg.mxu0
    %8391 = vmatpush.bf16.msra.mxu0 %v6247
    %8392 = vmatpush.bf16.msra.mxu0 %v6238
    %8393 = vmatpush.bf16.msra.mxu0 %v6229
    %8394 = vmatpush.bf16.msra.mxu0 %v6220
    %8395 = vmatpush.bf16.msra.mxu0 %v6211
    %8396 = vmatpush.bf16.msra.mxu0 %v6202
    %8397 = vmatpush.bf16.msra.mxu0 %v6193
    %8398 = vmatpush.bf16.msra.mxu0 %v6184
    %8399 = vmatmul.bf16.gmra.mxu0 %v8064
    %v8400 = vpop.f32.mrf.mxu0
    %v8401 = vadd.f32 %v8388, %v8400
    %v8402 = vpop.f32.mrf.mxu0
    %8403 = vdwg.mxu0
    %8404 = vmatpush.bf16.msra.mxu0 %v6319
    %8405 = vmatpush.bf16.msra.mxu0 %v6310
    %8406 = vmatpush.bf16.msra.mxu0 %v6301
    %8407 = vmatpush.bf16.msra.mxu0 %v6292
    %8408 = vmatpush.bf16.msra.mxu0 %v6283
    %8409 = vmatpush.bf16.msra.mxu0 %v6274
    %8410 = vmatpush.bf16.msra.mxu0 %v6265
    %8411 = vmatpush.bf16.msra.mxu0 %v6256
    %8412 = vmatmul.bf16.gmra.mxu0 %v8065
    %v8413 = vpop.f32.mrf.mxu0
    %v8414 = vadd.f32 %v8401, %v8413
    %v8415 = vpop.f32.mrf.mxu0
    %8416 = vdwg.mxu0
    %v8417 = vadd.f32 %v8054, %v8102
    %v8418 = vadd.f32 %v8055, %v8141
    %v8419 = vadd.f32 %v8056, %v8180
    %v8420 = vxor.u32 %v8417, 2147483648
    %v8421 = vxor.u32 %v8418, 2147483648
    %v8422 = vxor.u32 %v8419, 2147483648
    %v8423 = vmul.f32 %v8420, 1.442695
    %v8424 = vpow.pop %v8423
    %v8425 = vmul.f32 %v8421, 1.442695
    %v8426 = vpow.pop %v8425
    %v8427 = vmul.f32 %v8422, 1.442695
    %v8428 = vpow.pop %v8427
    %v8429 = vadd.f32 %v8424, 1.0
    %v8430 = vadd.f32 %v8426, 1.0
    %v8431 = vadd.f32 %v8428, 1.0
    %v8432 = vrcp.pop %v8429
    %v8433 = vmul.f32 %v8429, %v8432
    %v8434 = vsub.f32 1.0, %v8433
    %v8435 = vmul.f32 %v8432, %v8434
    %v8436 = vadd.f32 %v8432, %v8435
    %vm8437 = vweird.f32 %v8429
    %vm8438 = vweird.f32 %v8432
    %vm8439 = vmor %vm8437, %vm8438
    %v8440 = vsel %vm8439, %v8432, %v8436
    %v8441 = vand.u32 2147483647, %v8429
    %vm8442 = vcmp.eq.f32.partialorder %v8441, 8.507059e+37
    %v8443 = vand.u32 %v8429, 2147483648
    %v8444 = vor.u32 1.1754944e-38, %v8443
    %v8445 = vsel %vm8442, %v8444, %v8440
    %v8446 = vmul.f32 1.0, %v8445
    %v8447 = vrcp.pop %v8430
    %v8448 = vmul.f32 %v8430, %v8447
    %v8449 = vsub.f32 1.0, %v8448
    %v8450 = vmul.f32 %v8447, %v8449
    %v8451 = vadd.f32 %v8447, %v8450
    %vm8452 = vweird.f32 %v8430
    %vm8453 = vweird.f32 %v8447
    %vm8454 = vmor %vm8452, %vm8453
    %v8455 = vsel %vm8454, %v8447, %v8451
    %v8456 = vand.u32 2147483647, %v8430
    %vm8457 = vcmp.eq.f32.partialorder %v8456, 8.507059e+37
    %v8458 = vand.u32 %v8430, 2147483648
    %v8459 = vor.u32 1.1754944e-38, %v8458
    %v8460 = vsel %vm8457, %v8459, %v8455
    %v8461 = vmul.f32 1.0, %v8460
    %v8462 = vrcp.pop %v8431
    %v8463 = vmul.f32 %v8431, %v8462
    %v8464 = vsub.f32 1.0, %v8463
    %v8465 = vmul.f32 %v8462, %v8464
    %v8466 = vadd.f32 %v8462, %v8465
    %vm8467 = vweird.f32 %v8431
    %vm8468 = vweird.f32 %v8462
    %vm8469 = vmor %vm8467, %vm8468
    %v8470 = vsel %vm8469, %v8462, %v8466
    %v8471 = vand.u32 2147483647, %v8431
    %vm8472 = vcmp.eq.f32.partialorder %v8471, 8.507059e+37
    %v8473 = vand.u32 %v8431, 2147483648
    %v8474 = vor.u32 1.1754944e-38, %v8473
    %v8475 = vsel %vm8472, %v8474, %v8470
    %v8476 = vmul.f32 1.0, %v8475
    %v8477 = vadd.f32 %v8057, %v8219
    %v8478 = vadd.f32 %v8058, %v8258
    %v8479 = vadd.f32 %v8059, %v8297
    %v8480 = vxor.u32 %v8477, 2147483648
    %v8481 = vxor.u32 %v8478, 2147483648
    %v8482 = vxor.u32 %v8479, 2147483648
    %v8483 = vmul.f32 %v8480, 1.442695
    %v8484 = vpow.pop %v8483
    %v8485 = vmul.f32 %v8481, 1.442695
    %v8486 = vpow.pop %v8485
    %v8487 = vmul.f32 %v8482, 1.442695
    %v8488 = vpow.pop %v8487
    %v8489 = vadd.f32 %v8484, 1.0
    %v8490 = vadd.f32 %v8486, 1.0
    %v8491 = vadd.f32 %v8488, 1.0
    %v8492 = vrcp.pop %v8489
    %v8493 = vmul.f32 %v8489, %v8492
    %v8494 = vsub.f32 1.0, %v8493
    %v8495 = vmul.f32 %v8492, %v8494
    %v8496 = vadd.f32 %v8492, %v8495
    %vm8497 = vweird.f32 %v8489
    %vm8498 = vweird.f32 %v8492
    %vm8499 = vmor %vm8497, %vm8498
    %v8500 = vsel %vm8499, %v8492, %v8496
    %v8501 = vand.u32 2147483647, %v8489
    %vm8502 = vcmp.eq.f32.partialorder %v8501, 8.507059e+37
    %v8503 = vand.u32 %v8489, 2147483648
    %v8504 = vor.u32 1.1754944e-38, %v8503
    %v8505 = vsel %vm8502, %v8504, %v8500
    %v8506 = vmul.f32 1.0, %v8505
    %v8507 = vrcp.pop %v8490
    %v8508 = vmul.f32 %v8490, %v8507
    %v8509 = vsub.f32 1.0, %v8508
    %v8510 = vmul.f32 %v8507, %v8509
    %v8511 = vadd.f32 %v8507, %v8510
    %vm8512 = vweird.f32 %v8490
    %vm8513 = vweird.f32 %v8507
    %vm8514 = vmor %vm8512, %vm8513
    %v8515 = vsel %vm8514, %v8507, %v8511
    %v8516 = vand.u32 2147483647, %v8490
    %vm8517 = vcmp.eq.f32.partialorder %v8516, 8.507059e+37
    %v8518 = vand.u32 %v8490, 2147483648
    %v8519 = vor.u32 1.1754944e-38, %v8518
    %v8520 = vsel %vm8517, %v8519, %v8515
    %v8521 = vmul.f32 1.0, %v8520
    %v8522 = vrcp.pop %v8491
    %v8523 = vmul.f32 %v8491, %v8522
    %v8524 = vsub.f32 1.0, %v8523
    %v8525 = vmul.f32 %v8522, %v8524
    %v8526 = vadd.f32 %v8522, %v8525
    %vm8527 = vweird.f32 %v8491
    %vm8528 = vweird.f32 %v8522
    %vm8529 = vmor %vm8527, %vm8528
    %v8530 = vsel %vm8529, %v8522, %v8526
    %v8531 = vand.u32 2147483647, %v8491
    %vm8532 = vcmp.eq.f32.partialorder %v8531, 8.507059e+37
    %v8533 = vand.u32 %v8491, 2147483648
    %v8534 = vor.u32 1.1754944e-38, %v8533
    %v8535 = vsel %vm8532, %v8534, %v8530
    %v8536 = vmul.f32 1.0, %v8535
    %v8537 = vadd.f32 %v8336, %v5417
    %v8538 = vadd.f32 %v8375, %v5418
    %v8539 = vadd.f32 %v8414, %v5419
    %v8540 = vmul.f32 %v8446, %v8537
    %v8541 = vmul.f32 %v8461, %v8538
    %v8542 = vmul.f32 %v8476, %v8539
    %v8543 = vadd.f32 %v8060, %v8540
    %v8544 = vadd.f32 %v8061, %v8541
    %v8545 = vadd.f32 %v8062, %v8542
    %v8546 = vtanh.pop %v8543
    %v8547 = vtanh.pop %v8544
    %v8548 = vtanh.pop %v8545
    %v8549 = vsub.f32 1.0, %v8506
    %v8550 = vsub.f32 1.0, %v8521
    %v8551 = vsub.f32 1.0, %v8536
    %v8552 = vmul.f32 %v8549, %v8546
    %v8553 = vmul.f32 %v8550, %v8547
    %v8554 = vmul.f32 %v8551, %v8548
    %v8555 = vmul.f32 %v8506, %v8048
    %v8556 = vmul.f32 %v8521, %v8049
    %v8557 = vmul.f32 %v8536, %v8050
    %v8558 = vadd.f32 %v8552, %v8555
    %v8559 = vadd.f32 %v8553, %v8556
    %v8560 = vadd.f32 %v8554, %v8557
    %8561 = vst [vmem:[#allocation3 + $0x48] sm:$0xff] %v8558
    %8562 = vst [vmem:[#allocation3 + $0x50] sm:$0xff] %v8559
    %8563 = vst [vmem:[#allocation3 + $0x58] sm:$0xff] %v8560
    %v8564 = vld [vmem:[#allocation2 + $0x120] sm:$0xff]
    %v8565 = vld [vmem:[#allocation2 + $0x128] sm:$0xff]
    %v8566 = vld [vmem:[#allocation2 + $0x130] sm:$0xff]
    %v8567 = vld [vmem:[#allocation2 + $0x138] sm:$0xff]
    %v8568 = vld [vmem:[#allocation2 + $0x140] sm:$0xff]
    %v8569 = vld [vmem:[#allocation2 + $0x148] sm:$0xff]
    %v8570 = vld [vmem:[#allocation2 + $0x150] sm:$0xff]
    %v8571 = vld [vmem:[#allocation2 + $0x158] sm:$0xff]
    %v8572 = vld [vmem:[#allocation2 + $0x160] sm:$0xff]
    %v8573 = vpack.c.bf16 %v8558, %v8558
    %v8574 = vpack.c.bf16 %v8559, %v8559
    %v8575 = vpack.c.bf16 %v8560, %v8560
    %8576 = vmatpush.bf16.msra.mxu0 %v6167
    %8577 = vmatpush.bf16.msra.mxu0 %v6158
    %8578 = vmatpush.bf16.msra.mxu0 %v6149
    %8579 = vmatpush.bf16.msra.mxu0 %v6140
    %8580 = vmatpush.bf16.msra.mxu0 %v6131
    %8581 = vmatpush.bf16.msra.mxu0 %v6122
    %8582 = vmatpush.bf16.msra.mxu0 %v6113
    %8583 = vmatpush.bf16.msra.mxu0 %v6104
    %8584 = vmatmul.bf16.gmra.mxu0 %v8573
    %v8585 = vpop.f32.mrf.mxu0
    %v8586 = vadd.f32 0.0, %v8585
    %v8587 = vpop.f32.mrf.mxu0
    %8588 = vdwg.mxu0
    %8589 = vmatpush.bf16.msra.mxu0 %v6239
    %8590 = vmatpush.bf16.msra.mxu0 %v6230
    %8591 = vmatpush.bf16.msra.mxu0 %v6221
    %8592 = vmatpush.bf16.msra.mxu0 %v6212
    %8593 = vmatpush.bf16.msra.mxu0 %v6203
    %8594 = vmatpush.bf16.msra.mxu0 %v6194
    %8595 = vmatpush.bf16.msra.mxu0 %v6185
    %8596 = vmatpush.bf16.msra.mxu0 %v6176
    %8597 = vmatmul.bf16.gmra.mxu0 %v8574
    %v8598 = vpop.f32.mrf.mxu0
    %v8599 = vadd.f32 %v8586, %v8598
    %v8600 = vpop.f32.mrf.mxu0
    %8601 = vdwg.mxu0
    %8602 = vmatpush.bf16.msra.mxu0 %v6311
    %8603 = vmatpush.bf16.msra.mxu0 %v6302
    %8604 = vmatpush.bf16.msra.mxu0 %v6293
    %8605 = vmatpush.bf16.msra.mxu0 %v6284
    %8606 = vmatpush.bf16.msra.mxu0 %v6275
    %8607 = vmatpush.bf16.msra.mxu0 %v6266
    %8608 = vmatpush.bf16.msra.mxu0 %v6257
    %8609 = vmatpush.bf16.msra.mxu0 %v6248
    %8610 = vmatmul.bf16.gmra.mxu0 %v8575
    %v8611 = vpop.f32.mrf.mxu0
    %v8612 = vadd.f32 %v8599, %v8611
    %v8613 = vpop.f32.mrf.mxu0
    %8614 = vdwg.mxu0
    %8615 = vmatpush.bf16.msra.mxu0 %v6168
    %8616 = vmatpush.bf16.msra.mxu0 %v6159
    %8617 = vmatpush.bf16.msra.mxu0 %v6150
    %8618 = vmatpush.bf16.msra.mxu0 %v6141
    %8619 = vmatpush.bf16.msra.mxu0 %v6132
    %8620 = vmatpush.bf16.msra.mxu0 %v6123
    %8621 = vmatpush.bf16.msra.mxu0 %v6114
    %8622 = vmatpush.bf16.msra.mxu0 %v6105
    %8623 = vmatmul.bf16.gmra.mxu0 %v8573
    %v8624 = vpop.f32.mrf.mxu0
    %v8625 = vadd.f32 0.0, %v8624
    %v8626 = vpop.f32.mrf.mxu0
    %8627 = vdwg.mxu0
    %8628 = vmatpush.bf16.msra.mxu0 %v6240
    %8629 = vmatpush.bf16.msra.mxu0 %v6231
    %8630 = vmatpush.bf16.msra.mxu0 %v6222
    %8631 = vmatpush.bf16.msra.mxu0 %v6213
    %8632 = vmatpush.bf16.msra.mxu0 %v6204
    %8633 = vmatpush.bf16.msra.mxu0 %v6195
    %8634 = vmatpush.bf16.msra.mxu0 %v6186
    %8635 = vmatpush.bf16.msra.mxu0 %v6177
    %8636 = vmatmul.bf16.gmra.mxu0 %v8574
    %v8637 = vpop.f32.mrf.mxu0
    %v8638 = vadd.f32 %v8625, %v8637
    %v8639 = vpop.f32.mrf.mxu0
    %8640 = vdwg.mxu0
    %8641 = vmatpush.bf16.msra.mxu0 %v6312
    %8642 = vmatpush.bf16.msra.mxu0 %v6303
    %8643 = vmatpush.bf16.msra.mxu0 %v6294
    %8644 = vmatpush.bf16.msra.mxu0 %v6285
    %8645 = vmatpush.bf16.msra.mxu0 %v6276
    %8646 = vmatpush.bf16.msra.mxu0 %v6267
    %8647 = vmatpush.bf16.msra.mxu0 %v6258
    %8648 = vmatpush.bf16.msra.mxu0 %v6249
    %8649 = vmatmul.bf16.gmra.mxu0 %v8575
    %v8650 = vpop.f32.mrf.mxu0
    %v8651 = vadd.f32 %v8638, %v8650
    %v8652 = vpop.f32.mrf.mxu0
    %8653 = vdwg.mxu0
    %8654 = vmatpush.bf16.msra.mxu0 %v6169
    %8655 = vmatpush.bf16.msra.mxu0 %v6160
    %8656 = vmatpush.bf16.msra.mxu0 %v6151
    %8657 = vmatpush.bf16.msra.mxu0 %v6142
    %8658 = vmatpush.bf16.msra.mxu0 %v6133
    %8659 = vmatpush.bf16.msra.mxu0 %v6124
    %8660 = vmatpush.bf16.msra.mxu0 %v6115
    %8661 = vmatpush.bf16.msra.mxu0 %v6106
    %8662 = vmatmul.bf16.gmra.mxu0 %v8573
    %v8663 = vpop.f32.mrf.mxu0
    %v8664 = vadd.f32 0.0, %v8663
    %v8665 = vpop.f32.mrf.mxu0
    %8666 = vdwg.mxu0
    %8667 = vmatpush.bf16.msra.mxu0 %v6241
    %8668 = vmatpush.bf16.msra.mxu0 %v6232
    %8669 = vmatpush.bf16.msra.mxu0 %v6223
    %8670 = vmatpush.bf16.msra.mxu0 %v6214
    %8671 = vmatpush.bf16.msra.mxu0 %v6205
    %8672 = vmatpush.bf16.msra.mxu0 %v6196
    %8673 = vmatpush.bf16.msra.mxu0 %v6187
    %8674 = vmatpush.bf16.msra.mxu0 %v6178
    %8675 = vmatmul.bf16.gmra.mxu0 %v8574
    %v8676 = vpop.f32.mrf.mxu0
    %v8677 = vadd.f32 %v8664, %v8676
    %v8678 = vpop.f32.mrf.mxu0
    %8679 = vdwg.mxu0
    %8680 = vmatpush.bf16.msra.mxu0 %v6313
    %8681 = vmatpush.bf16.msra.mxu0 %v6304
    %8682 = vmatpush.bf16.msra.mxu0 %v6295
    %8683 = vmatpush.bf16.msra.mxu0 %v6286
    %8684 = vmatpush.bf16.msra.mxu0 %v6277
    %8685 = vmatpush.bf16.msra.mxu0 %v6268
    %8686 = vmatpush.bf16.msra.mxu0 %v6259
    %8687 = vmatpush.bf16.msra.mxu0 %v6250
    %8688 = vmatmul.bf16.gmra.mxu0 %v8575
    %v8689 = vpop.f32.mrf.mxu0
    %v8690 = vadd.f32 %v8677, %v8689
    %v8691 = vpop.f32.mrf.mxu0
    %8692 = vdwg.mxu0
    %8693 = vmatpush.bf16.msra.mxu0 %v6170
    %8694 = vmatpush.bf16.msra.mxu0 %v6161
    %8695 = vmatpush.bf16.msra.mxu0 %v6152
    %8696 = vmatpush.bf16.msra.mxu0 %v6143
    %8697 = vmatpush.bf16.msra.mxu0 %v6134
    %8698 = vmatpush.bf16.msra.mxu0 %v6125
    %8699 = vmatpush.bf16.msra.mxu0 %v6116
    %8700 = vmatpush.bf16.msra.mxu0 %v6107
    %8701 = vmatmul.bf16.gmra.mxu0 %v8573
    %v8702 = vpop.f32.mrf.mxu0
    %v8703 = vadd.f32 0.0, %v8702
    %v8704 = vpop.f32.mrf.mxu0
    %8705 = vdwg.mxu0
    %8706 = vmatpush.bf16.msra.mxu0 %v6242
    %8707 = vmatpush.bf16.msra.mxu0 %v6233
    %8708 = vmatpush.bf16.msra.mxu0 %v6224
    %8709 = vmatpush.bf16.msra.mxu0 %v6215
    %8710 = vmatpush.bf16.msra.mxu0 %v6206
    %8711 = vmatpush.bf16.msra.mxu0 %v6197
    %8712 = vmatpush.bf16.msra.mxu0 %v6188
    %8713 = vmatpush.bf16.msra.mxu0 %v6179
    %8714 = vmatmul.bf16.gmra.mxu0 %v8574
    %v8715 = vpop.f32.mrf.mxu0
    %v8716 = vadd.f32 %v8703, %v8715
    %v8717 = vpop.f32.mrf.mxu0
    %8718 = vdwg.mxu0
    %8719 = vmatpush.bf16.msra.mxu0 %v6314
    %8720 = vmatpush.bf16.msra.mxu0 %v6305
    %8721 = vmatpush.bf16.msra.mxu0 %v6296
    %8722 = vmatpush.bf16.msra.mxu0 %v6287
    %8723 = vmatpush.bf16.msra.mxu0 %v6278
    %8724 = vmatpush.bf16.msra.mxu0 %v6269
    %8725 = vmatpush.bf16.msra.mxu0 %v6260
    %8726 = vmatpush.bf16.msra.mxu0 %v6251
    %8727 = vmatmul.bf16.gmra.mxu0 %v8575
    %v8728 = vpop.f32.mrf.mxu0
    %v8729 = vadd.f32 %v8716, %v8728
    %v8730 = vpop.f32.mrf.mxu0
    %8731 = vdwg.mxu0
    %8732 = vmatpush.bf16.msra.mxu0 %v6171
    %8733 = vmatpush.bf16.msra.mxu0 %v6162
    %8734 = vmatpush.bf16.msra.mxu0 %v6153
    %8735 = vmatpush.bf16.msra.mxu0 %v6144
    %8736 = vmatpush.bf16.msra.mxu0 %v6135
    %8737 = vmatpush.bf16.msra.mxu0 %v6126
    %8738 = vmatpush.bf16.msra.mxu0 %v6117
    %8739 = vmatpush.bf16.msra.mxu0 %v6108
    %8740 = vmatmul.bf16.gmra.mxu0 %v8573
    %v8741 = vpop.f32.mrf.mxu0
    %v8742 = vadd.f32 0.0, %v8741
    %v8743 = vpop.f32.mrf.mxu0
    %8744 = vdwg.mxu0
    %8745 = vmatpush.bf16.msra.mxu0 %v6243
    %8746 = vmatpush.bf16.msra.mxu0 %v6234
    %8747 = vmatpush.bf16.msra.mxu0 %v6225
    %8748 = vmatpush.bf16.msra.mxu0 %v6216
    %8749 = vmatpush.bf16.msra.mxu0 %v6207
    %8750 = vmatpush.bf16.msra.mxu0 %v6198
    %8751 = vmatpush.bf16.msra.mxu0 %v6189
    %8752 = vmatpush.bf16.msra.mxu0 %v6180
    %8753 = vmatmul.bf16.gmra.mxu0 %v8574
    %v8754 = vpop.f32.mrf.mxu0
    %v8755 = vadd.f32 %v8742, %v8754
    %v8756 = vpop.f32.mrf.mxu0
    %8757 = vdwg.mxu0
    %8758 = vmatpush.bf16.msra.mxu0 %v6315
    %8759 = vmatpush.bf16.msra.mxu0 %v6306
    %8760 = vmatpush.bf16.msra.mxu0 %v6297
    %8761 = vmatpush.bf16.msra.mxu0 %v6288
    %8762 = vmatpush.bf16.msra.mxu0 %v6279
    %8763 = vmatpush.bf16.msra.mxu0 %v6270
    %8764 = vmatpush.bf16.msra.mxu0 %v6261
    %8765 = vmatpush.bf16.msra.mxu0 %v6252
    %8766 = vmatmul.bf16.gmra.mxu0 %v8575
    %v8767 = vpop.f32.mrf.mxu0
    %v8768 = vadd.f32 %v8755, %v8767
    %v8769 = vpop.f32.mrf.mxu0
    %8770 = vdwg.mxu0
    %8771 = vmatpush.bf16.msra.mxu0 %v6172
    %8772 = vmatpush.bf16.msra.mxu0 %v6163
    %8773 = vmatpush.bf16.msra.mxu0 %v6154
    %8774 = vmatpush.bf16.msra.mxu0 %v6145
    %8775 = vmatpush.bf16.msra.mxu0 %v6136
    %8776 = vmatpush.bf16.msra.mxu0 %v6127
    %8777 = vmatpush.bf16.msra.mxu0 %v6118
    %8778 = vmatpush.bf16.msra.mxu0 %v6109
    %8779 = vmatmul.bf16.gmra.mxu0 %v8573
    %v8780 = vpop.f32.mrf.mxu0
    %v8781 = vadd.f32 0.0, %v8780
    %v8782 = vpop.f32.mrf.mxu0
    %8783 = vdwg.mxu0
    %8784 = vmatpush.bf16.msra.mxu0 %v6244
    %8785 = vmatpush.bf16.msra.mxu0 %v6235
    %8786 = vmatpush.bf16.msra.mxu0 %v6226
    %8787 = vmatpush.bf16.msra.mxu0 %v6217
    %8788 = vmatpush.bf16.msra.mxu0 %v6208
    %8789 = vmatpush.bf16.msra.mxu0 %v6199
    %8790 = vmatpush.bf16.msra.mxu0 %v6190
    %8791 = vmatpush.bf16.msra.mxu0 %v6181
    %8792 = vmatmul.bf16.gmra.mxu0 %v8574
    %v8793 = vpop.f32.mrf.mxu0
    %v8794 = vadd.f32 %v8781, %v8793
    %v8795 = vpop.f32.mrf.mxu0
    %8796 = vdwg.mxu0
    %8797 = vmatpush.bf16.msra.mxu0 %v6316
    %8798 = vmatpush.bf16.msra.mxu0 %v6307
    %8799 = vmatpush.bf16.msra.mxu0 %v6298
    %8800 = vmatpush.bf16.msra.mxu0 %v6289
    %8801 = vmatpush.bf16.msra.mxu0 %v6280
    %8802 = vmatpush.bf16.msra.mxu0 %v6271
    %8803 = vmatpush.bf16.msra.mxu0 %v6262
    %8804 = vmatpush.bf16.msra.mxu0 %v6253
    %8805 = vmatmul.bf16.gmra.mxu0 %v8575
    %v8806 = vpop.f32.mrf.mxu0
    %v8807 = vadd.f32 %v8794, %v8806
    %v8808 = vpop.f32.mrf.mxu0
    %8809 = vdwg.mxu0
    %8810 = vmatpush.bf16.msra.mxu0 %v6173
    %8811 = vmatpush.bf16.msra.mxu0 %v6164
    %8812 = vmatpush.bf16.msra.mxu0 %v6155
    %8813 = vmatpush.bf16.msra.mxu0 %v6146
    %8814 = vmatpush.bf16.msra.mxu0 %v6137
    %8815 = vmatpush.bf16.msra.mxu0 %v6128
    %8816 = vmatpush.bf16.msra.mxu0 %v6119
    %8817 = vmatpush.bf16.msra.mxu0 %v6110
    %8818 = vmatmul.bf16.gmra.mxu0 %v8573
    %v8819 = vpop.f32.mrf.mxu0
    %v8820 = vadd.f32 0.0, %v8819
    %v8821 = vpop.f32.mrf.mxu0
    %8822 = vdwg.mxu0
    %8823 = vmatpush.bf16.msra.mxu0 %v6245
    %8824 = vmatpush.bf16.msra.mxu0 %v6236
    %8825 = vmatpush.bf16.msra.mxu0 %v6227
    %8826 = vmatpush.bf16.msra.mxu0 %v6218
    %8827 = vmatpush.bf16.msra.mxu0 %v6209
    %8828 = vmatpush.bf16.msra.mxu0 %v6200
    %8829 = vmatpush.bf16.msra.mxu0 %v6191
    %8830 = vmatpush.bf16.msra.mxu0 %v6182
    %8831 = vmatmul.bf16.gmra.mxu0 %v8574
    %v8832 = vpop.f32.mrf.mxu0
    %v8833 = vadd.f32 %v8820, %v8832
    %v8834 = vpop.f32.mrf.mxu0
    %8835 = vdwg.mxu0
    %8836 = vmatpush.bf16.msra.mxu0 %v6317
    %8837 = vmatpush.bf16.msra.mxu0 %v6308
    %8838 = vmatpush.bf16.msra.mxu0 %v6299
    %8839 = vmatpush.bf16.msra.mxu0 %v6290
    %8840 = vmatpush.bf16.msra.mxu0 %v6281
    %8841 = vmatpush.bf16.msra.mxu0 %v6272
    %8842 = vmatpush.bf16.msra.mxu0 %v6263
    %8843 = vmatpush.bf16.msra.mxu0 %v6254
    %8844 = vmatmul.bf16.gmra.mxu0 %v8575
    %v8845 = vpop.f32.mrf.mxu0
    %v8846 = vadd.f32 %v8833, %v8845
    %v8847 = vpop.f32.mrf.mxu0
    %8848 = vdwg.mxu0
    %8849 = vmatpush.bf16.msra.mxu0 %v6174
    %8850 = vmatpush.bf16.msra.mxu0 %v6165
    %8851 = vmatpush.bf16.msra.mxu0 %v6156
    %8852 = vmatpush.bf16.msra.mxu0 %v6147
    %8853 = vmatpush.bf16.msra.mxu0 %v6138
    %8854 = vmatpush.bf16.msra.mxu0 %v6129
    %8855 = vmatpush.bf16.msra.mxu0 %v6120
    %8856 = vmatpush.bf16.msra.mxu0 %v6111
    %8857 = vmatmul.bf16.gmra.mxu0 %v8573
    %v8858 = vpop.f32.mrf.mxu0
    %v8859 = vadd.f32 0.0, %v8858
    %v8860 = vpop.f32.mrf.mxu0
    %8861 = vdwg.mxu0
    %8862 = vmatpush.bf16.msra.mxu0 %v6246
    %8863 = vmatpush.bf16.msra.mxu0 %v6237
    %8864 = vmatpush.bf16.msra.mxu0 %v6228
    %8865 = vmatpush.bf16.msra.mxu0 %v6219
    %8866 = vmatpush.bf16.msra.mxu0 %v6210
    %8867 = vmatpush.bf16.msra.mxu0 %v6201
    %8868 = vmatpush.bf16.msra.mxu0 %v6192
    %8869 = vmatpush.bf16.msra.mxu0 %v6183
    %8870 = vmatmul.bf16.gmra.mxu0 %v8574
    %v8871 = vpop.f32.mrf.mxu0
    %v8872 = vadd.f32 %v8859, %v8871
    %v8873 = vpop.f32.mrf.mxu0
    %8874 = vdwg.mxu0
    %8875 = vmatpush.bf16.msra.mxu0 %v6318
    %8876 = vmatpush.bf16.msra.mxu0 %v6309
    %8877 = vmatpush.bf16.msra.mxu0 %v6300
    %8878 = vmatpush.bf16.msra.mxu0 %v6291
    %8879 = vmatpush.bf16.msra.mxu0 %v6282
    %8880 = vmatpush.bf16.msra.mxu0 %v6273
    %8881 = vmatpush.bf16.msra.mxu0 %v6264
    %8882 = vmatpush.bf16.msra.mxu0 %v6255
    %8883 = vmatmul.bf16.gmra.mxu0 %v8575
    %v8884 = vpop.f32.mrf.mxu0
    %v8885 = vadd.f32 %v8872, %v8884
    %v8886 = vpop.f32.mrf.mxu0
    %8887 = vdwg.mxu0
    %8888 = vmatpush.bf16.msra.mxu0 %v6175
    %8889 = vmatpush.bf16.msra.mxu0 %v6166
    %8890 = vmatpush.bf16.msra.mxu0 %v6157
    %8891 = vmatpush.bf16.msra.mxu0 %v6148
    %8892 = vmatpush.bf16.msra.mxu0 %v6139
    %8893 = vmatpush.bf16.msra.mxu0 %v6130
    %8894 = vmatpush.bf16.msra.mxu0 %v6121
    %8895 = vmatpush.bf16.msra.mxu0 %v6112
    %8896 = vmatmul.bf16.gmra.mxu0 %v8573
    %v8897 = vpop.f32.mrf.mxu0
    %v8898 = vadd.f32 0.0, %v8897
    %v8899 = vpop.f32.mrf.mxu0
    %8900 = vdwg.mxu0
    %8901 = vmatpush.bf16.msra.mxu0 %v6247
    %8902 = vmatpush.bf16.msra.mxu0 %v6238
    %8903 = vmatpush.bf16.msra.mxu0 %v6229
    %8904 = vmatpush.bf16.msra.mxu0 %v6220
    %8905 = vmatpush.bf16.msra.mxu0 %v6211
    %8906 = vmatpush.bf16.msra.mxu0 %v6202
    %8907 = vmatpush.bf16.msra.mxu0 %v6193
    %8908 = vmatpush.bf16.msra.mxu0 %v6184
    %8909 = vmatmul.bf16.gmra.mxu0 %v8574
    %v8910 = vpop.f32.mrf.mxu0
    %v8911 = vadd.f32 %v8898, %v8910
    %v8912 = vpop.f32.mrf.mxu0
    %8913 = vdwg.mxu0
    %8914 = vmatpush.bf16.msra.mxu0 %v6319
    %8915 = vmatpush.bf16.msra.mxu0 %v6310
    %8916 = vmatpush.bf16.msra.mxu0 %v6301
    %8917 = vmatpush.bf16.msra.mxu0 %v6292
    %8918 = vmatpush.bf16.msra.mxu0 %v6283
    %8919 = vmatpush.bf16.msra.mxu0 %v6274
    %8920 = vmatpush.bf16.msra.mxu0 %v6265
    %8921 = vmatpush.bf16.msra.mxu0 %v6256
    %8922 = vmatmul.bf16.gmra.mxu0 %v8575
    %v8923 = vpop.f32.mrf.mxu0
    %v8924 = vadd.f32 %v8911, %v8923
    %v8925 = vpop.f32.mrf.mxu0
    %8926 = vdwg.mxu0
    %v8927 = vadd.f32 %v8564, %v8612
    %v8928 = vadd.f32 %v8565, %v8651
    %v8929 = vadd.f32 %v8566, %v8690
    %v8930 = vxor.u32 %v8927, 2147483648
    %v8931 = vxor.u32 %v8928, 2147483648
    %v8932 = vxor.u32 %v8929, 2147483648
    %v8933 = vmul.f32 %v8930, 1.442695
    %v8934 = vpow.pop %v8933
    %v8935 = vmul.f32 %v8931, 1.442695
    %v8936 = vpow.pop %v8935
    %v8937 = vmul.f32 %v8932, 1.442695
    %v8938 = vpow.pop %v8937
    %v8939 = vadd.f32 %v8934, 1.0
    %v8940 = vadd.f32 %v8936, 1.0
    %v8941 = vadd.f32 %v8938, 1.0
    %v8942 = vrcp.pop %v8939
    %v8943 = vmul.f32 %v8939, %v8942
    %v8944 = vsub.f32 1.0, %v8943
    %v8945 = vmul.f32 %v8942, %v8944
    %v8946 = vadd.f32 %v8942, %v8945
    %vm8947 = vweird.f32 %v8939
    %vm8948 = vweird.f32 %v8942
    %vm8949 = vmor %vm8947, %vm8948
    %v8950 = vsel %vm8949, %v8942, %v8946
    %v8951 = vand.u32 2147483647, %v8939
    %vm8952 = vcmp.eq.f32.partialorder %v8951, 8.507059e+37
    %v8953 = vand.u32 %v8939, 2147483648
    %v8954 = vor.u32 1.1754944e-38, %v8953
    %v8955 = vsel %vm8952, %v8954, %v8950
    %v8956 = vmul.f32 1.0, %v8955
    %v8957 = vrcp.pop %v8940
    %v8958 = vmul.f32 %v8940, %v8957
    %v8959 = vsub.f32 1.0, %v8958
    %v8960 = vmul.f32 %v8957, %v8959
    %v8961 = vadd.f32 %v8957, %v8960
    %vm8962 = vweird.f32 %v8940
    %vm8963 = vweird.f32 %v8957
    %vm8964 = vmor %vm8962, %vm8963
    %v8965 = vsel %vm8964, %v8957, %v8961
    %v8966 = vand.u32 2147483647, %v8940
    %vm8967 = vcmp.eq.f32.partialorder %v8966, 8.507059e+37
    %v8968 = vand.u32 %v8940, 2147483648
    %v8969 = vor.u32 1.1754944e-38, %v8968
    %v8970 = vsel %vm8967, %v8969, %v8965
    %v8971 = vmul.f32 1.0, %v8970
    %v8972 = vrcp.pop %v8941
    %v8973 = vmul.f32 %v8941, %v8972
    %v8974 = vsub.f32 1.0, %v8973
    %v8975 = vmul.f32 %v8972, %v8974
    %v8976 = vadd.f32 %v8972, %v8975
    %vm8977 = vweird.f32 %v8941
    %vm8978 = vweird.f32 %v8972
    %vm8979 = vmor %vm8977, %vm8978
    %v8980 = vsel %vm8979, %v8972, %v8976
    %v8981 = vand.u32 2147483647, %v8941
    %vm8982 = vcmp.eq.f32.partialorder %v8981, 8.507059e+37
    %v8983 = vand.u32 %v8941, 2147483648
    %v8984 = vor.u32 1.1754944e-38, %v8983
    %v8985 = vsel %vm8982, %v8984, %v8980
    %v8986 = vmul.f32 1.0, %v8985
    %v8987 = vadd.f32 %v8567, %v8729
    %v8988 = vadd.f32 %v8568, %v8768
    %v8989 = vadd.f32 %v8569, %v8807
    %v8990 = vxor.u32 %v8987, 2147483648
    %v8991 = vxor.u32 %v8988, 2147483648
    %v8992 = vxor.u32 %v8989, 2147483648
    %v8993 = vmul.f32 %v8990, 1.442695
    %v8994 = vpow.pop %v8993
    %v8995 = vmul.f32 %v8991, 1.442695
    %v8996 = vpow.pop %v8995
    %v8997 = vmul.f32 %v8992, 1.442695
    %v8998 = vpow.pop %v8997
    %v8999 = vadd.f32 %v8994, 1.0
    %v9000 = vadd.f32 %v8996, 1.0
    %v9001 = vadd.f32 %v8998, 1.0
    %v9002 = vrcp.pop %v8999
    %v9003 = vmul.f32 %v8999, %v9002
    %v9004 = vsub.f32 1.0, %v9003
    %v9005 = vmul.f32 %v9002, %v9004
    %v9006 = vadd.f32 %v9002, %v9005
    %vm9007 = vweird.f32 %v8999
    %vm9008 = vweird.f32 %v9002
    %vm9009 = vmor %vm9007, %vm9008
    %v9010 = vsel %vm9009, %v9002, %v9006
    %v9011 = vand.u32 2147483647, %v8999
    %vm9012 = vcmp.eq.f32.partialorder %v9011, 8.507059e+37
    %v9013 = vand.u32 %v8999, 2147483648
    %v9014 = vor.u32 1.1754944e-38, %v9013
    %v9015 = vsel %vm9012, %v9014, %v9010
    %v9016 = vmul.f32 1.0, %v9015
    %v9017 = vrcp.pop %v9000
    %v9018 = vmul.f32 %v9000, %v9017
    %v9019 = vsub.f32 1.0, %v9018
    %v9020 = vmul.f32 %v9017, %v9019
    %v9021 = vadd.f32 %v9017, %v9020
    %vm9022 = vweird.f32 %v9000
    %vm9023 = vweird.f32 %v9017
    %vm9024 = vmor %vm9022, %vm9023
    %v9025 = vsel %vm9024, %v9017, %v9021
    %v9026 = vand.u32 2147483647, %v9000
    %vm9027 = vcmp.eq.f32.partialorder %v9026, 8.507059e+37
    %v9028 = vand.u32 %v9000, 2147483648
    %v9029 = vor.u32 1.1754944e-38, %v9028
    %v9030 = vsel %vm9027, %v9029, %v9025
    %v9031 = vmul.f32 1.0, %v9030
    %v9032 = vrcp.pop %v9001
    %v9033 = vmul.f32 %v9001, %v9032
    %v9034 = vsub.f32 1.0, %v9033
    %v9035 = vmul.f32 %v9032, %v9034
    %v9036 = vadd.f32 %v9032, %v9035
    %vm9037 = vweird.f32 %v9001
    %vm9038 = vweird.f32 %v9032
    %vm9039 = vmor %vm9037, %vm9038
    %v9040 = vsel %vm9039, %v9032, %v9036
    %v9041 = vand.u32 2147483647, %v9001
    %vm9042 = vcmp.eq.f32.partialorder %v9041, 8.507059e+37
    %v9043 = vand.u32 %v9001, 2147483648
    %v9044 = vor.u32 1.1754944e-38, %v9043
    %v9045 = vsel %vm9042, %v9044, %v9040
    %v9046 = vmul.f32 1.0, %v9045
    %v9047 = vadd.f32 %v8846, %v5417
    %v9048 = vadd.f32 %v8885, %v5418
    %v9049 = vadd.f32 %v8924, %v5419
    %v9050 = vmul.f32 %v8956, %v9047
    %v9051 = vmul.f32 %v8971, %v9048
    %v9052 = vmul.f32 %v8986, %v9049
    %v9053 = vadd.f32 %v8570, %v9050
    %v9054 = vadd.f32 %v8571, %v9051
    %v9055 = vadd.f32 %v8572, %v9052
    %v9056 = vtanh.pop %v9053
    %v9057 = vtanh.pop %v9054
    %v9058 = vtanh.pop %v9055
    %v9059 = vsub.f32 1.0, %v9016
    %v9060 = vsub.f32 1.0, %v9031
    %v9061 = vsub.f32 1.0, %v9046
    %v9062 = vmul.f32 %v9059, %v9056
    %v9063 = vmul.f32 %v9060, %v9057
    %v9064 = vmul.f32 %v9061, %v9058
    %v9065 = vmul.f32 %v9016, %v8558
    %v9066 = vmul.f32 %v9031, %v8559
    %v9067 = vmul.f32 %v9046, %v8560
    %v9068 = vadd.f32 %v9062, %v9065
    %v9069 = vadd.f32 %v9063, %v9066
    %v9070 = vadd.f32 %v9064, %v9067
    %9071 = vst [vmem:[#allocation3 + $0x60] sm:$0xff] %v9068
    %9072 = vst [vmem:[#allocation3 + $0x68] sm:$0xff] %v9069
    %9073 = vst [vmem:[#allocation3 + $0x70] sm:$0xff] %v9070
    %v9074 = vld [vmem:[#allocation2 + $0x168] sm:$0xff]
    %v9075 = vld [vmem:[#allocation2 + $0x170] sm:$0xff]
    %v9076 = vld [vmem:[#allocation2 + $0x178] sm:$0xff]
    %v9077 = vld [vmem:[#allocation2 + $0x180] sm:$0xff]
    %v9078 = vld [vmem:[#allocation2 + $0x188] sm:$0xff]
    %v9079 = vld [vmem:[#allocation2 + $0x190] sm:$0xff]
    %v9080 = vld [vmem:[#allocation2 + $0x198] sm:$0xff]
    %v9081 = vld [vmem:[#allocation2 + $0x1a0] sm:$0xff]
    %v9082 = vld [vmem:[#allocation2 + $0x1a8] sm:$0xff]
    %v9083 = vpack.c.bf16 %v9068, %v9068
    %v9084 = vpack.c.bf16 %v9069, %v9069
    %v9085 = vpack.c.bf16 %v9070, %v9070
    %9086 = vmatpush.bf16.msra.mxu0 %v6167
    %9087 = vmatpush.bf16.msra.mxu0 %v6158
    %9088 = vmatpush.bf16.msra.mxu0 %v6149
    %9089 = vmatpush.bf16.msra.mxu0 %v6140
    %9090 = vmatpush.bf16.msra.mxu0 %v6131
    %9091 = vmatpush.bf16.msra.mxu0 %v6122
    %9092 = vmatpush.bf16.msra.mxu0 %v6113
    %9093 = vmatpush.bf16.msra.mxu0 %v6104
    %9094 = vmatmul.bf16.gmra.mxu0 %v9083
    %v9095 = vpop.f32.mrf.mxu0
    %v9096 = vadd.f32 0.0, %v9095
    %v9097 = vpop.f32.mrf.mxu0
    %9098 = vdwg.mxu0
    %9099 = vmatpush.bf16.msra.mxu0 %v6239
    %9100 = vmatpush.bf16.msra.mxu0 %v6230
    %9101 = vmatpush.bf16.msra.mxu0 %v6221
    %9102 = vmatpush.bf16.msra.mxu0 %v6212
    %9103 = vmatpush.bf16.msra.mxu0 %v6203
    %9104 = vmatpush.bf16.msra.mxu0 %v6194
    %9105 = vmatpush.bf16.msra.mxu0 %v6185
    %9106 = vmatpush.bf16.msra.mxu0 %v6176
    %9107 = vmatmul.bf16.gmra.mxu0 %v9084
    %v9108 = vpop.f32.mrf.mxu0
    %v9109 = vadd.f32 %v9096, %v9108
    %v9110 = vpop.f32.mrf.mxu0
    %9111 = vdwg.mxu0
    %9112 = vmatpush.bf16.msra.mxu0 %v6311
    %9113 = vmatpush.bf16.msra.mxu0 %v6302
    %9114 = vmatpush.bf16.msra.mxu0 %v6293
    %9115 = vmatpush.bf16.msra.mxu0 %v6284
    %9116 = vmatpush.bf16.msra.mxu0 %v6275
    %9117 = vmatpush.bf16.msra.mxu0 %v6266
    %9118 = vmatpush.bf16.msra.mxu0 %v6257
    %9119 = vmatpush.bf16.msra.mxu0 %v6248
    %9120 = vmatmul.bf16.gmra.mxu0 %v9085
    %v9121 = vpop.f32.mrf.mxu0
    %v9122 = vadd.f32 %v9109, %v9121
    %v9123 = vpop.f32.mrf.mxu0
    %9124 = vdwg.mxu0
    %9125 = vmatpush.bf16.msra.mxu0 %v6168
    %9126 = vmatpush.bf16.msra.mxu0 %v6159
    %9127 = vmatpush.bf16.msra.mxu0 %v6150
    %9128 = vmatpush.bf16.msra.mxu0 %v6141
    %9129 = vmatpush.bf16.msra.mxu0 %v6132
    %9130 = vmatpush.bf16.msra.mxu0 %v6123
    %9131 = vmatpush.bf16.msra.mxu0 %v6114
    %9132 = vmatpush.bf16.msra.mxu0 %v6105
    %9133 = vmatmul.bf16.gmra.mxu0 %v9083
    %v9134 = vpop.f32.mrf.mxu0
    %v9135 = vadd.f32 0.0, %v9134
    %v9136 = vpop.f32.mrf.mxu0
    %9137 = vdwg.mxu0
    %9138 = vmatpush.bf16.msra.mxu0 %v6240
    %9139 = vmatpush.bf16.msra.mxu0 %v6231
    %9140 = vmatpush.bf16.msra.mxu0 %v6222
    %9141 = vmatpush.bf16.msra.mxu0 %v6213
    %9142 = vmatpush.bf16.msra.mxu0 %v6204
    %9143 = vmatpush.bf16.msra.mxu0 %v6195
    %9144 = vmatpush.bf16.msra.mxu0 %v6186
    %9145 = vmatpush.bf16.msra.mxu0 %v6177
    %9146 = vmatmul.bf16.gmra.mxu0 %v9084
    %v9147 = vpop.f32.mrf.mxu0
    %v9148 = vadd.f32 %v9135, %v9147
    %v9149 = vpop.f32.mrf.mxu0
    %9150 = vdwg.mxu0
    %9151 = vmatpush.bf16.msra.mxu0 %v6312
    %9152 = vmatpush.bf16.msra.mxu0 %v6303
    %9153 = vmatpush.bf16.msra.mxu0 %v6294
    %9154 = vmatpush.bf16.msra.mxu0 %v6285
    %9155 = vmatpush.bf16.msra.mxu0 %v6276
    %9156 = vmatpush.bf16.msra.mxu0 %v6267
    %9157 = vmatpush.bf16.msra.mxu0 %v6258
    %9158 = vmatpush.bf16.msra.mxu0 %v6249
    %9159 = vmatmul.bf16.gmra.mxu0 %v9085
    %v9160 = vpop.f32.mrf.mxu0
    %v9161 = vadd.f32 %v9148, %v9160
    %v9162 = vpop.f32.mrf.mxu0
    %9163 = vdwg.mxu0
    %9164 = vmatpush.bf16.msra.mxu0 %v6169
    %9165 = vmatpush.bf16.msra.mxu0 %v6160
    %9166 = vmatpush.bf16.msra.mxu0 %v6151
    %9167 = vmatpush.bf16.msra.mxu0 %v6142
    %9168 = vmatpush.bf16.msra.mxu0 %v6133
    %9169 = vmatpush.bf16.msra.mxu0 %v6124
    %9170 = vmatpush.bf16.msra.mxu0 %v6115
    %9171 = vmatpush.bf16.msra.mxu0 %v6106
    %9172 = vmatmul.bf16.gmra.mxu0 %v9083
    %v9173 = vpop.f32.mrf.mxu0
    %v9174 = vadd.f32 0.0, %v9173
    %v9175 = vpop.f32.mrf.mxu0
    %9176 = vdwg.mxu0
    %9177 = vmatpush.bf16.msra.mxu0 %v6241
    %9178 = vmatpush.bf16.msra.mxu0 %v6232
    %9179 = vmatpush.bf16.msra.mxu0 %v6223
    %9180 = vmatpush.bf16.msra.mxu0 %v6214
    %9181 = vmatpush.bf16.msra.mxu0 %v6205
    %9182 = vmatpush.bf16.msra.mxu0 %v6196
    %9183 = vmatpush.bf16.msra.mxu0 %v6187
    %9184 = vmatpush.bf16.msra.mxu0 %v6178
    %9185 = vmatmul.bf16.gmra.mxu0 %v9084
    %v9186 = vpop.f32.mrf.mxu0
    %v9187 = vadd.f32 %v9174, %v9186
    %v9188 = vpop.f32.mrf.mxu0
    %9189 = vdwg.mxu0
    %9190 = vmatpush.bf16.msra.mxu0 %v6313
    %9191 = vmatpush.bf16.msra.mxu0 %v6304
    %9192 = vmatpush.bf16.msra.mxu0 %v6295
    %9193 = vmatpush.bf16.msra.mxu0 %v6286
    %9194 = vmatpush.bf16.msra.mxu0 %v6277
    %9195 = vmatpush.bf16.msra.mxu0 %v6268
    %9196 = vmatpush.bf16.msra.mxu0 %v6259
    %9197 = vmatpush.bf16.msra.mxu0 %v6250
    %9198 = vmatmul.bf16.gmra.mxu0 %v9085
    %v9199 = vpop.f32.mrf.mxu0
    %v9200 = vadd.f32 %v9187, %v9199
    %v9201 = vpop.f32.mrf.mxu0
    %9202 = vdwg.mxu0
    %9203 = vmatpush.bf16.msra.mxu0 %v6170
    %9204 = vmatpush.bf16.msra.mxu0 %v6161
    %9205 = vmatpush.bf16.msra.mxu0 %v6152
    %9206 = vmatpush.bf16.msra.mxu0 %v6143
    %9207 = vmatpush.bf16.msra.mxu0 %v6134
    %9208 = vmatpush.bf16.msra.mxu0 %v6125
    %9209 = vmatpush.bf16.msra.mxu0 %v6116
    %9210 = vmatpush.bf16.msra.mxu0 %v6107
    %9211 = vmatmul.bf16.gmra.mxu0 %v9083
    %v9212 = vpop.f32.mrf.mxu0
    %v9213 = vadd.f32 0.0, %v9212
    %v9214 = vpop.f32.mrf.mxu0
    %9215 = vdwg.mxu0
    %9216 = vmatpush.bf16.msra.mxu0 %v6242
    %9217 = vmatpush.bf16.msra.mxu0 %v6233
    %9218 = vmatpush.bf16.msra.mxu0 %v6224
    %9219 = vmatpush.bf16.msra.mxu0 %v6215
    %9220 = vmatpush.bf16.msra.mxu0 %v6206
    %9221 = vmatpush.bf16.msra.mxu0 %v6197
    %9222 = vmatpush.bf16.msra.mxu0 %v6188
    %9223 = vmatpush.bf16.msra.mxu0 %v6179
    %9224 = vmatmul.bf16.gmra.mxu0 %v9084
    %v9225 = vpop.f32.mrf.mxu0
    %v9226 = vadd.f32 %v9213, %v9225
    %v9227 = vpop.f32.mrf.mxu0
    %9228 = vdwg.mxu0
    %9229 = vmatpush.bf16.msra.mxu0 %v6314
    %9230 = vmatpush.bf16.msra.mxu0 %v6305
    %9231 = vmatpush.bf16.msra.mxu0 %v6296
    %9232 = vmatpush.bf16.msra.mxu0 %v6287
    %9233 = vmatpush.bf16.msra.mxu0 %v6278
    %9234 = vmatpush.bf16.msra.mxu0 %v6269
    %9235 = vmatpush.bf16.msra.mxu0 %v6260
    %9236 = vmatpush.bf16.msra.mxu0 %v6251
    %9237 = vmatmul.bf16.gmra.mxu0 %v9085
    %v9238 = vpop.f32.mrf.mxu0
    %v9239 = vadd.f32 %v9226, %v9238
    %v9240 = vpop.f32.mrf.mxu0
    %9241 = vdwg.mxu0
    %9242 = vmatpush.bf16.msra.mxu0 %v6171
    %9243 = vmatpush.bf16.msra.mxu0 %v6162
    %9244 = vmatpush.bf16.msra.mxu0 %v6153
    %9245 = vmatpush.bf16.msra.mxu0 %v6144
    %9246 = vmatpush.bf16.msra.mxu0 %v6135
    %9247 = vmatpush.bf16.msra.mxu0 %v6126
    %9248 = vmatpush.bf16.msra.mxu0 %v6117
    %9249 = vmatpush.bf16.msra.mxu0 %v6108
    %9250 = vmatmul.bf16.gmra.mxu0 %v9083
    %v9251 = vpop.f32.mrf.mxu0
    %v9252 = vadd.f32 0.0, %v9251
    %v9253 = vpop.f32.mrf.mxu0
    %9254 = vdwg.mxu0
    %9255 = vmatpush.bf16.msra.mxu0 %v6243
    %9256 = vmatpush.bf16.msra.mxu0 %v6234
    %9257 = vmatpush.bf16.msra.mxu0 %v6225
    %9258 = vmatpush.bf16.msra.mxu0 %v6216
    %9259 = vmatpush.bf16.msra.mxu0 %v6207
    %9260 = vmatpush.bf16.msra.mxu0 %v6198
    %9261 = vmatpush.bf16.msra.mxu0 %v6189
    %9262 = vmatpush.bf16.msra.mxu0 %v6180
    %9263 = vmatmul.bf16.gmra.mxu0 %v9084
    %v9264 = vpop.f32.mrf.mxu0
    %v9265 = vadd.f32 %v9252, %v9264
    %v9266 = vpop.f32.mrf.mxu0
    %9267 = vdwg.mxu0
    %9268 = vmatpush.bf16.msra.mxu0 %v6315
    %9269 = vmatpush.bf16.msra.mxu0 %v6306
    %9270 = vmatpush.bf16.msra.mxu0 %v6297
    %9271 = vmatpush.bf16.msra.mxu0 %v6288
    %9272 = vmatpush.bf16.msra.mxu0 %v6279
    %9273 = vmatpush.bf16.msra.mxu0 %v6270
    %9274 = vmatpush.bf16.msra.mxu0 %v6261
    %9275 = vmatpush.bf16.msra.mxu0 %v6252
    %9276 = vmatmul.bf16.gmra.mxu0 %v9085
    %v9277 = vpop.f32.mrf.mxu0
    %v9278 = vadd.f32 %v9265, %v9277
    %v9279 = vpop.f32.mrf.mxu0
    %9280 = vdwg.mxu0
    %9281 = vmatpush.bf16.msra.mxu0 %v6172
    %9282 = vmatpush.bf16.msra.mxu0 %v6163
    %9283 = vmatpush.bf16.msra.mxu0 %v6154
    %9284 = vmatpush.bf16.msra.mxu0 %v6145
    %9285 = vmatpush.bf16.msra.mxu0 %v6136
    %9286 = vmatpush.bf16.msra.mxu0 %v6127
    %9287 = vmatpush.bf16.msra.mxu0 %v6118
    %9288 = vmatpush.bf16.msra.mxu0 %v6109
    %9289 = vmatmul.bf16.gmra.mxu0 %v9083
    %v9290 = vpop.f32.mrf.mxu0
    %v9291 = vadd.f32 0.0, %v9290
    %v9292 = vpop.f32.mrf.mxu0
    %9293 = vdwg.mxu0
    %9294 = vmatpush.bf16.msra.mxu0 %v6244
    %9295 = vmatpush.bf16.msra.mxu0 %v6235
    %9296 = vmatpush.bf16.msra.mxu0 %v6226
    %9297 = vmatpush.bf16.msra.mxu0 %v6217
    %9298 = vmatpush.bf16.msra.mxu0 %v6208
    %9299 = vmatpush.bf16.msra.mxu0 %v6199
    %9300 = vmatpush.bf16.msra.mxu0 %v6190
    %9301 = vmatpush.bf16.msra.mxu0 %v6181
    %9302 = vmatmul.bf16.gmra.mxu0 %v9084
    %v9303 = vpop.f32.mrf.mxu0
    %v9304 = vadd.f32 %v9291, %v9303
    %v9305 = vpop.f32.mrf.mxu0
    %9306 = vdwg.mxu0
    %9307 = vmatpush.bf16.msra.mxu0 %v6316
    %9308 = vmatpush.bf16.msra.mxu0 %v6307
    %9309 = vmatpush.bf16.msra.mxu0 %v6298
    %9310 = vmatpush.bf16.msra.mxu0 %v6289
    %9311 = vmatpush.bf16.msra.mxu0 %v6280
    %9312 = vmatpush.bf16.msra.mxu0 %v6271
    %9313 = vmatpush.bf16.msra.mxu0 %v6262
    %9314 = vmatpush.bf16.msra.mxu0 %v6253
    %9315 = vmatmul.bf16.gmra.mxu0 %v9085
    %v9316 = vpop.f32.mrf.mxu0
    %v9317 = vadd.f32 %v9304, %v9316
    %v9318 = vpop.f32.mrf.mxu0
    %9319 = vdwg.mxu0
    %9320 = vmatpush.bf16.msra.mxu0 %v6173
    %9321 = vmatpush.bf16.msra.mxu0 %v6164
    %9322 = vmatpush.bf16.msra.mxu0 %v6155
    %9323 = vmatpush.bf16.msra.mxu0 %v6146
    %9324 = vmatpush.bf16.msra.mxu0 %v6137
    %9325 = vmatpush.bf16.msra.mxu0 %v6128
    %9326 = vmatpush.bf16.msra.mxu0 %v6119
    %9327 = vmatpush.bf16.msra.mxu0 %v6110
    %9328 = vmatmul.bf16.gmra.mxu0 %v9083
    %v9329 = vpop.f32.mrf.mxu0
    %v9330 = vadd.f32 0.0, %v9329
    %v9331 = vpop.f32.mrf.mxu0
    %9332 = vdwg.mxu0
    %9333 = vmatpush.bf16.msra.mxu0 %v6245
    %9334 = vmatpush.bf16.msra.mxu0 %v6236
    %9335 = vmatpush.bf16.msra.mxu0 %v6227
    %9336 = vmatpush.bf16.msra.mxu0 %v6218
    %9337 = vmatpush.bf16.msra.mxu0 %v6209
    %9338 = vmatpush.bf16.msra.mxu0 %v6200
    %9339 = vmatpush.bf16.msra.mxu0 %v6191
    %9340 = vmatpush.bf16.msra.mxu0 %v6182
    %9341 = vmatmul.bf16.gmra.mxu0 %v9084
    %v9342 = vpop.f32.mrf.mxu0
    %v9343 = vadd.f32 %v9330, %v9342
    %v9344 = vpop.f32.mrf.mxu0
    %9345 = vdwg.mxu0
    %9346 = vmatpush.bf16.msra.mxu0 %v6317
    %9347 = vmatpush.bf16.msra.mxu0 %v6308
    %9348 = vmatpush.bf16.msra.mxu0 %v6299
    %9349 = vmatpush.bf16.msra.mxu0 %v6290
    %9350 = vmatpush.bf16.msra.mxu0 %v6281
    %9351 = vmatpush.bf16.msra.mxu0 %v6272
    %9352 = vmatpush.bf16.msra.mxu0 %v6263
    %9353 = vmatpush.bf16.msra.mxu0 %v6254
    %9354 = vmatmul.bf16.gmra.mxu0 %v9085
    %v9355 = vpop.f32.mrf.mxu0
    %v9356 = vadd.f32 %v9343, %v9355
    %v9357 = vpop.f32.mrf.mxu0
    %9358 = vdwg.mxu0
    %9359 = vmatpush.bf16.msra.mxu0 %v6174
    %9360 = vmatpush.bf16.msra.mxu0 %v6165
    %9361 = vmatpush.bf16.msra.mxu0 %v6156
    %9362 = vmatpush.bf16.msra.mxu0 %v6147
    %9363 = vmatpush.bf16.msra.mxu0 %v6138
    %9364 = vmatpush.bf16.msra.mxu0 %v6129
    %9365 = vmatpush.bf16.msra.mxu0 %v6120
    %9366 = vmatpush.bf16.msra.mxu0 %v6111
    %9367 = vmatmul.bf16.gmra.mxu0 %v9083
    %v9368 = vpop.f32.mrf.mxu0
    %v9369 = vadd.f32 0.0, %v9368
    %v9370 = vpop.f32.mrf.mxu0
    %9371 = vdwg.mxu0
    %9372 = vmatpush.bf16.msra.mxu0 %v6246
    %9373 = vmatpush.bf16.msra.mxu0 %v6237
    %9374 = vmatpush.bf16.msra.mxu0 %v6228
    %9375 = vmatpush.bf16.msra.mxu0 %v6219
    %9376 = vmatpush.bf16.msra.mxu0 %v6210
    %9377 = vmatpush.bf16.msra.mxu0 %v6201
    %9378 = vmatpush.bf16.msra.mxu0 %v6192
    %9379 = vmatpush.bf16.msra.mxu0 %v6183
    %9380 = vmatmul.bf16.gmra.mxu0 %v9084
    %v9381 = vpop.f32.mrf.mxu0
    %v9382 = vadd.f32 %v9369, %v9381
    %v9383 = vpop.f32.mrf.mxu0
    %9384 = vdwg.mxu0
    %9385 = vmatpush.bf16.msra.mxu0 %v6318
    %9386 = vmatpush.bf16.msra.mxu0 %v6309
    %9387 = vmatpush.bf16.msra.mxu0 %v6300
    %9388 = vmatpush.bf16.msra.mxu0 %v6291
    %9389 = vmatpush.bf16.msra.mxu0 %v6282
    %9390 = vmatpush.bf16.msra.mxu0 %v6273
    %9391 = vmatpush.bf16.msra.mxu0 %v6264
    %9392 = vmatpush.bf16.msra.mxu0 %v6255
    %9393 = vmatmul.bf16.gmra.mxu0 %v9085
    %v9394 = vpop.f32.mrf.mxu0
    %v9395 = vadd.f32 %v9382, %v9394
    %v9396 = vpop.f32.mrf.mxu0
    %9397 = vdwg.mxu0
    %9398 = vmatpush.bf16.msra.mxu0 %v6175
    %9399 = vmatpush.bf16.msra.mxu0 %v6166
    %9400 = vmatpush.bf16.msra.mxu0 %v6157
    %9401 = vmatpush.bf16.msra.mxu0 %v6148
    %9402 = vmatpush.bf16.msra.mxu0 %v6139
    %9403 = vmatpush.bf16.msra.mxu0 %v6130
    %9404 = vmatpush.bf16.msra.mxu0 %v6121
    %9405 = vmatpush.bf16.msra.mxu0 %v6112
    %9406 = vmatmul.bf16.gmra.mxu0 %v9083
    %v9407 = vpop.f32.mrf.mxu0
    %v9408 = vadd.f32 0.0, %v9407
    %v9409 = vpop.f32.mrf.mxu0
    %9410 = vdwg.mxu0
    %9411 = vmatpush.bf16.msra.mxu0 %v6247
    %9412 = vmatpush.bf16.msra.mxu0 %v6238
    %9413 = vmatpush.bf16.msra.mxu0 %v6229
    %9414 = vmatpush.bf16.msra.mxu0 %v6220
    %9415 = vmatpush.bf16.msra.mxu0 %v6211
    %9416 = vmatpush.bf16.msra.mxu0 %v6202
    %9417 = vmatpush.bf16.msra.mxu0 %v6193
    %9418 = vmatpush.bf16.msra.mxu0 %v6184
    %9419 = vmatmul.bf16.gmra.mxu0 %v9084
    %v9420 = vpop.f32.mrf.mxu0
    %v9421 = vadd.f32 %v9408, %v9420
    %v9422 = vpop.f32.mrf.mxu0
    %9423 = vdwg.mxu0
    %9424 = vmatpush.bf16.msra.mxu0 %v6319
    %9425 = vmatpush.bf16.msra.mxu0 %v6310
    %9426 = vmatpush.bf16.msra.mxu0 %v6301
    %9427 = vmatpush.bf16.msra.mxu0 %v6292
    %9428 = vmatpush.bf16.msra.mxu0 %v6283
    %9429 = vmatpush.bf16.msra.mxu0 %v6274
    %9430 = vmatpush.bf16.msra.mxu0 %v6265
    %9431 = vmatpush.bf16.msra.mxu0 %v6256
    %9432 = vmatmul.bf16.gmra.mxu0 %v9085
    %v9433 = vpop.f32.mrf.mxu0
    %v9434 = vadd.f32 %v9421, %v9433
    %v9435 = vpop.f32.mrf.mxu0
    %9436 = vdwg.mxu0
    %v9437 = vadd.f32 %v9074, %v9122
    %v9438 = vadd.f32 %v9075, %v9161
    %v9439 = vadd.f32 %v9076, %v9200
    %v9440 = vxor.u32 %v9437, 2147483648
    %v9441 = vxor.u32 %v9438, 2147483648
    %v9442 = vxor.u32 %v9439, 2147483648
    %v9443 = vmul.f32 %v9440, 1.442695
    %v9444 = vpow.pop %v9443
    %v9445 = vmul.f32 %v9441, 1.442695
    %v9446 = vpow.pop %v9445
    %v9447 = vmul.f32 %v9442, 1.442695
    %v9448 = vpow.pop %v9447
    %v9449 = vadd.f32 %v9444, 1.0
    %v9450 = vadd.f32 %v9446, 1.0
    %v9451 = vadd.f32 %v9448, 1.0
    %v9452 = vrcp.pop %v9449
    %v9453 = vmul.f32 %v9449, %v9452
    %v9454 = vsub.f32 1.0, %v9453
    %v9455 = vmul.f32 %v9452, %v9454
    %v9456 = vadd.f32 %v9452, %v9455
    %vm9457 = vweird.f32 %v9449
    %vm9458 = vweird.f32 %v9452
    %vm9459 = vmor %vm9457, %vm9458
    %v9460 = vsel %vm9459, %v9452, %v9456
    %v9461 = vand.u32 2147483647, %v9449
    %vm9462 = vcmp.eq.f32.partialorder %v9461, 8.507059e+37
    %v9463 = vand.u32 %v9449, 2147483648
    %v9464 = vor.u32 1.1754944e-38, %v9463
    %v9465 = vsel %vm9462, %v9464, %v9460
    %v9466 = vmul.f32 1.0, %v9465
    %v9467 = vrcp.pop %v9450
    %v9468 = vmul.f32 %v9450, %v9467
    %v9469 = vsub.f32 1.0, %v9468
    %v9470 = vmul.f32 %v9467, %v9469
    %v9471 = vadd.f32 %v9467, %v9470
    %vm9472 = vweird.f32 %v9450
    %vm9473 = vweird.f32 %v9467
    %vm9474 = vmor %vm9472, %vm9473
    %v9475 = vsel %vm9474, %v9467, %v9471
    %v9476 = vand.u32 2147483647, %v9450
    %vm9477 = vcmp.eq.f32.partialorder %v9476, 8.507059e+37
    %v9478 = vand.u32 %v9450, 2147483648
    %v9479 = vor.u32 1.1754944e-38, %v9478
    %v9480 = vsel %vm9477, %v9479, %v9475
    %v9481 = vmul.f32 1.0, %v9480
    %v9482 = vrcp.pop %v9451
    %v9483 = vmul.f32 %v9451, %v9482
    %v9484 = vsub.f32 1.0, %v9483
    %v9485 = vmul.f32 %v9482, %v9484
    %v9486 = vadd.f32 %v9482, %v9485
    %vm9487 = vweird.f32 %v9451
    %vm9488 = vweird.f32 %v9482
    %vm9489 = vmor %vm9487, %vm9488
    %v9490 = vsel %vm9489, %v9482, %v9486
    %v9491 = vand.u32 2147483647, %v9451
    %vm9492 = vcmp.eq.f32.partialorder %v9491, 8.507059e+37
    %v9493 = vand.u32 %v9451, 2147483648
    %v9494 = vor.u32 1.1754944e-38, %v9493
    %v9495 = vsel %vm9492, %v9494, %v9490
    %v9496 = vmul.f32 1.0, %v9495
    %v9497 = vadd.f32 %v9077, %v9239
    %v9498 = vadd.f32 %v9078, %v9278
    %v9499 = vadd.f32 %v9079, %v9317
    %v9500 = vxor.u32 %v9497, 2147483648
    %v9501 = vxor.u32 %v9498, 2147483648
    %v9502 = vxor.u32 %v9499, 2147483648
    %v9503 = vmul.f32 %v9500, 1.442695
    %v9504 = vpow.pop %v9503
    %v9505 = vmul.f32 %v9501, 1.442695
    %v9506 = vpow.pop %v9505
    %v9507 = vmul.f32 %v9502, 1.442695
    %v9508 = vpow.pop %v9507
    %v9509 = vadd.f32 %v9504, 1.0
    %v9510 = vadd.f32 %v9506, 1.0
    %v9511 = vadd.f32 %v9508, 1.0
    %v9512 = vrcp.pop %v9509
    %v9513 = vmul.f32 %v9509, %v9512
    %v9514 = vsub.f32 1.0, %v9513
    %v9515 = vmul.f32 %v9512, %v9514
    %v9516 = vadd.f32 %v9512, %v9515
    %vm9517 = vweird.f32 %v9509
    %vm9518 = vweird.f32 %v9512
    %vm9519 = vmor %vm9517, %vm9518
    %v9520 = vsel %vm9519, %v9512, %v9516
    %v9521 = vand.u32 2147483647, %v9509
    %vm9522 = vcmp.eq.f32.partialorder %v9521, 8.507059e+37
    %v9523 = vand.u32 %v9509, 2147483648
    %v9524 = vor.u32 1.1754944e-38, %v9523
    %v9525 = vsel %vm9522, %v9524, %v9520
    %v9526 = vmul.f32 1.0, %v9525
    %v9527 = vrcp.pop %v9510
    %v9528 = vmul.f32 %v9510, %v9527
    %v9529 = vsub.f32 1.0, %v9528
    %v9530 = vmul.f32 %v9527, %v9529
    %v9531 = vadd.f32 %v9527, %v9530
    %vm9532 = vweird.f32 %v9510
    %vm9533 = vweird.f32 %v9527
    %vm9534 = vmor %vm9532, %vm9533
    %v9535 = vsel %vm9534, %v9527, %v9531
    %v9536 = vand.u32 2147483647, %v9510
    %vm9537 = vcmp.eq.f32.partialorder %v9536, 8.507059e+37
    %v9538 = vand.u32 %v9510, 2147483648
    %v9539 = vor.u32 1.1754944e-38, %v9538
    %v9540 = vsel %vm9537, %v9539, %v9535
    %v9541 = vmul.f32 1.0, %v9540
    %v9542 = vrcp.pop %v9511
    %v9543 = vmul.f32 %v9511, %v9542
    %v9544 = vsub.f32 1.0, %v9543
    %v9545 = vmul.f32 %v9542, %v9544
    %v9546 = vadd.f32 %v9542, %v9545
    %vm9547 = vweird.f32 %v9511
    %vm9548 = vweird.f32 %v9542
    %vm9549 = vmor %vm9547, %vm9548
    %v9550 = vsel %vm9549, %v9542, %v9546
    %v9551 = vand.u32 2147483647, %v9511
    %vm9552 = vcmp.eq.f32.partialorder %v9551, 8.507059e+37
    %v9553 = vand.u32 %v9511, 2147483648
    %v9554 = vor.u32 1.1754944e-38, %v9553
    %v9555 = vsel %vm9552, %v9554, %v9550
    %v9556 = vmul.f32 1.0, %v9555
    %v9557 = vadd.f32 %v9356, %v5417
    %v9558 = vadd.f32 %v9395, %v5418
    %v9559 = vadd.f32 %v9434, %v5419
    %v9560 = vmul.f32 %v9466, %v9557
    %v9561 = vmul.f32 %v9481, %v9558
    %v9562 = vmul.f32 %v9496, %v9559
    %v9563 = vadd.f32 %v9080, %v9560
    %v9564 = vadd.f32 %v9081, %v9561
    %v9565 = vadd.f32 %v9082, %v9562
    %v9566 = vtanh.pop %v9563
    %v9567 = vtanh.pop %v9564
    %v9568 = vtanh.pop %v9565
    %v9569 = vsub.f32 1.0, %v9526
    %v9570 = vsub.f32 1.0, %v9541
    %v9571 = vsub.f32 1.0, %v9556
    %v9572 = vmul.f32 %v9569, %v9566
    %v9573 = vmul.f32 %v9570, %v9567
    %v9574 = vmul.f32 %v9571, %v9568
    %v9575 = vmul.f32 %v9526, %v9068
    %v9576 = vmul.f32 %v9541, %v9069
    %v9577 = vmul.f32 %v9556, %v9070
    %v9578 = vadd.f32 %v9572, %v9575
    %v9579 = vadd.f32 %v9573, %v9576
    %v9580 = vadd.f32 %v9574, %v9577
    %9581 = vst [vmem:[#allocation3 + $0x78] sm:$0xff] %v9578
    %9582 = vst [vmem:[#allocation3 + $0x80] sm:$0xff] %v9579
    %9583 = vst [vmem:[#allocation3 + $0x88] sm:$0xff] %v9580
    %v9584 = vld [vmem:[#allocation2 + $0x1b0] sm:$0xff]
    %v9585 = vld [vmem:[#allocation2 + $0x1b8] sm:$0xff]
    %v9586 = vld [vmem:[#allocation2 + $0x1c0] sm:$0xff]
    %v9587 = vld [vmem:[#allocation2 + $0x1c8] sm:$0xff]
    %v9588 = vld [vmem:[#allocation2 + $0x1d0] sm:$0xff]
    %v9589 = vld [vmem:[#allocation2 + $0x1d8] sm:$0xff]
    %v9590 = vld [vmem:[#allocation2 + $0x1e0] sm:$0xff]
    %v9591 = vld [vmem:[#allocation2 + $0x1e8] sm:$0xff]
    %v9592 = vld [vmem:[#allocation2 + $0x1f0] sm:$0xff]
    %v9593 = vpack.c.bf16 %v9578, %v9578
    %v9594 = vpack.c.bf16 %v9579, %v9579
    %v9595 = vpack.c.bf16 %v9580, %v9580
    %9596 = vmatpush.bf16.msra.mxu0 %v6167
    %9597 = vmatpush.bf16.msra.mxu0 %v6158
    %9598 = vmatpush.bf16.msra.mxu0 %v6149
    %9599 = vmatpush.bf16.msra.mxu0 %v6140
    %9600 = vmatpush.bf16.msra.mxu0 %v6131
    %9601 = vmatpush.bf16.msra.mxu0 %v6122
    %9602 = vmatpush.bf16.msra.mxu0 %v6113
    %9603 = vmatpush.bf16.msra.mxu0 %v6104
    %9604 = vmatmul.bf16.gmra.mxu0 %v9593
    %v9605 = vpop.f32.mrf.mxu0
    %v9606 = vadd.f32 0.0, %v9605
    %v9607 = vpop.f32.mrf.mxu0
    %9608 = vdwg.mxu0
    %9609 = vmatpush.bf16.msra.mxu0 %v6239
    %9610 = vmatpush.bf16.msra.mxu0 %v6230
    %9611 = vmatpush.bf16.msra.mxu0 %v6221
    %9612 = vmatpush.bf16.msra.mxu0 %v6212
    %9613 = vmatpush.bf16.msra.mxu0 %v6203
    %9614 = vmatpush.bf16.msra.mxu0 %v6194
    %9615 = vmatpush.bf16.msra.mxu0 %v6185
    %9616 = vmatpush.bf16.msra.mxu0 %v6176
    %9617 = vmatmul.bf16.gmra.mxu0 %v9594
    %v9618 = vpop.f32.mrf.mxu0
    %v9619 = vadd.f32 %v9606, %v9618
    %v9620 = vpop.f32.mrf.mxu0
    %9621 = vdwg.mxu0
    %9622 = vmatpush.bf16.msra.mxu0 %v6311
    %9623 = vmatpush.bf16.msra.mxu0 %v6302
    %9624 = vmatpush.bf16.msra.mxu0 %v6293
    %9625 = vmatpush.bf16.msra.mxu0 %v6284
    %9626 = vmatpush.bf16.msra.mxu0 %v6275
    %9627 = vmatpush.bf16.msra.mxu0 %v6266
    %9628 = vmatpush.bf16.msra.mxu0 %v6257
    %9629 = vmatpush.bf16.msra.mxu0 %v6248
    %9630 = vmatmul.bf16.gmra.mxu0 %v9595
    %v9631 = vpop.f32.mrf.mxu0
    %v9632 = vadd.f32 %v9619, %v9631
    %v9633 = vpop.f32.mrf.mxu0
    %9634 = vdwg.mxu0
    %9635 = vmatpush.bf16.msra.mxu0 %v6168
    %9636 = vmatpush.bf16.msra.mxu0 %v6159
    %9637 = vmatpush.bf16.msra.mxu0 %v6150
    %9638 = vmatpush.bf16.msra.mxu0 %v6141
    %9639 = vmatpush.bf16.msra.mxu0 %v6132
    %9640 = vmatpush.bf16.msra.mxu0 %v6123
    %9641 = vmatpush.bf16.msra.mxu0 %v6114
    %9642 = vmatpush.bf16.msra.mxu0 %v6105
    %9643 = vmatmul.bf16.gmra.mxu0 %v9593
    %v9644 = vpop.f32.mrf.mxu0
    %v9645 = vadd.f32 0.0, %v9644
    %v9646 = vpop.f32.mrf.mxu0
    %9647 = vdwg.mxu0
    %9648 = vmatpush.bf16.msra.mxu0 %v6240
    %9649 = vmatpush.bf16.msra.mxu0 %v6231
    %9650 = vmatpush.bf16.msra.mxu0 %v6222
    %9651 = vmatpush.bf16.msra.mxu0 %v6213
    %9652 = vmatpush.bf16.msra.mxu0 %v6204
    %9653 = vmatpush.bf16.msra.mxu0 %v6195
    %9654 = vmatpush.bf16.msra.mxu0 %v6186
    %9655 = vmatpush.bf16.msra.mxu0 %v6177
    %9656 = vmatmul.bf16.gmra.mxu0 %v9594
    %v9657 = vpop.f32.mrf.mxu0
    %v9658 = vadd.f32 %v9645, %v9657
    %v9659 = vpop.f32.mrf.mxu0
    %9660 = vdwg.mxu0
    %9661 = vmatpush.bf16.msra.mxu0 %v6312
    %9662 = vmatpush.bf16.msra.mxu0 %v6303
    %9663 = vmatpush.bf16.msra.mxu0 %v6294
    %9664 = vmatpush.bf16.msra.mxu0 %v6285
    %9665 = vmatpush.bf16.msra.mxu0 %v6276
    %9666 = vmatpush.bf16.msra.mxu0 %v6267
    %9667 = vmatpush.bf16.msra.mxu0 %v6258
    %9668 = vmatpush.bf16.msra.mxu0 %v6249
    %9669 = vmatmul.bf16.gmra.mxu0 %v9595
    %v9670 = vpop.f32.mrf.mxu0
    %v9671 = vadd.f32 %v9658, %v9670
    %v9672 = vpop.f32.mrf.mxu0
    %9673 = vdwg.mxu0
    %9674 = vmatpush.bf16.msra.mxu0 %v6169
    %9675 = vmatpush.bf16.msra.mxu0 %v6160
    %9676 = vmatpush.bf16.msra.mxu0 %v6151
    %9677 = vmatpush.bf16.msra.mxu0 %v6142
    %9678 = vmatpush.bf16.msra.mxu0 %v6133
    %9679 = vmatpush.bf16.msra.mxu0 %v6124
    %9680 = vmatpush.bf16.msra.mxu0 %v6115
    %9681 = vmatpush.bf16.msra.mxu0 %v6106
    %9682 = vmatmul.bf16.gmra.mxu0 %v9593
    %v9683 = vpop.f32.mrf.mxu0
    %v9684 = vadd.f32 0.0, %v9683
    %v9685 = vpop.f32.mrf.mxu0
    %9686 = vdwg.mxu0
    %9687 = vmatpush.bf16.msra.mxu0 %v6241
    %9688 = vmatpush.bf16.msra.mxu0 %v6232
    %9689 = vmatpush.bf16.msra.mxu0 %v6223
    %9690 = vmatpush.bf16.msra.mxu0 %v6214
    %9691 = vmatpush.bf16.msra.mxu0 %v6205
    %9692 = vmatpush.bf16.msra.mxu0 %v6196
    %9693 = vmatpush.bf16.msra.mxu0 %v6187
    %9694 = vmatpush.bf16.msra.mxu0 %v6178
    %9695 = vmatmul.bf16.gmra.mxu0 %v9594
    %v9696 = vpop.f32.mrf.mxu0
    %v9697 = vadd.f32 %v9684, %v9696
    %v9698 = vpop.f32.mrf.mxu0
    %9699 = vdwg.mxu0
    %9700 = vmatpush.bf16.msra.mxu0 %v6313
    %9701 = vmatpush.bf16.msra.mxu0 %v6304
    %9702 = vmatpush.bf16.msra.mxu0 %v6295
    %9703 = vmatpush.bf16.msra.mxu0 %v6286
    %9704 = vmatpush.bf16.msra.mxu0 %v6277
    %9705 = vmatpush.bf16.msra.mxu0 %v6268
    %9706 = vmatpush.bf16.msra.mxu0 %v6259
    %9707 = vmatpush.bf16.msra.mxu0 %v6250
    %9708 = vmatmul.bf16.gmra.mxu0 %v9595
    %v9709 = vpop.f32.mrf.mxu0
    %v9710 = vadd.f32 %v9697, %v9709
    %v9711 = vpop.f32.mrf.mxu0
    %9712 = vdwg.mxu0
    %9713 = vmatpush.bf16.msra.mxu0 %v6170
    %9714 = vmatpush.bf16.msra.mxu0 %v6161
    %9715 = vmatpush.bf16.msra.mxu0 %v6152
    %9716 = vmatpush.bf16.msra.mxu0 %v6143
    %9717 = vmatpush.bf16.msra.mxu0 %v6134
    %9718 = vmatpush.bf16.msra.mxu0 %v6125
    %9719 = vmatpush.bf16.msra.mxu0 %v6116
    %9720 = vmatpush.bf16.msra.mxu0 %v6107
    %9721 = vmatmul.bf16.gmra.mxu0 %v9593
    %v9722 = vpop.f32.mrf.mxu0
    %v9723 = vadd.f32 0.0, %v9722
    %v9724 = vpop.f32.mrf.mxu0
    %9725 = vdwg.mxu0
    %9726 = vmatpush.bf16.msra.mxu0 %v6242
    %9727 = vmatpush.bf16.msra.mxu0 %v6233
    %9728 = vmatpush.bf16.msra.mxu0 %v6224
    %9729 = vmatpush.bf16.msra.mxu0 %v6215
    %9730 = vmatpush.bf16.msra.mxu0 %v6206
    %9731 = vmatpush.bf16.msra.mxu0 %v6197
    %9732 = vmatpush.bf16.msra.mxu0 %v6188
    %9733 = vmatpush.bf16.msra.mxu0 %v6179
    %9734 = vmatmul.bf16.gmra.mxu0 %v9594
    %v9735 = vpop.f32.mrf.mxu0
    %v9736 = vadd.f32 %v9723, %v9735
    %v9737 = vpop.f32.mrf.mxu0
    %9738 = vdwg.mxu0
    %9739 = vmatpush.bf16.msra.mxu0 %v6314
    %9740 = vmatpush.bf16.msra.mxu0 %v6305
    %9741 = vmatpush.bf16.msra.mxu0 %v6296
    %9742 = vmatpush.bf16.msra.mxu0 %v6287
    %9743 = vmatpush.bf16.msra.mxu0 %v6278
    %9744 = vmatpush.bf16.msra.mxu0 %v6269
    %9745 = vmatpush.bf16.msra.mxu0 %v6260
    %9746 = vmatpush.bf16.msra.mxu0 %v6251
    %9747 = vmatmul.bf16.gmra.mxu0 %v9595
    %v9748 = vpop.f32.mrf.mxu0
    %v9749 = vadd.f32 %v9736, %v9748
    %v9750 = vpop.f32.mrf.mxu0
    %9751 = vdwg.mxu0
    %9752 = vmatpush.bf16.msra.mxu0 %v6171
    %9753 = vmatpush.bf16.msra.mxu0 %v6162
    %9754 = vmatpush.bf16.msra.mxu0 %v6153
    %9755 = vmatpush.bf16.msra.mxu0 %v6144
    %9756 = vmatpush.bf16.msra.mxu0 %v6135
    %9757 = vmatpush.bf16.msra.mxu0 %v6126
    %9758 = vmatpush.bf16.msra.mxu0 %v6117
    %9759 = vmatpush.bf16.msra.mxu0 %v6108
    %9760 = vmatmul.bf16.gmra.mxu0 %v9593
    %v9761 = vpop.f32.mrf.mxu0
    %v9762 = vadd.f32 0.0, %v9761
    %v9763 = vpop.f32.mrf.mxu0
    %9764 = vdwg.mxu0
    %9765 = vmatpush.bf16.msra.mxu0 %v6243
    %9766 = vmatpush.bf16.msra.mxu0 %v6234
    %9767 = vmatpush.bf16.msra.mxu0 %v6225
    %9768 = vmatpush.bf16.msra.mxu0 %v6216
    %9769 = vmatpush.bf16.msra.mxu0 %v6207
    %9770 = vmatpush.bf16.msra.mxu0 %v6198
    %9771 = vmatpush.bf16.msra.mxu0 %v6189
    %9772 = vmatpush.bf16.msra.mxu0 %v6180
    %9773 = vmatmul.bf16.gmra.mxu0 %v9594
    %v9774 = vpop.f32.mrf.mxu0
    %v9775 = vadd.f32 %v9762, %v9774
    %v9776 = vpop.f32.mrf.mxu0
    %9777 = vdwg.mxu0
    %9778 = vmatpush.bf16.msra.mxu0 %v6315
    %9779 = vmatpush.bf16.msra.mxu0 %v6306
    %9780 = vmatpush.bf16.msra.mxu0 %v6297
    %9781 = vmatpush.bf16.msra.mxu0 %v6288
    %9782 = vmatpush.bf16.msra.mxu0 %v6279
    %9783 = vmatpush.bf16.msra.mxu0 %v6270
    %9784 = vmatpush.bf16.msra.mxu0 %v6261
    %9785 = vmatpush.bf16.msra.mxu0 %v6252
    %9786 = vmatmul.bf16.gmra.mxu0 %v9595
    %v9787 = vpop.f32.mrf.mxu0
    %v9788 = vadd.f32 %v9775, %v9787
    %v9789 = vpop.f32.mrf.mxu0
    %9790 = vdwg.mxu0
    %9791 = vmatpush.bf16.msra.mxu0 %v6172
    %9792 = vmatpush.bf16.msra.mxu0 %v6163
    %9793 = vmatpush.bf16.msra.mxu0 %v6154
    %9794 = vmatpush.bf16.msra.mxu0 %v6145
    %9795 = vmatpush.bf16.msra.mxu0 %v6136
    %9796 = vmatpush.bf16.msra.mxu0 %v6127
    %9797 = vmatpush.bf16.msra.mxu0 %v6118
    %9798 = vmatpush.bf16.msra.mxu0 %v6109
    %9799 = vmatmul.bf16.gmra.mxu0 %v9593
    %v9800 = vpop.f32.mrf.mxu0
    %v9801 = vadd.f32 0.0, %v9800
    %v9802 = vpop.f32.mrf.mxu0
    %9803 = vdwg.mxu0
    %9804 = vmatpush.bf16.msra.mxu0 %v6244
    %9805 = vmatpush.bf16.msra.mxu0 %v6235
    %9806 = vmatpush.bf16.msra.mxu0 %v6226
    %9807 = vmatpush.bf16.msra.mxu0 %v6217
    %9808 = vmatpush.bf16.msra.mxu0 %v6208
    %9809 = vmatpush.bf16.msra.mxu0 %v6199
    %9810 = vmatpush.bf16.msra.mxu0 %v6190
    %9811 = vmatpush.bf16.msra.mxu0 %v6181
    %9812 = vmatmul.bf16.gmra.mxu0 %v9594
    %v9813 = vpop.f32.mrf.mxu0
    %v9814 = vadd.f32 %v9801, %v9813
    %v9815 = vpop.f32.mrf.mxu0
    %9816 = vdwg.mxu0
    %9817 = vmatpush.bf16.msra.mxu0 %v6316
    %9818 = vmatpush.bf16.msra.mxu0 %v6307
    %9819 = vmatpush.bf16.msra.mxu0 %v6298
    %9820 = vmatpush.bf16.msra.mxu0 %v6289
    %9821 = vmatpush.bf16.msra.mxu0 %v6280
    %9822 = vmatpush.bf16.msra.mxu0 %v6271
    %9823 = vmatpush.bf16.msra.mxu0 %v6262
    %9824 = vmatpush.bf16.msra.mxu0 %v6253
    %9825 = vmatmul.bf16.gmra.mxu0 %v9595
    %v9826 = vpop.f32.mrf.mxu0
    %v9827 = vadd.f32 %v9814, %v9826
    %v9828 = vpop.f32.mrf.mxu0
    %9829 = vdwg.mxu0
    %9830 = vmatpush.bf16.msra.mxu0 %v6173
    %9831 = vmatpush.bf16.msra.mxu0 %v6164
    %9832 = vmatpush.bf16.msra.mxu0 %v6155
    %9833 = vmatpush.bf16.msra.mxu0 %v6146
    %9834 = vmatpush.bf16.msra.mxu0 %v6137
    %9835 = vmatpush.bf16.msra.mxu0 %v6128
    %9836 = vmatpush.bf16.msra.mxu0 %v6119
    %9837 = vmatpush.bf16.msra.mxu0 %v6110
    %9838 = vmatmul.bf16.gmra.mxu0 %v9593
    %v9839 = vpop.f32.mrf.mxu0
    %v9840 = vadd.f32 0.0, %v9839
    %v9841 = vpop.f32.mrf.mxu0
    %9842 = vdwg.mxu0
    %9843 = vmatpush.bf16.msra.mxu0 %v6245
    %9844 = vmatpush.bf16.msra.mxu0 %v6236
    %9845 = vmatpush.bf16.msra.mxu0 %v6227
    %9846 = vmatpush.bf16.msra.mxu0 %v6218
    %9847 = vmatpush.bf16.msra.mxu0 %v6209
    %9848 = vmatpush.bf16.msra.mxu0 %v6200
    %9849 = vmatpush.bf16.msra.mxu0 %v6191
    %9850 = vmatpush.bf16.msra.mxu0 %v6182
    %9851 = vmatmul.bf16.gmra.mxu0 %v9594
    %v9852 = vpop.f32.mrf.mxu0
    %v9853 = vadd.f32 %v9840, %v9852
    %v9854 = vpop.f32.mrf.mxu0
    %9855 = vdwg.mxu0
    %9856 = vmatpush.bf16.msra.mxu0 %v6317
    %9857 = vmatpush.bf16.msra.mxu0 %v6308
    %9858 = vmatpush.bf16.msra.mxu0 %v6299
    %9859 = vmatpush.bf16.msra.mxu0 %v6290
    %9860 = vmatpush.bf16.msra.mxu0 %v6281
    %9861 = vmatpush.bf16.msra.mxu0 %v6272
    %9862 = vmatpush.bf16.msra.mxu0 %v6263
    %9863 = vmatpush.bf16.msra.mxu0 %v6254
    %9864 = vmatmul.bf16.gmra.mxu0 %v9595
    %v9865 = vpop.f32.mrf.mxu0
    %v9866 = vadd.f32 %v9853, %v9865
    %v9867 = vpop.f32.mrf.mxu0
    %9868 = vdwg.mxu0
    %9869 = vmatpush.bf16.msra.mxu0 %v6174
    %9870 = vmatpush.bf16.msra.mxu0 %v6165
    %9871 = vmatpush.bf16.msra.mxu0 %v6156
    %9872 = vmatpush.bf16.msra.mxu0 %v6147
    %9873 = vmatpush.bf16.msra.mxu0 %v6138
    %9874 = vmatpush.bf16.msra.mxu0 %v6129
    %9875 = vmatpush.bf16.msra.mxu0 %v6120
    %9876 = vmatpush.bf16.msra.mxu0 %v6111
    %9877 = vmatmul.bf16.gmra.mxu0 %v9593
    %v9878 = vpop.f32.mrf.mxu0
    %v9879 = vadd.f32 0.0, %v9878
    %v9880 = vpop.f32.mrf.mxu0
    %9881 = vdwg.mxu0
    %9882 = vmatpush.bf16.msra.mxu0 %v6246
    %9883 = vmatpush.bf16.msra.mxu0 %v6237
    %9884 = vmatpush.bf16.msra.mxu0 %v6228
    %9885 = vmatpush.bf16.msra.mxu0 %v6219
    %9886 = vmatpush.bf16.msra.mxu0 %v6210
    %9887 = vmatpush.bf16.msra.mxu0 %v6201
    %9888 = vmatpush.bf16.msra.mxu0 %v6192
    %9889 = vmatpush.bf16.msra.mxu0 %v6183
    %9890 = vmatmul.bf16.gmra.mxu0 %v9594
    %v9891 = vpop.f32.mrf.mxu0
    %v9892 = vadd.f32 %v9879, %v9891
    %v9893 = vpop.f32.mrf.mxu0
    %9894 = vdwg.mxu0
    %9895 = vmatpush.bf16.msra.mxu0 %v6318
    %9896 = vmatpush.bf16.msra.mxu0 %v6309
    %9897 = vmatpush.bf16.msra.mxu0 %v6300
    %9898 = vmatpush.bf16.msra.mxu0 %v6291
    %9899 = vmatpush.bf16.msra.mxu0 %v6282
    %9900 = vmatpush.bf16.msra.mxu0 %v6273
    %9901 = vmatpush.bf16.msra.mxu0 %v6264
    %9902 = vmatpush.bf16.msra.mxu0 %v6255
    %9903 = vmatmul.bf16.gmra.mxu0 %v9595
    %v9904 = vpop.f32.mrf.mxu0
    %v9905 = vadd.f32 %v9892, %v9904
    %v9906 = vpop.f32.mrf.mxu0
    %9907 = vdwg.mxu0
    %9908 = vmatpush.bf16.msra.mxu0 %v6175
    %9909 = vmatpush.bf16.msra.mxu0 %v6166
    %9910 = vmatpush.bf16.msra.mxu0 %v6157
    %9911 = vmatpush.bf16.msra.mxu0 %v6148
    %9912 = vmatpush.bf16.msra.mxu0 %v6139
    %9913 = vmatpush.bf16.msra.mxu0 %v6130
    %9914 = vmatpush.bf16.msra.mxu0 %v6121
    %9915 = vmatpush.bf16.msra.mxu0 %v6112
    %9916 = vmatmul.bf16.gmra.mxu0 %v9593
    %v9917 = vpop.f32.mrf.mxu0
    %v9918 = vadd.f32 0.0, %v9917
    %v9919 = vpop.f32.mrf.mxu0
    %9920 = vdwg.mxu0
    %9921 = vmatpush.bf16.msra.mxu0 %v6247
    %9922 = vmatpush.bf16.msra.mxu0 %v6238
    %9923 = vmatpush.bf16.msra.mxu0 %v6229
    %9924 = vmatpush.bf16.msra.mxu0 %v6220
    %9925 = vmatpush.bf16.msra.mxu0 %v6211
    %9926 = vmatpush.bf16.msra.mxu0 %v6202
    %9927 = vmatpush.bf16.msra.mxu0 %v6193
    %9928 = vmatpush.bf16.msra.mxu0 %v6184
    %9929 = vmatmul.bf16.gmra.mxu0 %v9594
    %v9930 = vpop.f32.mrf.mxu0
    %v9931 = vadd.f32 %v9918, %v9930
    %v9932 = vpop.f32.mrf.mxu0
    %9933 = vdwg.mxu0
    %9934 = vmatpush.bf16.msra.mxu0 %v6319
    %9935 = vmatpush.bf16.msra.mxu0 %v6310
    %9936 = vmatpush.bf16.msra.mxu0 %v6301
    %9937 = vmatpush.bf16.msra.mxu0 %v6292
    %9938 = vmatpush.bf16.msra.mxu0 %v6283
    %9939 = vmatpush.bf16.msra.mxu0 %v6274
    %9940 = vmatpush.bf16.msra.mxu0 %v6265
    %9941 = vmatpush.bf16.msra.mxu0 %v6256
    %9942 = vmatmul.bf16.gmra.mxu0 %v9595
    %v9943 = vpop.f32.mrf.mxu0
    %v9944 = vadd.f32 %v9931, %v9943
    %v9945 = vpop.f32.mrf.mxu0
    %9946 = vdwg.mxu0
    %v9947 = vadd.f32 %v9584, %v9632
    %v9948 = vadd.f32 %v9585, %v9671
    %v9949 = vadd.f32 %v9586, %v9710
    %v9950 = vxor.u32 %v9947, 2147483648
    %v9951 = vxor.u32 %v9948, 2147483648
    %v9952 = vxor.u32 %v9949, 2147483648
    %v9953 = vmul.f32 %v9950, 1.442695
    %v9954 = vpow.pop %v9953
    %v9955 = vmul.f32 %v9951, 1.442695
    %v9956 = vpow.pop %v9955
    %v9957 = vmul.f32 %v9952, 1.442695
    %v9958 = vpow.pop %v9957
    %v9959 = vadd.f32 %v9954, 1.0
    %v9960 = vadd.f32 %v9956, 1.0
    %v9961 = vadd.f32 %v9958, 1.0
    %v9962 = vrcp.pop %v9959
    %v9963 = vmul.f32 %v9959, %v9962
    %v9964 = vsub.f32 1.0, %v9963
    %v9965 = vmul.f32 %v9962, %v9964
    %v9966 = vadd.f32 %v9962, %v9965
    %vm9967 = vweird.f32 %v9959
    %vm9968 = vweird.f32 %v9962
    %vm9969 = vmor %vm9967, %vm9968
    %v9970 = vsel %vm9969, %v9962, %v9966
    %v9971 = vand.u32 2147483647, %v9959
    %vm9972 = vcmp.eq.f32.partialorder %v9971, 8.507059e+37
    %v9973 = vand.u32 %v9959, 2147483648
    %v9974 = vor.u32 1.1754944e-38, %v9973
    %v9975 = vsel %vm9972, %v9974, %v9970
    %v9976 = vmul.f32 1.0, %v9975
    %v9977 = vrcp.pop %v9960
    %v9978 = vmul.f32 %v9960, %v9977
    %v9979 = vsub.f32 1.0, %v9978
    %v9980 = vmul.f32 %v9977, %v9979
    %v9981 = vadd.f32 %v9977, %v9980
    %vm9982 = vweird.f32 %v9960
    %vm9983 = vweird.f32 %v9977
    %vm9984 = vmor %vm9982, %vm9983
    %v9985 = vsel %vm9984, %v9977, %v9981
    %v9986 = vand.u32 2147483647, %v9960
    %vm9987 = vcmp.eq.f32.partialorder %v9986, 8.507059e+37
    %v9988 = vand.u32 %v9960, 2147483648
    %v9989 = vor.u32 1.1754944e-38, %v9988
    %v9990 = vsel %vm9987, %v9989, %v9985
    %v9991 = vmul.f32 1.0, %v9990
    %v9992 = vrcp.pop %v9961
    %v9993 = vmul.f32 %v9961, %v9992
    %v9994 = vsub.f32 1.0, %v9993
    %v9995 = vmul.f32 %v9992, %v9994
    %v9996 = vadd.f32 %v9992, %v9995
    %vm9997 = vweird.f32 %v9961
    %vm9998 = vweird.f32 %v9992
    %vm9999 = vmor %vm9997, %vm9998
    %v10000 = vsel %vm9999, %v9992, %v9996
    %v10001 = vand.u32 2147483647, %v9961
    %vm10002 = vcmp.eq.f32.partialorder %v10001, 8.507059e+37
    %v10003 = vand.u32 %v9961, 2147483648
    %v10004 = vor.u32 1.1754944e-38, %v10003
    %v10005 = vsel %vm10002, %v10004, %v10000
    %v10006 = vmul.f32 1.0, %v10005
    %v10007 = vadd.f32 %v9587, %v9749
    %v10008 = vadd.f32 %v9588, %v9788
    %v10009 = vadd.f32 %v9589, %v9827
    %v10010 = vxor.u32 %v10007, 2147483648
    %v10011 = vxor.u32 %v10008, 2147483648
    %v10012 = vxor.u32 %v10009, 2147483648
    %v10013 = vmul.f32 %v10010, 1.442695
    %v10014 = vpow.pop %v10013
    %v10015 = vmul.f32 %v10011, 1.442695
    %v10016 = vpow.pop %v10015
    %v10017 = vmul.f32 %v10012, 1.442695
    %v10018 = vpow.pop %v10017
    %v10019 = vadd.f32 %v10014, 1.0
    %v10020 = vadd.f32 %v10016, 1.0
    %v10021 = vadd.f32 %v10018, 1.0
    %v10022 = vrcp.pop %v10019
    %v10023 = vmul.f32 %v10019, %v10022
    %v10024 = vsub.f32 1.0, %v10023
    %v10025 = vmul.f32 %v10022, %v10024
    %v10026 = vadd.f32 %v10022, %v10025
    %vm10027 = vweird.f32 %v10019
    %vm10028 = vweird.f32 %v10022
    %vm10029 = vmor %vm10027, %vm10028
    %v10030 = vsel %vm10029, %v10022, %v10026
    %v10031 = vand.u32 2147483647, %v10019
    %vm10032 = vcmp.eq.f32.partialorder %v10031, 8.507059e+37
    %v10033 = vand.u32 %v10019, 2147483648
    %v10034 = vor.u32 1.1754944e-38, %v10033
    %v10035 = vsel %vm10032, %v10034, %v10030
    %v10036 = vmul.f32 1.0, %v10035
    %v10037 = vrcp.pop %v10020
    %v10038 = vmul.f32 %v10020, %v10037
    %v10039 = vsub.f32 1.0, %v10038
    %v10040 = vmul.f32 %v10037, %v10039
    %v10041 = vadd.f32 %v10037, %v10040
    %vm10042 = vweird.f32 %v10020
    %vm10043 = vweird.f32 %v10037
    %vm10044 = vmor %vm10042, %vm10043
    %v10045 = vsel %vm10044, %v10037, %v10041
    %v10046 = vand.u32 2147483647, %v10020
    %vm10047 = vcmp.eq.f32.partialorder %v10046, 8.507059e+37
    %v10048 = vand.u32 %v10020, 2147483648
    %v10049 = vor.u32 1.1754944e-38, %v10048
    %v10050 = vsel %vm10047, %v10049, %v10045
    %v10051 = vmul.f32 1.0, %v10050
    %v10052 = vrcp.pop %v10021
    %v10053 = vmul.f32 %v10021, %v10052
    %v10054 = vsub.f32 1.0, %v10053
    %v10055 = vmul.f32 %v10052, %v10054
    %v10056 = vadd.f32 %v10052, %v10055
    %vm10057 = vweird.f32 %v10021
    %vm10058 = vweird.f32 %v10052
    %vm10059 = vmor %vm10057, %vm10058
    %v10060 = vsel %vm10059, %v10052, %v10056
    %v10061 = vand.u32 2147483647, %v10021
    %vm10062 = vcmp.eq.f32.partialorder %v10061, 8.507059e+37
    %v10063 = vand.u32 %v10021, 2147483648
    %v10064 = vor.u32 1.1754944e-38, %v10063
    %v10065 = vsel %vm10062, %v10064, %v10060
    %v10066 = vmul.f32 1.0, %v10065
    %v10067 = vadd.f32 %v9866, %v5417
    %v10068 = vadd.f32 %v9905, %v5418
    %v10069 = vadd.f32 %v9944, %v5419
    %v10070 = vmul.f32 %v9976, %v10067
    %v10071 = vmul.f32 %v9991, %v10068
    %v10072 = vmul.f32 %v10006, %v10069
    %v10073 = vadd.f32 %v9590, %v10070
    %v10074 = vadd.f32 %v9591, %v10071
    %v10075 = vadd.f32 %v9592, %v10072
    %v10076 = vtanh.pop %v10073
    %v10077 = vtanh.pop %v10074
    %v10078 = vtanh.pop %v10075
    %v10079 = vsub.f32 1.0, %v10036
    %v10080 = vsub.f32 1.0, %v10051
    %v10081 = vsub.f32 1.0, %v10066
    %v10082 = vmul.f32 %v10079, %v10076
    %v10083 = vmul.f32 %v10080, %v10077
    %v10084 = vmul.f32 %v10081, %v10078
    %v10085 = vmul.f32 %v10036, %v9578
    %v10086 = vmul.f32 %v10051, %v9579
    %v10087 = vmul.f32 %v10066, %v9580
    %v10088 = vadd.f32 %v10082, %v10085
    %v10089 = vadd.f32 %v10083, %v10086
    %v10090 = vadd.f32 %v10084, %v10087
    %10091 = vst [vmem:[#allocation3 + $0x90] sm:$0xff] %v10088
    %10092 = vst [vmem:[#allocation3 + $0x98] sm:$0xff] %v10089
    %10093 = vst [vmem:[#allocation3 + $0xa0] sm:$0xff] %v10090
    %v10094 = vld [vmem:[#allocation2 + $0x1f8] sm:$0xff]
    %v10095 = vld [vmem:[#allocation2 + $0x200] sm:$0xff]
    %v10096 = vld [vmem:[#allocation2 + $0x208] sm:$0xff]
    %v10097 = vld [vmem:[#allocation2 + $0x210] sm:$0xff]
    %v10098 = vld [vmem:[#allocation2 + $0x218] sm:$0xff]
    %v10099 = vld [vmem:[#allocation2 + $0x220] sm:$0xff]
    %v10100 = vld [vmem:[#allocation2 + $0x228] sm:$0xff]
    %v10101 = vld [vmem:[#allocation2 + $0x230] sm:$0xff]
    %v10102 = vld [vmem:[#allocation2 + $0x238] sm:$0xff]
    %v10103 = vpack.c.bf16 %v10088, %v10088
    %v10104 = vpack.c.bf16 %v10089, %v10089
    %v10105 = vpack.c.bf16 %v10090, %v10090
    %10106 = vmatpush.bf16.msra.mxu0 %v6167
    %10107 = vmatpush.bf16.msra.mxu0 %v6158
    %10108 = vmatpush.bf16.msra.mxu0 %v6149
    %10109 = vmatpush.bf16.msra.mxu0 %v6140
    %10110 = vmatpush.bf16.msra.mxu0 %v6131
    %10111 = vmatpush.bf16.msra.mxu0 %v6122
    %10112 = vmatpush.bf16.msra.mxu0 %v6113
    %10113 = vmatpush.bf16.msra.mxu0 %v6104
    %10114 = vmatmul.bf16.gmra.mxu0 %v10103
    %v10115 = vpop.f32.mrf.mxu0
    %v10116 = vadd.f32 0.0, %v10115
    %v10117 = vpop.f32.mrf.mxu0
    %10118 = vdwg.mxu0
    %10119 = vmatpush.bf16.msra.mxu0 %v6239
    %10120 = vmatpush.bf16.msra.mxu0 %v6230
    %10121 = vmatpush.bf16.msra.mxu0 %v6221
    %10122 = vmatpush.bf16.msra.mxu0 %v6212
    %10123 = vmatpush.bf16.msra.mxu0 %v6203
    %10124 = vmatpush.bf16.msra.mxu0 %v6194
    %10125 = vmatpush.bf16.msra.mxu0 %v6185
    %10126 = vmatpush.bf16.msra.mxu0 %v6176
    %10127 = vmatmul.bf16.gmra.mxu0 %v10104
    %v10128 = vpop.f32.mrf.mxu0
    %v10129 = vadd.f32 %v10116, %v10128
    %v10130 = vpop.f32.mrf.mxu0
    %10131 = vdwg.mxu0
    %10132 = vmatpush.bf16.msra.mxu0 %v6311
    %10133 = vmatpush.bf16.msra.mxu0 %v6302
    %10134 = vmatpush.bf16.msra.mxu0 %v6293
    %10135 = vmatpush.bf16.msra.mxu0 %v6284
    %10136 = vmatpush.bf16.msra.mxu0 %v6275
    %10137 = vmatpush.bf16.msra.mxu0 %v6266
    %10138 = vmatpush.bf16.msra.mxu0 %v6257
    %10139 = vmatpush.bf16.msra.mxu0 %v6248
    %10140 = vmatmul.bf16.gmra.mxu0 %v10105
    %v10141 = vpop.f32.mrf.mxu0
    %v10142 = vadd.f32 %v10129, %v10141
    %v10143 = vpop.f32.mrf.mxu0
    %10144 = vdwg.mxu0
    %10145 = vmatpush.bf16.msra.mxu0 %v6168
    %10146 = vmatpush.bf16.msra.mxu0 %v6159
    %10147 = vmatpush.bf16.msra.mxu0 %v6150
    %10148 = vmatpush.bf16.msra.mxu0 %v6141
    %10149 = vmatpush.bf16.msra.mxu0 %v6132
    %10150 = vmatpush.bf16.msra.mxu0 %v6123
    %10151 = vmatpush.bf16.msra.mxu0 %v6114
    %10152 = vmatpush.bf16.msra.mxu0 %v6105
    %10153 = vmatmul.bf16.gmra.mxu0 %v10103
    %v10154 = vpop.f32.mrf.mxu0
    %v10155 = vadd.f32 0.0, %v10154
    %v10156 = vpop.f32.mrf.mxu0
    %10157 = vdwg.mxu0
    %10158 = vmatpush.bf16.msra.mxu0 %v6240
    %10159 = vmatpush.bf16.msra.mxu0 %v6231
    %10160 = vmatpush.bf16.msra.mxu0 %v6222
    %10161 = vmatpush.bf16.msra.mxu0 %v6213
    %10162 = vmatpush.bf16.msra.mxu0 %v6204
    %10163 = vmatpush.bf16.msra.mxu0 %v6195
    %10164 = vmatpush.bf16.msra.mxu0 %v6186
    %10165 = vmatpush.bf16.msra.mxu0 %v6177
    %10166 = vmatmul.bf16.gmra.mxu0 %v10104
    %v10167 = vpop.f32.mrf.mxu0
    %v10168 = vadd.f32 %v10155, %v10167
    %v10169 = vpop.f32.mrf.mxu0
    %10170 = vdwg.mxu0
    %10171 = vmatpush.bf16.msra.mxu0 %v6312
    %10172 = vmatpush.bf16.msra.mxu0 %v6303
    %10173 = vmatpush.bf16.msra.mxu0 %v6294
    %10174 = vmatpush.bf16.msra.mxu0 %v6285
    %10175 = vmatpush.bf16.msra.mxu0 %v6276
    %10176 = vmatpush.bf16.msra.mxu0 %v6267
    %10177 = vmatpush.bf16.msra.mxu0 %v6258
    %10178 = vmatpush.bf16.msra.mxu0 %v6249
    %10179 = vmatmul.bf16.gmra.mxu0 %v10105
    %v10180 = vpop.f32.mrf.mxu0
    %v10181 = vadd.f32 %v10168, %v10180
    %v10182 = vpop.f32.mrf.mxu0
    %10183 = vdwg.mxu0
    %10184 = vmatpush.bf16.msra.mxu0 %v6169
    %10185 = vmatpush.bf16.msra.mxu0 %v6160
    %10186 = vmatpush.bf16.msra.mxu0 %v6151
    %10187 = vmatpush.bf16.msra.mxu0 %v6142
    %10188 = vmatpush.bf16.msra.mxu0 %v6133
    %10189 = vmatpush.bf16.msra.mxu0 %v6124
    %10190 = vmatpush.bf16.msra.mxu0 %v6115
    %10191 = vmatpush.bf16.msra.mxu0 %v6106
    %10192 = vmatmul.bf16.gmra.mxu0 %v10103
    %v10193 = vpop.f32.mrf.mxu0
    %v10194 = vadd.f32 0.0, %v10193
    %v10195 = vpop.f32.mrf.mxu0
    %10196 = vdwg.mxu0
    %10197 = vmatpush.bf16.msra.mxu0 %v6241
    %10198 = vmatpush.bf16.msra.mxu0 %v6232
    %10199 = vmatpush.bf16.msra.mxu0 %v6223
    %10200 = vmatpush.bf16.msra.mxu0 %v6214
    %10201 = vmatpush.bf16.msra.mxu0 %v6205
    %10202 = vmatpush.bf16.msra.mxu0 %v6196
    %10203 = vmatpush.bf16.msra.mxu0 %v6187
    %10204 = vmatpush.bf16.msra.mxu0 %v6178
    %10205 = vmatmul.bf16.gmra.mxu0 %v10104
    %v10206 = vpop.f32.mrf.mxu0
    %v10207 = vadd.f32 %v10194, %v10206
    %v10208 = vpop.f32.mrf.mxu0
    %10209 = vdwg.mxu0
    %10210 = vmatpush.bf16.msra.mxu0 %v6313
    %10211 = vmatpush.bf16.msra.mxu0 %v6304
    %10212 = vmatpush.bf16.msra.mxu0 %v6295
    %10213 = vmatpush.bf16.msra.mxu0 %v6286
    %10214 = vmatpush.bf16.msra.mxu0 %v6277
    %10215 = vmatpush.bf16.msra.mxu0 %v6268
    %10216 = vmatpush.bf16.msra.mxu0 %v6259
    %10217 = vmatpush.bf16.msra.mxu0 %v6250
    %10218 = vmatmul.bf16.gmra.mxu0 %v10105
    %v10219 = vpop.f32.mrf.mxu0
    %v10220 = vadd.f32 %v10207, %v10219
    %v10221 = vpop.f32.mrf.mxu0
    %10222 = vdwg.mxu0
    %10223 = vmatpush.bf16.msra.mxu0 %v6170
    %10224 = vmatpush.bf16.msra.mxu0 %v6161
    %10225 = vmatpush.bf16.msra.mxu0 %v6152
    %10226 = vmatpush.bf16.msra.mxu0 %v6143
    %10227 = vmatpush.bf16.msra.mxu0 %v6134
    %10228 = vmatpush.bf16.msra.mxu0 %v6125
    %10229 = vmatpush.bf16.msra.mxu0 %v6116
    %10230 = vmatpush.bf16.msra.mxu0 %v6107
    %10231 = vmatmul.bf16.gmra.mxu0 %v10103
    %v10232 = vpop.f32.mrf.mxu0
    %v10233 = vadd.f32 0.0, %v10232
    %v10234 = vpop.f32.mrf.mxu0
    %10235 = vdwg.mxu0
    %10236 = vmatpush.bf16.msra.mxu0 %v6242
    %10237 = vmatpush.bf16.msra.mxu0 %v6233
    %10238 = vmatpush.bf16.msra.mxu0 %v6224
    %10239 = vmatpush.bf16.msra.mxu0 %v6215
    %10240 = vmatpush.bf16.msra.mxu0 %v6206
    %10241 = vmatpush.bf16.msra.mxu0 %v6197
    %10242 = vmatpush.bf16.msra.mxu0 %v6188
    %10243 = vmatpush.bf16.msra.mxu0 %v6179
    %10244 = vmatmul.bf16.gmra.mxu0 %v10104
    %v10245 = vpop.f32.mrf.mxu0
    %v10246 = vadd.f32 %v10233, %v10245
    %v10247 = vpop.f32.mrf.mxu0
    %10248 = vdwg.mxu0
    %10249 = vmatpush.bf16.msra.mxu0 %v6314
    %10250 = vmatpush.bf16.msra.mxu0 %v6305
    %10251 = vmatpush.bf16.msra.mxu0 %v6296
    %10252 = vmatpush.bf16.msra.mxu0 %v6287
    %10253 = vmatpush.bf16.msra.mxu0 %v6278
    %10254 = vmatpush.bf16.msra.mxu0 %v6269
    %10255 = vmatpush.bf16.msra.mxu0 %v6260
    %10256 = vmatpush.bf16.msra.mxu0 %v6251
    %10257 = vmatmul.bf16.gmra.mxu0 %v10105
    %v10258 = vpop.f32.mrf.mxu0
    %v10259 = vadd.f32 %v10246, %v10258
    %v10260 = vpop.f32.mrf.mxu0
    %10261 = vdwg.mxu0
    %10262 = vmatpush.bf16.msra.mxu0 %v6171
    %10263 = vmatpush.bf16.msra.mxu0 %v6162
    %10264 = vmatpush.bf16.msra.mxu0 %v6153
    %10265 = vmatpush.bf16.msra.mxu0 %v6144
    %10266 = vmatpush.bf16.msra.mxu0 %v6135
    %10267 = vmatpush.bf16.msra.mxu0 %v6126
    %10268 = vmatpush.bf16.msra.mxu0 %v6117
    %10269 = vmatpush.bf16.msra.mxu0 %v6108
    %10270 = vmatmul.bf16.gmra.mxu0 %v10103
    %v10271 = vpop.f32.mrf.mxu0
    %v10272 = vadd.f32 0.0, %v10271
    %v10273 = vpop.f32.mrf.mxu0
    %10274 = vdwg.mxu0
    %10275 = vmatpush.bf16.msra.mxu0 %v6243
    %10276 = vmatpush.bf16.msra.mxu0 %v6234
    %10277 = vmatpush.bf16.msra.mxu0 %v6225
    %10278 = vmatpush.bf16.msra.mxu0 %v6216
    %10279 = vmatpush.bf16.msra.mxu0 %v6207
    %10280 = vmatpush.bf16.msra.mxu0 %v6198
    %10281 = vmatpush.bf16.msra.mxu0 %v6189
    %10282 = vmatpush.bf16.msra.mxu0 %v6180
    %10283 = vmatmul.bf16.gmra.mxu0 %v10104
    %v10284 = vpop.f32.mrf.mxu0
    %v10285 = vadd.f32 %v10272, %v10284
    %v10286 = vpop.f32.mrf.mxu0
    %10287 = vdwg.mxu0
    %10288 = vmatpush.bf16.msra.mxu0 %v6315
    %10289 = vmatpush.bf16.msra.mxu0 %v6306
    %10290 = vmatpush.bf16.msra.mxu0 %v6297
    %10291 = vmatpush.bf16.msra.mxu0 %v6288
    %10292 = vmatpush.bf16.msra.mxu0 %v6279
    %10293 = vmatpush.bf16.msra.mxu0 %v6270
    %10294 = vmatpush.bf16.msra.mxu0 %v6261
    %10295 = vmatpush.bf16.msra.mxu0 %v6252
    %10296 = vmatmul.bf16.gmra.mxu0 %v10105
    %v10297 = vpop.f32.mrf.mxu0
    %v10298 = vadd.f32 %v10285, %v10297
    %v10299 = vpop.f32.mrf.mxu0
    %10300 = vdwg.mxu0
    %10301 = vmatpush.bf16.msra.mxu0 %v6172
    %10302 = vmatpush.bf16.msra.mxu0 %v6163
    %10303 = vmatpush.bf16.msra.mxu0 %v6154
    %10304 = vmatpush.bf16.msra.mxu0 %v6145
    %10305 = vmatpush.bf16.msra.mxu0 %v6136
    %10306 = vmatpush.bf16.msra.mxu0 %v6127
    %10307 = vmatpush.bf16.msra.mxu0 %v6118
    %10308 = vmatpush.bf16.msra.mxu0 %v6109
    %10309 = vmatmul.bf16.gmra.mxu0 %v10103
    %v10310 = vpop.f32.mrf.mxu0
    %v10311 = vadd.f32 0.0, %v10310
    %v10312 = vpop.f32.mrf.mxu0
    %10313 = vdwg.mxu0
    %10314 = vmatpush.bf16.msra.mxu0 %v6244
    %10315 = vmatpush.bf16.msra.mxu0 %v6235
    %10316 = vmatpush.bf16.msra.mxu0 %v6226
    %10317 = vmatpush.bf16.msra.mxu0 %v6217
    %10318 = vmatpush.bf16.msra.mxu0 %v6208
    %10319 = vmatpush.bf16.msra.mxu0 %v6199
    %10320 = vmatpush.bf16.msra.mxu0 %v6190
    %10321 = vmatpush.bf16.msra.mxu0 %v6181
    %10322 = vmatmul.bf16.gmra.mxu0 %v10104
    %v10323 = vpop.f32.mrf.mxu0
    %v10324 = vadd.f32 %v10311, %v10323
    %v10325 = vpop.f32.mrf.mxu0
    %10326 = vdwg.mxu0
    %10327 = vmatpush.bf16.msra.mxu0 %v6316
    %10328 = vmatpush.bf16.msra.mxu0 %v6307
    %10329 = vmatpush.bf16.msra.mxu0 %v6298
    %10330 = vmatpush.bf16.msra.mxu0 %v6289
    %10331 = vmatpush.bf16.msra.mxu0 %v6280
    %10332 = vmatpush.bf16.msra.mxu0 %v6271
    %10333 = vmatpush.bf16.msra.mxu0 %v6262
    %10334 = vmatpush.bf16.msra.mxu0 %v6253
    %10335 = vmatmul.bf16.gmra.mxu0 %v10105
    %v10336 = vpop.f32.mrf.mxu0
    %v10337 = vadd.f32 %v10324, %v10336
    %v10338 = vpop.f32.mrf.mxu0
    %10339 = vdwg.mxu0
    %10340 = vmatpush.bf16.msra.mxu0 %v6173
    %10341 = vmatpush.bf16.msra.mxu0 %v6164
    %10342 = vmatpush.bf16.msra.mxu0 %v6155
    %10343 = vmatpush.bf16.msra.mxu0 %v6146
    %10344 = vmatpush.bf16.msra.mxu0 %v6137
    %10345 = vmatpush.bf16.msra.mxu0 %v6128
    %10346 = vmatpush.bf16.msra.mxu0 %v6119
    %10347 = vmatpush.bf16.msra.mxu0 %v6110
    %10348 = vmatmul.bf16.gmra.mxu0 %v10103
    %v10349 = vpop.f32.mrf.mxu0
    %v10350 = vadd.f32 0.0, %v10349
    %v10351 = vpop.f32.mrf.mxu0
    %10352 = vdwg.mxu0
    %10353 = vmatpush.bf16.msra.mxu0 %v6245
    %10354 = vmatpush.bf16.msra.mxu0 %v6236
    %10355 = vmatpush.bf16.msra.mxu0 %v6227
    %10356 = vmatpush.bf16.msra.mxu0 %v6218
    %10357 = vmatpush.bf16.msra.mxu0 %v6209
    %10358 = vmatpush.bf16.msra.mxu0 %v6200
    %10359 = vmatpush.bf16.msra.mxu0 %v6191
    %10360 = vmatpush.bf16.msra.mxu0 %v6182
    %10361 = vmatmul.bf16.gmra.mxu0 %v10104
    %v10362 = vpop.f32.mrf.mxu0
    %v10363 = vadd.f32 %v10350, %v10362
    %v10364 = vpop.f32.mrf.mxu0
    %10365 = vdwg.mxu0
    %10366 = vmatpush.bf16.msra.mxu0 %v6317
    %10367 = vmatpush.bf16.msra.mxu0 %v6308
    %10368 = vmatpush.bf16.msra.mxu0 %v6299
    %10369 = vmatpush.bf16.msra.mxu0 %v6290
    %10370 = vmatpush.bf16.msra.mxu0 %v6281
    %10371 = vmatpush.bf16.msra.mxu0 %v6272
    %10372 = vmatpush.bf16.msra.mxu0 %v6263
    %10373 = vmatpush.bf16.msra.mxu0 %v6254
    %10374 = vmatmul.bf16.gmra.mxu0 %v10105
    %v10375 = vpop.f32.mrf.mxu0
    %v10376 = vadd.f32 %v10363, %v10375
    %v10377 = vpop.f32.mrf.mxu0
    %10378 = vdwg.mxu0
    %10379 = vmatpush.bf16.msra.mxu0 %v6174
    %10380 = vmatpush.bf16.msra.mxu0 %v6165
    %10381 = vmatpush.bf16.msra.mxu0 %v6156
    %10382 = vmatpush.bf16.msra.mxu0 %v6147
    %10383 = vmatpush.bf16.msra.mxu0 %v6138
    %10384 = vmatpush.bf16.msra.mxu0 %v6129
    %10385 = vmatpush.bf16.msra.mxu0 %v6120
    %10386 = vmatpush.bf16.msra.mxu0 %v6111
    %10387 = vmatmul.bf16.gmra.mxu0 %v10103
    %v10388 = vpop.f32.mrf.mxu0
    %v10389 = vadd.f32 0.0, %v10388
    %v10390 = vpop.f32.mrf.mxu0
    %10391 = vdwg.mxu0
    %10392 = vmatpush.bf16.msra.mxu0 %v6246
    %10393 = vmatpush.bf16.msra.mxu0 %v6237
    %10394 = vmatpush.bf16.msra.mxu0 %v6228
    %10395 = vmatpush.bf16.msra.mxu0 %v6219
    %10396 = vmatpush.bf16.msra.mxu0 %v6210
    %10397 = vmatpush.bf16.msra.mxu0 %v6201
    %10398 = vmatpush.bf16.msra.mxu0 %v6192
    %10399 = vmatpush.bf16.msra.mxu0 %v6183
    %10400 = vmatmul.bf16.gmra.mxu0 %v10104
    %v10401 = vpop.f32.mrf.mxu0
    %v10402 = vadd.f32 %v10389, %v10401
    %v10403 = vpop.f32.mrf.mxu0
    %10404 = vdwg.mxu0
    %10405 = vmatpush.bf16.msra.mxu0 %v6318
    %10406 = vmatpush.bf16.msra.mxu0 %v6309
    %10407 = vmatpush.bf16.msra.mxu0 %v6300
    %10408 = vmatpush.bf16.msra.mxu0 %v6291
    %10409 = vmatpush.bf16.msra.mxu0 %v6282
    %10410 = vmatpush.bf16.msra.mxu0 %v6273
    %10411 = vmatpush.bf16.msra.mxu0 %v6264
    %10412 = vmatpush.bf16.msra.mxu0 %v6255
    %10413 = vmatmul.bf16.gmra.mxu0 %v10105
    %v10414 = vpop.f32.mrf.mxu0
    %v10415 = vadd.f32 %v10402, %v10414
    %v10416 = vpop.f32.mrf.mxu0
    %10417 = vdwg.mxu0
    %10418 = vmatpush.bf16.msra.mxu0 %v6175
    %10419 = vmatpush.bf16.msra.mxu0 %v6166
    %10420 = vmatpush.bf16.msra.mxu0 %v6157
    %10421 = vmatpush.bf16.msra.mxu0 %v6148
    %10422 = vmatpush.bf16.msra.mxu0 %v6139
    %10423 = vmatpush.bf16.msra.mxu0 %v6130
    %10424 = vmatpush.bf16.msra.mxu0 %v6121
    %10425 = vmatpush.bf16.msra.mxu0 %v6112
    %10426 = vmatmul.bf16.gmra.mxu0 %v10103
    %v10427 = vpop.f32.mrf.mxu0
    %v10428 = vadd.f32 0.0, %v10427
    %v10429 = vpop.f32.mrf.mxu0
    %10430 = vdwg.mxu0
    %10431 = vmatpush.bf16.msra.mxu0 %v6247
    %10432 = vmatpush.bf16.msra.mxu0 %v6238
    %10433 = vmatpush.bf16.msra.mxu0 %v6229
    %10434 = vmatpush.bf16.msra.mxu0 %v6220
    %10435 = vmatpush.bf16.msra.mxu0 %v6211
    %10436 = vmatpush.bf16.msra.mxu0 %v6202
    %10437 = vmatpush.bf16.msra.mxu0 %v6193
    %10438 = vmatpush.bf16.msra.mxu0 %v6184
    %10439 = vmatmul.bf16.gmra.mxu0 %v10104
    %v10440 = vpop.f32.mrf.mxu0
    %v10441 = vadd.f32 %v10428, %v10440
    %v10442 = vpop.f32.mrf.mxu0
    %10443 = vdwg.mxu0
    %10444 = vmatpush.bf16.msra.mxu0 %v6319
    %10445 = vmatpush.bf16.msra.mxu0 %v6310
    %10446 = vmatpush.bf16.msra.mxu0 %v6301
    %10447 = vmatpush.bf16.msra.mxu0 %v6292
    %10448 = vmatpush.bf16.msra.mxu0 %v6283
    %10449 = vmatpush.bf16.msra.mxu0 %v6274
    %10450 = vmatpush.bf16.msra.mxu0 %v6265
    %10451 = vmatpush.bf16.msra.mxu0 %v6256
    %10452 = vmatmul.bf16.gmra.mxu0 %v10105
    %v10453 = vpop.f32.mrf.mxu0
    %v10454 = vadd.f32 %v10441, %v10453
    %v10455 = vpop.f32.mrf.mxu0
    %10456 = vdwg.mxu0
    %v10457 = vadd.f32 %v10094, %v10142
    %v10458 = vadd.f32 %v10095, %v10181
    %v10459 = vadd.f32 %v10096, %v10220
    %v10460 = vxor.u32 %v10457, 2147483648
    %v10461 = vxor.u32 %v10458, 2147483648
    %v10462 = vxor.u32 %v10459, 2147483648
    %v10463 = vmul.f32 %v10460, 1.442695
    %v10464 = vpow.pop %v10463
    %v10465 = vmul.f32 %v10461, 1.442695
    %v10466 = vpow.pop %v10465
    %v10467 = vmul.f32 %v10462, 1.442695
    %v10468 = vpow.pop %v10467
    %v10469 = vadd.f32 %v10464, 1.0
    %v10470 = vadd.f32 %v10466, 1.0
    %v10471 = vadd.f32 %v10468, 1.0
    %v10472 = vrcp.pop %v10469
    %v10473 = vmul.f32 %v10469, %v10472
    %v10474 = vsub.f32 1.0, %v10473
    %v10475 = vmul.f32 %v10472, %v10474
    %v10476 = vadd.f32 %v10472, %v10475
    %vm10477 = vweird.f32 %v10469
    %vm10478 = vweird.f32 %v10472
    %vm10479 = vmor %vm10477, %vm10478
    %v10480 = vsel %vm10479, %v10472, %v10476
    %v10481 = vand.u32 2147483647, %v10469
    %vm10482 = vcmp.eq.f32.partialorder %v10481, 8.507059e+37
    %v10483 = vand.u32 %v10469, 2147483648
    %v10484 = vor.u32 1.1754944e-38, %v10483
    %v10485 = vsel %vm10482, %v10484, %v10480
    %v10486 = vmul.f32 1.0, %v10485
    %v10487 = vrcp.pop %v10470
    %v10488 = vmul.f32 %v10470, %v10487
    %v10489 = vsub.f32 1.0, %v10488
    %v10490 = vmul.f32 %v10487, %v10489
    %v10491 = vadd.f32 %v10487, %v10490
    %vm10492 = vweird.f32 %v10470
    %vm10493 = vweird.f32 %v10487
    %vm10494 = vmor %vm10492, %vm10493
    %v10495 = vsel %vm10494, %v10487, %v10491
    %v10496 = vand.u32 2147483647, %v10470
    %vm10497 = vcmp.eq.f32.partialorder %v10496, 8.507059e+37
    %v10498 = vand.u32 %v10470, 2147483648
    %v10499 = vor.u32 1.1754944e-38, %v10498
    %v10500 = vsel %vm10497, %v10499, %v10495
    %v10501 = vmul.f32 1.0, %v10500
    %v10502 = vrcp.pop %v10471
    %v10503 = vmul.f32 %v10471, %v10502
    %v10504 = vsub.f32 1.0, %v10503
    %v10505 = vmul.f32 %v10502, %v10504
    %v10506 = vadd.f32 %v10502, %v10505
    %vm10507 = vweird.f32 %v10471
    %vm10508 = vweird.f32 %v10502
    %vm10509 = vmor %vm10507, %vm10508
    %v10510 = vsel %vm10509, %v10502, %v10506
    %v10511 = vand.u32 2147483647, %v10471
    %vm10512 = vcmp.eq.f32.partialorder %v10511, 8.507059e+37
    %v10513 = vand.u32 %v10471, 2147483648
    %v10514 = vor.u32 1.1754944e-38, %v10513
    %v10515 = vsel %vm10512, %v10514, %v10510
    %v10516 = vmul.f32 1.0, %v10515
    %v10517 = vadd.f32 %v10097, %v10259
    %v10518 = vadd.f32 %v10098, %v10298
    %v10519 = vadd.f32 %v10099, %v10337
    %v10520 = vxor.u32 %v10517, 2147483648
    %v10521 = vxor.u32 %v10518, 2147483648
    %v10522 = vxor.u32 %v10519, 2147483648
    %v10523 = vmul.f32 %v10520, 1.442695
    %v10524 = vpow.pop %v10523
    %v10525 = vmul.f32 %v10521, 1.442695
    %v10526 = vpow.pop %v10525
    %v10527 = vmul.f32 %v10522, 1.442695
    %v10528 = vpow.pop %v10527
    %v10529 = vadd.f32 %v10524, 1.0
    %v10530 = vadd.f32 %v10526, 1.0
    %v10531 = vadd.f32 %v10528, 1.0
    %v10532 = vrcp.pop %v10529
    %v10533 = vmul.f32 %v10529, %v10532
    %v10534 = vsub.f32 1.0, %v10533
    %v10535 = vmul.f32 %v10532, %v10534
    %v10536 = vadd.f32 %v10532, %v10535
    %vm10537 = vweird.f32 %v10529
    %vm10538 = vweird.f32 %v10532
    %vm10539 = vmor %vm10537, %vm10538
    %v10540 = vsel %vm10539, %v10532, %v10536
    %v10541 = vand.u32 2147483647, %v10529
    %vm10542 = vcmp.eq.f32.partialorder %v10541, 8.507059e+37
    %v10543 = vand.u32 %v10529, 2147483648
    %v10544 = vor.u32 1.1754944e-38, %v10543
    %v10545 = vsel %vm10542, %v10544, %v10540
    %v10546 = vmul.f32 1.0, %v10545
    %v10547 = vrcp.pop %v10530
    %v10548 = vmul.f32 %v10530, %v10547
    %v10549 = vsub.f32 1.0, %v10548
    %v10550 = vmul.f32 %v10547, %v10549
    %v10551 = vadd.f32 %v10547, %v10550
    %vm10552 = vweird.f32 %v10530
    %vm10553 = vweird.f32 %v10547
    %vm10554 = vmor %vm10552, %vm10553
    %v10555 = vsel %vm10554, %v10547, %v10551
    %v10556 = vand.u32 2147483647, %v10530
    %vm10557 = vcmp.eq.f32.partialorder %v10556, 8.507059e+37
    %v10558 = vand.u32 %v10530, 2147483648
    %v10559 = vor.u32 1.1754944e-38, %v10558
    %v10560 = vsel %vm10557, %v10559, %v10555
    %v10561 = vmul.f32 1.0, %v10560
    %v10562 = vrcp.pop %v10531
    %v10563 = vmul.f32 %v10531, %v10562
    %v10564 = vsub.f32 1.0, %v10563
    %v10565 = vmul.f32 %v10562, %v10564
    %v10566 = vadd.f32 %v10562, %v10565
    %vm10567 = vweird.f32 %v10531
    %vm10568 = vweird.f32 %v10562
    %vm10569 = vmor %vm10567, %vm10568
    %v10570 = vsel %vm10569, %v10562, %v10566
    %v10571 = vand.u32 2147483647, %v10531
    %vm10572 = vcmp.eq.f32.partialorder %v10571, 8.507059e+37
    %v10573 = vand.u32 %v10531, 2147483648
    %v10574 = vor.u32 1.1754944e-38, %v10573
    %v10575 = vsel %vm10572, %v10574, %v10570
    %v10576 = vmul.f32 1.0, %v10575
    %v10577 = vadd.f32 %v10376, %v5417
    %v10578 = vadd.f32 %v10415, %v5418
    %v10579 = vadd.f32 %v10454, %v5419
    %v10580 = vmul.f32 %v10486, %v10577
    %v10581 = vmul.f32 %v10501, %v10578
    %v10582 = vmul.f32 %v10516, %v10579
    %v10583 = vadd.f32 %v10100, %v10580
    %v10584 = vadd.f32 %v10101, %v10581
    %v10585 = vadd.f32 %v10102, %v10582
    %v10586 = vtanh.pop %v10583
    %v10587 = vtanh.pop %v10584
    %v10588 = vtanh.pop %v10585
    %v10589 = vsub.f32 1.0, %v10546
    %v10590 = vsub.f32 1.0, %v10561
    %v10591 = vsub.f32 1.0, %v10576
    %v10592 = vmul.f32 %v10589, %v10586
    %v10593 = vmul.f32 %v10590, %v10587
    %v10594 = vmul.f32 %v10591, %v10588
    %v10595 = vmul.f32 %v10546, %v10088
    %v10596 = vmul.f32 %v10561, %v10089
    %v10597 = vmul.f32 %v10576, %v10090
    %v10598 = vadd.f32 %v10592, %v10595
    %v10599 = vadd.f32 %v10593, %v10596
    %v10600 = vadd.f32 %v10594, %v10597
    %10601 = vst [vmem:[#allocation3 + $0xa8] sm:$0xff] %v10598
    %10602 = vst [vmem:[#allocation3 + $0xb0] sm:$0xff] %v10599
    %10603 = vst [vmem:[#allocation3 + $0xb8] sm:$0xff] %v10600
    %v10604 = vld [vmem:[#allocation3] sm:$0xff]
    %v10605 = vld [vmem:[#allocation3 + $0x8] sm:$0xff]
    %v10606 = vld [vmem:[#allocation3 + $0x10] sm:$0xff]
    %v10607 = vld [vmem:[#allocation3 + $0x18] sm:$0xff]
    %v10608 = vld [vmem:[#allocation3 + $0x20] sm:$0xff]
    %v10609 = vld [vmem:[#allocation3 + $0x28] sm:$0xff]
    %v10610 = vld [vmem:[#allocation3 + $0x30] sm:$0xff]
    %v10611 = vld [vmem:[#allocation3 + $0x38] sm:$0xff]
    %v10612 = vld [vmem:[#allocation3 + $0x40] sm:$0xff]
    %v10613 = vld [vmem:[#allocation3 + $0x48] sm:$0xff]
    %v10614 = vld [vmem:[#allocation3 + $0x50] sm:$0xff]
    %v10615 = vld [vmem:[#allocation3 + $0x58] sm:$0xff]
    %v10616 = vld [vmem:[#allocation3 + $0x60] sm:$0xff]
    %v10617 = vld [vmem:[#allocation3 + $0x68] sm:$0xff]
    %v10618 = vld [vmem:[#allocation3 + $0x70] sm:$0xff]
    %v10619 = vld [vmem:[#allocation3 + $0x78] sm:$0xff]
    %v10620 = vld [vmem:[#allocation3 + $0x80] sm:$0xff]
    %v10621 = vld [vmem:[#allocation3 + $0x88] sm:$0xff]
    %v10622 = vld [vmem:[#allocation3 + $0x90] sm:$0xff]
    %v10623 = vld [vmem:[#allocation3 + $0x98] sm:$0xff]
    %v10624 = vld [vmem:[#allocation3 + $0xa0] sm:$0xff]
    %v10625 = vld [vmem:[#allocation3 + $0xa8] sm:$0xff]
    %v10626 = vld [vmem:[#allocation3 + $0xb0] sm:$0xff]
    %v10627 = vld [vmem:[#allocation3 + $0xb8] sm:$0xff]
    %v10628 = vpack.c.bf16 %v10607, %v10604
    %v10629 = vpack.c.bf16 %v10608, %v10605
    %v10630 = vpack.c.bf16 %v10609, %v10606
    %v10631 = vpack.c.bf16 %v10613, %v10610
    %v10632 = vpack.c.bf16 %v10614, %v10611
    %v10633 = vpack.c.bf16 %v10615, %v10612
    %v10634 = vpack.c.bf16 %v10619, %v10616
    %v10635 = vpack.c.bf16 %v10620, %v10617
    %v10636 = vpack.c.bf16 %v10621, %v10618
    %v10637 = vpack.c.bf16 %v10625, %v10622
    %v10638 = vpack.c.bf16 %v10626, %v10623
    %v10639 = vpack.c.bf16 %v10627, %v10624
    %v10640 = vld [vmem:[%s9] sm:$0xf]
    %v10641 = vld [vmem:[%s9 + $0x4] sm:$0xf]
    %v10642 = vld [vmem:[%s9 + $0x8] sm:$0xf]
    %v10643 = vld [vmem:[%s9 + $0xc] sm:$0xf]
    %v10644 = vld [vmem:[%s9 + $0x10] sm:$0xf]
    %v10645 = vld [vmem:[%s9 + $0x14] sm:$0xf]
    %v10646 = vld [vmem:[%s9 + $0x18] sm:$0xf]
    %v10647 = vld [vmem:[%s9 + $0x1c] sm:$0xf]
    %v10648 = vld [vmem:[%s9 + $0x20] sm:$0xf]
    %v10649 = vld [vmem:[%s9 + $0x24] sm:$0xf]
    %v10650 = vld [vmem:[%s9 + $0x28] sm:$0xf]
    %v10651 = vld [vmem:[%s9 + $0x2c] sm:$0xf]
    %v10652 = vld [vmem:[%s9 + $0x30] sm:$0xf]
    %v10653 = vld [vmem:[%s9 + $0x34] sm:$0xf]
    %v10654 = vld [vmem:[%s9 + $0x38] sm:$0xf]
    %v10655 = vld [vmem:[%s9 + $0x3c] sm:$0xf]
    %v10656 = vld [vmem:[%s9 + $0x40] sm:$0xf]
    %v10657 = vld [vmem:[%s9 + $0x44] sm:$0xf]
    %v10658 = vld [vmem:[%s9 + $0x48] sm:$0xf]
    %v10659 = vld [vmem:[%s9 + $0x4c] sm:$0xf]
    %v10660 = vld [vmem:[%s9 + $0x50] sm:$0xf]
    %v10661 = vld [vmem:[%s9 + $0x54] sm:$0xf]
    %v10662 = vld [vmem:[%s9 + $0x58] sm:$0xf]
    %v10663 = vld [vmem:[%s9 + $0x5c] sm:$0xf]
    %v10664 = vld [vmem:[%s9 + $0x60] sm:$0xf]
    %v10665 = vld [vmem:[%s9 + $0x64] sm:$0xf]
    %v10666 = vld [vmem:[%s9 + $0x68] sm:$0xf]
    %v10667 = vld [vmem:[%s9 + $0x6c] sm:$0xf]
    %v10668 = vld [vmem:[%s9 + $0x70] sm:$0xf]
    %v10669 = vld [vmem:[%s9 + $0x74] sm:$0xf]
    %v10670 = vld [vmem:[%s9 + $0x78] sm:$0xf]
    %v10671 = vld [vmem:[%s9 + $0x7c] sm:$0xf]
    %v10672 = vld [vmem:[%s9 + $0x80] sm:$0xf]
    %v10673 = vld [vmem:[%s9 + $0x84] sm:$0xf]
    %v10674 = vld [vmem:[%s9 + $0x88] sm:$0xf]
    %v10675 = vld [vmem:[%s9 + $0x8c] sm:$0xf]
    %v10676 = vld [vmem:[%s9 + $0x90] sm:$0xf]
    %v10677 = vld [vmem:[%s9 + $0x94] sm:$0xf]
    %v10678 = vld [vmem:[%s9 + $0x98] sm:$0xf]
    %v10679 = vld [vmem:[%s9 + $0x9c] sm:$0xf]
    %v10680 = vld [vmem:[%s9 + $0xa0] sm:$0xf]
    %v10681 = vld [vmem:[%s9 + $0xa4] sm:$0xf]
    %v10682 = vld [vmem:[%s9 + $0xa8] sm:$0xf]
    %v10683 = vld [vmem:[%s9 + $0xac] sm:$0xf]
    %v10684 = vld [vmem:[%s9 + $0xb0] sm:$0xf]
    %v10685 = vld [vmem:[%s9 + $0xb4] sm:$0xf]
    %v10686 = vld [vmem:[%s9 + $0xb8] sm:$0xf]
    %v10687 = vld [vmem:[%s9 + $0xbc] sm:$0xf]
    %v10688 = vld [vmem:[%s10] sm:$0x1]
    %v10690 = vperm.slane %v10688, 0
    %v10740 = vunpack.c.l.b16 %v10640
    %v10741 = vunpack.c.l.b16 %v10641
    %v10742 = vunpack.c.l.b16 %v10642
    %v10743 = vunpack.c.l.b16 %v10643
    %v10744 = vunpack.c.l.b16 %v10644
    %v10745 = vunpack.c.l.b16 %v10645
    %v10746 = vunpack.c.l.b16 %v10646
    %v10747 = vunpack.c.l.b16 %v10647
    %v10748 = vunpack.c.l.b16 %v10648
    %v10749 = vunpack.c.l.b16 %v10649
    %v10750 = vunpack.c.l.b16 %v10650
    %v10751 = vunpack.c.l.b16 %v10651
    %v10752 = vunpack.c.l.b16 %v10652
    %v10753 = vunpack.c.l.b16 %v10653
    %v10754 = vunpack.c.l.b16 %v10654
    %v10755 = vunpack.c.l.b16 %v10655
    %v10756 = vunpack.c.l.b16 %v10656
    %v10757 = vunpack.c.l.b16 %v10657
    %v10758 = vunpack.c.l.b16 %v10658
    %v10759 = vunpack.c.l.b16 %v10659
    %v10760 = vunpack.c.l.b16 %v10660
    %v10761 = vunpack.c.l.b16 %v10661
    %v10762 = vunpack.c.l.b16 %v10662
    %v10763 = vunpack.c.l.b16 %v10663
    %v10764 = vunpack.c.l.b16 %v10664
    %v10765 = vunpack.c.l.b16 %v10665
    %v10766 = vunpack.c.l.b16 %v10666
    %v10767 = vunpack.c.l.b16 %v10667
    %v10768 = vunpack.c.l.b16 %v10668
    %v10769 = vunpack.c.l.b16 %v10669
    %v10770 = vunpack.c.l.b16 %v10670
    %v10771 = vunpack.c.l.b16 %v10671
    %v10772 = vunpack.c.l.b16 %v10672
    %v10773 = vunpack.c.l.b16 %v10673
    %v10774 = vunpack.c.l.b16 %v10674
    %v10775 = vunpack.c.l.b16 %v10675
    %v10776 = vunpack.c.l.b16 %v10676
    %v10777 = vunpack.c.l.b16 %v10677
    %v10778 = vunpack.c.l.b16 %v10678
    %v10779 = vunpack.c.l.b16 %v10679
    %v10780 = vunpack.c.l.b16 %v10680
    %v10781 = vunpack.c.l.b16 %v10681
    %v10782 = vunpack.c.l.b16 %v10682
    %v10783 = vunpack.c.l.b16 %v10683
    %v10784 = vunpack.c.l.b16 %v10684
    %v10785 = vunpack.c.l.b16 %v10685
    %v10786 = vunpack.c.l.b16 %v10686
    %v10787 = vunpack.c.l.b16 %v10687
    %v10788 = vpack.c.b16 %v10741, %v10740
    %v10789 = vpack.c.b16 %v10743, %v10742
    %v10790 = vpack.c.b16 %v10745, %v10744
    %v10791 = vpack.c.b16 %v10747, %v10746
    %v10792 = vpack.c.b16 %v10749, %v10748
    %v10793 = vpack.c.b16 %v10751, %v10750
    %v10794 = vpack.c.b16 %v10753, %v10752
    %v10795 = vpack.c.b16 %v10755, %v10754
    %v10796 = vpack.c.b16 %v10757, %v10756
    %v10797 = vpack.c.b16 %v10759, %v10758
    %v10798 = vpack.c.b16 %v10761, %v10760
    %v10799 = vpack.c.b16 %v10763, %v10762
    %v10800 = vpack.c.b16 %v10765, %v10764
    %v10801 = vpack.c.b16 %v10767, %v10766
    %v10802 = vpack.c.b16 %v10769, %v10768
    %v10803 = vpack.c.b16 %v10771, %v10770
    %v10804 = vpack.c.b16 %v10773, %v10772
    %v10805 = vpack.c.b16 %v10775, %v10774
    %v10806 = vpack.c.b16 %v10777, %v10776
    %v10807 = vpack.c.b16 %v10779, %v10778
    %v10808 = vpack.c.b16 %v10781, %v10780
    %v10809 = vpack.c.b16 %v10783, %v10782
    %v10810 = vpack.c.b16 %v10785, %v10784
    %v10811 = vpack.c.b16 %v10787, %v10786
    %10836 = vmatpush.bf16.msra.mxu0 %v10795
    %10837 = vmatpush.bf16.msra.mxu0 %v10794
    %10838 = vmatpush.bf16.msra.mxu0 %v10793
    %10839 = vmatpush.bf16.msra.mxu0 %v10792
    %10840 = vmatpush.bf16.msra.mxu0 %v10791
    %10841 = vmatpush.bf16.msra.mxu0 %v10790
    %10842 = vmatpush.bf16.msra.mxu0 %v10789
    %10843 = vmatpush.bf16.msra.mxu0 %v10788
    %10844 = vmatmul.bf16.gmra.mxu0 %v10628
    %v10845 = vpop.f32.mrf.mxu0
    %v10846 = vadd.f32 %v10690, %v10845
    %v10847 = vpop.f32.mrf.mxu0
    %v10848 = vadd.f32 %v10690, %v10847
    %10849 = vmatmul.bf16.gmra.mxu0 %v10631
    %v10850 = vpop.f32.mrf.mxu0
    %v10851 = vadd.f32 %v10690, %v10850
    %v10852 = vpop.f32.mrf.mxu0
    %v10853 = vadd.f32 %v10690, %v10852
    %10854 = vmatmul.bf16.gmra.mxu0 %v10634
    %v10855 = vpop.f32.mrf.mxu0
    %v10856 = vadd.f32 %v10690, %v10855
    %v10857 = vpop.f32.mrf.mxu0
    %v10858 = vadd.f32 %v10690, %v10857
    %10859 = vmatmul.bf16.gmra.mxu0 %v10637
    %v10860 = vpop.f32.mrf.mxu0
    %v10861 = vadd.f32 %v10690, %v10860
    %v10862 = vpop.f32.mrf.mxu0
    %v10863 = vadd.f32 %v10690, %v10862
    %10864 = vdwg.mxu0
    %10865 = vmatpush.bf16.msra.mxu0 %v10803
    %10866 = vmatpush.bf16.msra.mxu0 %v10802
    %10867 = vmatpush.bf16.msra.mxu0 %v10801
    %10868 = vmatpush.bf16.msra.mxu0 %v10800
    %10869 = vmatpush.bf16.msra.mxu0 %v10799
    %10870 = vmatpush.bf16.msra.mxu0 %v10798
    %10871 = vmatpush.bf16.msra.mxu0 %v10797
    %10872 = vmatpush.bf16.msra.mxu0 %v10796
    %10873 = vmatmul.bf16.gmra.mxu0 %v10629
    %v10874 = vpop.f32.mrf.mxu0
    %v10875 = vadd.f32 %v10846, %v10874
    %v10876 = vpop.f32.mrf.mxu0
    %v10877 = vadd.f32 %v10848, %v10876
    %10878 = vmatmul.bf16.gmra.mxu0 %v10632
    %v10879 = vpop.f32.mrf.mxu0
    %v10880 = vadd.f32 %v10851, %v10879
    %v10881 = vpop.f32.mrf.mxu0
    %v10882 = vadd.f32 %v10853, %v10881
    %10883 = vmatmul.bf16.gmra.mxu0 %v10635
    %v10884 = vpop.f32.mrf.mxu0
    %v10885 = vadd.f32 %v10856, %v10884
    %v10886 = vpop.f32.mrf.mxu0
    %v10887 = vadd.f32 %v10858, %v10886
    %10888 = vmatmul.bf16.gmra.mxu0 %v10638
    %v10889 = vpop.f32.mrf.mxu0
    %v10890 = vadd.f32 %v10861, %v10889
    %v10891 = vpop.f32.mrf.mxu0
    %v10892 = vadd.f32 %v10863, %v10891
    %10893 = vdwg.mxu0
    %10894 = vmatpush.bf16.msra.mxu0 %v10811
    %10895 = vmatpush.bf16.msra.mxu0 %v10810
    %10896 = vmatpush.bf16.msra.mxu0 %v10809
    %10897 = vmatpush.bf16.msra.mxu0 %v10808
    %10898 = vmatpush.bf16.msra.mxu0 %v10807
    %10899 = vmatpush.bf16.msra.mxu0 %v10806
    %10900 = vmatpush.bf16.msra.mxu0 %v10805
    %10901 = vmatpush.bf16.msra.mxu0 %v10804
    %10902 = vmatmul.bf16.gmra.mxu0 %v10630
    %v10903 = vpop.f32.mrf.mxu0
    %v10904 = vadd.f32 %v10875, %v10903
    %v10905 = vpop.f32.mrf.mxu0
    %v10906 = vadd.f32 %v10877, %v10905
    %10907 = vmatmul.bf16.gmra.mxu0 %v10633
    %v10908 = vpop.f32.mrf.mxu0
    %v10909 = vadd.f32 %v10880, %v10908
    %v10910 = vpop.f32.mrf.mxu0
    %v10911 = vadd.f32 %v10882, %v10910
    %10912 = vmatmul.bf16.gmra.mxu0 %v10636
    %v10913 = vpop.f32.mrf.mxu0
    %v10914 = vadd.f32 %v10885, %v10913
    %v10915 = vpop.f32.mrf.mxu0
    %v10916 = vadd.f32 %v10887, %v10915
    %10917 = vmatmul.bf16.gmra.mxu0 %v10639
    %v10918 = vpop.f32.mrf.mxu0
    %v10919 = vadd.f32 %v10890, %v10918
    %v10920 = vpop.f32.mrf.mxu0
    %v10921 = vadd.f32 %v10892, %v10920
    %10922 = vdwg.mxu0
    %vm10923 = vcmask 490496
    %10924 = vst.msk [vmem:[#allocation10] sm:$0xff] %vm10923, %v10904
    %10925 = vst.msk [vmem:[#allocation10 + $0x8] sm:$0xff] %vm10923, %v10906
    %10926 = vst.msk [vmem:[#allocation10 + $0x10] sm:$0xff] %vm10923, %v10909
    %10927 = vst.msk [vmem:[#allocation10 + $0x18] sm:$0xff] %vm10923, %v10911
    %10928 = vst.msk [vmem:[#allocation10 + $0x20] sm:$0xff] %vm10923, %v10914
    %10929 = vst.msk [vmem:[#allocation10 + $0x28] sm:$0xff] %vm10923, %v10916
    %10930 = vst.msk [vmem:[#allocation10 + $0x30] sm:$0xff] %vm10923, %v10919
    %10931 = vst.msk [vmem:[#allocation10 + $0x38] sm:$0xff] %vm10923, %v10921
    // Predicated region
    $region58: #{tpu_custom_call.1} parent=1 // pred_check
      _
    $region59: #{tpu_custom_call.1} parent=1 // pred_check_branch
      %10933 = sbr.rel (0) target = $region61
    $region60: #{tpu_custom_call.1} parent=1 // pred_region
      %10935 = vsyncadd [#allocation6], 0
      %s10936 = sshll.u32 [#allocation10], 4
      %s10937 = int_to_ptr.vmem [resolvable:$true] %s10936
      %s10938 = sshll.u32 %s11, 4
      %s10939 = int_to_ptr.hbm [resolvable:$true] %s10938
      %10944 = dma.vmem_to_hbm [thread:$0]  %s10937, 1024, %s10939, [#allocation6], 128, 128, 8
    $region61: #{tpu_custom_call.1} parent=1 // pred_fallthru
      _
    // Predicated region
    $region62: #{tpu_custom_call.1} parent=1 // pred_check
      _
    $region63: #{tpu_custom_call.1} parent=1 // pred_check_branch
      %10946 = sbr.rel (0) target = $region65
    $region64: #{tpu_custom_call.1} parent=1 // pred_region
      %10948 = dma.done [#allocation6], 1024
    $region65: #{tpu_custom_call.1} parent=1 // pred_fallthru
      _
    %10949 = vsyncpa [#allocation5], 1
    %10950 = vsyncpa [#allocation8], 1
    %10951 = vsyncpa [#allocation6], 1

</llo_original>
